<compile_context>
chip_gen: v5e
topology: v5e:2x2
jax: 0.10.0
libtpu: 0.0.40
codegen_flags: <defaults>
</compile_context>

<pallas_src>
import jax
import jax.numpy as jnp
from jax import lax
from jax.experimental import pallas as pl
from jax.experimental.pallas import tpu as pltpu


# ---------------------------------------------------------------------------
# Fused kernel: conv1+bn1 -> (+3) -> conv2+bn2 -> relu -> +out1 -> flatten -> fc
# Single grid point; whole problem (< 50 KiB) lives in VMEM.
# ---------------------------------------------------------------------------
def fused_net_kernel(x_ref, wcat_ref, wfc_ref, bfc_ref, o_ref):
    """Shapes:
      x_ref:    (C, B*HW)   input (NCHW with batch merged into the lane dim)
      wcat_ref: (2C, C+1)   packed [w1f | c1 ; w2f | c2]  (BN + '+3' folded)
      wfc_ref:  (C, HW, 5)  fc weight, native orientation (K=HW, N=5 on lanes)
      bfc_ref:  (1, 5)      fc bias
      o_ref:    (B, 5)      output
    """
    C, BHW = x_ref.shape
    HW = wfc_ref.shape[1]
    B = BHW // HW
    hp = lax.Precision.HIGHEST

    wcat = wcat_ref[...]                                      # (2C, C+1)
    w1 = wcat[:C, :C]
    c1 = wcat[:C, C:C + 1]
    w2 = wcat[C:, :C]
    c2 = wcat[C:, C:C + 1]

    x = x_ref[...]                                            # (C, B*HW)
    # conv1 + bn1 (folded): ONE MXU matmul over the whole batch.
    out1 = jnp.dot(w1, x, preferred_element_type=jnp.float32,
                   precision=hp) + c1
    # ('+3' folded into c2) conv2 + bn2 + relu + residual: ONE more matmul.
    z = jnp.maximum(
        jnp.dot(w2, out1, preferred_element_type=jnp.float32,
                precision=hp) + c2,
        0.0) + out1                                           # (C, B*HW)

    wfc = wfc_ref[...]                                        # (C, HW, 5)
    bfc = bfc_ref[...]                                        # (1, 5)

    # fc over the row-major flatten of z per batch (== x.view(B, -1) in NCHW):
    #   out[b, f] = bfc[f] + sum_c sum_p z[c, b*HW + p] * wfc[c, p, f]
    rows = []
    for b in range(B):                                        # B tiny & static
        z_b = z[:, b * HW:(b + 1) * HW][:, None, :]           # (C, 1, HW)
        # One batched contraction (batch over C, contract HW) against the
        # natively-oriented (HW, 5) slabs -> (C, 1, 5).
        per_c = lax.dot_general(
            z_b, wfc,
            dimension_numbers=(((2,), (1,)), ((0,), (0,))),
            preferred_element_type=jnp.float32, precision=hp)
        rows.append(jnp.sum(per_c, axis=0) + bfc)             # (1, 5)
    o_ref[...] = jnp.concatenate(rows, axis=0)                # single (B,5) store


# ---------------------------------------------------------------------------
# Host-side wrappers
# ---------------------------------------------------------------------------
def fold_params(params):
    """One-time (parameter-load-time) folding of BN (eval) and the '+3' into
    the conv weights, plus fc-weight relayout.  NOT re-run per forward call."""
    (w1, b1, s1, t1, w2, b2, s2, t2, wfc, bfc) = params
    C = w1.shape[0]
    nf, chw = wfc.shape
    HW = chw // C

    w1f = s1 * w1                                             # (C, C)
    c1 = s1 * b1 + t1                                         # (C, 1)
    w2f = s2 * w2                                             # (C, C)
    # w2f @ (out1 + 3) + c2  ==  w2f @ out1 + (c2 + 3*rowsum(w2f))
    c2 = s2 * b2 + t2 + 3.0 * jnp.sum(w2f, axis=1, keepdims=True)

    # Pack conv weights + constants into one small slab -> one DMA.
    wcat = jnp.concatenate(
        [jnp.concatenate([w1f, c1], axis=1),
         jnp.concatenate([w2f, c2], axis=1)], axis=0)         # (2C, C+1)

    # fc weight: PyTorch Linear stores (5, C*HW); present it natively oriented
    # as (C, HW, 5): contraction dim HW on sublanes, 5 free on lanes.
    wfc_r = wfc.reshape(nf, C, HW).transpose(1, 2, 0)         # (C, HW, 5)
    bfc_r = bfc.reshape(1, nf)
    return wcat, wfc_r, bfc_r


def net_forward(x_nchw, folded):
    wcat, wfc_r, bfc_r = folded
    B, C, H, W = x_nchw.shape
    HW = H * W
    nf = bfc_r.shape[1]

    # Merge batch into the lane dim: (C, B*HW).
    x = x_nchw.transpose(1, 0, 2, 3).reshape(C, B * HW).astype(jnp.float32)

    flops = 2 * 2 * C * C * B * HW + 2 * C * HW * nf * B
    bytes_accessed = 4 * (C * B * HW + wcat.size + wfc_r.size
                          + bfc_r.size + B * nf)

    vmem = lambda: pl.BlockSpec(memory_space=pltpu.MemorySpace.VMEM)
    return pl.pallas_call(
        fused_net_kernel,
        out_shape=jax.ShapeDtypeStruct((B, nf), jnp.float32),
        in_specs=[vmem() for _ in range(4)],
        out_specs=vmem(),
        cost_estimate=pl.CostEstimate(flops=flops, transcendentals=0,
                                      bytes_accessed=bytes_accessed),
    )(x, wcat, wfc_r, bfc_r)


def make_params(key, C, H, W):
    """Deterministic synthetic parameters matching the PyTorch module shapes."""
    ks = jax.random.split(key, 6)
    eps = 1e-5

    # conv1 / conv2: Conv2d(C, C, kernel_size=1) -> weight (C, C), bias (C, 1)
    w1 = 0.1 * jax.random.normal(ks[0], (C, C), jnp.float32)
    b1 = 0.1 * jax.random.normal(ks[1], (C, 1), jnp.float32)
    w2 = 0.1 * jax.random.normal(ks[2], (C, C), jnp.float32)
    b2 = 0.1 * jax.random.normal(ks[3], (C, 1), jnp.float32)

    # bn1 / bn2 (eval mode): gamma, beta, running_mean, running_var per channel
    idx = jnp.arange(C, dtype=jnp.float32).reshape(C, 1)
    g1, be1, m1, v1 = 1.0 + 0.1 * idx, 0.05 * idx, 0.01 * idx, 1.0 + 0.02 * idx
    g2, be2, m2, v2 = 1.0 - 0.05 * idx, -0.03 * idx, 0.02 * idx, 1.0 + 0.01 * idx
    s1 = g1 / jnp.sqrt(v1 + eps)
    t1 = be1 - m1 * s1
    s2 = g2 / jnp.sqrt(v2 + eps)
    t2 = be2 - m2 * s2

    # fc: Linear(C*H*W, 5) in PyTorch layout -> weight (5, C*H*W), bias (5,)
    wfc = 0.05 * jax.random.normal(ks[4], (5, C * H * W), jnp.float32)
    bfc = 0.05 * jax.random.normal(ks[5], (5,), jnp.float32)

    return (w1, b1, s1, t1, w2, b2, s2, t2, wfc, bfc)


def reference_forward(x_nchw, params):
    """Pure-JAX reference with the original (unfolded) op ordering."""
    (w1, b1, s1, t1, w2, b2, s2, t2, wfc, bfc) = params
    B, C, H, W = x_nchw.shape
    x = x_nchw.reshape(B, C, H * W).astype(jnp.float32)
    hp = jax.lax.Precision.HIGHEST
    y1 = jnp.einsum("oc,bcp->bop", w1, x, precision=hp) + b1[None]
    out1 = s1[None] * y1 + t1[None]
    t = out1 + 3.0
    y2 = jnp.einsum("oc,bcp->bop", w2, t, precision=hp) + b2[None]
    z = jnp.maximum(s2[None] * y2 + t2[None], 0.0) + out1
    flat = z.reshape(B, C * H * W)
    return jnp.dot(flat, wfc.T, precision=hp) + bfc[None]


if __name__ == "__main__":
    B, C, H, W = 2, 4, 16, 16
    key = jax.random.PRNGKey(0)
    k_x, k_p = jax.random.split(key)
    x = jax.random.normal(k_x, (B, C, H, W), jnp.float32)
    params = make_params(k_p, C, H, W)

    # Fold BN / '+3' / fc relayout once (parameter-load time).
    folded = fold_params(params)

    fwd = jax.jit(net_forward)
    out = jax.block_until_ready(fwd(x, folded))
    ref = reference_forward(x, params)

    assert out.shape == (B, 5)
    assert jnp.allclose(out, ref, atol=1e-3, rtol=1e-3), "mismatch vs reference"

    print("KERNEL_OK")
</pallas_src>

<mosaic_0001>
module attributes {stable_mosaic.version = 11 : i64} {
  func.func @fused_net_kernel(%arg0: memref<4x512xf32, #tpu.memory_space<vmem>>, %arg1: memref<8x5xf32, #tpu.memory_space<vmem>>, %arg2: memref<4x256x5xf32, #tpu.memory_space<vmem>>, %arg3: memref<1x5xf32, #tpu.memory_space<vmem>>, %arg4: memref<2x5xf32, #tpu.memory_space<vmem>>) attributes {dimension_semantics = [], scalar_prefetch = 0 : i64, scratch_operands = 0 : i64, tpu.core_type = #tpu.core_type<tc>} {
    %c0 = arith.constant 0 : index
    %c0_0 = arith.constant 0 : index
    %0 = vector.load %arg1[%c0, %c0_0] : memref<8x5xf32, #tpu.memory_space<vmem>>, vector<8x5xf32>
    %1 = vector.extract_strided_slice %0 {offsets = [0, 0], sizes = [4, 4], strides = [1, 1]} : vector<8x5xf32> to vector<4x4xf32>
    %2 = vector.extract_strided_slice %0 {offsets = [0, 4], sizes = [4, 1], strides = [1, 1]} : vector<8x5xf32> to vector<4x1xf32>
    %3 = vector.extract_strided_slice %0 {offsets = [4, 0], sizes = [4, 4], strides = [1, 1]} : vector<8x5xf32> to vector<4x4xf32>
    %4 = vector.extract_strided_slice %0 {offsets = [4, 4], sizes = [4, 1], strides = [1, 1]} : vector<8x5xf32> to vector<4x1xf32>
    %c0_1 = arith.constant 0 : index
    %c0_2 = arith.constant 0 : index
    %5 = vector.load %arg0[%c0_1, %c0_2] : memref<4x512xf32, #tpu.memory_space<vmem>>, vector<4x512xf32>
    %cst = arith.constant dense<0.000000e+00> : vector<4x512xf32>
    %6 = tpu.matmul %1, %5, %cst {dimension_numbers = #tpu.dot_dimension_numbers<[1], [0], [0], [1], [0, 0, 1, 1], [], []>, precision = #tpu.contract_precision<fp32>} : vector<4x4xf32>, vector<4x512xf32>, vector<4x512xf32> -> vector<4x512xf32>
    %7 = vector.broadcast %2 : vector<4x1xf32> to vector<4x512xf32>
    %8 = arith.addf %6, %7 : vector<4x512xf32>
    %cst_3 = arith.constant dense<0.000000e+00> : vector<4x512xf32>
    %9 = tpu.matmul %3, %8, %cst_3 {dimension_numbers = #tpu.dot_dimension_numbers<[1], [0], [0], [1], [0, 0, 1, 1], [], []>, precision = #tpu.contract_precision<fp32>} : vector<4x4xf32>, vector<4x512xf32>, vector<4x512xf32> -> vector<4x512xf32>
    %10 = vector.broadcast %4 : vector<4x1xf32> to vector<4x512xf32>
    %11 = arith.addf %9, %10 : vector<4x512xf32>
    %cst_4 = arith.constant 0.000000e+00 : f32
    %12 = vector.broadcast %cst_4 : f32 to vector<4x512xf32>
    %13 = arith.maximumf %11, %12 : vector<4x512xf32>
    %14 = arith.addf %13, %8 : vector<4x512xf32>
    %c0_5 = arith.constant 0 : index
    %c0_6 = arith.constant 0 : index
    %c0_7 = arith.constant 0 : index
    %15 = vector.load %arg2[%c0_5, %c0_6, %c0_7] : memref<4x256x5xf32, #tpu.memory_space<vmem>>, vector<4x256x5xf32>
    %c0_8 = arith.constant 0 : index
    %c0_9 = arith.constant 0 : index
    %16 = vector.load %arg3[%c0_8, %c0_9] : memref<1x5xf32, #tpu.memory_space<vmem>>, vector<1x5xf32>
    %17 = vector.extract_strided_slice %14 {offsets = [0, 0], sizes = [4, 256], strides = [1, 1]} : vector<4x512xf32> to vector<4x256xf32>
    %18 = vector.shape_cast %17 : vector<4x256xf32> to vector<4x1x256xf32>
    %cst_10 = arith.constant dense<0.000000e+00> : vector<4x1x5xf32>
    %19 = tpu.matmul %18, %15, %cst_10 {dimension_numbers = #tpu.dot_dimension_numbers<[2], [1], [1], [2], [0, 0, 0, 1, 1, 2], [0], [0]>, precision = #tpu.contract_precision<fp32>} : vector<4x1x256xf32>, vector<4x256x5xf32>, vector<4x1x5xf32> -> vector<4x1x5xf32>
    %cst_11 = arith.constant dense<0.000000e+00> : vector<1x5xf32>
    %20 = vector.multi_reduction <add>, %19, %cst_11 [0] : vector<4x1x5xf32> to vector<1x5xf32>
    %21 = arith.addf %20, %16 : vector<1x5xf32>
    %22 = vector.extract_strided_slice %14 {offsets = [0, 256], sizes = [4, 256], strides = [1, 1]} : vector<4x512xf32> to vector<4x256xf32>
    %23 = vector.shape_cast %22 : vector<4x256xf32> to vector<4x1x256xf32>
    %cst_12 = arith.constant dense<0.000000e+00> : vector<4x1x5xf32>
    %24 = tpu.matmul %23, %15, %cst_12 {dimension_numbers = #tpu.dot_dimension_numbers<[2], [1], [1], [2], [0, 0, 0, 1, 1, 2], [0], [0]>, precision = #tpu.contract_precision<fp32>} : vector<4x1x256xf32>, vector<4x256x5xf32>, vector<4x1x5xf32> -> vector<4x1x5xf32>
    %cst_13 = arith.constant dense<0.000000e+00> : vector<1x5xf32>
    %25 = vector.multi_reduction <add>, %24, %cst_13 [0] : vector<4x1x5xf32> to vector<1x5xf32>
    %26 = arith.addf %25, %16 : vector<1x5xf32>
    %27 = tpu.concatenate %21, %26 in 0 : vector<1x5xf32>, vector<1x5xf32> -> vector<2x5xf32>
    %c0_14 = arith.constant 0 : index
    %c0_15 = arith.constant 0 : index
    %28 = vector.load %arg4[%c0_14, %c0_15] : memref<2x5xf32, #tpu.memory_space<vmem>>, vector<2x5xf32>
    tpu.vector_store %arg4[%c0_14, %c0_15], %27 {strides = array<i32>} : memref<2x5xf32, #tpu.memory_space<vmem>>, vector<2x5xf32>,
    return
  }
}

</mosaic_0001>

<llo_original>
// kernel: net_forward.1
$region0: #{net_forward.1}
  #allocation0 [shape = 'u32[]', space=smem, size = 0x4, offset = 0x4, fixed_abs, tag = 'smem constant byte address 0x4 - core index']
  #allocation1 [shape = 'u32[72,128]{1,0:T(1,128)}', space=vmem, size = 0x9000, scoped, tag = 'internal scratch']
  %s0 = inlined_call_operand.vmem [shape: f32[4,512], index: 0, kind: input, shape index: {}]
  %s1 = inlined_call_operand.vmem [shape: f32[8,5], index: 1, kind: input, shape index: {}]
  %s2 = inlined_call_operand.vmem [shape: f32[4,256,5], index: 2, kind: input, shape index: {}]
  %s3 = inlined_call_operand.vmem [shape: f32[1,5], index: 3, kind: input, shape index: {}]
  %s4 = inlined_call_operand.hbm [shape: f32[2,5], index: 4, kind: output, shape index: {}]
  %s5 = sld [smem:[#allocation0]]
  $region26: #{net_forward.1} parent=0
    _
  %s7 = ssub.s32 1, %s5
  %s8 = scalar_select 0, %s7, %s5
  $region1: #{net_forward.1} parent=0
    #allocation2 [shape = 'u8[1024]{0}', space=vmem, size = 0x400, scoped, tag = 'output window, operand 0, single buffered']
    #allocation3 [shape = 's32[1]{0}', space=sflag, size = 0x4, scoped, tag = 'scoped memory for net_forward.1']
    %9 = vsyncpa [#allocation3], 0
    // Predicated region
    $region2: #{net_forward.1} parent=1 // pred_check
      _
    $region3: #{net_forward.1} parent=1 // pred_check_branch
      %11 = sbr.rel (0) target = $region5
    $region4: #{net_forward.1} parent=1 // pred_region
      _
    $region5: #{net_forward.1} parent=1 // pred_fallthru
      _
    // Predicated region
    $region6: #{net_forward.1} parent=1 // pred_check
      _
    $region7: #{net_forward.1} parent=1 // pred_check_branch
      %13 = sbr.rel (0) target = $region9
    $region8: #{net_forward.1} parent=1 // pred_region
      _
    $region9: #{net_forward.1} parent=1 // pred_fallthru
      _
    // Predicated region
    $region10: #{net_forward.1} parent=1 // pred_check
      _
    $region11: #{net_forward.1} parent=1 // pred_check_branch
      %15 = sbr.rel (0) target = $region13
    $region12: #{net_forward.1} parent=1 // pred_region
      _
    $region13: #{net_forward.1} parent=1 // pred_fallthru
      _
    // Predicated region
    $region14: #{net_forward.1} parent=1 // pred_check
      _
    $region15: #{net_forward.1} parent=1 // pred_check_branch
      %17 = sbr.rel (0) target = $region17
    $region16: #{net_forward.1} parent=1 // pred_region
      _
    $region17: #{net_forward.1} parent=1 // pred_fallthru
      _
    %v18 = vld [vmem:[%s1] sm:$0xff]
    %v19 = vld [vmem:[%s0] sm:$0xff]
    %v20 = vld [vmem:[%s0 + $0x8] sm:$0xff]
    %22 = vset.pattern.permute.xlu0 4
    %23 = vperm.xlu0 %22, %v18
    %v24 = vpop.permute.xlu0 %23
    %28 = vst [vmem:[#allocation1] ss:$2 sm:$0xff] %v19
    %s29 = scalar_lea.vmem [#allocation1], 16
    %30 = vst [vmem:[%s29] ss:$2 sm:$0xff] %v20
    %v31 = vld.sshfl [vmem:[#allocation1] sm:$0xff pattern:$0x75316420]
    %v32 = vld.sshfl [vmem:[#allocation1 + $0x8] sm:$0xff pattern:$0x75316420]
    %v33 = vld.sshfl [vmem:[#allocation1 + $0x10] sm:$0xff pattern:$0x75316420]
    %v34 = vld.sshfl [vmem:[#allocation1 + $0x18] sm:$0xff pattern:$0x75316420]
    %vm35 = vcmask 31744
    %v36 = vsel %vm35, %v18, 0
    %vm38 = vcmask 1043456
    %v39 = vsel %vm38, %v31, 0
    %v41 = vsel %vm38, %v32, 0
    %v43 = vsel %vm38, %v33, 0
    %v45 = vsel %vm38, %v34, 0
    %47 = vmatpush.msra.mxu0 0.0
    %48 = vmatpush.msra.mxu0 0.0
    %49 = vmatpush.msra.mxu0 0.0
    %50 = vmatpush.msra.mxu0 0.0
    %51 = vmatpush.msra.mxu0 0.0
    %52 = vmatpush.msra.mxu0 0.0
    %53 = vmatpush.msra.mxu0 0.0
    %54 = vmatpush.msra.mxu0 0.0
    %55 = vmatpush.msra.mxu0 0.0
    %56 = vmatpush.msra.mxu0 0.0
    %57 = vmatpush.msra.mxu0 0.0
    %58 = vmatpush.msra.mxu0 0.0
    %59 = vmatpush.msra.mxu0 0.0
    %60 = vmatpush.msra.mxu0 0.0
    %61 = vmatpush.msra.mxu0 0.0
    %v62 = vand.u32 %v39, 4294901760
    %63 = vmatpush.msra.mxu0 %v62
    %v64 = vand.u32 %v36, 4294901760
    %v65 = vsub.f32 %v36, %v64
    %v66 = vand.u32 %v65, 4294901760
    %v67 = vsub.f32 %v65, %v66
    %v68 = vand.u32 %v67, 4294901760
    %69 = vmatmul.f32.gmra.mxu0 %v68
    %v70 = vpop.f32.mrf.mxu0
    %v71 = vadd.f32 %v24, %v70
    %72 = vdwg.mxu0
    %73 = vmatpush.msra.mxu0 0.0
    %74 = vmatpush.msra.mxu0 0.0
    %75 = vmatpush.msra.mxu0 0.0
    %76 = vmatpush.msra.mxu0 0.0
    %77 = vmatpush.msra.mxu0 0.0
    %78 = vmatpush.msra.mxu0 0.0
    %79 = vmatpush.msra.mxu0 0.0
    %80 = vmatpush.msra.mxu0 0.0
    %81 = vmatpush.msra.mxu0 0.0
    %82 = vmatpush.msra.mxu0 0.0
    %83 = vmatpush.msra.mxu0 0.0
    %84 = vmatpush.msra.mxu0 0.0
    %85 = vmatpush.msra.mxu0 0.0
    %86 = vmatpush.msra.mxu0 0.0
    %87 = vmatpush.msra.mxu0 0.0
    %v88 = vand.u32 %v39, 4294901760
    %v89 = vsub.f32 %v39, %v88
    %v90 = vand.u32 %v89, 4294901760
    %v91 = vsub.f32 %v89, %v90
    %v92 = vand.u32 %v91, 4294901760
    %93 = vmatpush.msra.mxu0 %v92
    %v94 = vand.u32 %v36, 4294901760
    %95 = vmatmul.f32.gmra.mxu0 %v94
    %v96 = vpop.f32.mrf.mxu0
    %v97 = vadd.f32 %v71, %v96
    %98 = vdwg.mxu0
    %99 = vmatpush.msra.mxu0 0.0
    %100 = vmatpush.msra.mxu0 0.0
    %101 = vmatpush.msra.mxu0 0.0
    %102 = vmatpush.msra.mxu0 0.0
    %103 = vmatpush.msra.mxu0 0.0
    %104 = vmatpush.msra.mxu0 0.0
    %105 = vmatpush.msra.mxu0 0.0
    %106 = vmatpush.msra.mxu0 0.0
    %107 = vmatpush.msra.mxu0 0.0
    %108 = vmatpush.msra.mxu0 0.0
    %109 = vmatpush.msra.mxu0 0.0
    %110 = vmatpush.msra.mxu0 0.0
    %111 = vmatpush.msra.mxu0 0.0
    %112 = vmatpush.msra.mxu0 0.0
    %113 = vmatpush.msra.mxu0 0.0
    %v114 = vand.u32 %v39, 4294901760
    %v115 = vsub.f32 %v39, %v114
    %116 = vmatpush.msra.mxu0 %v115
    %v117 = vand.u32 %v36, 4294901760
    %v118 = vsub.f32 %v36, %v117
    %119 = vmatmul.f32.gmra.mxu0 %v118
    %v120 = vpop.f32.mrf.mxu0
    %v121 = vadd.f32 %v97, %v120
    %122 = vdwg.mxu0
    %123 = vmatpush.msra.mxu0 0.0
    %124 = vmatpush.msra.mxu0 0.0
    %125 = vmatpush.msra.mxu0 0.0
    %126 = vmatpush.msra.mxu0 0.0
    %127 = vmatpush.msra.mxu0 0.0
    %128 = vmatpush.msra.mxu0 0.0
    %129 = vmatpush.msra.mxu0 0.0
    %130 = vmatpush.msra.mxu0 0.0
    %131 = vmatpush.msra.mxu0 0.0
    %132 = vmatpush.msra.mxu0 0.0
    %133 = vmatpush.msra.mxu0 0.0
    %134 = vmatpush.msra.mxu0 0.0
    %135 = vmatpush.msra.mxu0 0.0
    %136 = vmatpush.msra.mxu0 0.0
    %137 = vmatpush.msra.mxu0 0.0
    %v138 = vand.u32 %v39, 4294901760
    %139 = vmatpush.msra.mxu0 %v138
    %v140 = vand.u32 %v36, 4294901760
    %v141 = vsub.f32 %v36, %v140
    %v142 = vand.u32 %v141, 4294901760
    %143 = vmatmul.f32.gmra.mxu0 %v142
    %v144 = vpop.f32.mrf.mxu0
    %v145 = vadd.f32 %v121, %v144
    %146 = vdwg.mxu0
    %147 = vmatpush.msra.mxu0 0.0
    %148 = vmatpush.msra.mxu0 0.0
    %149 = vmatpush.msra.mxu0 0.0
    %150 = vmatpush.msra.mxu0 0.0
    %151 = vmatpush.msra.mxu0 0.0
    %152 = vmatpush.msra.mxu0 0.0
    %153 = vmatpush.msra.mxu0 0.0
    %154 = vmatpush.msra.mxu0 0.0
    %155 = vmatpush.msra.mxu0 0.0
    %156 = vmatpush.msra.mxu0 0.0
    %157 = vmatpush.msra.mxu0 0.0
    %158 = vmatpush.msra.mxu0 0.0
    %159 = vmatpush.msra.mxu0 0.0
    %160 = vmatpush.msra.mxu0 0.0
    %161 = vmatpush.msra.mxu0 0.0
    %v162 = vand.u32 %v39, 4294901760
    %v163 = vsub.f32 %v39, %v162
    %v164 = vand.u32 %v163, 4294901760
    %165 = vmatpush.msra.mxu0 %v164
    %v166 = vand.u32 %v36, 4294901760
    %167 = vmatmul.f32.gmra.mxu0 %v166
    %v168 = vpop.f32.mrf.mxu0
    %v169 = vadd.f32 %v145, %v168
    %170 = vdwg.mxu0
    %171 = vmatpush.msra.mxu0 0.0
    %172 = vmatpush.msra.mxu0 0.0
    %173 = vmatpush.msra.mxu0 0.0
    %174 = vmatpush.msra.mxu0 0.0
    %175 = vmatpush.msra.mxu0 0.0
    %176 = vmatpush.msra.mxu0 0.0
    %177 = vmatpush.msra.mxu0 0.0
    %178 = vmatpush.msra.mxu0 0.0
    %179 = vmatpush.msra.mxu0 0.0
    %180 = vmatpush.msra.mxu0 0.0
    %181 = vmatpush.msra.mxu0 0.0
    %182 = vmatpush.msra.mxu0 0.0
    %183 = vmatpush.msra.mxu0 0.0
    %184 = vmatpush.msra.mxu0 0.0
    %185 = vmatpush.msra.mxu0 0.0
    %v186 = vand.u32 %v39, 4294901760
    %187 = vmatpush.msra.mxu0 %v186
    %v188 = vand.u32 %v36, 4294901760
    %189 = vmatmul.f32.gmra.mxu0 %v188
    %v190 = vpop.f32.mrf.mxu0
    %v191 = vadd.f32 %v169, %v190
    %192 = vdwg.mxu0
    %193 = vmatpush.msra.mxu0 0.0
    %194 = vmatpush.msra.mxu0 0.0
    %195 = vmatpush.msra.mxu0 0.0
    %196 = vmatpush.msra.mxu0 0.0
    %197 = vmatpush.msra.mxu0 0.0
    %198 = vmatpush.msra.mxu0 0.0
    %199 = vmatpush.msra.mxu0 0.0
    %200 = vmatpush.msra.mxu0 0.0
    %201 = vmatpush.msra.mxu0 0.0
    %202 = vmatpush.msra.mxu0 0.0
    %203 = vmatpush.msra.mxu0 0.0
    %204 = vmatpush.msra.mxu0 0.0
    %205 = vmatpush.msra.mxu0 0.0
    %206 = vmatpush.msra.mxu0 0.0
    %207 = vmatpush.msra.mxu0 0.0
    %v208 = vand.u32 %v41, 4294901760
    %209 = vmatpush.msra.mxu0 %v208
    %v210 = vand.u32 %v36, 4294901760
    %v211 = vsub.f32 %v36, %v210
    %v212 = vand.u32 %v211, 4294901760
    %v213 = vsub.f32 %v211, %v212
    %v214 = vand.u32 %v213, 4294901760
    %215 = vmatmul.f32.gmra.mxu0 %v214
    %v216 = vpop.f32.mrf.mxu0
    %v217 = vadd.f32 %v24, %v216
    %218 = vdwg.mxu0
    %219 = vmatpush.msra.mxu0 0.0
    %220 = vmatpush.msra.mxu0 0.0
    %221 = vmatpush.msra.mxu0 0.0
    %222 = vmatpush.msra.mxu0 0.0
    %223 = vmatpush.msra.mxu0 0.0
    %224 = vmatpush.msra.mxu0 0.0
    %225 = vmatpush.msra.mxu0 0.0
    %226 = vmatpush.msra.mxu0 0.0
    %227 = vmatpush.msra.mxu0 0.0
    %228 = vmatpush.msra.mxu0 0.0
    %229 = vmatpush.msra.mxu0 0.0
    %230 = vmatpush.msra.mxu0 0.0
    %231 = vmatpush.msra.mxu0 0.0
    %232 = vmatpush.msra.mxu0 0.0
    %233 = vmatpush.msra.mxu0 0.0
    %v234 = vand.u32 %v41, 4294901760
    %v235 = vsub.f32 %v41, %v234
    %v236 = vand.u32 %v235, 4294901760
    %v237 = vsub.f32 %v235, %v236
    %v238 = vand.u32 %v237, 4294901760
    %239 = vmatpush.msra.mxu0 %v238
    %v240 = vand.u32 %v36, 4294901760
    %241 = vmatmul.f32.gmra.mxu0 %v240
    %v242 = vpop.f32.mrf.mxu0
    %v243 = vadd.f32 %v217, %v242
    %244 = vdwg.mxu0
    %245 = vmatpush.msra.mxu0 0.0
    %246 = vmatpush.msra.mxu0 0.0
    %247 = vmatpush.msra.mxu0 0.0
    %248 = vmatpush.msra.mxu0 0.0
    %249 = vmatpush.msra.mxu0 0.0
    %250 = vmatpush.msra.mxu0 0.0
    %251 = vmatpush.msra.mxu0 0.0
    %252 = vmatpush.msra.mxu0 0.0
    %253 = vmatpush.msra.mxu0 0.0
    %254 = vmatpush.msra.mxu0 0.0
    %255 = vmatpush.msra.mxu0 0.0
    %256 = vmatpush.msra.mxu0 0.0
    %257 = vmatpush.msra.mxu0 0.0
    %258 = vmatpush.msra.mxu0 0.0
    %259 = vmatpush.msra.mxu0 0.0
    %v260 = vand.u32 %v41, 4294901760
    %v261 = vsub.f32 %v41, %v260
    %262 = vmatpush.msra.mxu0 %v261
    %v263 = vand.u32 %v36, 4294901760
    %v264 = vsub.f32 %v36, %v263
    %265 = vmatmul.f32.gmra.mxu0 %v264
    %v266 = vpop.f32.mrf.mxu0
    %v267 = vadd.f32 %v243, %v266
    %268 = vdwg.mxu0
    %269 = vmatpush.msra.mxu0 0.0
    %270 = vmatpush.msra.mxu0 0.0
    %271 = vmatpush.msra.mxu0 0.0
    %272 = vmatpush.msra.mxu0 0.0
    %273 = vmatpush.msra.mxu0 0.0
    %274 = vmatpush.msra.mxu0 0.0
    %275 = vmatpush.msra.mxu0 0.0
    %276 = vmatpush.msra.mxu0 0.0
    %277 = vmatpush.msra.mxu0 0.0
    %278 = vmatpush.msra.mxu0 0.0
    %279 = vmatpush.msra.mxu0 0.0
    %280 = vmatpush.msra.mxu0 0.0
    %281 = vmatpush.msra.mxu0 0.0
    %282 = vmatpush.msra.mxu0 0.0
    %283 = vmatpush.msra.mxu0 0.0
    %v284 = vand.u32 %v41, 4294901760
    %285 = vmatpush.msra.mxu0 %v284
    %v286 = vand.u32 %v36, 4294901760
    %v287 = vsub.f32 %v36, %v286
    %v288 = vand.u32 %v287, 4294901760
    %289 = vmatmul.f32.gmra.mxu0 %v288
    %v290 = vpop.f32.mrf.mxu0
    %v291 = vadd.f32 %v267, %v290
    %292 = vdwg.mxu0
    %293 = vmatpush.msra.mxu0 0.0
    %294 = vmatpush.msra.mxu0 0.0
    %295 = vmatpush.msra.mxu0 0.0
    %296 = vmatpush.msra.mxu0 0.0
    %297 = vmatpush.msra.mxu0 0.0
    %298 = vmatpush.msra.mxu0 0.0
    %299 = vmatpush.msra.mxu0 0.0
    %300 = vmatpush.msra.mxu0 0.0
    %301 = vmatpush.msra.mxu0 0.0
    %302 = vmatpush.msra.mxu0 0.0
    %303 = vmatpush.msra.mxu0 0.0
    %304 = vmatpush.msra.mxu0 0.0
    %305 = vmatpush.msra.mxu0 0.0
    %306 = vmatpush.msra.mxu0 0.0
    %307 = vmatpush.msra.mxu0 0.0
    %v308 = vand.u32 %v41, 4294901760
    %v309 = vsub.f32 %v41, %v308
    %v310 = vand.u32 %v309, 4294901760
    %311 = vmatpush.msra.mxu0 %v310
    %v312 = vand.u32 %v36, 4294901760
    %313 = vmatmul.f32.gmra.mxu0 %v312
    %v314 = vpop.f32.mrf.mxu0
    %v315 = vadd.f32 %v291, %v314
    %316 = vdwg.mxu0
    %317 = vmatpush.msra.mxu0 0.0
    %318 = vmatpush.msra.mxu0 0.0
    %319 = vmatpush.msra.mxu0 0.0
    %320 = vmatpush.msra.mxu0 0.0
    %321 = vmatpush.msra.mxu0 0.0
    %322 = vmatpush.msra.mxu0 0.0
    %323 = vmatpush.msra.mxu0 0.0
    %324 = vmatpush.msra.mxu0 0.0
    %325 = vmatpush.msra.mxu0 0.0
    %326 = vmatpush.msra.mxu0 0.0
    %327 = vmatpush.msra.mxu0 0.0
    %328 = vmatpush.msra.mxu0 0.0
    %329 = vmatpush.msra.mxu0 0.0
    %330 = vmatpush.msra.mxu0 0.0
    %331 = vmatpush.msra.mxu0 0.0
    %v332 = vand.u32 %v41, 4294901760
    %333 = vmatpush.msra.mxu0 %v332
    %v334 = vand.u32 %v36, 4294901760
    %335 = vmatmul.f32.gmra.mxu0 %v334
    %v336 = vpop.f32.mrf.mxu0
    %v337 = vadd.f32 %v315, %v336
    %338 = vdwg.mxu0
    %339 = vmatpush.msra.mxu0 0.0
    %340 = vmatpush.msra.mxu0 0.0
    %341 = vmatpush.msra.mxu0 0.0
    %342 = vmatpush.msra.mxu0 0.0
    %343 = vmatpush.msra.mxu0 0.0
    %344 = vmatpush.msra.mxu0 0.0
    %345 = vmatpush.msra.mxu0 0.0
    %346 = vmatpush.msra.mxu0 0.0
    %347 = vmatpush.msra.mxu0 0.0
    %348 = vmatpush.msra.mxu0 0.0
    %349 = vmatpush.msra.mxu0 0.0
    %350 = vmatpush.msra.mxu0 0.0
    %351 = vmatpush.msra.mxu0 0.0
    %352 = vmatpush.msra.mxu0 0.0
    %353 = vmatpush.msra.mxu0 0.0
    %v354 = vand.u32 %v43, 4294901760
    %355 = vmatpush.msra.mxu0 %v354
    %v356 = vand.u32 %v36, 4294901760
    %v357 = vsub.f32 %v36, %v356
    %v358 = vand.u32 %v357, 4294901760
    %v359 = vsub.f32 %v357, %v358
    %v360 = vand.u32 %v359, 4294901760
    %361 = vmatmul.f32.gmra.mxu0 %v360
    %v362 = vpop.f32.mrf.mxu0
    %v363 = vadd.f32 %v24, %v362
    %364 = vdwg.mxu0
    %365 = vmatpush.msra.mxu0 0.0
    %366 = vmatpush.msra.mxu0 0.0
    %367 = vmatpush.msra.mxu0 0.0
    %368 = vmatpush.msra.mxu0 0.0
    %369 = vmatpush.msra.mxu0 0.0
    %370 = vmatpush.msra.mxu0 0.0
    %371 = vmatpush.msra.mxu0 0.0
    %372 = vmatpush.msra.mxu0 0.0
    %373 = vmatpush.msra.mxu0 0.0
    %374 = vmatpush.msra.mxu0 0.0
    %375 = vmatpush.msra.mxu0 0.0
    %376 = vmatpush.msra.mxu0 0.0
    %377 = vmatpush.msra.mxu0 0.0
    %378 = vmatpush.msra.mxu0 0.0
    %379 = vmatpush.msra.mxu0 0.0
    %v380 = vand.u32 %v43, 4294901760
    %v381 = vsub.f32 %v43, %v380
    %v382 = vand.u32 %v381, 4294901760
    %v383 = vsub.f32 %v381, %v382
    %v384 = vand.u32 %v383, 4294901760
    %385 = vmatpush.msra.mxu0 %v384
    %v386 = vand.u32 %v36, 4294901760
    %387 = vmatmul.f32.gmra.mxu0 %v386
    %v388 = vpop.f32.mrf.mxu0
    %v389 = vadd.f32 %v363, %v388
    %390 = vdwg.mxu0
    %391 = vmatpush.msra.mxu0 0.0
    %392 = vmatpush.msra.mxu0 0.0
    %393 = vmatpush.msra.mxu0 0.0
    %394 = vmatpush.msra.mxu0 0.0
    %395 = vmatpush.msra.mxu0 0.0
    %396 = vmatpush.msra.mxu0 0.0
    %397 = vmatpush.msra.mxu0 0.0
    %398 = vmatpush.msra.mxu0 0.0
    %399 = vmatpush.msra.mxu0 0.0
    %400 = vmatpush.msra.mxu0 0.0
    %401 = vmatpush.msra.mxu0 0.0
    %402 = vmatpush.msra.mxu0 0.0
    %403 = vmatpush.msra.mxu0 0.0
    %404 = vmatpush.msra.mxu0 0.0
    %405 = vmatpush.msra.mxu0 0.0
    %v406 = vand.u32 %v43, 4294901760
    %v407 = vsub.f32 %v43, %v406
    %408 = vmatpush.msra.mxu0 %v407
    %v409 = vand.u32 %v36, 4294901760
    %v410 = vsub.f32 %v36, %v409
    %411 = vmatmul.f32.gmra.mxu0 %v410
    %v412 = vpop.f32.mrf.mxu0
    %v413 = vadd.f32 %v389, %v412
    %414 = vdwg.mxu0
    %415 = vmatpush.msra.mxu0 0.0
    %416 = vmatpush.msra.mxu0 0.0
    %417 = vmatpush.msra.mxu0 0.0
    %418 = vmatpush.msra.mxu0 0.0
    %419 = vmatpush.msra.mxu0 0.0
    %420 = vmatpush.msra.mxu0 0.0
    %421 = vmatpush.msra.mxu0 0.0
    %422 = vmatpush.msra.mxu0 0.0
    %423 = vmatpush.msra.mxu0 0.0
    %424 = vmatpush.msra.mxu0 0.0
    %425 = vmatpush.msra.mxu0 0.0
    %426 = vmatpush.msra.mxu0 0.0
    %427 = vmatpush.msra.mxu0 0.0
    %428 = vmatpush.msra.mxu0 0.0
    %429 = vmatpush.msra.mxu0 0.0
    %v430 = vand.u32 %v43, 4294901760
    %431 = vmatpush.msra.mxu0 %v430
    %v432 = vand.u32 %v36, 4294901760
    %v433 = vsub.f32 %v36, %v432
    %v434 = vand.u32 %v433, 4294901760
    %435 = vmatmul.f32.gmra.mxu0 %v434
    %v436 = vpop.f32.mrf.mxu0
    %v437 = vadd.f32 %v413, %v436
    %438 = vdwg.mxu0
    %439 = vmatpush.msra.mxu0 0.0
    %440 = vmatpush.msra.mxu0 0.0
    %441 = vmatpush.msra.mxu0 0.0
    %442 = vmatpush.msra.mxu0 0.0
    %443 = vmatpush.msra.mxu0 0.0
    %444 = vmatpush.msra.mxu0 0.0
    %445 = vmatpush.msra.mxu0 0.0
    %446 = vmatpush.msra.mxu0 0.0
    %447 = vmatpush.msra.mxu0 0.0
    %448 = vmatpush.msra.mxu0 0.0
    %449 = vmatpush.msra.mxu0 0.0
    %450 = vmatpush.msra.mxu0 0.0
    %451 = vmatpush.msra.mxu0 0.0
    %452 = vmatpush.msra.mxu0 0.0
    %453 = vmatpush.msra.mxu0 0.0
    %v454 = vand.u32 %v43, 4294901760
    %v455 = vsub.f32 %v43, %v454
    %v456 = vand.u32 %v455, 4294901760
    %457 = vmatpush.msra.mxu0 %v456
    %v458 = vand.u32 %v36, 4294901760
    %459 = vmatmul.f32.gmra.mxu0 %v458
    %v460 = vpop.f32.mrf.mxu0
    %v461 = vadd.f32 %v437, %v460
    %462 = vdwg.mxu0
    %463 = vmatpush.msra.mxu0 0.0
    %464 = vmatpush.msra.mxu0 0.0
    %465 = vmatpush.msra.mxu0 0.0
    %466 = vmatpush.msra.mxu0 0.0
    %467 = vmatpush.msra.mxu0 0.0
    %468 = vmatpush.msra.mxu0 0.0
    %469 = vmatpush.msra.mxu0 0.0
    %470 = vmatpush.msra.mxu0 0.0
    %471 = vmatpush.msra.mxu0 0.0
    %472 = vmatpush.msra.mxu0 0.0
    %473 = vmatpush.msra.mxu0 0.0
    %474 = vmatpush.msra.mxu0 0.0
    %475 = vmatpush.msra.mxu0 0.0
    %476 = vmatpush.msra.mxu0 0.0
    %477 = vmatpush.msra.mxu0 0.0
    %v478 = vand.u32 %v43, 4294901760
    %479 = vmatpush.msra.mxu0 %v478
    %v480 = vand.u32 %v36, 4294901760
    %481 = vmatmul.f32.gmra.mxu0 %v480
    %v482 = vpop.f32.mrf.mxu0
    %v483 = vadd.f32 %v461, %v482
    %484 = vdwg.mxu0
    %485 = vmatpush.msra.mxu0 0.0
    %486 = vmatpush.msra.mxu0 0.0
    %487 = vmatpush.msra.mxu0 0.0
    %488 = vmatpush.msra.mxu0 0.0
    %489 = vmatpush.msra.mxu0 0.0
    %490 = vmatpush.msra.mxu0 0.0
    %491 = vmatpush.msra.mxu0 0.0
    %492 = vmatpush.msra.mxu0 0.0
    %493 = vmatpush.msra.mxu0 0.0
    %494 = vmatpush.msra.mxu0 0.0
    %495 = vmatpush.msra.mxu0 0.0
    %496 = vmatpush.msra.mxu0 0.0
    %497 = vmatpush.msra.mxu0 0.0
    %498 = vmatpush.msra.mxu0 0.0
    %499 = vmatpush.msra.mxu0 0.0
    %v500 = vand.u32 %v45, 4294901760
    %501 = vmatpush.msra.mxu0 %v500
    %v502 = vand.u32 %v36, 4294901760
    %v503 = vsub.f32 %v36, %v502
    %v504 = vand.u32 %v503, 4294901760
    %v505 = vsub.f32 %v503, %v504
    %v506 = vand.u32 %v505, 4294901760
    %507 = vmatmul.f32.gmra.mxu0 %v506
    %v508 = vpop.f32.mrf.mxu0
    %v509 = vadd.f32 %v24, %v508
    %510 = vdwg.mxu0
    %511 = vmatpush.msra.mxu0 0.0
    %512 = vmatpush.msra.mxu0 0.0
    %513 = vmatpush.msra.mxu0 0.0
    %514 = vmatpush.msra.mxu0 0.0
    %515 = vmatpush.msra.mxu0 0.0
    %516 = vmatpush.msra.mxu0 0.0
    %517 = vmatpush.msra.mxu0 0.0
    %518 = vmatpush.msra.mxu0 0.0
    %519 = vmatpush.msra.mxu0 0.0
    %520 = vmatpush.msra.mxu0 0.0
    %521 = vmatpush.msra.mxu0 0.0
    %522 = vmatpush.msra.mxu0 0.0
    %523 = vmatpush.msra.mxu0 0.0
    %524 = vmatpush.msra.mxu0 0.0
    %525 = vmatpush.msra.mxu0 0.0
    %v526 = vand.u32 %v45, 4294901760
    %v527 = vsub.f32 %v45, %v526
    %v528 = vand.u32 %v527, 4294901760
    %v529 = vsub.f32 %v527, %v528
    %v530 = vand.u32 %v529, 4294901760
    %531 = vmatpush.msra.mxu0 %v530
    %v532 = vand.u32 %v36, 4294901760
    %533 = vmatmul.f32.gmra.mxu0 %v532
    %v534 = vpop.f32.mrf.mxu0
    %v535 = vadd.f32 %v509, %v534
    %536 = vdwg.mxu0
    %537 = vmatpush.msra.mxu0 0.0
    %538 = vmatpush.msra.mxu0 0.0
    %539 = vmatpush.msra.mxu0 0.0
    %540 = vmatpush.msra.mxu0 0.0
    %541 = vmatpush.msra.mxu0 0.0
    %542 = vmatpush.msra.mxu0 0.0
    %543 = vmatpush.msra.mxu0 0.0
    %544 = vmatpush.msra.mxu0 0.0
    %545 = vmatpush.msra.mxu0 0.0
    %546 = vmatpush.msra.mxu0 0.0
    %547 = vmatpush.msra.mxu0 0.0
    %548 = vmatpush.msra.mxu0 0.0
    %549 = vmatpush.msra.mxu0 0.0
    %550 = vmatpush.msra.mxu0 0.0
    %551 = vmatpush.msra.mxu0 0.0
    %v552 = vand.u32 %v45, 4294901760
    %v553 = vsub.f32 %v45, %v552
    %554 = vmatpush.msra.mxu0 %v553
    %v555 = vand.u32 %v36, 4294901760
    %v556 = vsub.f32 %v36, %v555
    %557 = vmatmul.f32.gmra.mxu0 %v556
    %v558 = vpop.f32.mrf.mxu0
    %v559 = vadd.f32 %v535, %v558
    %560 = vdwg.mxu0
    %561 = vmatpush.msra.mxu0 0.0
    %562 = vmatpush.msra.mxu0 0.0
    %563 = vmatpush.msra.mxu0 0.0
    %564 = vmatpush.msra.mxu0 0.0
    %565 = vmatpush.msra.mxu0 0.0
    %566 = vmatpush.msra.mxu0 0.0
    %567 = vmatpush.msra.mxu0 0.0
    %568 = vmatpush.msra.mxu0 0.0
    %569 = vmatpush.msra.mxu0 0.0
    %570 = vmatpush.msra.mxu0 0.0
    %571 = vmatpush.msra.mxu0 0.0
    %572 = vmatpush.msra.mxu0 0.0
    %573 = vmatpush.msra.mxu0 0.0
    %574 = vmatpush.msra.mxu0 0.0
    %575 = vmatpush.msra.mxu0 0.0
    %v576 = vand.u32 %v45, 4294901760
    %577 = vmatpush.msra.mxu0 %v576
    %v578 = vand.u32 %v36, 4294901760
    %v579 = vsub.f32 %v36, %v578
    %v580 = vand.u32 %v579, 4294901760
    %581 = vmatmul.f32.gmra.mxu0 %v580
    %v582 = vpop.f32.mrf.mxu0
    %v583 = vadd.f32 %v559, %v582
    %584 = vdwg.mxu0
    %585 = vmatpush.msra.mxu0 0.0
    %586 = vmatpush.msra.mxu0 0.0
    %587 = vmatpush.msra.mxu0 0.0
    %588 = vmatpush.msra.mxu0 0.0
    %589 = vmatpush.msra.mxu0 0.0
    %590 = vmatpush.msra.mxu0 0.0
    %591 = vmatpush.msra.mxu0 0.0
    %592 = vmatpush.msra.mxu0 0.0
    %593 = vmatpush.msra.mxu0 0.0
    %594 = vmatpush.msra.mxu0 0.0
    %595 = vmatpush.msra.mxu0 0.0
    %596 = vmatpush.msra.mxu0 0.0
    %597 = vmatpush.msra.mxu0 0.0
    %598 = vmatpush.msra.mxu0 0.0
    %599 = vmatpush.msra.mxu0 0.0
    %v600 = vand.u32 %v45, 4294901760
    %v601 = vsub.f32 %v45, %v600
    %v602 = vand.u32 %v601, 4294901760
    %603 = vmatpush.msra.mxu0 %v602
    %v604 = vand.u32 %v36, 4294901760
    %605 = vmatmul.f32.gmra.mxu0 %v604
    %v606 = vpop.f32.mrf.mxu0
    %v607 = vadd.f32 %v583, %v606
    %608 = vdwg.mxu0
    %609 = vmatpush.msra.mxu0 0.0
    %610 = vmatpush.msra.mxu0 0.0
    %611 = vmatpush.msra.mxu0 0.0
    %612 = vmatpush.msra.mxu0 0.0
    %613 = vmatpush.msra.mxu0 0.0
    %614 = vmatpush.msra.mxu0 0.0
    %615 = vmatpush.msra.mxu0 0.0
    %616 = vmatpush.msra.mxu0 0.0
    %617 = vmatpush.msra.mxu0 0.0
    %618 = vmatpush.msra.mxu0 0.0
    %619 = vmatpush.msra.mxu0 0.0
    %620 = vmatpush.msra.mxu0 0.0
    %621 = vmatpush.msra.mxu0 0.0
    %622 = vmatpush.msra.mxu0 0.0
    %623 = vmatpush.msra.mxu0 0.0
    %v624 = vand.u32 %v45, 4294901760
    %625 = vmatpush.msra.mxu0 %v624
    %v626 = vand.u32 %v36, 4294901760
    %627 = vmatmul.f32.gmra.mxu0 %v626
    %v628 = vpop.f32.mrf.mxu0
    %v629 = vadd.f32 %v607, %v628
    %630 = vdwg.mxu0
    %v631 = vrot.slane %v18, 4
    %v632 = vrot.slane %v24, 4
    %v634 = vsel %vm35, %v631, 0
    %v637 = vsel %vm38, %v191, 0
    %v640 = vsel %vm38, %v337, 0
    %v643 = vsel %vm38, %v483, 0
    %v646 = vsel %vm38, %v629, 0
    %648 = vmatpush.msra.mxu0 0.0
    %649 = vmatpush.msra.mxu0 0.0
    %650 = vmatpush.msra.mxu0 0.0
    %651 = vmatpush.msra.mxu0 0.0
    %652 = vmatpush.msra.mxu0 0.0
    %653 = vmatpush.msra.mxu0 0.0
    %654 = vmatpush.msra.mxu0 0.0
    %655 = vmatpush.msra.mxu0 0.0
    %656 = vmatpush.msra.mxu0 0.0
    %657 = vmatpush.msra.mxu0 0.0
    %658 = vmatpush.msra.mxu0 0.0
    %659 = vmatpush.msra.mxu0 0.0
    %660 = vmatpush.msra.mxu0 0.0
    %661 = vmatpush.msra.mxu0 0.0
    %662 = vmatpush.msra.mxu0 0.0
    %v663 = vand.u32 %v637, 4294901760
    %664 = vmatpush.msra.mxu0 %v663
    %v665 = vand.u32 %v634, 4294901760
    %v666 = vsub.f32 %v634, %v665
    %v667 = vand.u32 %v666, 4294901760
    %v668 = vsub.f32 %v666, %v667
    %v669 = vand.u32 %v668, 4294901760
    %670 = vmatmul.f32.gmra.mxu0 %v669
    %v671 = vpop.f32.mrf.mxu0
    %v672 = vadd.f32 %v632, %v671
    %673 = vdwg.mxu0
    %674 = vmatpush.msra.mxu0 0.0
    %675 = vmatpush.msra.mxu0 0.0
    %676 = vmatpush.msra.mxu0 0.0
    %677 = vmatpush.msra.mxu0 0.0
    %678 = vmatpush.msra.mxu0 0.0
    %679 = vmatpush.msra.mxu0 0.0
    %680 = vmatpush.msra.mxu0 0.0
    %681 = vmatpush.msra.mxu0 0.0
    %682 = vmatpush.msra.mxu0 0.0
    %683 = vmatpush.msra.mxu0 0.0
    %684 = vmatpush.msra.mxu0 0.0
    %685 = vmatpush.msra.mxu0 0.0
    %686 = vmatpush.msra.mxu0 0.0
    %687 = vmatpush.msra.mxu0 0.0
    %688 = vmatpush.msra.mxu0 0.0
    %v689 = vand.u32 %v637, 4294901760
    %v690 = vsub.f32 %v637, %v689
    %v691 = vand.u32 %v690, 4294901760
    %v692 = vsub.f32 %v690, %v691
    %v693 = vand.u32 %v692, 4294901760
    %694 = vmatpush.msra.mxu0 %v693
    %v695 = vand.u32 %v634, 4294901760
    %696 = vmatmul.f32.gmra.mxu0 %v695
    %v697 = vpop.f32.mrf.mxu0
    %v698 = vadd.f32 %v672, %v697
    %699 = vdwg.mxu0
    %700 = vmatpush.msra.mxu0 0.0
    %701 = vmatpush.msra.mxu0 0.0
    %702 = vmatpush.msra.mxu0 0.0
    %703 = vmatpush.msra.mxu0 0.0
    %704 = vmatpush.msra.mxu0 0.0
    %705 = vmatpush.msra.mxu0 0.0
    %706 = vmatpush.msra.mxu0 0.0
    %707 = vmatpush.msra.mxu0 0.0
    %708 = vmatpush.msra.mxu0 0.0
    %709 = vmatpush.msra.mxu0 0.0
    %710 = vmatpush.msra.mxu0 0.0
    %711 = vmatpush.msra.mxu0 0.0
    %712 = vmatpush.msra.mxu0 0.0
    %713 = vmatpush.msra.mxu0 0.0
    %714 = vmatpush.msra.mxu0 0.0
    %v715 = vand.u32 %v637, 4294901760
    %v716 = vsub.f32 %v637, %v715
    %717 = vmatpush.msra.mxu0 %v716
    %v718 = vand.u32 %v634, 4294901760
    %v719 = vsub.f32 %v634, %v718
    %720 = vmatmul.f32.gmra.mxu0 %v719
    %v721 = vpop.f32.mrf.mxu0
    %v722 = vadd.f32 %v698, %v721
    %723 = vdwg.mxu0
    %724 = vmatpush.msra.mxu0 0.0
    %725 = vmatpush.msra.mxu0 0.0
    %726 = vmatpush.msra.mxu0 0.0
    %727 = vmatpush.msra.mxu0 0.0
    %728 = vmatpush.msra.mxu0 0.0
    %729 = vmatpush.msra.mxu0 0.0
    %730 = vmatpush.msra.mxu0 0.0
    %731 = vmatpush.msra.mxu0 0.0
    %732 = vmatpush.msra.mxu0 0.0
    %733 = vmatpush.msra.mxu0 0.0
    %734 = vmatpush.msra.mxu0 0.0
    %735 = vmatpush.msra.mxu0 0.0
    %736 = vmatpush.msra.mxu0 0.0
    %737 = vmatpush.msra.mxu0 0.0
    %738 = vmatpush.msra.mxu0 0.0
    %v739 = vand.u32 %v637, 4294901760
    %740 = vmatpush.msra.mxu0 %v739
    %v741 = vand.u32 %v634, 4294901760
    %v742 = vsub.f32 %v634, %v741
    %v743 = vand.u32 %v742, 4294901760
    %744 = vmatmul.f32.gmra.mxu0 %v743
    %v745 = vpop.f32.mrf.mxu0
    %v746 = vadd.f32 %v722, %v745
    %747 = vdwg.mxu0
    %748 = vmatpush.msra.mxu0 0.0
    %749 = vmatpush.msra.mxu0 0.0
    %750 = vmatpush.msra.mxu0 0.0
    %751 = vmatpush.msra.mxu0 0.0
    %752 = vmatpush.msra.mxu0 0.0
    %753 = vmatpush.msra.mxu0 0.0
    %754 = vmatpush.msra.mxu0 0.0
    %755 = vmatpush.msra.mxu0 0.0
    %756 = vmatpush.msra.mxu0 0.0
    %757 = vmatpush.msra.mxu0 0.0
    %758 = vmatpush.msra.mxu0 0.0
    %759 = vmatpush.msra.mxu0 0.0
    %760 = vmatpush.msra.mxu0 0.0
    %761 = vmatpush.msra.mxu0 0.0
    %762 = vmatpush.msra.mxu0 0.0
    %v763 = vand.u32 %v637, 4294901760
    %v764 = vsub.f32 %v637, %v763
    %v765 = vand.u32 %v764, 4294901760
    %766 = vmatpush.msra.mxu0 %v765
    %v767 = vand.u32 %v634, 4294901760
    %768 = vmatmul.f32.gmra.mxu0 %v767
    %v769 = vpop.f32.mrf.mxu0
    %v770 = vadd.f32 %v746, %v769
    %771 = vdwg.mxu0
    %772 = vmatpush.msra.mxu0 0.0
    %773 = vmatpush.msra.mxu0 0.0
    %774 = vmatpush.msra.mxu0 0.0
    %775 = vmatpush.msra.mxu0 0.0
    %776 = vmatpush.msra.mxu0 0.0
    %777 = vmatpush.msra.mxu0 0.0
    %778 = vmatpush.msra.mxu0 0.0
    %779 = vmatpush.msra.mxu0 0.0
    %780 = vmatpush.msra.mxu0 0.0
    %781 = vmatpush.msra.mxu0 0.0
    %782 = vmatpush.msra.mxu0 0.0
    %783 = vmatpush.msra.mxu0 0.0
    %784 = vmatpush.msra.mxu0 0.0
    %785 = vmatpush.msra.mxu0 0.0
    %786 = vmatpush.msra.mxu0 0.0
    %v787 = vand.u32 %v637, 4294901760
    %788 = vmatpush.msra.mxu0 %v787
    %v789 = vand.u32 %v634, 4294901760
    %790 = vmatmul.f32.gmra.mxu0 %v789
    %v791 = vpop.f32.mrf.mxu0
    %v792 = vadd.f32 %v770, %v791
    %793 = vdwg.mxu0
    %794 = vmatpush.msra.mxu0 0.0
    %795 = vmatpush.msra.mxu0 0.0
    %796 = vmatpush.msra.mxu0 0.0
    %797 = vmatpush.msra.mxu0 0.0
    %798 = vmatpush.msra.mxu0 0.0
    %799 = vmatpush.msra.mxu0 0.0
    %800 = vmatpush.msra.mxu0 0.0
    %801 = vmatpush.msra.mxu0 0.0
    %802 = vmatpush.msra.mxu0 0.0
    %803 = vmatpush.msra.mxu0 0.0
    %804 = vmatpush.msra.mxu0 0.0
    %805 = vmatpush.msra.mxu0 0.0
    %806 = vmatpush.msra.mxu0 0.0
    %807 = vmatpush.msra.mxu0 0.0
    %808 = vmatpush.msra.mxu0 0.0
    %v809 = vand.u32 %v640, 4294901760
    %810 = vmatpush.msra.mxu0 %v809
    %v811 = vand.u32 %v634, 4294901760
    %v812 = vsub.f32 %v634, %v811
    %v813 = vand.u32 %v812, 4294901760
    %v814 = vsub.f32 %v812, %v813
    %v815 = vand.u32 %v814, 4294901760
    %816 = vmatmul.f32.gmra.mxu0 %v815
    %v817 = vpop.f32.mrf.mxu0
    %v818 = vadd.f32 %v632, %v817
    %819 = vdwg.mxu0
    %820 = vmatpush.msra.mxu0 0.0
    %821 = vmatpush.msra.mxu0 0.0
    %822 = vmatpush.msra.mxu0 0.0
    %823 = vmatpush.msra.mxu0 0.0
    %824 = vmatpush.msra.mxu0 0.0
    %825 = vmatpush.msra.mxu0 0.0
    %826 = vmatpush.msra.mxu0 0.0
    %827 = vmatpush.msra.mxu0 0.0
    %828 = vmatpush.msra.mxu0 0.0
    %829 = vmatpush.msra.mxu0 0.0
    %830 = vmatpush.msra.mxu0 0.0
    %831 = vmatpush.msra.mxu0 0.0
    %832 = vmatpush.msra.mxu0 0.0
    %833 = vmatpush.msra.mxu0 0.0
    %834 = vmatpush.msra.mxu0 0.0
    %v835 = vand.u32 %v640, 4294901760
    %v836 = vsub.f32 %v640, %v835
    %v837 = vand.u32 %v836, 4294901760
    %v838 = vsub.f32 %v836, %v837
    %v839 = vand.u32 %v838, 4294901760
    %840 = vmatpush.msra.mxu0 %v839
    %v841 = vand.u32 %v634, 4294901760
    %842 = vmatmul.f32.gmra.mxu0 %v841
    %v843 = vpop.f32.mrf.mxu0
    %v844 = vadd.f32 %v818, %v843
    %845 = vdwg.mxu0
    %846 = vmatpush.msra.mxu0 0.0
    %847 = vmatpush.msra.mxu0 0.0
    %848 = vmatpush.msra.mxu0 0.0
    %849 = vmatpush.msra.mxu0 0.0
    %850 = vmatpush.msra.mxu0 0.0
    %851 = vmatpush.msra.mxu0 0.0
    %852 = vmatpush.msra.mxu0 0.0
    %853 = vmatpush.msra.mxu0 0.0
    %854 = vmatpush.msra.mxu0 0.0
    %855 = vmatpush.msra.mxu0 0.0
    %856 = vmatpush.msra.mxu0 0.0
    %857 = vmatpush.msra.mxu0 0.0
    %858 = vmatpush.msra.mxu0 0.0
    %859 = vmatpush.msra.mxu0 0.0
    %860 = vmatpush.msra.mxu0 0.0
    %v861 = vand.u32 %v640, 4294901760
    %v862 = vsub.f32 %v640, %v861
    %863 = vmatpush.msra.mxu0 %v862
    %v864 = vand.u32 %v634, 4294901760
    %v865 = vsub.f32 %v634, %v864
    %866 = vmatmul.f32.gmra.mxu0 %v865
    %v867 = vpop.f32.mrf.mxu0
    %v868 = vadd.f32 %v844, %v867
    %869 = vdwg.mxu0
    %870 = vmatpush.msra.mxu0 0.0
    %871 = vmatpush.msra.mxu0 0.0
    %872 = vmatpush.msra.mxu0 0.0
    %873 = vmatpush.msra.mxu0 0.0
    %874 = vmatpush.msra.mxu0 0.0
    %875 = vmatpush.msra.mxu0 0.0
    %876 = vmatpush.msra.mxu0 0.0
    %877 = vmatpush.msra.mxu0 0.0
    %878 = vmatpush.msra.mxu0 0.0
    %879 = vmatpush.msra.mxu0 0.0
    %880 = vmatpush.msra.mxu0 0.0
    %881 = vmatpush.msra.mxu0 0.0
    %882 = vmatpush.msra.mxu0 0.0
    %883 = vmatpush.msra.mxu0 0.0
    %884 = vmatpush.msra.mxu0 0.0
    %v885 = vand.u32 %v640, 4294901760
    %886 = vmatpush.msra.mxu0 %v885
    %v887 = vand.u32 %v634, 4294901760
    %v888 = vsub.f32 %v634, %v887
    %v889 = vand.u32 %v888, 4294901760
    %890 = vmatmul.f32.gmra.mxu0 %v889
    %v891 = vpop.f32.mrf.mxu0
    %v892 = vadd.f32 %v868, %v891
    %893 = vdwg.mxu0
    %894 = vmatpush.msra.mxu0 0.0
    %895 = vmatpush.msra.mxu0 0.0
    %896 = vmatpush.msra.mxu0 0.0
    %897 = vmatpush.msra.mxu0 0.0
    %898 = vmatpush.msra.mxu0 0.0
    %899 = vmatpush.msra.mxu0 0.0
    %900 = vmatpush.msra.mxu0 0.0
    %901 = vmatpush.msra.mxu0 0.0
    %902 = vmatpush.msra.mxu0 0.0
    %903 = vmatpush.msra.mxu0 0.0
    %904 = vmatpush.msra.mxu0 0.0
    %905 = vmatpush.msra.mxu0 0.0
    %906 = vmatpush.msra.mxu0 0.0
    %907 = vmatpush.msra.mxu0 0.0
    %908 = vmatpush.msra.mxu0 0.0
    %v909 = vand.u32 %v640, 4294901760
    %v910 = vsub.f32 %v640, %v909
    %v911 = vand.u32 %v910, 4294901760
    %912 = vmatpush.msra.mxu0 %v911
    %v913 = vand.u32 %v634, 4294901760
    %914 = vmatmul.f32.gmra.mxu0 %v913
    %v915 = vpop.f32.mrf.mxu0
    %v916 = vadd.f32 %v892, %v915
    %917 = vdwg.mxu0
    %918 = vmatpush.msra.mxu0 0.0
    %919 = vmatpush.msra.mxu0 0.0
    %920 = vmatpush.msra.mxu0 0.0
    %921 = vmatpush.msra.mxu0 0.0
    %922 = vmatpush.msra.mxu0 0.0
    %923 = vmatpush.msra.mxu0 0.0
    %924 = vmatpush.msra.mxu0 0.0
    %925 = vmatpush.msra.mxu0 0.0
    %926 = vmatpush.msra.mxu0 0.0
    %927 = vmatpush.msra.mxu0 0.0
    %928 = vmatpush.msra.mxu0 0.0
    %929 = vmatpush.msra.mxu0 0.0
    %930 = vmatpush.msra.mxu0 0.0
    %931 = vmatpush.msra.mxu0 0.0
    %932 = vmatpush.msra.mxu0 0.0
    %v933 = vand.u32 %v640, 4294901760
    %934 = vmatpush.msra.mxu0 %v933
    %v935 = vand.u32 %v634, 4294901760
    %936 = vmatmul.f32.gmra.mxu0 %v935
    %v937 = vpop.f32.mrf.mxu0
    %v938 = vadd.f32 %v916, %v937
    %939 = vdwg.mxu0
    %940 = vmatpush.msra.mxu0 0.0
    %941 = vmatpush.msra.mxu0 0.0
    %942 = vmatpush.msra.mxu0 0.0
    %943 = vmatpush.msra.mxu0 0.0
    %944 = vmatpush.msra.mxu0 0.0
    %945 = vmatpush.msra.mxu0 0.0
    %946 = vmatpush.msra.mxu0 0.0
    %947 = vmatpush.msra.mxu0 0.0
    %948 = vmatpush.msra.mxu0 0.0
    %949 = vmatpush.msra.mxu0 0.0
    %950 = vmatpush.msra.mxu0 0.0
    %951 = vmatpush.msra.mxu0 0.0
    %952 = vmatpush.msra.mxu0 0.0
    %953 = vmatpush.msra.mxu0 0.0
    %954 = vmatpush.msra.mxu0 0.0
    %v955 = vand.u32 %v643, 4294901760
    %956 = vmatpush.msra.mxu0 %v955
    %v957 = vand.u32 %v634, 4294901760
    %v958 = vsub.f32 %v634, %v957
    %v959 = vand.u32 %v958, 4294901760
    %v960 = vsub.f32 %v958, %v959
    %v961 = vand.u32 %v960, 4294901760
    %962 = vmatmul.f32.gmra.mxu0 %v961
    %v963 = vpop.f32.mrf.mxu0
    %v964 = vadd.f32 %v632, %v963
    %965 = vdwg.mxu0
    %966 = vmatpush.msra.mxu0 0.0
    %967 = vmatpush.msra.mxu0 0.0
    %968 = vmatpush.msra.mxu0 0.0
    %969 = vmatpush.msra.mxu0 0.0
    %970 = vmatpush.msra.mxu0 0.0
    %971 = vmatpush.msra.mxu0 0.0
    %972 = vmatpush.msra.mxu0 0.0
    %973 = vmatpush.msra.mxu0 0.0
    %974 = vmatpush.msra.mxu0 0.0
    %975 = vmatpush.msra.mxu0 0.0
    %976 = vmatpush.msra.mxu0 0.0
    %977 = vmatpush.msra.mxu0 0.0
    %978 = vmatpush.msra.mxu0 0.0
    %979 = vmatpush.msra.mxu0 0.0
    %980 = vmatpush.msra.mxu0 0.0
    %v981 = vand.u32 %v643, 4294901760
    %v982 = vsub.f32 %v643, %v981
    %v983 = vand.u32 %v982, 4294901760
    %v984 = vsub.f32 %v982, %v983
    %v985 = vand.u32 %v984, 4294901760
    %986 = vmatpush.msra.mxu0 %v985
    %v987 = vand.u32 %v634, 4294901760
    %988 = vmatmul.f32.gmra.mxu0 %v987
    %v989 = vpop.f32.mrf.mxu0
    %v990 = vadd.f32 %v964, %v989
    %991 = vdwg.mxu0
    %992 = vmatpush.msra.mxu0 0.0
    %993 = vmatpush.msra.mxu0 0.0
    %994 = vmatpush.msra.mxu0 0.0
    %995 = vmatpush.msra.mxu0 0.0
    %996 = vmatpush.msra.mxu0 0.0
    %997 = vmatpush.msra.mxu0 0.0
    %998 = vmatpush.msra.mxu0 0.0
    %999 = vmatpush.msra.mxu0 0.0
    %1000 = vmatpush.msra.mxu0 0.0
    %1001 = vmatpush.msra.mxu0 0.0
    %1002 = vmatpush.msra.mxu0 0.0
    %1003 = vmatpush.msra.mxu0 0.0
    %1004 = vmatpush.msra.mxu0 0.0
    %1005 = vmatpush.msra.mxu0 0.0
    %1006 = vmatpush.msra.mxu0 0.0
    %v1007 = vand.u32 %v643, 4294901760
    %v1008 = vsub.f32 %v643, %v1007
    %1009 = vmatpush.msra.mxu0 %v1008
    %v1010 = vand.u32 %v634, 4294901760
    %v1011 = vsub.f32 %v634, %v1010
    %1012 = vmatmul.f32.gmra.mxu0 %v1011
    %v1013 = vpop.f32.mrf.mxu0
    %v1014 = vadd.f32 %v990, %v1013
    %1015 = vdwg.mxu0
    %1016 = vmatpush.msra.mxu0 0.0
    %1017 = vmatpush.msra.mxu0 0.0
    %1018 = vmatpush.msra.mxu0 0.0
    %1019 = vmatpush.msra.mxu0 0.0
    %1020 = vmatpush.msra.mxu0 0.0
    %1021 = vmatpush.msra.mxu0 0.0
    %1022 = vmatpush.msra.mxu0 0.0
    %1023 = vmatpush.msra.mxu0 0.0
    %1024 = vmatpush.msra.mxu0 0.0
    %1025 = vmatpush.msra.mxu0 0.0
    %1026 = vmatpush.msra.mxu0 0.0
    %1027 = vmatpush.msra.mxu0 0.0
    %1028 = vmatpush.msra.mxu0 0.0
    %1029 = vmatpush.msra.mxu0 0.0
    %1030 = vmatpush.msra.mxu0 0.0
    %v1031 = vand.u32 %v643, 4294901760
    %1032 = vmatpush.msra.mxu0 %v1031
    %v1033 = vand.u32 %v634, 4294901760
    %v1034 = vsub.f32 %v634, %v1033
    %v1035 = vand.u32 %v1034, 4294901760
    %1036 = vmatmul.f32.gmra.mxu0 %v1035
    %v1037 = vpop.f32.mrf.mxu0
    %v1038 = vadd.f32 %v1014, %v1037
    %1039 = vdwg.mxu0
    %1040 = vmatpush.msra.mxu0 0.0
    %1041 = vmatpush.msra.mxu0 0.0
    %1042 = vmatpush.msra.mxu0 0.0
    %1043 = vmatpush.msra.mxu0 0.0
    %1044 = vmatpush.msra.mxu0 0.0
    %1045 = vmatpush.msra.mxu0 0.0
    %1046 = vmatpush.msra.mxu0 0.0
    %1047 = vmatpush.msra.mxu0 0.0
    %1048 = vmatpush.msra.mxu0 0.0
    %1049 = vmatpush.msra.mxu0 0.0
    %1050 = vmatpush.msra.mxu0 0.0
    %1051 = vmatpush.msra.mxu0 0.0
    %1052 = vmatpush.msra.mxu0 0.0
    %1053 = vmatpush.msra.mxu0 0.0
    %1054 = vmatpush.msra.mxu0 0.0
    %v1055 = vand.u32 %v643, 4294901760
    %v1056 = vsub.f32 %v643, %v1055
    %v1057 = vand.u32 %v1056, 4294901760
    %1058 = vmatpush.msra.mxu0 %v1057
    %v1059 = vand.u32 %v634, 4294901760
    %1060 = vmatmul.f32.gmra.mxu0 %v1059
    %v1061 = vpop.f32.mrf.mxu0
    %v1062 = vadd.f32 %v1038, %v1061
    %1063 = vdwg.mxu0
    %1064 = vmatpush.msra.mxu0 0.0
    %1065 = vmatpush.msra.mxu0 0.0
    %1066 = vmatpush.msra.mxu0 0.0
    %1067 = vmatpush.msra.mxu0 0.0
    %1068 = vmatpush.msra.mxu0 0.0
    %1069 = vmatpush.msra.mxu0 0.0
    %1070 = vmatpush.msra.mxu0 0.0
    %1071 = vmatpush.msra.mxu0 0.0
    %1072 = vmatpush.msra.mxu0 0.0
    %1073 = vmatpush.msra.mxu0 0.0
    %1074 = vmatpush.msra.mxu0 0.0
    %1075 = vmatpush.msra.mxu0 0.0
    %1076 = vmatpush.msra.mxu0 0.0
    %1077 = vmatpush.msra.mxu0 0.0
    %1078 = vmatpush.msra.mxu0 0.0
    %v1079 = vand.u32 %v643, 4294901760
    %1080 = vmatpush.msra.mxu0 %v1079
    %v1081 = vand.u32 %v634, 4294901760
    %1082 = vmatmul.f32.gmra.mxu0 %v1081
    %v1083 = vpop.f32.mrf.mxu0
    %v1084 = vadd.f32 %v1062, %v1083
    %1085 = vdwg.mxu0
    %1086 = vmatpush.msra.mxu0 0.0
    %1087 = vmatpush.msra.mxu0 0.0
    %1088 = vmatpush.msra.mxu0 0.0
    %1089 = vmatpush.msra.mxu0 0.0
    %1090 = vmatpush.msra.mxu0 0.0
    %1091 = vmatpush.msra.mxu0 0.0
    %1092 = vmatpush.msra.mxu0 0.0
    %1093 = vmatpush.msra.mxu0 0.0
    %1094 = vmatpush.msra.mxu0 0.0
    %1095 = vmatpush.msra.mxu0 0.0
    %1096 = vmatpush.msra.mxu0 0.0
    %1097 = vmatpush.msra.mxu0 0.0
    %1098 = vmatpush.msra.mxu0 0.0
    %1099 = vmatpush.msra.mxu0 0.0
    %1100 = vmatpush.msra.mxu0 0.0
    %v1101 = vand.u32 %v646, 4294901760
    %1102 = vmatpush.msra.mxu0 %v1101
    %v1103 = vand.u32 %v634, 4294901760
    %v1104 = vsub.f32 %v634, %v1103
    %v1105 = vand.u32 %v1104, 4294901760
    %v1106 = vsub.f32 %v1104, %v1105
    %v1107 = vand.u32 %v1106, 4294901760
    %1108 = vmatmul.f32.gmra.mxu0 %v1107
    %v1109 = vpop.f32.mrf.mxu0
    %v1110 = vadd.f32 %v632, %v1109
    %1111 = vdwg.mxu0
    %1112 = vmatpush.msra.mxu0 0.0
    %1113 = vmatpush.msra.mxu0 0.0
    %1114 = vmatpush.msra.mxu0 0.0
    %1115 = vmatpush.msra.mxu0 0.0
    %1116 = vmatpush.msra.mxu0 0.0
    %1117 = vmatpush.msra.mxu0 0.0
    %1118 = vmatpush.msra.mxu0 0.0
    %1119 = vmatpush.msra.mxu0 0.0
    %1120 = vmatpush.msra.mxu0 0.0
    %1121 = vmatpush.msra.mxu0 0.0
    %1122 = vmatpush.msra.mxu0 0.0
    %1123 = vmatpush.msra.mxu0 0.0
    %1124 = vmatpush.msra.mxu0 0.0
    %1125 = vmatpush.msra.mxu0 0.0
    %1126 = vmatpush.msra.mxu0 0.0
    %v1127 = vand.u32 %v646, 4294901760
    %v1128 = vsub.f32 %v646, %v1127
    %v1129 = vand.u32 %v1128, 4294901760
    %v1130 = vsub.f32 %v1128, %v1129
    %v1131 = vand.u32 %v1130, 4294901760
    %1132 = vmatpush.msra.mxu0 %v1131
    %v1133 = vand.u32 %v634, 4294901760
    %1134 = vmatmul.f32.gmra.mxu0 %v1133
    %v1135 = vpop.f32.mrf.mxu0
    %v1136 = vadd.f32 %v1110, %v1135
    %1137 = vdwg.mxu0
    %1138 = vmatpush.msra.mxu0 0.0
    %1139 = vmatpush.msra.mxu0 0.0
    %1140 = vmatpush.msra.mxu0 0.0
    %1141 = vmatpush.msra.mxu0 0.0
    %1142 = vmatpush.msra.mxu0 0.0
    %1143 = vmatpush.msra.mxu0 0.0
    %1144 = vmatpush.msra.mxu0 0.0
    %1145 = vmatpush.msra.mxu0 0.0
    %1146 = vmatpush.msra.mxu0 0.0
    %1147 = vmatpush.msra.mxu0 0.0
    %1148 = vmatpush.msra.mxu0 0.0
    %1149 = vmatpush.msra.mxu0 0.0
    %1150 = vmatpush.msra.mxu0 0.0
    %1151 = vmatpush.msra.mxu0 0.0
    %1152 = vmatpush.msra.mxu0 0.0
    %v1153 = vand.u32 %v646, 4294901760
    %v1154 = vsub.f32 %v646, %v1153
    %1155 = vmatpush.msra.mxu0 %v1154
    %v1156 = vand.u32 %v634, 4294901760
    %v1157 = vsub.f32 %v634, %v1156
    %1158 = vmatmul.f32.gmra.mxu0 %v1157
    %v1159 = vpop.f32.mrf.mxu0
    %v1160 = vadd.f32 %v1136, %v1159
    %1161 = vdwg.mxu0
    %1162 = vmatpush.msra.mxu0 0.0
    %1163 = vmatpush.msra.mxu0 0.0
    %1164 = vmatpush.msra.mxu0 0.0
    %1165 = vmatpush.msra.mxu0 0.0
    %1166 = vmatpush.msra.mxu0 0.0
    %1167 = vmatpush.msra.mxu0 0.0
    %1168 = vmatpush.msra.mxu0 0.0
    %1169 = vmatpush.msra.mxu0 0.0
    %1170 = vmatpush.msra.mxu0 0.0
    %1171 = vmatpush.msra.mxu0 0.0
    %1172 = vmatpush.msra.mxu0 0.0
    %1173 = vmatpush.msra.mxu0 0.0
    %1174 = vmatpush.msra.mxu0 0.0
    %1175 = vmatpush.msra.mxu0 0.0
    %1176 = vmatpush.msra.mxu0 0.0
    %v1177 = vand.u32 %v646, 4294901760
    %1178 = vmatpush.msra.mxu0 %v1177
    %v1179 = vand.u32 %v634, 4294901760
    %v1180 = vsub.f32 %v634, %v1179
    %v1181 = vand.u32 %v1180, 4294901760
    %1182 = vmatmul.f32.gmra.mxu0 %v1181
    %v1183 = vpop.f32.mrf.mxu0
    %v1184 = vadd.f32 %v1160, %v1183
    %1185 = vdwg.mxu0
    %1186 = vmatpush.msra.mxu0 0.0
    %1187 = vmatpush.msra.mxu0 0.0
    %1188 = vmatpush.msra.mxu0 0.0
    %1189 = vmatpush.msra.mxu0 0.0
    %1190 = vmatpush.msra.mxu0 0.0
    %1191 = vmatpush.msra.mxu0 0.0
    %1192 = vmatpush.msra.mxu0 0.0
    %1193 = vmatpush.msra.mxu0 0.0
    %1194 = vmatpush.msra.mxu0 0.0
    %1195 = vmatpush.msra.mxu0 0.0
    %1196 = vmatpush.msra.mxu0 0.0
    %1197 = vmatpush.msra.mxu0 0.0
    %1198 = vmatpush.msra.mxu0 0.0
    %1199 = vmatpush.msra.mxu0 0.0
    %1200 = vmatpush.msra.mxu0 0.0
    %v1201 = vand.u32 %v646, 4294901760
    %v1202 = vsub.f32 %v646, %v1201
    %v1203 = vand.u32 %v1202, 4294901760
    %1204 = vmatpush.msra.mxu0 %v1203
    %v1205 = vand.u32 %v634, 4294901760
    %1206 = vmatmul.f32.gmra.mxu0 %v1205
    %v1207 = vpop.f32.mrf.mxu0
    %v1208 = vadd.f32 %v1184, %v1207
    %1209 = vdwg.mxu0
    %1210 = vmatpush.msra.mxu0 0.0
    %1211 = vmatpush.msra.mxu0 0.0
    %1212 = vmatpush.msra.mxu0 0.0
    %1213 = vmatpush.msra.mxu0 0.0
    %1214 = vmatpush.msra.mxu0 0.0
    %1215 = vmatpush.msra.mxu0 0.0
    %1216 = vmatpush.msra.mxu0 0.0
    %1217 = vmatpush.msra.mxu0 0.0
    %1218 = vmatpush.msra.mxu0 0.0
    %1219 = vmatpush.msra.mxu0 0.0
    %1220 = vmatpush.msra.mxu0 0.0
    %1221 = vmatpush.msra.mxu0 0.0
    %1222 = vmatpush.msra.mxu0 0.0
    %1223 = vmatpush.msra.mxu0 0.0
    %1224 = vmatpush.msra.mxu0 0.0
    %v1225 = vand.u32 %v646, 4294901760
    %1226 = vmatpush.msra.mxu0 %v1225
    %v1227 = vand.u32 %v634, 4294901760
    %1228 = vmatmul.f32.gmra.mxu0 %v1227
    %v1229 = vpop.f32.mrf.mxu0
    %v1230 = vadd.f32 %v1208, %v1229
    %1231 = vdwg.mxu0
    %v1232 = vmax.f32 %v792, 0.0
    %v1233 = vmax.f32 %v938, 0.0
    %v1234 = vmax.f32 %v1084, 0.0
    %v1235 = vmax.f32 %v1230, 0.0
    %v1236 = vadd.f32 %v1232, %v191
    %v1237 = vadd.f32 %v1233, %v337
    %v1238 = vadd.f32 %v1234, %v483
    %v1239 = vadd.f32 %v1235, %v629
    %v1240 = vld [vmem:[%s2] sm:$0xff]
    %v1241 = vld [vmem:[%s2 + $0x8] sm:$0xff]
    %v1242 = vld [vmem:[%s2 + $0x10] sm:$0xff]
    %v1243 = vld [vmem:[%s2 + $0x18] sm:$0xff]
    %v1244 = vld [vmem:[%s2 + $0x20] sm:$0xff]
    %v1245 = vld [vmem:[%s2 + $0x28] sm:$0xff]
    %v1246 = vld [vmem:[%s2 + $0x30] sm:$0xff]
    %v1247 = vld [vmem:[%s2 + $0x38] sm:$0xff]
    %v1248 = vld [vmem:[%s2 + $0x40] sm:$0xff]
    %v1249 = vld [vmem:[%s2 + $0x48] sm:$0xff]
    %v1250 = vld [vmem:[%s2 + $0x50] sm:$0xff]
    %v1251 = vld [vmem:[%s2 + $0x58] sm:$0xff]
    %v1252 = vld [vmem:[%s2 + $0x60] sm:$0xff]
    %v1253 = vld [vmem:[%s2 + $0x68] sm:$0xff]
    %v1254 = vld [vmem:[%s2 + $0x70] sm:$0xff]
    %v1255 = vld [vmem:[%s2 + $0x78] sm:$0xff]
    %v1256 = vld [vmem:[%s2 + $0x80] sm:$0xff]
    %v1257 = vld [vmem:[%s2 + $0x88] sm:$0xff]
    %v1258 = vld [vmem:[%s2 + $0x90] sm:$0xff]
    %v1259 = vld [vmem:[%s2 + $0x98] sm:$0xff]
    %v1260 = vld [vmem:[%s2 + $0xa0] sm:$0xff]
    %v1261 = vld [vmem:[%s2 + $0xa8] sm:$0xff]
    %v1262 = vld [vmem:[%s2 + $0xb0] sm:$0xff]
    %v1263 = vld [vmem:[%s2 + $0xb8] sm:$0xff]
    %v1264 = vld [vmem:[%s2 + $0xc0] sm:$0xff]
    %v1265 = vld [vmem:[%s2 + $0xc8] sm:$0xff]
    %v1266 = vld [vmem:[%s2 + $0xd0] sm:$0xff]
    %v1267 = vld [vmem:[%s2 + $0xd8] sm:$0xff]
    %v1268 = vld [vmem:[%s2 + $0xe0] sm:$0xff]
    %v1269 = vld [vmem:[%s2 + $0xe8] sm:$0xff]
    %v1270 = vld [vmem:[%s2 + $0xf0] sm:$0xff]
    %v1271 = vld [vmem:[%s2 + $0xf8] sm:$0xff]
    %v1272 = vld [vmem:[%s2 + $0x100] sm:$0xff]
    %v1273 = vld [vmem:[%s2 + $0x108] sm:$0xff]
    %v1274 = vld [vmem:[%s2 + $0x110] sm:$0xff]
    %v1275 = vld [vmem:[%s2 + $0x118] sm:$0xff]
    %v1276 = vld [vmem:[%s2 + $0x120] sm:$0xff]
    %v1277 = vld [vmem:[%s2 + $0x128] sm:$0xff]
    %v1278 = vld [vmem:[%s2 + $0x130] sm:$0xff]
    %v1279 = vld [vmem:[%s2 + $0x138] sm:$0xff]
    %v1280 = vld [vmem:[%s2 + $0x140] sm:$0xff]
    %v1281 = vld [vmem:[%s2 + $0x148] sm:$0xff]
    %v1282 = vld [vmem:[%s2 + $0x150] sm:$0xff]
    %v1283 = vld [vmem:[%s2 + $0x158] sm:$0xff]
    %v1284 = vld [vmem:[%s2 + $0x160] sm:$0xff]
    %v1285 = vld [vmem:[%s2 + $0x168] sm:$0xff]
    %v1286 = vld [vmem:[%s2 + $0x170] sm:$0xff]
    %v1287 = vld [vmem:[%s2 + $0x178] sm:$0xff]
    %v1288 = vld [vmem:[%s2 + $0x180] sm:$0xff]
    %v1289 = vld [vmem:[%s2 + $0x188] sm:$0xff]
    %v1290 = vld [vmem:[%s2 + $0x190] sm:$0xff]
    %v1291 = vld [vmem:[%s2 + $0x198] sm:$0xff]
    %v1292 = vld [vmem:[%s2 + $0x1a0] sm:$0xff]
    %v1293 = vld [vmem:[%s2 + $0x1a8] sm:$0xff]
    %v1294 = vld [vmem:[%s2 + $0x1b0] sm:$0xff]
    %v1295 = vld [vmem:[%s2 + $0x1b8] sm:$0xff]
    %v1296 = vld [vmem:[%s2 + $0x1c0] sm:$0xff]
    %v1297 = vld [vmem:[%s2 + $0x1c8] sm:$0xff]
    %v1298 = vld [vmem:[%s2 + $0x1d0] sm:$0xff]
    %v1299 = vld [vmem:[%s2 + $0x1d8] sm:$0xff]
    %v1300 = vld [vmem:[%s2 + $0x1e0] sm:$0xff]
    %v1301 = vld [vmem:[%s2 + $0x1e8] sm:$0xff]
    %v1302 = vld [vmem:[%s2 + $0x1f0] sm:$0xff]
    %v1303 = vld [vmem:[%s2 + $0x1f8] sm:$0xff]
    %v1304 = vld [vmem:[%s2 + $0x200] sm:$0xff]
    %v1305 = vld [vmem:[%s2 + $0x208] sm:$0xff]
    %v1306 = vld [vmem:[%s2 + $0x210] sm:$0xff]
    %v1307 = vld [vmem:[%s2 + $0x218] sm:$0xff]
    %v1308 = vld [vmem:[%s2 + $0x220] sm:$0xff]
    %v1309 = vld [vmem:[%s2 + $0x228] sm:$0xff]
    %v1310 = vld [vmem:[%s2 + $0x230] sm:$0xff]
    %v1311 = vld [vmem:[%s2 + $0x238] sm:$0xff]
    %v1312 = vld [vmem:[%s2 + $0x240] sm:$0xff]
    %v1313 = vld [vmem:[%s2 + $0x248] sm:$0xff]
    %v1314 = vld [vmem:[%s2 + $0x250] sm:$0xff]
    %v1315 = vld [vmem:[%s2 + $0x258] sm:$0xff]
    %v1316 = vld [vmem:[%s2 + $0x260] sm:$0xff]
    %v1317 = vld [vmem:[%s2 + $0x268] sm:$0xff]
    %v1318 = vld [vmem:[%s2 + $0x270] sm:$0xff]
    %v1319 = vld [vmem:[%s2 + $0x278] sm:$0xff]
    %v1320 = vld [vmem:[%s2 + $0x280] sm:$0xff]
    %v1321 = vld [vmem:[%s2 + $0x288] sm:$0xff]
    %v1322 = vld [vmem:[%s2 + $0x290] sm:$0xff]
    %v1323 = vld [vmem:[%s2 + $0x298] sm:$0xff]
    %v1324 = vld [vmem:[%s2 + $0x2a0] sm:$0xff]
    %v1325 = vld [vmem:[%s2 + $0x2a8] sm:$0xff]
    %v1326 = vld [vmem:[%s2 + $0x2b0] sm:$0xff]
    %v1327 = vld [vmem:[%s2 + $0x2b8] sm:$0xff]
    %v1328 = vld [vmem:[%s2 + $0x2c0] sm:$0xff]
    %v1329 = vld [vmem:[%s2 + $0x2c8] sm:$0xff]
    %v1330 = vld [vmem:[%s2 + $0x2d0] sm:$0xff]
    %v1331 = vld [vmem:[%s2 + $0x2d8] sm:$0xff]
    %v1332 = vld [vmem:[%s2 + $0x2e0] sm:$0xff]
    %v1333 = vld [vmem:[%s2 + $0x2e8] sm:$0xff]
    %v1334 = vld [vmem:[%s2 + $0x2f0] sm:$0xff]
    %v1335 = vld [vmem:[%s2 + $0x2f8] sm:$0xff]
    %v1336 = vld [vmem:[%s2 + $0x300] sm:$0xff]
    %v1337 = vld [vmem:[%s2 + $0x308] sm:$0xff]
    %v1338 = vld [vmem:[%s2 + $0x310] sm:$0xff]
    %v1339 = vld [vmem:[%s2 + $0x318] sm:$0xff]
    %v1340 = vld [vmem:[%s2 + $0x320] sm:$0xff]
    %v1341 = vld [vmem:[%s2 + $0x328] sm:$0xff]
    %v1342 = vld [vmem:[%s2 + $0x330] sm:$0xff]
    %v1343 = vld [vmem:[%s2 + $0x338] sm:$0xff]
    %v1344 = vld [vmem:[%s2 + $0x340] sm:$0xff]
    %v1345 = vld [vmem:[%s2 + $0x348] sm:$0xff]
    %v1346 = vld [vmem:[%s2 + $0x350] sm:$0xff]
    %v1347 = vld [vmem:[%s2 + $0x358] sm:$0xff]
    %v1348 = vld [vmem:[%s2 + $0x360] sm:$0xff]
    %v1349 = vld [vmem:[%s2 + $0x368] sm:$0xff]
    %v1350 = vld [vmem:[%s2 + $0x370] sm:$0xff]
    %v1351 = vld [vmem:[%s2 + $0x378] sm:$0xff]
    %v1352 = vld [vmem:[%s2 + $0x380] sm:$0xff]
    %v1353 = vld [vmem:[%s2 + $0x388] sm:$0xff]
    %v1354 = vld [vmem:[%s2 + $0x390] sm:$0xff]
    %v1355 = vld [vmem:[%s2 + $0x398] sm:$0xff]
    %v1356 = vld [vmem:[%s2 + $0x3a0] sm:$0xff]
    %v1357 = vld [vmem:[%s2 + $0x3a8] sm:$0xff]
    %v1358 = vld [vmem:[%s2 + $0x3b0] sm:$0xff]
    %v1359 = vld [vmem:[%s2 + $0x3b8] sm:$0xff]
    %v1360 = vld [vmem:[%s2 + $0x3c0] sm:$0xff]
    %v1361 = vld [vmem:[%s2 + $0x3c8] sm:$0xff]
    %v1362 = vld [vmem:[%s2 + $0x3d0] sm:$0xff]
    %v1363 = vld [vmem:[%s2 + $0x3d8] sm:$0xff]
    %v1364 = vld [vmem:[%s2 + $0x3e0] sm:$0xff]
    %v1365 = vld [vmem:[%s2 + $0x3e8] sm:$0xff]
    %v1366 = vld [vmem:[%s2 + $0x3f0] sm:$0xff]
    %v1367 = vld [vmem:[%s2 + $0x3f8] sm:$0xff]
    %v1368 = vld [vmem:[%s3] sm:$0x1]
    %v1371 = vrot.slane %v1237, 7
    %vm1372 = vcmask 1040384
    %v1373 = vsel %vm1372, %v1236, %v1371
    %vm1374 = vcmask 1041409
    %v1375 = vsel %vm1374, %v1236, %v1371
    %v1376 = vrot.slane %v1375, 1
    %vm1377 = vcmask 1042434
    %v1378 = vsel %vm1377, %v1236, %v1371
    %v1379 = vrot.slane %v1378, 2
    %vm1380 = vcmask 1043459
    %v1381 = vsel %vm1380, %v1236, %v1371
    %v1382 = vrot.slane %v1381, 3
    %v1383 = vperm.slane %v1373, 0
    %v1384 = vperm.slane %v1373, 1
    %v1387 = vand.u32 %v1255, 4294901760
    %1388 = vmatpush.msra.mxu0 %v1387
    %v1389 = vand.u32 %v1254, 4294901760
    %1390 = vmatpush.msra.mxu0 %v1389
    %v1391 = vand.u32 %v1253, 4294901760
    %1392 = vmatpush.msra.mxu0 %v1391
    %v1393 = vand.u32 %v1252, 4294901760
    %1394 = vmatpush.msra.mxu0 %v1393
    %v1395 = vand.u32 %v1251, 4294901760
    %1396 = vmatpush.msra.mxu0 %v1395
    %v1397 = vand.u32 %v1250, 4294901760
    %1398 = vmatpush.msra.mxu0 %v1397
    %v1399 = vand.u32 %v1249, 4294901760
    %1400 = vmatpush.msra.mxu0 %v1399
    %v1401 = vand.u32 %v1248, 4294901760
    %1402 = vmatpush.msra.mxu0 %v1401
    %v1403 = vand.u32 %v1247, 4294901760
    %1404 = vmatpush.msra.mxu0 %v1403
    %v1405 = vand.u32 %v1246, 4294901760
    %1406 = vmatpush.msra.mxu0 %v1405
    %v1407 = vand.u32 %v1245, 4294901760
    %1408 = vmatpush.msra.mxu0 %v1407
    %v1409 = vand.u32 %v1244, 4294901760
    %1410 = vmatpush.msra.mxu0 %v1409
    %v1411 = vand.u32 %v1243, 4294901760
    %1412 = vmatpush.msra.mxu0 %v1411
    %v1413 = vand.u32 %v1242, 4294901760
    %1414 = vmatpush.msra.mxu0 %v1413
    %v1415 = vand.u32 %v1241, 4294901760
    %1416 = vmatpush.msra.mxu0 %v1415
    %v1417 = vand.u32 %v1240, 4294901760
    %1418 = vmatpush.msra.mxu0 %v1417
    %v1419 = vand.u32 %v1383, 4294901760
    %v1420 = vsub.f32 %v1383, %v1419
    %v1421 = vand.u32 %v1420, 4294901760
    %v1422 = vsub.f32 %v1420, %v1421
    %v1423 = vand.u32 %v1422, 4294901760
    %1424 = vmatmul.f32.gmra.mxu0 %v1423
    %v1425 = vpop.f32.mrf.mxu0
    %v1426 = vadd.f32 0.0, %v1425
    %1427 = vdwg.mxu0
    %v1428 = vand.u32 %v1255, 4294901760
    %v1429 = vsub.f32 %v1255, %v1428
    %v1430 = vand.u32 %v1429, 4294901760
    %v1431 = vsub.f32 %v1429, %v1430
    %v1432 = vand.u32 %v1431, 4294901760
    %1433 = vmatpush.msra.mxu0 %v1432
    %v1434 = vand.u32 %v1254, 4294901760
    %v1435 = vsub.f32 %v1254, %v1434
    %v1436 = vand.u32 %v1435, 4294901760
    %v1437 = vsub.f32 %v1435, %v1436
    %v1438 = vand.u32 %v1437, 4294901760
    %1439 = vmatpush.msra.mxu0 %v1438
    %v1440 = vand.u32 %v1253, 4294901760
    %v1441 = vsub.f32 %v1253, %v1440
    %v1442 = vand.u32 %v1441, 4294901760
    %v1443 = vsub.f32 %v1441, %v1442
    %v1444 = vand.u32 %v1443, 4294901760
    %1445 = vmatpush.msra.mxu0 %v1444
    %v1446 = vand.u32 %v1252, 4294901760
    %v1447 = vsub.f32 %v1252, %v1446
    %v1448 = vand.u32 %v1447, 4294901760
    %v1449 = vsub.f32 %v1447, %v1448
    %v1450 = vand.u32 %v1449, 4294901760
    %1451 = vmatpush.msra.mxu0 %v1450
    %v1452 = vand.u32 %v1251, 4294901760
    %v1453 = vsub.f32 %v1251, %v1452
    %v1454 = vand.u32 %v1453, 4294901760
    %v1455 = vsub.f32 %v1453, %v1454
    %v1456 = vand.u32 %v1455, 4294901760
    %1457 = vmatpush.msra.mxu0 %v1456
    %v1458 = vand.u32 %v1250, 4294901760
    %v1459 = vsub.f32 %v1250, %v1458
    %v1460 = vand.u32 %v1459, 4294901760
    %v1461 = vsub.f32 %v1459, %v1460
    %v1462 = vand.u32 %v1461, 4294901760
    %1463 = vmatpush.msra.mxu0 %v1462
    %v1464 = vand.u32 %v1249, 4294901760
    %v1465 = vsub.f32 %v1249, %v1464
    %v1466 = vand.u32 %v1465, 4294901760
    %v1467 = vsub.f32 %v1465, %v1466
    %v1468 = vand.u32 %v1467, 4294901760
    %1469 = vmatpush.msra.mxu0 %v1468
    %v1470 = vand.u32 %v1248, 4294901760
    %v1471 = vsub.f32 %v1248, %v1470
    %v1472 = vand.u32 %v1471, 4294901760
    %v1473 = vsub.f32 %v1471, %v1472
    %v1474 = vand.u32 %v1473, 4294901760
    %1475 = vmatpush.msra.mxu0 %v1474
    %v1476 = vand.u32 %v1247, 4294901760
    %v1477 = vsub.f32 %v1247, %v1476
    %v1478 = vand.u32 %v1477, 4294901760
    %v1479 = vsub.f32 %v1477, %v1478
    %v1480 = vand.u32 %v1479, 4294901760
    %1481 = vmatpush.msra.mxu0 %v1480
    %v1482 = vand.u32 %v1246, 4294901760
    %v1483 = vsub.f32 %v1246, %v1482
    %v1484 = vand.u32 %v1483, 4294901760
    %v1485 = vsub.f32 %v1483, %v1484
    %v1486 = vand.u32 %v1485, 4294901760
    %1487 = vmatpush.msra.mxu0 %v1486
    %v1488 = vand.u32 %v1245, 4294901760
    %v1489 = vsub.f32 %v1245, %v1488
    %v1490 = vand.u32 %v1489, 4294901760
    %v1491 = vsub.f32 %v1489, %v1490
    %v1492 = vand.u32 %v1491, 4294901760
    %1493 = vmatpush.msra.mxu0 %v1492
    %v1494 = vand.u32 %v1244, 4294901760
    %v1495 = vsub.f32 %v1244, %v1494
    %v1496 = vand.u32 %v1495, 4294901760
    %v1497 = vsub.f32 %v1495, %v1496
    %v1498 = vand.u32 %v1497, 4294901760
    %1499 = vmatpush.msra.mxu0 %v1498
    %v1500 = vand.u32 %v1243, 4294901760
    %v1501 = vsub.f32 %v1243, %v1500
    %v1502 = vand.u32 %v1501, 4294901760
    %v1503 = vsub.f32 %v1501, %v1502
    %v1504 = vand.u32 %v1503, 4294901760
    %1505 = vmatpush.msra.mxu0 %v1504
    %v1506 = vand.u32 %v1242, 4294901760
    %v1507 = vsub.f32 %v1242, %v1506
    %v1508 = vand.u32 %v1507, 4294901760
    %v1509 = vsub.f32 %v1507, %v1508
    %v1510 = vand.u32 %v1509, 4294901760
    %1511 = vmatpush.msra.mxu0 %v1510
    %v1512 = vand.u32 %v1241, 4294901760
    %v1513 = vsub.f32 %v1241, %v1512
    %v1514 = vand.u32 %v1513, 4294901760
    %v1515 = vsub.f32 %v1513, %v1514
    %v1516 = vand.u32 %v1515, 4294901760
    %1517 = vmatpush.msra.mxu0 %v1516
    %v1518 = vand.u32 %v1240, 4294901760
    %v1519 = vsub.f32 %v1240, %v1518
    %v1520 = vand.u32 %v1519, 4294901760
    %v1521 = vsub.f32 %v1519, %v1520
    %v1522 = vand.u32 %v1521, 4294901760
    %1523 = vmatpush.msra.mxu0 %v1522
    %v1524 = vand.u32 %v1383, 4294901760
    %1525 = vmatmul.f32.gmra.mxu0 %v1524
    %v1526 = vpop.f32.mrf.mxu0
    %v1527 = vadd.f32 %v1426, %v1526
    %1528 = vdwg.mxu0
    %v1529 = vand.u32 %v1255, 4294901760
    %v1530 = vsub.f32 %v1255, %v1529
    %1531 = vmatpush.msra.mxu0 %v1530
    %v1532 = vand.u32 %v1254, 4294901760
    %v1533 = vsub.f32 %v1254, %v1532
    %1534 = vmatpush.msra.mxu0 %v1533
    %v1535 = vand.u32 %v1253, 4294901760
    %v1536 = vsub.f32 %v1253, %v1535
    %1537 = vmatpush.msra.mxu0 %v1536
    %v1538 = vand.u32 %v1252, 4294901760
    %v1539 = vsub.f32 %v1252, %v1538
    %1540 = vmatpush.msra.mxu0 %v1539
    %v1541 = vand.u32 %v1251, 4294901760
    %v1542 = vsub.f32 %v1251, %v1541
    %1543 = vmatpush.msra.mxu0 %v1542
    %v1544 = vand.u32 %v1250, 4294901760
    %v1545 = vsub.f32 %v1250, %v1544
    %1546 = vmatpush.msra.mxu0 %v1545
    %v1547 = vand.u32 %v1249, 4294901760
    %v1548 = vsub.f32 %v1249, %v1547
    %1549 = vmatpush.msra.mxu0 %v1548
    %v1550 = vand.u32 %v1248, 4294901760
    %v1551 = vsub.f32 %v1248, %v1550
    %1552 = vmatpush.msra.mxu0 %v1551
    %v1553 = vand.u32 %v1247, 4294901760
    %v1554 = vsub.f32 %v1247, %v1553
    %1555 = vmatpush.msra.mxu0 %v1554
    %v1556 = vand.u32 %v1246, 4294901760
    %v1557 = vsub.f32 %v1246, %v1556
    %1558 = vmatpush.msra.mxu0 %v1557
    %v1559 = vand.u32 %v1245, 4294901760
    %v1560 = vsub.f32 %v1245, %v1559
    %1561 = vmatpush.msra.mxu0 %v1560
    %v1562 = vand.u32 %v1244, 4294901760
    %v1563 = vsub.f32 %v1244, %v1562
    %1564 = vmatpush.msra.mxu0 %v1563
    %v1565 = vand.u32 %v1243, 4294901760
    %v1566 = vsub.f32 %v1243, %v1565
    %1567 = vmatpush.msra.mxu0 %v1566
    %v1568 = vand.u32 %v1242, 4294901760
    %v1569 = vsub.f32 %v1242, %v1568
    %1570 = vmatpush.msra.mxu0 %v1569
    %v1571 = vand.u32 %v1241, 4294901760
    %v1572 = vsub.f32 %v1241, %v1571
    %1573 = vmatpush.msra.mxu0 %v1572
    %v1574 = vand.u32 %v1240, 4294901760
    %v1575 = vsub.f32 %v1240, %v1574
    %1576 = vmatpush.msra.mxu0 %v1575
    %v1577 = vand.u32 %v1383, 4294901760
    %v1578 = vsub.f32 %v1383, %v1577
    %1579 = vmatmul.f32.gmra.mxu0 %v1578
    %v1580 = vpop.f32.mrf.mxu0
    %v1581 = vadd.f32 %v1527, %v1580
    %1582 = vdwg.mxu0
    %v1583 = vand.u32 %v1255, 4294901760
    %1584 = vmatpush.msra.mxu0 %v1583
    %v1585 = vand.u32 %v1254, 4294901760
    %1586 = vmatpush.msra.mxu0 %v1585
    %v1587 = vand.u32 %v1253, 4294901760
    %1588 = vmatpush.msra.mxu0 %v1587
    %v1589 = vand.u32 %v1252, 4294901760
    %1590 = vmatpush.msra.mxu0 %v1589
    %v1591 = vand.u32 %v1251, 4294901760
    %1592 = vmatpush.msra.mxu0 %v1591
    %v1593 = vand.u32 %v1250, 4294901760
    %1594 = vmatpush.msra.mxu0 %v1593
    %v1595 = vand.u32 %v1249, 4294901760
    %1596 = vmatpush.msra.mxu0 %v1595
    %v1597 = vand.u32 %v1248, 4294901760
    %1598 = vmatpush.msra.mxu0 %v1597
    %v1599 = vand.u32 %v1247, 4294901760
    %1600 = vmatpush.msra.mxu0 %v1599
    %v1601 = vand.u32 %v1246, 4294901760
    %1602 = vmatpush.msra.mxu0 %v1601
    %v1603 = vand.u32 %v1245, 4294901760
    %1604 = vmatpush.msra.mxu0 %v1603
    %v1605 = vand.u32 %v1244, 4294901760
    %1606 = vmatpush.msra.mxu0 %v1605
    %v1607 = vand.u32 %v1243, 4294901760
    %1608 = vmatpush.msra.mxu0 %v1607
    %v1609 = vand.u32 %v1242, 4294901760
    %1610 = vmatpush.msra.mxu0 %v1609
    %v1611 = vand.u32 %v1241, 4294901760
    %1612 = vmatpush.msra.mxu0 %v1611
    %v1613 = vand.u32 %v1240, 4294901760
    %1614 = vmatpush.msra.mxu0 %v1613
    %v1615 = vand.u32 %v1383, 4294901760
    %v1616 = vsub.f32 %v1383, %v1615
    %v1617 = vand.u32 %v1616, 4294901760
    %1618 = vmatmul.f32.gmra.mxu0 %v1617
    %v1619 = vpop.f32.mrf.mxu0
    %v1620 = vadd.f32 %v1581, %v1619
    %1621 = vdwg.mxu0
    %v1622 = vand.u32 %v1255, 4294901760
    %v1623 = vsub.f32 %v1255, %v1622
    %v1624 = vand.u32 %v1623, 4294901760
    %1625 = vmatpush.msra.mxu0 %v1624
    %v1626 = vand.u32 %v1254, 4294901760
    %v1627 = vsub.f32 %v1254, %v1626
    %v1628 = vand.u32 %v1627, 4294901760
    %1629 = vmatpush.msra.mxu0 %v1628
    %v1630 = vand.u32 %v1253, 4294901760
    %v1631 = vsub.f32 %v1253, %v1630
    %v1632 = vand.u32 %v1631, 4294901760
    %1633 = vmatpush.msra.mxu0 %v1632
    %v1634 = vand.u32 %v1252, 4294901760
    %v1635 = vsub.f32 %v1252, %v1634
    %v1636 = vand.u32 %v1635, 4294901760
    %1637 = vmatpush.msra.mxu0 %v1636
    %v1638 = vand.u32 %v1251, 4294901760
    %v1639 = vsub.f32 %v1251, %v1638
    %v1640 = vand.u32 %v1639, 4294901760
    %1641 = vmatpush.msra.mxu0 %v1640
    %v1642 = vand.u32 %v1250, 4294901760
    %v1643 = vsub.f32 %v1250, %v1642
    %v1644 = vand.u32 %v1643, 4294901760
    %1645 = vmatpush.msra.mxu0 %v1644
    %v1646 = vand.u32 %v1249, 4294901760
    %v1647 = vsub.f32 %v1249, %v1646
    %v1648 = vand.u32 %v1647, 4294901760
    %1649 = vmatpush.msra.mxu0 %v1648
    %v1650 = vand.u32 %v1248, 4294901760
    %v1651 = vsub.f32 %v1248, %v1650
    %v1652 = vand.u32 %v1651, 4294901760
    %1653 = vmatpush.msra.mxu0 %v1652
    %v1654 = vand.u32 %v1247, 4294901760
    %v1655 = vsub.f32 %v1247, %v1654
    %v1656 = vand.u32 %v1655, 4294901760
    %1657 = vmatpush.msra.mxu0 %v1656
    %v1658 = vand.u32 %v1246, 4294901760
    %v1659 = vsub.f32 %v1246, %v1658
    %v1660 = vand.u32 %v1659, 4294901760
    %1661 = vmatpush.msra.mxu0 %v1660
    %v1662 = vand.u32 %v1245, 4294901760
    %v1663 = vsub.f32 %v1245, %v1662
    %v1664 = vand.u32 %v1663, 4294901760
    %1665 = vmatpush.msra.mxu0 %v1664
    %v1666 = vand.u32 %v1244, 4294901760
    %v1667 = vsub.f32 %v1244, %v1666
    %v1668 = vand.u32 %v1667, 4294901760
    %1669 = vmatpush.msra.mxu0 %v1668
    %v1670 = vand.u32 %v1243, 4294901760
    %v1671 = vsub.f32 %v1243, %v1670
    %v1672 = vand.u32 %v1671, 4294901760
    %1673 = vmatpush.msra.mxu0 %v1672
    %v1674 = vand.u32 %v1242, 4294901760
    %v1675 = vsub.f32 %v1242, %v1674
    %v1676 = vand.u32 %v1675, 4294901760
    %1677 = vmatpush.msra.mxu0 %v1676
    %v1678 = vand.u32 %v1241, 4294901760
    %v1679 = vsub.f32 %v1241, %v1678
    %v1680 = vand.u32 %v1679, 4294901760
    %1681 = vmatpush.msra.mxu0 %v1680
    %v1682 = vand.u32 %v1240, 4294901760
    %v1683 = vsub.f32 %v1240, %v1682
    %v1684 = vand.u32 %v1683, 4294901760
    %1685 = vmatpush.msra.mxu0 %v1684
    %v1686 = vand.u32 %v1383, 4294901760
    %1687 = vmatmul.f32.gmra.mxu0 %v1686
    %v1688 = vpop.f32.mrf.mxu0
    %v1689 = vadd.f32 %v1620, %v1688
    %1690 = vdwg.mxu0
    %v1691 = vand.u32 %v1255, 4294901760
    %1692 = vmatpush.msra.mxu0 %v1691
    %v1693 = vand.u32 %v1254, 4294901760
    %1694 = vmatpush.msra.mxu0 %v1693
    %v1695 = vand.u32 %v1253, 4294901760
    %1696 = vmatpush.msra.mxu0 %v1695
    %v1697 = vand.u32 %v1252, 4294901760
    %1698 = vmatpush.msra.mxu0 %v1697
    %v1699 = vand.u32 %v1251, 4294901760
    %1700 = vmatpush.msra.mxu0 %v1699
    %v1701 = vand.u32 %v1250, 4294901760
    %1702 = vmatpush.msra.mxu0 %v1701
    %v1703 = vand.u32 %v1249, 4294901760
    %1704 = vmatpush.msra.mxu0 %v1703
    %v1705 = vand.u32 %v1248, 4294901760
    %1706 = vmatpush.msra.mxu0 %v1705
    %v1707 = vand.u32 %v1247, 4294901760
    %1708 = vmatpush.msra.mxu0 %v1707
    %v1709 = vand.u32 %v1246, 4294901760
    %1710 = vmatpush.msra.mxu0 %v1709
    %v1711 = vand.u32 %v1245, 4294901760
    %1712 = vmatpush.msra.mxu0 %v1711
    %v1713 = vand.u32 %v1244, 4294901760
    %1714 = vmatpush.msra.mxu0 %v1713
    %v1715 = vand.u32 %v1243, 4294901760
    %1716 = vmatpush.msra.mxu0 %v1715
    %v1717 = vand.u32 %v1242, 4294901760
    %1718 = vmatpush.msra.mxu0 %v1717
    %v1719 = vand.u32 %v1241, 4294901760
    %1720 = vmatpush.msra.mxu0 %v1719
    %v1721 = vand.u32 %v1240, 4294901760
    %1722 = vmatpush.msra.mxu0 %v1721
    %v1723 = vand.u32 %v1383, 4294901760
    %1724 = vmatmul.f32.gmra.mxu0 %v1723
    %v1725 = vpop.f32.mrf.mxu0
    %v1726 = vadd.f32 %v1689, %v1725
    %1727 = vdwg.mxu0
    %v1728 = vand.u32 %v1271, 4294901760
    %1729 = vmatpush.msra.mxu0 %v1728
    %v1730 = vand.u32 %v1270, 4294901760
    %1731 = vmatpush.msra.mxu0 %v1730
    %v1732 = vand.u32 %v1269, 4294901760
    %1733 = vmatpush.msra.mxu0 %v1732
    %v1734 = vand.u32 %v1268, 4294901760
    %1735 = vmatpush.msra.mxu0 %v1734
    %v1736 = vand.u32 %v1267, 4294901760
    %1737 = vmatpush.msra.mxu0 %v1736
    %v1738 = vand.u32 %v1266, 4294901760
    %1739 = vmatpush.msra.mxu0 %v1738
    %v1740 = vand.u32 %v1265, 4294901760
    %1741 = vmatpush.msra.mxu0 %v1740
    %v1742 = vand.u32 %v1264, 4294901760
    %1743 = vmatpush.msra.mxu0 %v1742
    %v1744 = vand.u32 %v1263, 4294901760
    %1745 = vmatpush.msra.mxu0 %v1744
    %v1746 = vand.u32 %v1262, 4294901760
    %1747 = vmatpush.msra.mxu0 %v1746
    %v1748 = vand.u32 %v1261, 4294901760
    %1749 = vmatpush.msra.mxu0 %v1748
    %v1750 = vand.u32 %v1260, 4294901760
    %1751 = vmatpush.msra.mxu0 %v1750
    %v1752 = vand.u32 %v1259, 4294901760
    %1753 = vmatpush.msra.mxu0 %v1752
    %v1754 = vand.u32 %v1258, 4294901760
    %1755 = vmatpush.msra.mxu0 %v1754
    %v1756 = vand.u32 %v1257, 4294901760
    %1757 = vmatpush.msra.mxu0 %v1756
    %v1758 = vand.u32 %v1256, 4294901760
    %1759 = vmatpush.msra.mxu0 %v1758
    %v1760 = vand.u32 %v1384, 4294901760
    %v1761 = vsub.f32 %v1384, %v1760
    %v1762 = vand.u32 %v1761, 4294901760
    %v1763 = vsub.f32 %v1761, %v1762
    %v1764 = vand.u32 %v1763, 4294901760
    %1765 = vmatmul.f32.gmra.mxu0 %v1764
    %v1766 = vpop.f32.mrf.mxu0
    %v1767 = vadd.f32 %v1726, %v1766
    %1768 = vdwg.mxu0
    %v1769 = vand.u32 %v1271, 4294901760
    %v1770 = vsub.f32 %v1271, %v1769
    %v1771 = vand.u32 %v1770, 4294901760
    %v1772 = vsub.f32 %v1770, %v1771
    %v1773 = vand.u32 %v1772, 4294901760
    %1774 = vmatpush.msra.mxu0 %v1773
    %v1775 = vand.u32 %v1270, 4294901760
    %v1776 = vsub.f32 %v1270, %v1775
    %v1777 = vand.u32 %v1776, 4294901760
    %v1778 = vsub.f32 %v1776, %v1777
    %v1779 = vand.u32 %v1778, 4294901760
    %1780 = vmatpush.msra.mxu0 %v1779
    %v1781 = vand.u32 %v1269, 4294901760
    %v1782 = vsub.f32 %v1269, %v1781
    %v1783 = vand.u32 %v1782, 4294901760
    %v1784 = vsub.f32 %v1782, %v1783
    %v1785 = vand.u32 %v1784, 4294901760
    %1786 = vmatpush.msra.mxu0 %v1785
    %v1787 = vand.u32 %v1268, 4294901760
    %v1788 = vsub.f32 %v1268, %v1787
    %v1789 = vand.u32 %v1788, 4294901760
    %v1790 = vsub.f32 %v1788, %v1789
    %v1791 = vand.u32 %v1790, 4294901760
    %1792 = vmatpush.msra.mxu0 %v1791
    %v1793 = vand.u32 %v1267, 4294901760
    %v1794 = vsub.f32 %v1267, %v1793
    %v1795 = vand.u32 %v1794, 4294901760
    %v1796 = vsub.f32 %v1794, %v1795
    %v1797 = vand.u32 %v1796, 4294901760
    %1798 = vmatpush.msra.mxu0 %v1797
    %v1799 = vand.u32 %v1266, 4294901760
    %v1800 = vsub.f32 %v1266, %v1799
    %v1801 = vand.u32 %v1800, 4294901760
    %v1802 = vsub.f32 %v1800, %v1801
    %v1803 = vand.u32 %v1802, 4294901760
    %1804 = vmatpush.msra.mxu0 %v1803
    %v1805 = vand.u32 %v1265, 4294901760
    %v1806 = vsub.f32 %v1265, %v1805
    %v1807 = vand.u32 %v1806, 4294901760
    %v1808 = vsub.f32 %v1806, %v1807
    %v1809 = vand.u32 %v1808, 4294901760
    %1810 = vmatpush.msra.mxu0 %v1809
    %v1811 = vand.u32 %v1264, 4294901760
    %v1812 = vsub.f32 %v1264, %v1811
    %v1813 = vand.u32 %v1812, 4294901760
    %v1814 = vsub.f32 %v1812, %v1813
    %v1815 = vand.u32 %v1814, 4294901760
    %1816 = vmatpush.msra.mxu0 %v1815
    %v1817 = vand.u32 %v1263, 4294901760
    %v1818 = vsub.f32 %v1263, %v1817
    %v1819 = vand.u32 %v1818, 4294901760
    %v1820 = vsub.f32 %v1818, %v1819
    %v1821 = vand.u32 %v1820, 4294901760
    %1822 = vmatpush.msra.mxu0 %v1821
    %v1823 = vand.u32 %v1262, 4294901760
    %v1824 = vsub.f32 %v1262, %v1823
    %v1825 = vand.u32 %v1824, 4294901760
    %v1826 = vsub.f32 %v1824, %v1825
    %v1827 = vand.u32 %v1826, 4294901760
    %1828 = vmatpush.msra.mxu0 %v1827
    %v1829 = vand.u32 %v1261, 4294901760
    %v1830 = vsub.f32 %v1261, %v1829
    %v1831 = vand.u32 %v1830, 4294901760
    %v1832 = vsub.f32 %v1830, %v1831
    %v1833 = vand.u32 %v1832, 4294901760
    %1834 = vmatpush.msra.mxu0 %v1833
    %v1835 = vand.u32 %v1260, 4294901760
    %v1836 = vsub.f32 %v1260, %v1835
    %v1837 = vand.u32 %v1836, 4294901760
    %v1838 = vsub.f32 %v1836, %v1837
    %v1839 = vand.u32 %v1838, 4294901760
    %1840 = vmatpush.msra.mxu0 %v1839
    %v1841 = vand.u32 %v1259, 4294901760
    %v1842 = vsub.f32 %v1259, %v1841
    %v1843 = vand.u32 %v1842, 4294901760
    %v1844 = vsub.f32 %v1842, %v1843
    %v1845 = vand.u32 %v1844, 4294901760
    %1846 = vmatpush.msra.mxu0 %v1845
    %v1847 = vand.u32 %v1258, 4294901760
    %v1848 = vsub.f32 %v1258, %v1847
    %v1849 = vand.u32 %v1848, 4294901760
    %v1850 = vsub.f32 %v1848, %v1849
    %v1851 = vand.u32 %v1850, 4294901760
    %1852 = vmatpush.msra.mxu0 %v1851
    %v1853 = vand.u32 %v1257, 4294901760
    %v1854 = vsub.f32 %v1257, %v1853
    %v1855 = vand.u32 %v1854, 4294901760
    %v1856 = vsub.f32 %v1854, %v1855
    %v1857 = vand.u32 %v1856, 4294901760
    %1858 = vmatpush.msra.mxu0 %v1857
    %v1859 = vand.u32 %v1256, 4294901760
    %v1860 = vsub.f32 %v1256, %v1859
    %v1861 = vand.u32 %v1860, 4294901760
    %v1862 = vsub.f32 %v1860, %v1861
    %v1863 = vand.u32 %v1862, 4294901760
    %1864 = vmatpush.msra.mxu0 %v1863
    %v1865 = vand.u32 %v1384, 4294901760
    %1866 = vmatmul.f32.gmra.mxu0 %v1865
    %v1867 = vpop.f32.mrf.mxu0
    %v1868 = vadd.f32 %v1767, %v1867
    %1869 = vdwg.mxu0
    %v1870 = vand.u32 %v1271, 4294901760
    %v1871 = vsub.f32 %v1271, %v1870
    %1872 = vmatpush.msra.mxu0 %v1871
    %v1873 = vand.u32 %v1270, 4294901760
    %v1874 = vsub.f32 %v1270, %v1873
    %1875 = vmatpush.msra.mxu0 %v1874
    %v1876 = vand.u32 %v1269, 4294901760
    %v1877 = vsub.f32 %v1269, %v1876
    %1878 = vmatpush.msra.mxu0 %v1877
    %v1879 = vand.u32 %v1268, 4294901760
    %v1880 = vsub.f32 %v1268, %v1879
    %1881 = vmatpush.msra.mxu0 %v1880
    %v1882 = vand.u32 %v1267, 4294901760
    %v1883 = vsub.f32 %v1267, %v1882
    %1884 = vmatpush.msra.mxu0 %v1883
    %v1885 = vand.u32 %v1266, 4294901760
    %v1886 = vsub.f32 %v1266, %v1885
    %1887 = vmatpush.msra.mxu0 %v1886
    %v1888 = vand.u32 %v1265, 4294901760
    %v1889 = vsub.f32 %v1265, %v1888
    %1890 = vmatpush.msra.mxu0 %v1889
    %v1891 = vand.u32 %v1264, 4294901760
    %v1892 = vsub.f32 %v1264, %v1891
    %1893 = vmatpush.msra.mxu0 %v1892
    %v1894 = vand.u32 %v1263, 4294901760
    %v1895 = vsub.f32 %v1263, %v1894
    %1896 = vmatpush.msra.mxu0 %v1895
    %v1897 = vand.u32 %v1262, 4294901760
    %v1898 = vsub.f32 %v1262, %v1897
    %1899 = vmatpush.msra.mxu0 %v1898
    %v1900 = vand.u32 %v1261, 4294901760
    %v1901 = vsub.f32 %v1261, %v1900
    %1902 = vmatpush.msra.mxu0 %v1901
    %v1903 = vand.u32 %v1260, 4294901760
    %v1904 = vsub.f32 %v1260, %v1903
    %1905 = vmatpush.msra.mxu0 %v1904
    %v1906 = vand.u32 %v1259, 4294901760
    %v1907 = vsub.f32 %v1259, %v1906
    %1908 = vmatpush.msra.mxu0 %v1907
    %v1909 = vand.u32 %v1258, 4294901760
    %v1910 = vsub.f32 %v1258, %v1909
    %1911 = vmatpush.msra.mxu0 %v1910
    %v1912 = vand.u32 %v1257, 4294901760
    %v1913 = vsub.f32 %v1257, %v1912
    %1914 = vmatpush.msra.mxu0 %v1913
    %v1915 = vand.u32 %v1256, 4294901760
    %v1916 = vsub.f32 %v1256, %v1915
    %1917 = vmatpush.msra.mxu0 %v1916
    %v1918 = vand.u32 %v1384, 4294901760
    %v1919 = vsub.f32 %v1384, %v1918
    %1920 = vmatmul.f32.gmra.mxu0 %v1919
    %v1921 = vpop.f32.mrf.mxu0
    %v1922 = vadd.f32 %v1868, %v1921
    %1923 = vdwg.mxu0
    %v1924 = vand.u32 %v1271, 4294901760
    %1925 = vmatpush.msra.mxu0 %v1924
    %v1926 = vand.u32 %v1270, 4294901760
    %1927 = vmatpush.msra.mxu0 %v1926
    %v1928 = vand.u32 %v1269, 4294901760
    %1929 = vmatpush.msra.mxu0 %v1928
    %v1930 = vand.u32 %v1268, 4294901760
    %1931 = vmatpush.msra.mxu0 %v1930
    %v1932 = vand.u32 %v1267, 4294901760
    %1933 = vmatpush.msra.mxu0 %v1932
    %v1934 = vand.u32 %v1266, 4294901760
    %1935 = vmatpush.msra.mxu0 %v1934
    %v1936 = vand.u32 %v1265, 4294901760
    %1937 = vmatpush.msra.mxu0 %v1936
    %v1938 = vand.u32 %v1264, 4294901760
    %1939 = vmatpush.msra.mxu0 %v1938
    %v1940 = vand.u32 %v1263, 4294901760
    %1941 = vmatpush.msra.mxu0 %v1940
    %v1942 = vand.u32 %v1262, 4294901760
    %1943 = vmatpush.msra.mxu0 %v1942
    %v1944 = vand.u32 %v1261, 4294901760
    %1945 = vmatpush.msra.mxu0 %v1944
    %v1946 = vand.u32 %v1260, 4294901760
    %1947 = vmatpush.msra.mxu0 %v1946
    %v1948 = vand.u32 %v1259, 4294901760
    %1949 = vmatpush.msra.mxu0 %v1948
    %v1950 = vand.u32 %v1258, 4294901760
    %1951 = vmatpush.msra.mxu0 %v1950
    %v1952 = vand.u32 %v1257, 4294901760
    %1953 = vmatpush.msra.mxu0 %v1952
    %v1954 = vand.u32 %v1256, 4294901760
    %1955 = vmatpush.msra.mxu0 %v1954
    %v1956 = vand.u32 %v1384, 4294901760
    %v1957 = vsub.f32 %v1384, %v1956
    %v1958 = vand.u32 %v1957, 4294901760
    %1959 = vmatmul.f32.gmra.mxu0 %v1958
    %v1960 = vpop.f32.mrf.mxu0
    %v1961 = vadd.f32 %v1922, %v1960
    %1962 = vdwg.mxu0
    %v1963 = vand.u32 %v1271, 4294901760
    %v1964 = vsub.f32 %v1271, %v1963
    %v1965 = vand.u32 %v1964, 4294901760
    %1966 = vmatpush.msra.mxu0 %v1965
    %v1967 = vand.u32 %v1270, 4294901760
    %v1968 = vsub.f32 %v1270, %v1967
    %v1969 = vand.u32 %v1968, 4294901760
    %1970 = vmatpush.msra.mxu0 %v1969
    %v1971 = vand.u32 %v1269, 4294901760
    %v1972 = vsub.f32 %v1269, %v1971
    %v1973 = vand.u32 %v1972, 4294901760
    %1974 = vmatpush.msra.mxu0 %v1973
    %v1975 = vand.u32 %v1268, 4294901760
    %v1976 = vsub.f32 %v1268, %v1975
    %v1977 = vand.u32 %v1976, 4294901760
    %1978 = vmatpush.msra.mxu0 %v1977
    %v1979 = vand.u32 %v1267, 4294901760
    %v1980 = vsub.f32 %v1267, %v1979
    %v1981 = vand.u32 %v1980, 4294901760
    %1982 = vmatpush.msra.mxu0 %v1981
    %v1983 = vand.u32 %v1266, 4294901760
    %v1984 = vsub.f32 %v1266, %v1983
    %v1985 = vand.u32 %v1984, 4294901760
    %1986 = vmatpush.msra.mxu0 %v1985
    %v1987 = vand.u32 %v1265, 4294901760
    %v1988 = vsub.f32 %v1265, %v1987
    %v1989 = vand.u32 %v1988, 4294901760
    %1990 = vmatpush.msra.mxu0 %v1989
    %v1991 = vand.u32 %v1264, 4294901760
    %v1992 = vsub.f32 %v1264, %v1991
    %v1993 = vand.u32 %v1992, 4294901760
    %1994 = vmatpush.msra.mxu0 %v1993
    %v1995 = vand.u32 %v1263, 4294901760
    %v1996 = vsub.f32 %v1263, %v1995
    %v1997 = vand.u32 %v1996, 4294901760
    %1998 = vmatpush.msra.mxu0 %v1997
    %v1999 = vand.u32 %v1262, 4294901760
    %v2000 = vsub.f32 %v1262, %v1999
    %v2001 = vand.u32 %v2000, 4294901760
    %2002 = vmatpush.msra.mxu0 %v2001
    %v2003 = vand.u32 %v1261, 4294901760
    %v2004 = vsub.f32 %v1261, %v2003
    %v2005 = vand.u32 %v2004, 4294901760
    %2006 = vmatpush.msra.mxu0 %v2005
    %v2007 = vand.u32 %v1260, 4294901760
    %v2008 = vsub.f32 %v1260, %v2007
    %v2009 = vand.u32 %v2008, 4294901760
    %2010 = vmatpush.msra.mxu0 %v2009
    %v2011 = vand.u32 %v1259, 4294901760
    %v2012 = vsub.f32 %v1259, %v2011
    %v2013 = vand.u32 %v2012, 4294901760
    %2014 = vmatpush.msra.mxu0 %v2013
    %v2015 = vand.u32 %v1258, 4294901760
    %v2016 = vsub.f32 %v1258, %v2015
    %v2017 = vand.u32 %v2016, 4294901760
    %2018 = vmatpush.msra.mxu0 %v2017
    %v2019 = vand.u32 %v1257, 4294901760
    %v2020 = vsub.f32 %v1257, %v2019
    %v2021 = vand.u32 %v2020, 4294901760
    %2022 = vmatpush.msra.mxu0 %v2021
    %v2023 = vand.u32 %v1256, 4294901760
    %v2024 = vsub.f32 %v1256, %v2023
    %v2025 = vand.u32 %v2024, 4294901760
    %2026 = vmatpush.msra.mxu0 %v2025
    %v2027 = vand.u32 %v1384, 4294901760
    %2028 = vmatmul.f32.gmra.mxu0 %v2027
    %v2029 = vpop.f32.mrf.mxu0
    %v2030 = vadd.f32 %v1961, %v2029
    %2031 = vdwg.mxu0
    %v2032 = vand.u32 %v1271, 4294901760
    %2033 = vmatpush.msra.mxu0 %v2032
    %v2034 = vand.u32 %v1270, 4294901760
    %2035 = vmatpush.msra.mxu0 %v2034
    %v2036 = vand.u32 %v1269, 4294901760
    %2037 = vmatpush.msra.mxu0 %v2036
    %v2038 = vand.u32 %v1268, 4294901760
    %2039 = vmatpush.msra.mxu0 %v2038
    %v2040 = vand.u32 %v1267, 4294901760
    %2041 = vmatpush.msra.mxu0 %v2040
    %v2042 = vand.u32 %v1266, 4294901760
    %2043 = vmatpush.msra.mxu0 %v2042
    %v2044 = vand.u32 %v1265, 4294901760
    %2045 = vmatpush.msra.mxu0 %v2044
    %v2046 = vand.u32 %v1264, 4294901760
    %2047 = vmatpush.msra.mxu0 %v2046
    %v2048 = vand.u32 %v1263, 4294901760
    %2049 = vmatpush.msra.mxu0 %v2048
    %v2050 = vand.u32 %v1262, 4294901760
    %2051 = vmatpush.msra.mxu0 %v2050
    %v2052 = vand.u32 %v1261, 4294901760
    %2053 = vmatpush.msra.mxu0 %v2052
    %v2054 = vand.u32 %v1260, 4294901760
    %2055 = vmatpush.msra.mxu0 %v2054
    %v2056 = vand.u32 %v1259, 4294901760
    %2057 = vmatpush.msra.mxu0 %v2056
    %v2058 = vand.u32 %v1258, 4294901760
    %2059 = vmatpush.msra.mxu0 %v2058
    %v2060 = vand.u32 %v1257, 4294901760
    %2061 = vmatpush.msra.mxu0 %v2060
    %v2062 = vand.u32 %v1256, 4294901760
    %2063 = vmatpush.msra.mxu0 %v2062
    %v2064 = vand.u32 %v1384, 4294901760
    %2065 = vmatmul.f32.gmra.mxu0 %v2064
    %v2066 = vpop.f32.mrf.mxu0
    %v2067 = vadd.f32 %v2030, %v2066
    %2068 = vdwg.mxu0
    %v2069 = vperm.slane %v1376, 0
    %v2070 = vperm.slane %v1376, 1
    %v2073 = vand.u32 %v1287, 4294901760
    %2074 = vmatpush.msra.mxu0 %v2073
    %v2075 = vand.u32 %v1286, 4294901760
    %2076 = vmatpush.msra.mxu0 %v2075
    %v2077 = vand.u32 %v1285, 4294901760
    %2078 = vmatpush.msra.mxu0 %v2077
    %v2079 = vand.u32 %v1284, 4294901760
    %2080 = vmatpush.msra.mxu0 %v2079
    %v2081 = vand.u32 %v1283, 4294901760
    %2082 = vmatpush.msra.mxu0 %v2081
    %v2083 = vand.u32 %v1282, 4294901760
    %2084 = vmatpush.msra.mxu0 %v2083
    %v2085 = vand.u32 %v1281, 4294901760
    %2086 = vmatpush.msra.mxu0 %v2085
    %v2087 = vand.u32 %v1280, 4294901760
    %2088 = vmatpush.msra.mxu0 %v2087
    %v2089 = vand.u32 %v1279, 4294901760
    %2090 = vmatpush.msra.mxu0 %v2089
    %v2091 = vand.u32 %v1278, 4294901760
    %2092 = vmatpush.msra.mxu0 %v2091
    %v2093 = vand.u32 %v1277, 4294901760
    %2094 = vmatpush.msra.mxu0 %v2093
    %v2095 = vand.u32 %v1276, 4294901760
    %2096 = vmatpush.msra.mxu0 %v2095
    %v2097 = vand.u32 %v1275, 4294901760
    %2098 = vmatpush.msra.mxu0 %v2097
    %v2099 = vand.u32 %v1274, 4294901760
    %2100 = vmatpush.msra.mxu0 %v2099
    %v2101 = vand.u32 %v1273, 4294901760
    %2102 = vmatpush.msra.mxu0 %v2101
    %v2103 = vand.u32 %v1272, 4294901760
    %2104 = vmatpush.msra.mxu0 %v2103
    %v2105 = vand.u32 %v2069, 4294901760
    %v2106 = vsub.f32 %v2069, %v2105
    %v2107 = vand.u32 %v2106, 4294901760
    %v2108 = vsub.f32 %v2106, %v2107
    %v2109 = vand.u32 %v2108, 4294901760
    %2110 = vmatmul.f32.gmra.mxu0 %v2109
    %v2111 = vpop.f32.mrf.mxu0
    %v2112 = vadd.f32 0.0, %v2111
    %2113 = vdwg.mxu0
    %v2114 = vand.u32 %v1287, 4294901760
    %v2115 = vsub.f32 %v1287, %v2114
    %v2116 = vand.u32 %v2115, 4294901760
    %v2117 = vsub.f32 %v2115, %v2116
    %v2118 = vand.u32 %v2117, 4294901760
    %2119 = vmatpush.msra.mxu0 %v2118
    %v2120 = vand.u32 %v1286, 4294901760
    %v2121 = vsub.f32 %v1286, %v2120
    %v2122 = vand.u32 %v2121, 4294901760
    %v2123 = vsub.f32 %v2121, %v2122
    %v2124 = vand.u32 %v2123, 4294901760
    %2125 = vmatpush.msra.mxu0 %v2124
    %v2126 = vand.u32 %v1285, 4294901760
    %v2127 = vsub.f32 %v1285, %v2126
    %v2128 = vand.u32 %v2127, 4294901760
    %v2129 = vsub.f32 %v2127, %v2128
    %v2130 = vand.u32 %v2129, 4294901760
    %2131 = vmatpush.msra.mxu0 %v2130
    %v2132 = vand.u32 %v1284, 4294901760
    %v2133 = vsub.f32 %v1284, %v2132
    %v2134 = vand.u32 %v2133, 4294901760
    %v2135 = vsub.f32 %v2133, %v2134
    %v2136 = vand.u32 %v2135, 4294901760
    %2137 = vmatpush.msra.mxu0 %v2136
    %v2138 = vand.u32 %v1283, 4294901760
    %v2139 = vsub.f32 %v1283, %v2138
    %v2140 = vand.u32 %v2139, 4294901760
    %v2141 = vsub.f32 %v2139, %v2140
    %v2142 = vand.u32 %v2141, 4294901760
    %2143 = vmatpush.msra.mxu0 %v2142
    %v2144 = vand.u32 %v1282, 4294901760
    %v2145 = vsub.f32 %v1282, %v2144
    %v2146 = vand.u32 %v2145, 4294901760
    %v2147 = vsub.f32 %v2145, %v2146
    %v2148 = vand.u32 %v2147, 4294901760
    %2149 = vmatpush.msra.mxu0 %v2148
    %v2150 = vand.u32 %v1281, 4294901760
    %v2151 = vsub.f32 %v1281, %v2150
    %v2152 = vand.u32 %v2151, 4294901760
    %v2153 = vsub.f32 %v2151, %v2152
    %v2154 = vand.u32 %v2153, 4294901760
    %2155 = vmatpush.msra.mxu0 %v2154
    %v2156 = vand.u32 %v1280, 4294901760
    %v2157 = vsub.f32 %v1280, %v2156
    %v2158 = vand.u32 %v2157, 4294901760
    %v2159 = vsub.f32 %v2157, %v2158
    %v2160 = vand.u32 %v2159, 4294901760
    %2161 = vmatpush.msra.mxu0 %v2160
    %v2162 = vand.u32 %v1279, 4294901760
    %v2163 = vsub.f32 %v1279, %v2162
    %v2164 = vand.u32 %v2163, 4294901760
    %v2165 = vsub.f32 %v2163, %v2164
    %v2166 = vand.u32 %v2165, 4294901760
    %2167 = vmatpush.msra.mxu0 %v2166
    %v2168 = vand.u32 %v1278, 4294901760
    %v2169 = vsub.f32 %v1278, %v2168
    %v2170 = vand.u32 %v2169, 4294901760
    %v2171 = vsub.f32 %v2169, %v2170
    %v2172 = vand.u32 %v2171, 4294901760
    %2173 = vmatpush.msra.mxu0 %v2172
    %v2174 = vand.u32 %v1277, 4294901760
    %v2175 = vsub.f32 %v1277, %v2174
    %v2176 = vand.u32 %v2175, 4294901760
    %v2177 = vsub.f32 %v2175, %v2176
    %v2178 = vand.u32 %v2177, 4294901760
    %2179 = vmatpush.msra.mxu0 %v2178
    %v2180 = vand.u32 %v1276, 4294901760
    %v2181 = vsub.f32 %v1276, %v2180
    %v2182 = vand.u32 %v2181, 4294901760
    %v2183 = vsub.f32 %v2181, %v2182
    %v2184 = vand.u32 %v2183, 4294901760
    %2185 = vmatpush.msra.mxu0 %v2184
    %v2186 = vand.u32 %v1275, 4294901760
    %v2187 = vsub.f32 %v1275, %v2186
    %v2188 = vand.u32 %v2187, 4294901760
    %v2189 = vsub.f32 %v2187, %v2188
    %v2190 = vand.u32 %v2189, 4294901760
    %2191 = vmatpush.msra.mxu0 %v2190
    %v2192 = vand.u32 %v1274, 4294901760
    %v2193 = vsub.f32 %v1274, %v2192
    %v2194 = vand.u32 %v2193, 4294901760
    %v2195 = vsub.f32 %v2193, %v2194
    %v2196 = vand.u32 %v2195, 4294901760
    %2197 = vmatpush.msra.mxu0 %v2196
    %v2198 = vand.u32 %v1273, 4294901760
    %v2199 = vsub.f32 %v1273, %v2198
    %v2200 = vand.u32 %v2199, 4294901760
    %v2201 = vsub.f32 %v2199, %v2200
    %v2202 = vand.u32 %v2201, 4294901760
    %2203 = vmatpush.msra.mxu0 %v2202
    %v2204 = vand.u32 %v1272, 4294901760
    %v2205 = vsub.f32 %v1272, %v2204
    %v2206 = vand.u32 %v2205, 4294901760
    %v2207 = vsub.f32 %v2205, %v2206
    %v2208 = vand.u32 %v2207, 4294901760
    %2209 = vmatpush.msra.mxu0 %v2208
    %v2210 = vand.u32 %v2069, 4294901760
    %2211 = vmatmul.f32.gmra.mxu0 %v2210
    %v2212 = vpop.f32.mrf.mxu0
    %v2213 = vadd.f32 %v2112, %v2212
    %2214 = vdwg.mxu0
    %v2215 = vand.u32 %v1287, 4294901760
    %v2216 = vsub.f32 %v1287, %v2215
    %2217 = vmatpush.msra.mxu0 %v2216
    %v2218 = vand.u32 %v1286, 4294901760
    %v2219 = vsub.f32 %v1286, %v2218
    %2220 = vmatpush.msra.mxu0 %v2219
    %v2221 = vand.u32 %v1285, 4294901760
    %v2222 = vsub.f32 %v1285, %v2221
    %2223 = vmatpush.msra.mxu0 %v2222
    %v2224 = vand.u32 %v1284, 4294901760
    %v2225 = vsub.f32 %v1284, %v2224
    %2226 = vmatpush.msra.mxu0 %v2225
    %v2227 = vand.u32 %v1283, 4294901760
    %v2228 = vsub.f32 %v1283, %v2227
    %2229 = vmatpush.msra.mxu0 %v2228
    %v2230 = vand.u32 %v1282, 4294901760
    %v2231 = vsub.f32 %v1282, %v2230
    %2232 = vmatpush.msra.mxu0 %v2231
    %v2233 = vand.u32 %v1281, 4294901760
    %v2234 = vsub.f32 %v1281, %v2233
    %2235 = vmatpush.msra.mxu0 %v2234
    %v2236 = vand.u32 %v1280, 4294901760
    %v2237 = vsub.f32 %v1280, %v2236
    %2238 = vmatpush.msra.mxu0 %v2237
    %v2239 = vand.u32 %v1279, 4294901760
    %v2240 = vsub.f32 %v1279, %v2239
    %2241 = vmatpush.msra.mxu0 %v2240
    %v2242 = vand.u32 %v1278, 4294901760
    %v2243 = vsub.f32 %v1278, %v2242
    %2244 = vmatpush.msra.mxu0 %v2243
    %v2245 = vand.u32 %v1277, 4294901760
    %v2246 = vsub.f32 %v1277, %v2245
    %2247 = vmatpush.msra.mxu0 %v2246
    %v2248 = vand.u32 %v1276, 4294901760
    %v2249 = vsub.f32 %v1276, %v2248
    %2250 = vmatpush.msra.mxu0 %v2249
    %v2251 = vand.u32 %v1275, 4294901760
    %v2252 = vsub.f32 %v1275, %v2251
    %2253 = vmatpush.msra.mxu0 %v2252
    %v2254 = vand.u32 %v1274, 4294901760
    %v2255 = vsub.f32 %v1274, %v2254
    %2256 = vmatpush.msra.mxu0 %v2255
    %v2257 = vand.u32 %v1273, 4294901760
    %v2258 = vsub.f32 %v1273, %v2257
    %2259 = vmatpush.msra.mxu0 %v2258
    %v2260 = vand.u32 %v1272, 4294901760
    %v2261 = vsub.f32 %v1272, %v2260
    %2262 = vmatpush.msra.mxu0 %v2261
    %v2263 = vand.u32 %v2069, 4294901760
    %v2264 = vsub.f32 %v2069, %v2263
    %2265 = vmatmul.f32.gmra.mxu0 %v2264
    %v2266 = vpop.f32.mrf.mxu0
    %v2267 = vadd.f32 %v2213, %v2266
    %2268 = vdwg.mxu0
    %v2269 = vand.u32 %v1287, 4294901760
    %2270 = vmatpush.msra.mxu0 %v2269
    %v2271 = vand.u32 %v1286, 4294901760
    %2272 = vmatpush.msra.mxu0 %v2271
    %v2273 = vand.u32 %v1285, 4294901760
    %2274 = vmatpush.msra.mxu0 %v2273
    %v2275 = vand.u32 %v1284, 4294901760
    %2276 = vmatpush.msra.mxu0 %v2275
    %v2277 = vand.u32 %v1283, 4294901760
    %2278 = vmatpush.msra.mxu0 %v2277
    %v2279 = vand.u32 %v1282, 4294901760
    %2280 = vmatpush.msra.mxu0 %v2279
    %v2281 = vand.u32 %v1281, 4294901760
    %2282 = vmatpush.msra.mxu0 %v2281
    %v2283 = vand.u32 %v1280, 4294901760
    %2284 = vmatpush.msra.mxu0 %v2283
    %v2285 = vand.u32 %v1279, 4294901760
    %2286 = vmatpush.msra.mxu0 %v2285
    %v2287 = vand.u32 %v1278, 4294901760
    %2288 = vmatpush.msra.mxu0 %v2287
    %v2289 = vand.u32 %v1277, 4294901760
    %2290 = vmatpush.msra.mxu0 %v2289
    %v2291 = vand.u32 %v1276, 4294901760
    %2292 = vmatpush.msra.mxu0 %v2291
    %v2293 = vand.u32 %v1275, 4294901760
    %2294 = vmatpush.msra.mxu0 %v2293
    %v2295 = vand.u32 %v1274, 4294901760
    %2296 = vmatpush.msra.mxu0 %v2295
    %v2297 = vand.u32 %v1273, 4294901760
    %2298 = vmatpush.msra.mxu0 %v2297
    %v2299 = vand.u32 %v1272, 4294901760
    %2300 = vmatpush.msra.mxu0 %v2299
    %v2301 = vand.u32 %v2069, 4294901760
    %v2302 = vsub.f32 %v2069, %v2301
    %v2303 = vand.u32 %v2302, 4294901760
    %2304 = vmatmul.f32.gmra.mxu0 %v2303
    %v2305 = vpop.f32.mrf.mxu0
    %v2306 = vadd.f32 %v2267, %v2305
    %2307 = vdwg.mxu0
    %v2308 = vand.u32 %v1287, 4294901760
    %v2309 = vsub.f32 %v1287, %v2308
    %v2310 = vand.u32 %v2309, 4294901760
    %2311 = vmatpush.msra.mxu0 %v2310
    %v2312 = vand.u32 %v1286, 4294901760
    %v2313 = vsub.f32 %v1286, %v2312
    %v2314 = vand.u32 %v2313, 4294901760
    %2315 = vmatpush.msra.mxu0 %v2314
    %v2316 = vand.u32 %v1285, 4294901760
    %v2317 = vsub.f32 %v1285, %v2316
    %v2318 = vand.u32 %v2317, 4294901760
    %2319 = vmatpush.msra.mxu0 %v2318
    %v2320 = vand.u32 %v1284, 4294901760
    %v2321 = vsub.f32 %v1284, %v2320
    %v2322 = vand.u32 %v2321, 4294901760
    %2323 = vmatpush.msra.mxu0 %v2322
    %v2324 = vand.u32 %v1283, 4294901760
    %v2325 = vsub.f32 %v1283, %v2324
    %v2326 = vand.u32 %v2325, 4294901760
    %2327 = vmatpush.msra.mxu0 %v2326
    %v2328 = vand.u32 %v1282, 4294901760
    %v2329 = vsub.f32 %v1282, %v2328
    %v2330 = vand.u32 %v2329, 4294901760
    %2331 = vmatpush.msra.mxu0 %v2330
    %v2332 = vand.u32 %v1281, 4294901760
    %v2333 = vsub.f32 %v1281, %v2332
    %v2334 = vand.u32 %v2333, 4294901760
    %2335 = vmatpush.msra.mxu0 %v2334
    %v2336 = vand.u32 %v1280, 4294901760
    %v2337 = vsub.f32 %v1280, %v2336
    %v2338 = vand.u32 %v2337, 4294901760
    %2339 = vmatpush.msra.mxu0 %v2338
    %v2340 = vand.u32 %v1279, 4294901760
    %v2341 = vsub.f32 %v1279, %v2340
    %v2342 = vand.u32 %v2341, 4294901760
    %2343 = vmatpush.msra.mxu0 %v2342
    %v2344 = vand.u32 %v1278, 4294901760
    %v2345 = vsub.f32 %v1278, %v2344
    %v2346 = vand.u32 %v2345, 4294901760
    %2347 = vmatpush.msra.mxu0 %v2346
    %v2348 = vand.u32 %v1277, 4294901760
    %v2349 = vsub.f32 %v1277, %v2348
    %v2350 = vand.u32 %v2349, 4294901760
    %2351 = vmatpush.msra.mxu0 %v2350
    %v2352 = vand.u32 %v1276, 4294901760
    %v2353 = vsub.f32 %v1276, %v2352
    %v2354 = vand.u32 %v2353, 4294901760
    %2355 = vmatpush.msra.mxu0 %v2354
    %v2356 = vand.u32 %v1275, 4294901760
    %v2357 = vsub.f32 %v1275, %v2356
    %v2358 = vand.u32 %v2357, 4294901760
    %2359 = vmatpush.msra.mxu0 %v2358
    %v2360 = vand.u32 %v1274, 4294901760
    %v2361 = vsub.f32 %v1274, %v2360
    %v2362 = vand.u32 %v2361, 4294901760
    %2363 = vmatpush.msra.mxu0 %v2362
    %v2364 = vand.u32 %v1273, 4294901760
    %v2365 = vsub.f32 %v1273, %v2364
    %v2366 = vand.u32 %v2365, 4294901760
    %2367 = vmatpush.msra.mxu0 %v2366
    %v2368 = vand.u32 %v1272, 4294901760
    %v2369 = vsub.f32 %v1272, %v2368
    %v2370 = vand.u32 %v2369, 4294901760
    %2371 = vmatpush.msra.mxu0 %v2370
    %v2372 = vand.u32 %v2069, 4294901760
    %2373 = vmatmul.f32.gmra.mxu0 %v2372
    %v2374 = vpop.f32.mrf.mxu0
    %v2375 = vadd.f32 %v2306, %v2374
    %2376 = vdwg.mxu0
    %v2377 = vand.u32 %v1287, 4294901760
    %2378 = vmatpush.msra.mxu0 %v2377
    %v2379 = vand.u32 %v1286, 4294901760
    %2380 = vmatpush.msra.mxu0 %v2379
    %v2381 = vand.u32 %v1285, 4294901760
    %2382 = vmatpush.msra.mxu0 %v2381
    %v2383 = vand.u32 %v1284, 4294901760
    %2384 = vmatpush.msra.mxu0 %v2383
    %v2385 = vand.u32 %v1283, 4294901760
    %2386 = vmatpush.msra.mxu0 %v2385
    %v2387 = vand.u32 %v1282, 4294901760
    %2388 = vmatpush.msra.mxu0 %v2387
    %v2389 = vand.u32 %v1281, 4294901760
    %2390 = vmatpush.msra.mxu0 %v2389
    %v2391 = vand.u32 %v1280, 4294901760
    %2392 = vmatpush.msra.mxu0 %v2391
    %v2393 = vand.u32 %v1279, 4294901760
    %2394 = vmatpush.msra.mxu0 %v2393
    %v2395 = vand.u32 %v1278, 4294901760
    %2396 = vmatpush.msra.mxu0 %v2395
    %v2397 = vand.u32 %v1277, 4294901760
    %2398 = vmatpush.msra.mxu0 %v2397
    %v2399 = vand.u32 %v1276, 4294901760
    %2400 = vmatpush.msra.mxu0 %v2399
    %v2401 = vand.u32 %v1275, 4294901760
    %2402 = vmatpush.msra.mxu0 %v2401
    %v2403 = vand.u32 %v1274, 4294901760
    %2404 = vmatpush.msra.mxu0 %v2403
    %v2405 = vand.u32 %v1273, 4294901760
    %2406 = vmatpush.msra.mxu0 %v2405
    %v2407 = vand.u32 %v1272, 4294901760
    %2408 = vmatpush.msra.mxu0 %v2407
    %v2409 = vand.u32 %v2069, 4294901760
    %2410 = vmatmul.f32.gmra.mxu0 %v2409
    %v2411 = vpop.f32.mrf.mxu0
    %v2412 = vadd.f32 %v2375, %v2411
    %2413 = vdwg.mxu0
    %v2414 = vand.u32 %v1303, 4294901760
    %2415 = vmatpush.msra.mxu0 %v2414
    %v2416 = vand.u32 %v1302, 4294901760
    %2417 = vmatpush.msra.mxu0 %v2416
    %v2418 = vand.u32 %v1301, 4294901760
    %2419 = vmatpush.msra.mxu0 %v2418
    %v2420 = vand.u32 %v1300, 4294901760
    %2421 = vmatpush.msra.mxu0 %v2420
    %v2422 = vand.u32 %v1299, 4294901760
    %2423 = vmatpush.msra.mxu0 %v2422
    %v2424 = vand.u32 %v1298, 4294901760
    %2425 = vmatpush.msra.mxu0 %v2424
    %v2426 = vand.u32 %v1297, 4294901760
    %2427 = vmatpush.msra.mxu0 %v2426
    %v2428 = vand.u32 %v1296, 4294901760
    %2429 = vmatpush.msra.mxu0 %v2428
    %v2430 = vand.u32 %v1295, 4294901760
    %2431 = vmatpush.msra.mxu0 %v2430
    %v2432 = vand.u32 %v1294, 4294901760
    %2433 = vmatpush.msra.mxu0 %v2432
    %v2434 = vand.u32 %v1293, 4294901760
    %2435 = vmatpush.msra.mxu0 %v2434
    %v2436 = vand.u32 %v1292, 4294901760
    %2437 = vmatpush.msra.mxu0 %v2436
    %v2438 = vand.u32 %v1291, 4294901760
    %2439 = vmatpush.msra.mxu0 %v2438
    %v2440 = vand.u32 %v1290, 4294901760
    %2441 = vmatpush.msra.mxu0 %v2440
    %v2442 = vand.u32 %v1289, 4294901760
    %2443 = vmatpush.msra.mxu0 %v2442
    %v2444 = vand.u32 %v1288, 4294901760
    %2445 = vmatpush.msra.mxu0 %v2444
    %v2446 = vand.u32 %v2070, 4294901760
    %v2447 = vsub.f32 %v2070, %v2446
    %v2448 = vand.u32 %v2447, 4294901760
    %v2449 = vsub.f32 %v2447, %v2448
    %v2450 = vand.u32 %v2449, 4294901760
    %2451 = vmatmul.f32.gmra.mxu0 %v2450
    %v2452 = vpop.f32.mrf.mxu0
    %v2453 = vadd.f32 %v2412, %v2452
    %2454 = vdwg.mxu0
    %v2455 = vand.u32 %v1303, 4294901760
    %v2456 = vsub.f32 %v1303, %v2455
    %v2457 = vand.u32 %v2456, 4294901760
    %v2458 = vsub.f32 %v2456, %v2457
    %v2459 = vand.u32 %v2458, 4294901760
    %2460 = vmatpush.msra.mxu0 %v2459
    %v2461 = vand.u32 %v1302, 4294901760
    %v2462 = vsub.f32 %v1302, %v2461
    %v2463 = vand.u32 %v2462, 4294901760
    %v2464 = vsub.f32 %v2462, %v2463
    %v2465 = vand.u32 %v2464, 4294901760
    %2466 = vmatpush.msra.mxu0 %v2465
    %v2467 = vand.u32 %v1301, 4294901760
    %v2468 = vsub.f32 %v1301, %v2467
    %v2469 = vand.u32 %v2468, 4294901760
    %v2470 = vsub.f32 %v2468, %v2469
    %v2471 = vand.u32 %v2470, 4294901760
    %2472 = vmatpush.msra.mxu0 %v2471
    %v2473 = vand.u32 %v1300, 4294901760
    %v2474 = vsub.f32 %v1300, %v2473
    %v2475 = vand.u32 %v2474, 4294901760
    %v2476 = vsub.f32 %v2474, %v2475
    %v2477 = vand.u32 %v2476, 4294901760
    %2478 = vmatpush.msra.mxu0 %v2477
    %v2479 = vand.u32 %v1299, 4294901760
    %v2480 = vsub.f32 %v1299, %v2479
    %v2481 = vand.u32 %v2480, 4294901760
    %v2482 = vsub.f32 %v2480, %v2481
    %v2483 = vand.u32 %v2482, 4294901760
    %2484 = vmatpush.msra.mxu0 %v2483
    %v2485 = vand.u32 %v1298, 4294901760
    %v2486 = vsub.f32 %v1298, %v2485
    %v2487 = vand.u32 %v2486, 4294901760
    %v2488 = vsub.f32 %v2486, %v2487
    %v2489 = vand.u32 %v2488, 4294901760
    %2490 = vmatpush.msra.mxu0 %v2489
    %v2491 = vand.u32 %v1297, 4294901760
    %v2492 = vsub.f32 %v1297, %v2491
    %v2493 = vand.u32 %v2492, 4294901760
    %v2494 = vsub.f32 %v2492, %v2493
    %v2495 = vand.u32 %v2494, 4294901760
    %2496 = vmatpush.msra.mxu0 %v2495
    %v2497 = vand.u32 %v1296, 4294901760
    %v2498 = vsub.f32 %v1296, %v2497
    %v2499 = vand.u32 %v2498, 4294901760
    %v2500 = vsub.f32 %v2498, %v2499
    %v2501 = vand.u32 %v2500, 4294901760
    %2502 = vmatpush.msra.mxu0 %v2501
    %v2503 = vand.u32 %v1295, 4294901760
    %v2504 = vsub.f32 %v1295, %v2503
    %v2505 = vand.u32 %v2504, 4294901760
    %v2506 = vsub.f32 %v2504, %v2505
    %v2507 = vand.u32 %v2506, 4294901760
    %2508 = vmatpush.msra.mxu0 %v2507
    %v2509 = vand.u32 %v1294, 4294901760
    %v2510 = vsub.f32 %v1294, %v2509
    %v2511 = vand.u32 %v2510, 4294901760
    %v2512 = vsub.f32 %v2510, %v2511
    %v2513 = vand.u32 %v2512, 4294901760
    %2514 = vmatpush.msra.mxu0 %v2513
    %v2515 = vand.u32 %v1293, 4294901760
    %v2516 = vsub.f32 %v1293, %v2515
    %v2517 = vand.u32 %v2516, 4294901760
    %v2518 = vsub.f32 %v2516, %v2517
    %v2519 = vand.u32 %v2518, 4294901760
    %2520 = vmatpush.msra.mxu0 %v2519
    %v2521 = vand.u32 %v1292, 4294901760
    %v2522 = vsub.f32 %v1292, %v2521
    %v2523 = vand.u32 %v2522, 4294901760
    %v2524 = vsub.f32 %v2522, %v2523
    %v2525 = vand.u32 %v2524, 4294901760
    %2526 = vmatpush.msra.mxu0 %v2525
    %v2527 = vand.u32 %v1291, 4294901760
    %v2528 = vsub.f32 %v1291, %v2527
    %v2529 = vand.u32 %v2528, 4294901760
    %v2530 = vsub.f32 %v2528, %v2529
    %v2531 = vand.u32 %v2530, 4294901760
    %2532 = vmatpush.msra.mxu0 %v2531
    %v2533 = vand.u32 %v1290, 4294901760
    %v2534 = vsub.f32 %v1290, %v2533
    %v2535 = vand.u32 %v2534, 4294901760
    %v2536 = vsub.f32 %v2534, %v2535
    %v2537 = vand.u32 %v2536, 4294901760
    %2538 = vmatpush.msra.mxu0 %v2537
    %v2539 = vand.u32 %v1289, 4294901760
    %v2540 = vsub.f32 %v1289, %v2539
    %v2541 = vand.u32 %v2540, 4294901760
    %v2542 = vsub.f32 %v2540, %v2541
    %v2543 = vand.u32 %v2542, 4294901760
    %2544 = vmatpush.msra.mxu0 %v2543
    %v2545 = vand.u32 %v1288, 4294901760
    %v2546 = vsub.f32 %v1288, %v2545
    %v2547 = vand.u32 %v2546, 4294901760
    %v2548 = vsub.f32 %v2546, %v2547
    %v2549 = vand.u32 %v2548, 4294901760
    %2550 = vmatpush.msra.mxu0 %v2549
    %v2551 = vand.u32 %v2070, 4294901760
    %2552 = vmatmul.f32.gmra.mxu0 %v2551
    %v2553 = vpop.f32.mrf.mxu0
    %v2554 = vadd.f32 %v2453, %v2553
    %2555 = vdwg.mxu0
    %v2556 = vand.u32 %v1303, 4294901760
    %v2557 = vsub.f32 %v1303, %v2556
    %2558 = vmatpush.msra.mxu0 %v2557
    %v2559 = vand.u32 %v1302, 4294901760
    %v2560 = vsub.f32 %v1302, %v2559
    %2561 = vmatpush.msra.mxu0 %v2560
    %v2562 = vand.u32 %v1301, 4294901760
    %v2563 = vsub.f32 %v1301, %v2562
    %2564 = vmatpush.msra.mxu0 %v2563
    %v2565 = vand.u32 %v1300, 4294901760
    %v2566 = vsub.f32 %v1300, %v2565
    %2567 = vmatpush.msra.mxu0 %v2566
    %v2568 = vand.u32 %v1299, 4294901760
    %v2569 = vsub.f32 %v1299, %v2568
    %2570 = vmatpush.msra.mxu0 %v2569
    %v2571 = vand.u32 %v1298, 4294901760
    %v2572 = vsub.f32 %v1298, %v2571
    %2573 = vmatpush.msra.mxu0 %v2572
    %v2574 = vand.u32 %v1297, 4294901760
    %v2575 = vsub.f32 %v1297, %v2574
    %2576 = vmatpush.msra.mxu0 %v2575
    %v2577 = vand.u32 %v1296, 4294901760
    %v2578 = vsub.f32 %v1296, %v2577
    %2579 = vmatpush.msra.mxu0 %v2578
    %v2580 = vand.u32 %v1295, 4294901760
    %v2581 = vsub.f32 %v1295, %v2580
    %2582 = vmatpush.msra.mxu0 %v2581
    %v2583 = vand.u32 %v1294, 4294901760
    %v2584 = vsub.f32 %v1294, %v2583
    %2585 = vmatpush.msra.mxu0 %v2584
    %v2586 = vand.u32 %v1293, 4294901760
    %v2587 = vsub.f32 %v1293, %v2586
    %2588 = vmatpush.msra.mxu0 %v2587
    %v2589 = vand.u32 %v1292, 4294901760
    %v2590 = vsub.f32 %v1292, %v2589
    %2591 = vmatpush.msra.mxu0 %v2590
    %v2592 = vand.u32 %v1291, 4294901760
    %v2593 = vsub.f32 %v1291, %v2592
    %2594 = vmatpush.msra.mxu0 %v2593
    %v2595 = vand.u32 %v1290, 4294901760
    %v2596 = vsub.f32 %v1290, %v2595
    %2597 = vmatpush.msra.mxu0 %v2596
    %v2598 = vand.u32 %v1289, 4294901760
    %v2599 = vsub.f32 %v1289, %v2598
    %2600 = vmatpush.msra.mxu0 %v2599
    %v2601 = vand.u32 %v1288, 4294901760
    %v2602 = vsub.f32 %v1288, %v2601
    %2603 = vmatpush.msra.mxu0 %v2602
    %v2604 = vand.u32 %v2070, 4294901760
    %v2605 = vsub.f32 %v2070, %v2604
    %2606 = vmatmul.f32.gmra.mxu0 %v2605
    %v2607 = vpop.f32.mrf.mxu0
    %v2608 = vadd.f32 %v2554, %v2607
    %2609 = vdwg.mxu0
    %v2610 = vand.u32 %v1303, 4294901760
    %2611 = vmatpush.msra.mxu0 %v2610
    %v2612 = vand.u32 %v1302, 4294901760
    %2613 = vmatpush.msra.mxu0 %v2612
    %v2614 = vand.u32 %v1301, 4294901760
    %2615 = vmatpush.msra.mxu0 %v2614
    %v2616 = vand.u32 %v1300, 4294901760
    %2617 = vmatpush.msra.mxu0 %v2616
    %v2618 = vand.u32 %v1299, 4294901760
    %2619 = vmatpush.msra.mxu0 %v2618
    %v2620 = vand.u32 %v1298, 4294901760
    %2621 = vmatpush.msra.mxu0 %v2620
    %v2622 = vand.u32 %v1297, 4294901760
    %2623 = vmatpush.msra.mxu0 %v2622
    %v2624 = vand.u32 %v1296, 4294901760
    %2625 = vmatpush.msra.mxu0 %v2624
    %v2626 = vand.u32 %v1295, 4294901760
    %2627 = vmatpush.msra.mxu0 %v2626
    %v2628 = vand.u32 %v1294, 4294901760
    %2629 = vmatpush.msra.mxu0 %v2628
    %v2630 = vand.u32 %v1293, 4294901760
    %2631 = vmatpush.msra.mxu0 %v2630
    %v2632 = vand.u32 %v1292, 4294901760
    %2633 = vmatpush.msra.mxu0 %v2632
    %v2634 = vand.u32 %v1291, 4294901760
    %2635 = vmatpush.msra.mxu0 %v2634
    %v2636 = vand.u32 %v1290, 4294901760
    %2637 = vmatpush.msra.mxu0 %v2636
    %v2638 = vand.u32 %v1289, 4294901760
    %2639 = vmatpush.msra.mxu0 %v2638
    %v2640 = vand.u32 %v1288, 4294901760
    %2641 = vmatpush.msra.mxu0 %v2640
    %v2642 = vand.u32 %v2070, 4294901760
    %v2643 = vsub.f32 %v2070, %v2642
    %v2644 = vand.u32 %v2643, 4294901760
    %2645 = vmatmul.f32.gmra.mxu0 %v2644
    %v2646 = vpop.f32.mrf.mxu0
    %v2647 = vadd.f32 %v2608, %v2646
    %2648 = vdwg.mxu0
    %v2649 = vand.u32 %v1303, 4294901760
    %v2650 = vsub.f32 %v1303, %v2649
    %v2651 = vand.u32 %v2650, 4294901760
    %2652 = vmatpush.msra.mxu0 %v2651
    %v2653 = vand.u32 %v1302, 4294901760
    %v2654 = vsub.f32 %v1302, %v2653
    %v2655 = vand.u32 %v2654, 4294901760
    %2656 = vmatpush.msra.mxu0 %v2655
    %v2657 = vand.u32 %v1301, 4294901760
    %v2658 = vsub.f32 %v1301, %v2657
    %v2659 = vand.u32 %v2658, 4294901760
    %2660 = vmatpush.msra.mxu0 %v2659
    %v2661 = vand.u32 %v1300, 4294901760
    %v2662 = vsub.f32 %v1300, %v2661
    %v2663 = vand.u32 %v2662, 4294901760
    %2664 = vmatpush.msra.mxu0 %v2663
    %v2665 = vand.u32 %v1299, 4294901760
    %v2666 = vsub.f32 %v1299, %v2665
    %v2667 = vand.u32 %v2666, 4294901760
    %2668 = vmatpush.msra.mxu0 %v2667
    %v2669 = vand.u32 %v1298, 4294901760
    %v2670 = vsub.f32 %v1298, %v2669
    %v2671 = vand.u32 %v2670, 4294901760
    %2672 = vmatpush.msra.mxu0 %v2671
    %v2673 = vand.u32 %v1297, 4294901760
    %v2674 = vsub.f32 %v1297, %v2673
    %v2675 = vand.u32 %v2674, 4294901760
    %2676 = vmatpush.msra.mxu0 %v2675
    %v2677 = vand.u32 %v1296, 4294901760
    %v2678 = vsub.f32 %v1296, %v2677
    %v2679 = vand.u32 %v2678, 4294901760
    %2680 = vmatpush.msra.mxu0 %v2679
    %v2681 = vand.u32 %v1295, 4294901760
    %v2682 = vsub.f32 %v1295, %v2681
    %v2683 = vand.u32 %v2682, 4294901760
    %2684 = vmatpush.msra.mxu0 %v2683
    %v2685 = vand.u32 %v1294, 4294901760
    %v2686 = vsub.f32 %v1294, %v2685
    %v2687 = vand.u32 %v2686, 4294901760
    %2688 = vmatpush.msra.mxu0 %v2687
    %v2689 = vand.u32 %v1293, 4294901760
    %v2690 = vsub.f32 %v1293, %v2689
    %v2691 = vand.u32 %v2690, 4294901760
    %2692 = vmatpush.msra.mxu0 %v2691
    %v2693 = vand.u32 %v1292, 4294901760
    %v2694 = vsub.f32 %v1292, %v2693
    %v2695 = vand.u32 %v2694, 4294901760
    %2696 = vmatpush.msra.mxu0 %v2695
    %v2697 = vand.u32 %v1291, 4294901760
    %v2698 = vsub.f32 %v1291, %v2697
    %v2699 = vand.u32 %v2698, 4294901760
    %2700 = vmatpush.msra.mxu0 %v2699
    %v2701 = vand.u32 %v1290, 4294901760
    %v2702 = vsub.f32 %v1290, %v2701
    %v2703 = vand.u32 %v2702, 4294901760
    %2704 = vmatpush.msra.mxu0 %v2703
    %v2705 = vand.u32 %v1289, 4294901760
    %v2706 = vsub.f32 %v1289, %v2705
    %v2707 = vand.u32 %v2706, 4294901760
    %2708 = vmatpush.msra.mxu0 %v2707
    %v2709 = vand.u32 %v1288, 4294901760
    %v2710 = vsub.f32 %v1288, %v2709
    %v2711 = vand.u32 %v2710, 4294901760
    %2712 = vmatpush.msra.mxu0 %v2711
    %v2713 = vand.u32 %v2070, 4294901760
    %2714 = vmatmul.f32.gmra.mxu0 %v2713
    %v2715 = vpop.f32.mrf.mxu0
    %v2716 = vadd.f32 %v2647, %v2715
    %2717 = vdwg.mxu0
    %v2718 = vand.u32 %v1303, 4294901760
    %2719 = vmatpush.msra.mxu0 %v2718
    %v2720 = vand.u32 %v1302, 4294901760
    %2721 = vmatpush.msra.mxu0 %v2720
    %v2722 = vand.u32 %v1301, 4294901760
    %2723 = vmatpush.msra.mxu0 %v2722
    %v2724 = vand.u32 %v1300, 4294901760
    %2725 = vmatpush.msra.mxu0 %v2724
    %v2726 = vand.u32 %v1299, 4294901760
    %2727 = vmatpush.msra.mxu0 %v2726
    %v2728 = vand.u32 %v1298, 4294901760
    %2729 = vmatpush.msra.mxu0 %v2728
    %v2730 = vand.u32 %v1297, 4294901760
    %2731 = vmatpush.msra.mxu0 %v2730
    %v2732 = vand.u32 %v1296, 4294901760
    %2733 = vmatpush.msra.mxu0 %v2732
    %v2734 = vand.u32 %v1295, 4294901760
    %2735 = vmatpush.msra.mxu0 %v2734
    %v2736 = vand.u32 %v1294, 4294901760
    %2737 = vmatpush.msra.mxu0 %v2736
    %v2738 = vand.u32 %v1293, 4294901760
    %2739 = vmatpush.msra.mxu0 %v2738
    %v2740 = vand.u32 %v1292, 4294901760
    %2741 = vmatpush.msra.mxu0 %v2740
    %v2742 = vand.u32 %v1291, 4294901760
    %2743 = vmatpush.msra.mxu0 %v2742
    %v2744 = vand.u32 %v1290, 4294901760
    %2745 = vmatpush.msra.mxu0 %v2744
    %v2746 = vand.u32 %v1289, 4294901760
    %2747 = vmatpush.msra.mxu0 %v2746
    %v2748 = vand.u32 %v1288, 4294901760
    %2749 = vmatpush.msra.mxu0 %v2748
    %v2750 = vand.u32 %v2070, 4294901760
    %2751 = vmatmul.f32.gmra.mxu0 %v2750
    %v2752 = vpop.f32.mrf.mxu0
    %v2753 = vadd.f32 %v2716, %v2752
    %2754 = vdwg.mxu0
    %v2755 = vperm.slane %v1379, 0
    %v2756 = vperm.slane %v1379, 1
    %v2759 = vand.u32 %v1319, 4294901760
    %2760 = vmatpush.msra.mxu0 %v2759
    %v2761 = vand.u32 %v1318, 4294901760
    %2762 = vmatpush.msra.mxu0 %v2761
    %v2763 = vand.u32 %v1317, 4294901760
    %2764 = vmatpush.msra.mxu0 %v2763
    %v2765 = vand.u32 %v1316, 4294901760
    %2766 = vmatpush.msra.mxu0 %v2765
    %v2767 = vand.u32 %v1315, 4294901760
    %2768 = vmatpush.msra.mxu0 %v2767
    %v2769 = vand.u32 %v1314, 4294901760
    %2770 = vmatpush.msra.mxu0 %v2769
    %v2771 = vand.u32 %v1313, 4294901760
    %2772 = vmatpush.msra.mxu0 %v2771
    %v2773 = vand.u32 %v1312, 4294901760
    %2774 = vmatpush.msra.mxu0 %v2773
    %v2775 = vand.u32 %v1311, 4294901760
    %2776 = vmatpush.msra.mxu0 %v2775
    %v2777 = vand.u32 %v1310, 4294901760
    %2778 = vmatpush.msra.mxu0 %v2777
    %v2779 = vand.u32 %v1309, 4294901760
    %2780 = vmatpush.msra.mxu0 %v2779
    %v2781 = vand.u32 %v1308, 4294901760
    %2782 = vmatpush.msra.mxu0 %v2781
    %v2783 = vand.u32 %v1307, 4294901760
    %2784 = vmatpush.msra.mxu0 %v2783
    %v2785 = vand.u32 %v1306, 4294901760
    %2786 = vmatpush.msra.mxu0 %v2785
    %v2787 = vand.u32 %v1305, 4294901760
    %2788 = vmatpush.msra.mxu0 %v2787
    %v2789 = vand.u32 %v1304, 4294901760
    %2790 = vmatpush.msra.mxu0 %v2789
    %v2791 = vand.u32 %v2755, 4294901760
    %v2792 = vsub.f32 %v2755, %v2791
    %v2793 = vand.u32 %v2792, 4294901760
    %v2794 = vsub.f32 %v2792, %v2793
    %v2795 = vand.u32 %v2794, 4294901760
    %2796 = vmatmul.f32.gmra.mxu0 %v2795
    %v2797 = vpop.f32.mrf.mxu0
    %v2798 = vadd.f32 0.0, %v2797
    %2799 = vdwg.mxu0
    %v2800 = vand.u32 %v1319, 4294901760
    %v2801 = vsub.f32 %v1319, %v2800
    %v2802 = vand.u32 %v2801, 4294901760
    %v2803 = vsub.f32 %v2801, %v2802
    %v2804 = vand.u32 %v2803, 4294901760
    %2805 = vmatpush.msra.mxu0 %v2804
    %v2806 = vand.u32 %v1318, 4294901760
    %v2807 = vsub.f32 %v1318, %v2806
    %v2808 = vand.u32 %v2807, 4294901760
    %v2809 = vsub.f32 %v2807, %v2808
    %v2810 = vand.u32 %v2809, 4294901760
    %2811 = vmatpush.msra.mxu0 %v2810
    %v2812 = vand.u32 %v1317, 4294901760
    %v2813 = vsub.f32 %v1317, %v2812
    %v2814 = vand.u32 %v2813, 4294901760
    %v2815 = vsub.f32 %v2813, %v2814
    %v2816 = vand.u32 %v2815, 4294901760
    %2817 = vmatpush.msra.mxu0 %v2816
    %v2818 = vand.u32 %v1316, 4294901760
    %v2819 = vsub.f32 %v1316, %v2818
    %v2820 = vand.u32 %v2819, 4294901760
    %v2821 = vsub.f32 %v2819, %v2820
    %v2822 = vand.u32 %v2821, 4294901760
    %2823 = vmatpush.msra.mxu0 %v2822
    %v2824 = vand.u32 %v1315, 4294901760
    %v2825 = vsub.f32 %v1315, %v2824
    %v2826 = vand.u32 %v2825, 4294901760
    %v2827 = vsub.f32 %v2825, %v2826
    %v2828 = vand.u32 %v2827, 4294901760
    %2829 = vmatpush.msra.mxu0 %v2828
    %v2830 = vand.u32 %v1314, 4294901760
    %v2831 = vsub.f32 %v1314, %v2830
    %v2832 = vand.u32 %v2831, 4294901760
    %v2833 = vsub.f32 %v2831, %v2832
    %v2834 = vand.u32 %v2833, 4294901760
    %2835 = vmatpush.msra.mxu0 %v2834
    %v2836 = vand.u32 %v1313, 4294901760
    %v2837 = vsub.f32 %v1313, %v2836
    %v2838 = vand.u32 %v2837, 4294901760
    %v2839 = vsub.f32 %v2837, %v2838
    %v2840 = vand.u32 %v2839, 4294901760
    %2841 = vmatpush.msra.mxu0 %v2840
    %v2842 = vand.u32 %v1312, 4294901760
    %v2843 = vsub.f32 %v1312, %v2842
    %v2844 = vand.u32 %v2843, 4294901760
    %v2845 = vsub.f32 %v2843, %v2844
    %v2846 = vand.u32 %v2845, 4294901760
    %2847 = vmatpush.msra.mxu0 %v2846
    %v2848 = vand.u32 %v1311, 4294901760
    %v2849 = vsub.f32 %v1311, %v2848
    %v2850 = vand.u32 %v2849, 4294901760
    %v2851 = vsub.f32 %v2849, %v2850
    %v2852 = vand.u32 %v2851, 4294901760
    %2853 = vmatpush.msra.mxu0 %v2852
    %v2854 = vand.u32 %v1310, 4294901760
    %v2855 = vsub.f32 %v1310, %v2854
    %v2856 = vand.u32 %v2855, 4294901760
    %v2857 = vsub.f32 %v2855, %v2856
    %v2858 = vand.u32 %v2857, 4294901760
    %2859 = vmatpush.msra.mxu0 %v2858
    %v2860 = vand.u32 %v1309, 4294901760
    %v2861 = vsub.f32 %v1309, %v2860
    %v2862 = vand.u32 %v2861, 4294901760
    %v2863 = vsub.f32 %v2861, %v2862
    %v2864 = vand.u32 %v2863, 4294901760
    %2865 = vmatpush.msra.mxu0 %v2864
    %v2866 = vand.u32 %v1308, 4294901760
    %v2867 = vsub.f32 %v1308, %v2866
    %v2868 = vand.u32 %v2867, 4294901760
    %v2869 = vsub.f32 %v2867, %v2868
    %v2870 = vand.u32 %v2869, 4294901760
    %2871 = vmatpush.msra.mxu0 %v2870
    %v2872 = vand.u32 %v1307, 4294901760
    %v2873 = vsub.f32 %v1307, %v2872
    %v2874 = vand.u32 %v2873, 4294901760
    %v2875 = vsub.f32 %v2873, %v2874
    %v2876 = vand.u32 %v2875, 4294901760
    %2877 = vmatpush.msra.mxu0 %v2876
    %v2878 = vand.u32 %v1306, 4294901760
    %v2879 = vsub.f32 %v1306, %v2878
    %v2880 = vand.u32 %v2879, 4294901760
    %v2881 = vsub.f32 %v2879, %v2880
    %v2882 = vand.u32 %v2881, 4294901760
    %2883 = vmatpush.msra.mxu0 %v2882
    %v2884 = vand.u32 %v1305, 4294901760
    %v2885 = vsub.f32 %v1305, %v2884
    %v2886 = vand.u32 %v2885, 4294901760
    %v2887 = vsub.f32 %v2885, %v2886
    %v2888 = vand.u32 %v2887, 4294901760
    %2889 = vmatpush.msra.mxu0 %v2888
    %v2890 = vand.u32 %v1304, 4294901760
    %v2891 = vsub.f32 %v1304, %v2890
    %v2892 = vand.u32 %v2891, 4294901760
    %v2893 = vsub.f32 %v2891, %v2892
    %v2894 = vand.u32 %v2893, 4294901760
    %2895 = vmatpush.msra.mxu0 %v2894
    %v2896 = vand.u32 %v2755, 4294901760
    %2897 = vmatmul.f32.gmra.mxu0 %v2896
    %v2898 = vpop.f32.mrf.mxu0
    %v2899 = vadd.f32 %v2798, %v2898
    %2900 = vdwg.mxu0
    %v2901 = vand.u32 %v1319, 4294901760
    %v2902 = vsub.f32 %v1319, %v2901
    %2903 = vmatpush.msra.mxu0 %v2902
    %v2904 = vand.u32 %v1318, 4294901760
    %v2905 = vsub.f32 %v1318, %v2904
    %2906 = vmatpush.msra.mxu0 %v2905
    %v2907 = vand.u32 %v1317, 4294901760
    %v2908 = vsub.f32 %v1317, %v2907
    %2909 = vmatpush.msra.mxu0 %v2908
    %v2910 = vand.u32 %v1316, 4294901760
    %v2911 = vsub.f32 %v1316, %v2910
    %2912 = vmatpush.msra.mxu0 %v2911
    %v2913 = vand.u32 %v1315, 4294901760
    %v2914 = vsub.f32 %v1315, %v2913
    %2915 = vmatpush.msra.mxu0 %v2914
    %v2916 = vand.u32 %v1314, 4294901760
    %v2917 = vsub.f32 %v1314, %v2916
    %2918 = vmatpush.msra.mxu0 %v2917
    %v2919 = vand.u32 %v1313, 4294901760
    %v2920 = vsub.f32 %v1313, %v2919
    %2921 = vmatpush.msra.mxu0 %v2920
    %v2922 = vand.u32 %v1312, 4294901760
    %v2923 = vsub.f32 %v1312, %v2922
    %2924 = vmatpush.msra.mxu0 %v2923
    %v2925 = vand.u32 %v1311, 4294901760
    %v2926 = vsub.f32 %v1311, %v2925
    %2927 = vmatpush.msra.mxu0 %v2926
    %v2928 = vand.u32 %v1310, 4294901760
    %v2929 = vsub.f32 %v1310, %v2928
    %2930 = vmatpush.msra.mxu0 %v2929
    %v2931 = vand.u32 %v1309, 4294901760
    %v2932 = vsub.f32 %v1309, %v2931
    %2933 = vmatpush.msra.mxu0 %v2932
    %v2934 = vand.u32 %v1308, 4294901760
    %v2935 = vsub.f32 %v1308, %v2934
    %2936 = vmatpush.msra.mxu0 %v2935
    %v2937 = vand.u32 %v1307, 4294901760
    %v2938 = vsub.f32 %v1307, %v2937
    %2939 = vmatpush.msra.mxu0 %v2938
    %v2940 = vand.u32 %v1306, 4294901760
    %v2941 = vsub.f32 %v1306, %v2940
    %2942 = vmatpush.msra.mxu0 %v2941
    %v2943 = vand.u32 %v1305, 4294901760
    %v2944 = vsub.f32 %v1305, %v2943
    %2945 = vmatpush.msra.mxu0 %v2944
    %v2946 = vand.u32 %v1304, 4294901760
    %v2947 = vsub.f32 %v1304, %v2946
    %2948 = vmatpush.msra.mxu0 %v2947
    %v2949 = vand.u32 %v2755, 4294901760
    %v2950 = vsub.f32 %v2755, %v2949
    %2951 = vmatmul.f32.gmra.mxu0 %v2950
    %v2952 = vpop.f32.mrf.mxu0
    %v2953 = vadd.f32 %v2899, %v2952
    %2954 = vdwg.mxu0
    %v2955 = vand.u32 %v1319, 4294901760
    %2956 = vmatpush.msra.mxu0 %v2955
    %v2957 = vand.u32 %v1318, 4294901760
    %2958 = vmatpush.msra.mxu0 %v2957
    %v2959 = vand.u32 %v1317, 4294901760
    %2960 = vmatpush.msra.mxu0 %v2959
    %v2961 = vand.u32 %v1316, 4294901760
    %2962 = vmatpush.msra.mxu0 %v2961
    %v2963 = vand.u32 %v1315, 4294901760
    %2964 = vmatpush.msra.mxu0 %v2963
    %v2965 = vand.u32 %v1314, 4294901760
    %2966 = vmatpush.msra.mxu0 %v2965
    %v2967 = vand.u32 %v1313, 4294901760
    %2968 = vmatpush.msra.mxu0 %v2967
    %v2969 = vand.u32 %v1312, 4294901760
    %2970 = vmatpush.msra.mxu0 %v2969
    %v2971 = vand.u32 %v1311, 4294901760
    %2972 = vmatpush.msra.mxu0 %v2971
    %v2973 = vand.u32 %v1310, 4294901760
    %2974 = vmatpush.msra.mxu0 %v2973
    %v2975 = vand.u32 %v1309, 4294901760
    %2976 = vmatpush.msra.mxu0 %v2975
    %v2977 = vand.u32 %v1308, 4294901760
    %2978 = vmatpush.msra.mxu0 %v2977
    %v2979 = vand.u32 %v1307, 4294901760
    %2980 = vmatpush.msra.mxu0 %v2979
    %v2981 = vand.u32 %v1306, 4294901760
    %2982 = vmatpush.msra.mxu0 %v2981
    %v2983 = vand.u32 %v1305, 4294901760
    %2984 = vmatpush.msra.mxu0 %v2983
    %v2985 = vand.u32 %v1304, 4294901760
    %2986 = vmatpush.msra.mxu0 %v2985
    %v2987 = vand.u32 %v2755, 4294901760
    %v2988 = vsub.f32 %v2755, %v2987
    %v2989 = vand.u32 %v2988, 4294901760
    %2990 = vmatmul.f32.gmra.mxu0 %v2989
    %v2991 = vpop.f32.mrf.mxu0
    %v2992 = vadd.f32 %v2953, %v2991
    %2993 = vdwg.mxu0
    %v2994 = vand.u32 %v1319, 4294901760
    %v2995 = vsub.f32 %v1319, %v2994
    %v2996 = vand.u32 %v2995, 4294901760
    %2997 = vmatpush.msra.mxu0 %v2996
    %v2998 = vand.u32 %v1318, 4294901760
    %v2999 = vsub.f32 %v1318, %v2998
    %v3000 = vand.u32 %v2999, 4294901760
    %3001 = vmatpush.msra.mxu0 %v3000
    %v3002 = vand.u32 %v1317, 4294901760
    %v3003 = vsub.f32 %v1317, %v3002
    %v3004 = vand.u32 %v3003, 4294901760
    %3005 = vmatpush.msra.mxu0 %v3004
    %v3006 = vand.u32 %v1316, 4294901760
    %v3007 = vsub.f32 %v1316, %v3006
    %v3008 = vand.u32 %v3007, 4294901760
    %3009 = vmatpush.msra.mxu0 %v3008
    %v3010 = vand.u32 %v1315, 4294901760
    %v3011 = vsub.f32 %v1315, %v3010
    %v3012 = vand.u32 %v3011, 4294901760
    %3013 = vmatpush.msra.mxu0 %v3012
    %v3014 = vand.u32 %v1314, 4294901760
    %v3015 = vsub.f32 %v1314, %v3014
    %v3016 = vand.u32 %v3015, 4294901760
    %3017 = vmatpush.msra.mxu0 %v3016
    %v3018 = vand.u32 %v1313, 4294901760
    %v3019 = vsub.f32 %v1313, %v3018
    %v3020 = vand.u32 %v3019, 4294901760
    %3021 = vmatpush.msra.mxu0 %v3020
    %v3022 = vand.u32 %v1312, 4294901760
    %v3023 = vsub.f32 %v1312, %v3022
    %v3024 = vand.u32 %v3023, 4294901760
    %3025 = vmatpush.msra.mxu0 %v3024
    %v3026 = vand.u32 %v1311, 4294901760
    %v3027 = vsub.f32 %v1311, %v3026
    %v3028 = vand.u32 %v3027, 4294901760
    %3029 = vmatpush.msra.mxu0 %v3028
    %v3030 = vand.u32 %v1310, 4294901760
    %v3031 = vsub.f32 %v1310, %v3030
    %v3032 = vand.u32 %v3031, 4294901760
    %3033 = vmatpush.msra.mxu0 %v3032
    %v3034 = vand.u32 %v1309, 4294901760
    %v3035 = vsub.f32 %v1309, %v3034
    %v3036 = vand.u32 %v3035, 4294901760
    %3037 = vmatpush.msra.mxu0 %v3036
    %v3038 = vand.u32 %v1308, 4294901760
    %v3039 = vsub.f32 %v1308, %v3038
    %v3040 = vand.u32 %v3039, 4294901760
    %3041 = vmatpush.msra.mxu0 %v3040
    %v3042 = vand.u32 %v1307, 4294901760
    %v3043 = vsub.f32 %v1307, %v3042
    %v3044 = vand.u32 %v3043, 4294901760
    %3045 = vmatpush.msra.mxu0 %v3044
    %v3046 = vand.u32 %v1306, 4294901760
    %v3047 = vsub.f32 %v1306, %v3046
    %v3048 = vand.u32 %v3047, 4294901760
    %3049 = vmatpush.msra.mxu0 %v3048
    %v3050 = vand.u32 %v1305, 4294901760
    %v3051 = vsub.f32 %v1305, %v3050
    %v3052 = vand.u32 %v3051, 4294901760
    %3053 = vmatpush.msra.mxu0 %v3052
    %v3054 = vand.u32 %v1304, 4294901760
    %v3055 = vsub.f32 %v1304, %v3054
    %v3056 = vand.u32 %v3055, 4294901760
    %3057 = vmatpush.msra.mxu0 %v3056
    %v3058 = vand.u32 %v2755, 4294901760
    %3059 = vmatmul.f32.gmra.mxu0 %v3058
    %v3060 = vpop.f32.mrf.mxu0
    %v3061 = vadd.f32 %v2992, %v3060
    %3062 = vdwg.mxu0
    %v3063 = vand.u32 %v1319, 4294901760
    %3064 = vmatpush.msra.mxu0 %v3063
    %v3065 = vand.u32 %v1318, 4294901760
    %3066 = vmatpush.msra.mxu0 %v3065
    %v3067 = vand.u32 %v1317, 4294901760
    %3068 = vmatpush.msra.mxu0 %v3067
    %v3069 = vand.u32 %v1316, 4294901760
    %3070 = vmatpush.msra.mxu0 %v3069
    %v3071 = vand.u32 %v1315, 4294901760
    %3072 = vmatpush.msra.mxu0 %v3071
    %v3073 = vand.u32 %v1314, 4294901760
    %3074 = vmatpush.msra.mxu0 %v3073
    %v3075 = vand.u32 %v1313, 4294901760
    %3076 = vmatpush.msra.mxu0 %v3075
    %v3077 = vand.u32 %v1312, 4294901760
    %3078 = vmatpush.msra.mxu0 %v3077
    %v3079 = vand.u32 %v1311, 4294901760
    %3080 = vmatpush.msra.mxu0 %v3079
    %v3081 = vand.u32 %v1310, 4294901760
    %3082 = vmatpush.msra.mxu0 %v3081
    %v3083 = vand.u32 %v1309, 4294901760
    %3084 = vmatpush.msra.mxu0 %v3083
    %v3085 = vand.u32 %v1308, 4294901760
    %3086 = vmatpush.msra.mxu0 %v3085
    %v3087 = vand.u32 %v1307, 4294901760
    %3088 = vmatpush.msra.mxu0 %v3087
    %v3089 = vand.u32 %v1306, 4294901760
    %3090 = vmatpush.msra.mxu0 %v3089
    %v3091 = vand.u32 %v1305, 4294901760
    %3092 = vmatpush.msra.mxu0 %v3091
    %v3093 = vand.u32 %v1304, 4294901760
    %3094 = vmatpush.msra.mxu0 %v3093
    %v3095 = vand.u32 %v2755, 4294901760
    %3096 = vmatmul.f32.gmra.mxu0 %v3095
    %v3097 = vpop.f32.mrf.mxu0
    %v3098 = vadd.f32 %v3061, %v3097
    %3099 = vdwg.mxu0
    %v3100 = vand.u32 %v1335, 4294901760
    %3101 = vmatpush.msra.mxu0 %v3100
    %v3102 = vand.u32 %v1334, 4294901760
    %3103 = vmatpush.msra.mxu0 %v3102
    %v3104 = vand.u32 %v1333, 4294901760
    %3105 = vmatpush.msra.mxu0 %v3104
    %v3106 = vand.u32 %v1332, 4294901760
    %3107 = vmatpush.msra.mxu0 %v3106
    %v3108 = vand.u32 %v1331, 4294901760
    %3109 = vmatpush.msra.mxu0 %v3108
    %v3110 = vand.u32 %v1330, 4294901760
    %3111 = vmatpush.msra.mxu0 %v3110
    %v3112 = vand.u32 %v1329, 4294901760
    %3113 = vmatpush.msra.mxu0 %v3112
    %v3114 = vand.u32 %v1328, 4294901760
    %3115 = vmatpush.msra.mxu0 %v3114
    %v3116 = vand.u32 %v1327, 4294901760
    %3117 = vmatpush.msra.mxu0 %v3116
    %v3118 = vand.u32 %v1326, 4294901760
    %3119 = vmatpush.msra.mxu0 %v3118
    %v3120 = vand.u32 %v1325, 4294901760
    %3121 = vmatpush.msra.mxu0 %v3120
    %v3122 = vand.u32 %v1324, 4294901760
    %3123 = vmatpush.msra.mxu0 %v3122
    %v3124 = vand.u32 %v1323, 4294901760
    %3125 = vmatpush.msra.mxu0 %v3124
    %v3126 = vand.u32 %v1322, 4294901760
    %3127 = vmatpush.msra.mxu0 %v3126
    %v3128 = vand.u32 %v1321, 4294901760
    %3129 = vmatpush.msra.mxu0 %v3128
    %v3130 = vand.u32 %v1320, 4294901760
    %3131 = vmatpush.msra.mxu0 %v3130
    %v3132 = vand.u32 %v2756, 4294901760
    %v3133 = vsub.f32 %v2756, %v3132
    %v3134 = vand.u32 %v3133, 4294901760
    %v3135 = vsub.f32 %v3133, %v3134
    %v3136 = vand.u32 %v3135, 4294901760
    %3137 = vmatmul.f32.gmra.mxu0 %v3136
    %v3138 = vpop.f32.mrf.mxu0
    %v3139 = vadd.f32 %v3098, %v3138
    %3140 = vdwg.mxu0
    %v3141 = vand.u32 %v1335, 4294901760
    %v3142 = vsub.f32 %v1335, %v3141
    %v3143 = vand.u32 %v3142, 4294901760
    %v3144 = vsub.f32 %v3142, %v3143
    %v3145 = vand.u32 %v3144, 4294901760
    %3146 = vmatpush.msra.mxu0 %v3145
    %v3147 = vand.u32 %v1334, 4294901760
    %v3148 = vsub.f32 %v1334, %v3147
    %v3149 = vand.u32 %v3148, 4294901760
    %v3150 = vsub.f32 %v3148, %v3149
    %v3151 = vand.u32 %v3150, 4294901760
    %3152 = vmatpush.msra.mxu0 %v3151
    %v3153 = vand.u32 %v1333, 4294901760
    %v3154 = vsub.f32 %v1333, %v3153
    %v3155 = vand.u32 %v3154, 4294901760
    %v3156 = vsub.f32 %v3154, %v3155
    %v3157 = vand.u32 %v3156, 4294901760
    %3158 = vmatpush.msra.mxu0 %v3157
    %v3159 = vand.u32 %v1332, 4294901760
    %v3160 = vsub.f32 %v1332, %v3159
    %v3161 = vand.u32 %v3160, 4294901760
    %v3162 = vsub.f32 %v3160, %v3161
    %v3163 = vand.u32 %v3162, 4294901760
    %3164 = vmatpush.msra.mxu0 %v3163
    %v3165 = vand.u32 %v1331, 4294901760
    %v3166 = vsub.f32 %v1331, %v3165
    %v3167 = vand.u32 %v3166, 4294901760
    %v3168 = vsub.f32 %v3166, %v3167
    %v3169 = vand.u32 %v3168, 4294901760
    %3170 = vmatpush.msra.mxu0 %v3169
    %v3171 = vand.u32 %v1330, 4294901760
    %v3172 = vsub.f32 %v1330, %v3171
    %v3173 = vand.u32 %v3172, 4294901760
    %v3174 = vsub.f32 %v3172, %v3173
    %v3175 = vand.u32 %v3174, 4294901760
    %3176 = vmatpush.msra.mxu0 %v3175
    %v3177 = vand.u32 %v1329, 4294901760
    %v3178 = vsub.f32 %v1329, %v3177
    %v3179 = vand.u32 %v3178, 4294901760
    %v3180 = vsub.f32 %v3178, %v3179
    %v3181 = vand.u32 %v3180, 4294901760
    %3182 = vmatpush.msra.mxu0 %v3181
    %v3183 = vand.u32 %v1328, 4294901760
    %v3184 = vsub.f32 %v1328, %v3183
    %v3185 = vand.u32 %v3184, 4294901760
    %v3186 = vsub.f32 %v3184, %v3185
    %v3187 = vand.u32 %v3186, 4294901760
    %3188 = vmatpush.msra.mxu0 %v3187
    %v3189 = vand.u32 %v1327, 4294901760
    %v3190 = vsub.f32 %v1327, %v3189
    %v3191 = vand.u32 %v3190, 4294901760
    %v3192 = vsub.f32 %v3190, %v3191
    %v3193 = vand.u32 %v3192, 4294901760
    %3194 = vmatpush.msra.mxu0 %v3193
    %v3195 = vand.u32 %v1326, 4294901760
    %v3196 = vsub.f32 %v1326, %v3195
    %v3197 = vand.u32 %v3196, 4294901760
    %v3198 = vsub.f32 %v3196, %v3197
    %v3199 = vand.u32 %v3198, 4294901760
    %3200 = vmatpush.msra.mxu0 %v3199
    %v3201 = vand.u32 %v1325, 4294901760
    %v3202 = vsub.f32 %v1325, %v3201
    %v3203 = vand.u32 %v3202, 4294901760
    %v3204 = vsub.f32 %v3202, %v3203
    %v3205 = vand.u32 %v3204, 4294901760
    %3206 = vmatpush.msra.mxu0 %v3205
    %v3207 = vand.u32 %v1324, 4294901760
    %v3208 = vsub.f32 %v1324, %v3207
    %v3209 = vand.u32 %v3208, 4294901760
    %v3210 = vsub.f32 %v3208, %v3209
    %v3211 = vand.u32 %v3210, 4294901760
    %3212 = vmatpush.msra.mxu0 %v3211
    %v3213 = vand.u32 %v1323, 4294901760
    %v3214 = vsub.f32 %v1323, %v3213
    %v3215 = vand.u32 %v3214, 4294901760
    %v3216 = vsub.f32 %v3214, %v3215
    %v3217 = vand.u32 %v3216, 4294901760
    %3218 = vmatpush.msra.mxu0 %v3217
    %v3219 = vand.u32 %v1322, 4294901760
    %v3220 = vsub.f32 %v1322, %v3219
    %v3221 = vand.u32 %v3220, 4294901760
    %v3222 = vsub.f32 %v3220, %v3221
    %v3223 = vand.u32 %v3222, 4294901760
    %3224 = vmatpush.msra.mxu0 %v3223
    %v3225 = vand.u32 %v1321, 4294901760
    %v3226 = vsub.f32 %v1321, %v3225
    %v3227 = vand.u32 %v3226, 4294901760
    %v3228 = vsub.f32 %v3226, %v3227
    %v3229 = vand.u32 %v3228, 4294901760
    %3230 = vmatpush.msra.mxu0 %v3229
    %v3231 = vand.u32 %v1320, 4294901760
    %v3232 = vsub.f32 %v1320, %v3231
    %v3233 = vand.u32 %v3232, 4294901760
    %v3234 = vsub.f32 %v3232, %v3233
    %v3235 = vand.u32 %v3234, 4294901760
    %3236 = vmatpush.msra.mxu0 %v3235
    %v3237 = vand.u32 %v2756, 4294901760
    %3238 = vmatmul.f32.gmra.mxu0 %v3237
    %v3239 = vpop.f32.mrf.mxu0
    %v3240 = vadd.f32 %v3139, %v3239
    %3241 = vdwg.mxu0
    %v3242 = vand.u32 %v1335, 4294901760
    %v3243 = vsub.f32 %v1335, %v3242
    %3244 = vmatpush.msra.mxu0 %v3243
    %v3245 = vand.u32 %v1334, 4294901760
    %v3246 = vsub.f32 %v1334, %v3245
    %3247 = vmatpush.msra.mxu0 %v3246
    %v3248 = vand.u32 %v1333, 4294901760
    %v3249 = vsub.f32 %v1333, %v3248
    %3250 = vmatpush.msra.mxu0 %v3249
    %v3251 = vand.u32 %v1332, 4294901760
    %v3252 = vsub.f32 %v1332, %v3251
    %3253 = vmatpush.msra.mxu0 %v3252
    %v3254 = vand.u32 %v1331, 4294901760
    %v3255 = vsub.f32 %v1331, %v3254
    %3256 = vmatpush.msra.mxu0 %v3255
    %v3257 = vand.u32 %v1330, 4294901760
    %v3258 = vsub.f32 %v1330, %v3257
    %3259 = vmatpush.msra.mxu0 %v3258
    %v3260 = vand.u32 %v1329, 4294901760
    %v3261 = vsub.f32 %v1329, %v3260
    %3262 = vmatpush.msra.mxu0 %v3261
    %v3263 = vand.u32 %v1328, 4294901760
    %v3264 = vsub.f32 %v1328, %v3263
    %3265 = vmatpush.msra.mxu0 %v3264
    %v3266 = vand.u32 %v1327, 4294901760
    %v3267 = vsub.f32 %v1327, %v3266
    %3268 = vmatpush.msra.mxu0 %v3267
    %v3269 = vand.u32 %v1326, 4294901760
    %v3270 = vsub.f32 %v1326, %v3269
    %3271 = vmatpush.msra.mxu0 %v3270
    %v3272 = vand.u32 %v1325, 4294901760
    %v3273 = vsub.f32 %v1325, %v3272
    %3274 = vmatpush.msra.mxu0 %v3273
    %v3275 = vand.u32 %v1324, 4294901760
    %v3276 = vsub.f32 %v1324, %v3275
    %3277 = vmatpush.msra.mxu0 %v3276
    %v3278 = vand.u32 %v1323, 4294901760
    %v3279 = vsub.f32 %v1323, %v3278
    %3280 = vmatpush.msra.mxu0 %v3279
    %v3281 = vand.u32 %v1322, 4294901760
    %v3282 = vsub.f32 %v1322, %v3281
    %3283 = vmatpush.msra.mxu0 %v3282
    %v3284 = vand.u32 %v1321, 4294901760
    %v3285 = vsub.f32 %v1321, %v3284
    %3286 = vmatpush.msra.mxu0 %v3285
    %v3287 = vand.u32 %v1320, 4294901760
    %v3288 = vsub.f32 %v1320, %v3287
    %3289 = vmatpush.msra.mxu0 %v3288
    %v3290 = vand.u32 %v2756, 4294901760
    %v3291 = vsub.f32 %v2756, %v3290
    %3292 = vmatmul.f32.gmra.mxu0 %v3291
    %v3293 = vpop.f32.mrf.mxu0
    %v3294 = vadd.f32 %v3240, %v3293
    %3295 = vdwg.mxu0
    %v3296 = vand.u32 %v1335, 4294901760
    %3297 = vmatpush.msra.mxu0 %v3296
    %v3298 = vand.u32 %v1334, 4294901760
    %3299 = vmatpush.msra.mxu0 %v3298
    %v3300 = vand.u32 %v1333, 4294901760
    %3301 = vmatpush.msra.mxu0 %v3300
    %v3302 = vand.u32 %v1332, 4294901760
    %3303 = vmatpush.msra.mxu0 %v3302
    %v3304 = vand.u32 %v1331, 4294901760
    %3305 = vmatpush.msra.mxu0 %v3304
    %v3306 = vand.u32 %v1330, 4294901760
    %3307 = vmatpush.msra.mxu0 %v3306
    %v3308 = vand.u32 %v1329, 4294901760
    %3309 = vmatpush.msra.mxu0 %v3308
    %v3310 = vand.u32 %v1328, 4294901760
    %3311 = vmatpush.msra.mxu0 %v3310
    %v3312 = vand.u32 %v1327, 4294901760
    %3313 = vmatpush.msra.mxu0 %v3312
    %v3314 = vand.u32 %v1326, 4294901760
    %3315 = vmatpush.msra.mxu0 %v3314
    %v3316 = vand.u32 %v1325, 4294901760
    %3317 = vmatpush.msra.mxu0 %v3316
    %v3318 = vand.u32 %v1324, 4294901760
    %3319 = vmatpush.msra.mxu0 %v3318
    %v3320 = vand.u32 %v1323, 4294901760
    %3321 = vmatpush.msra.mxu0 %v3320
    %v3322 = vand.u32 %v1322, 4294901760
    %3323 = vmatpush.msra.mxu0 %v3322
    %v3324 = vand.u32 %v1321, 4294901760
    %3325 = vmatpush.msra.mxu0 %v3324
    %v3326 = vand.u32 %v1320, 4294901760
    %3327 = vmatpush.msra.mxu0 %v3326
    %v3328 = vand.u32 %v2756, 4294901760
    %v3329 = vsub.f32 %v2756, %v3328
    %v3330 = vand.u32 %v3329, 4294901760
    %3331 = vmatmul.f32.gmra.mxu0 %v3330
    %v3332 = vpop.f32.mrf.mxu0
    %v3333 = vadd.f32 %v3294, %v3332
    %3334 = vdwg.mxu0
    %v3335 = vand.u32 %v1335, 4294901760
    %v3336 = vsub.f32 %v1335, %v3335
    %v3337 = vand.u32 %v3336, 4294901760
    %3338 = vmatpush.msra.mxu0 %v3337
    %v3339 = vand.u32 %v1334, 4294901760
    %v3340 = vsub.f32 %v1334, %v3339
    %v3341 = vand.u32 %v3340, 4294901760
    %3342 = vmatpush.msra.mxu0 %v3341
    %v3343 = vand.u32 %v1333, 4294901760
    %v3344 = vsub.f32 %v1333, %v3343
    %v3345 = vand.u32 %v3344, 4294901760
    %3346 = vmatpush.msra.mxu0 %v3345
    %v3347 = vand.u32 %v1332, 4294901760
    %v3348 = vsub.f32 %v1332, %v3347
    %v3349 = vand.u32 %v3348, 4294901760
    %3350 = vmatpush.msra.mxu0 %v3349
    %v3351 = vand.u32 %v1331, 4294901760
    %v3352 = vsub.f32 %v1331, %v3351
    %v3353 = vand.u32 %v3352, 4294901760
    %3354 = vmatpush.msra.mxu0 %v3353
    %v3355 = vand.u32 %v1330, 4294901760
    %v3356 = vsub.f32 %v1330, %v3355
    %v3357 = vand.u32 %v3356, 4294901760
    %3358 = vmatpush.msra.mxu0 %v3357
    %v3359 = vand.u32 %v1329, 4294901760
    %v3360 = vsub.f32 %v1329, %v3359
    %v3361 = vand.u32 %v3360, 4294901760
    %3362 = vmatpush.msra.mxu0 %v3361
    %v3363 = vand.u32 %v1328, 4294901760
    %v3364 = vsub.f32 %v1328, %v3363
    %v3365 = vand.u32 %v3364, 4294901760
    %3366 = vmatpush.msra.mxu0 %v3365
    %v3367 = vand.u32 %v1327, 4294901760
    %v3368 = vsub.f32 %v1327, %v3367
    %v3369 = vand.u32 %v3368, 4294901760
    %3370 = vmatpush.msra.mxu0 %v3369
    %v3371 = vand.u32 %v1326, 4294901760
    %v3372 = vsub.f32 %v1326, %v3371
    %v3373 = vand.u32 %v3372, 4294901760
    %3374 = vmatpush.msra.mxu0 %v3373
    %v3375 = vand.u32 %v1325, 4294901760
    %v3376 = vsub.f32 %v1325, %v3375
    %v3377 = vand.u32 %v3376, 4294901760
    %3378 = vmatpush.msra.mxu0 %v3377
    %v3379 = vand.u32 %v1324, 4294901760
    %v3380 = vsub.f32 %v1324, %v3379
    %v3381 = vand.u32 %v3380, 4294901760
    %3382 = vmatpush.msra.mxu0 %v3381
    %v3383 = vand.u32 %v1323, 4294901760
    %v3384 = vsub.f32 %v1323, %v3383
    %v3385 = vand.u32 %v3384, 4294901760
    %3386 = vmatpush.msra.mxu0 %v3385
    %v3387 = vand.u32 %v1322, 4294901760
    %v3388 = vsub.f32 %v1322, %v3387
    %v3389 = vand.u32 %v3388, 4294901760
    %3390 = vmatpush.msra.mxu0 %v3389
    %v3391 = vand.u32 %v1321, 4294901760
    %v3392 = vsub.f32 %v1321, %v3391
    %v3393 = vand.u32 %v3392, 4294901760
    %3394 = vmatpush.msra.mxu0 %v3393
    %v3395 = vand.u32 %v1320, 4294901760
    %v3396 = vsub.f32 %v1320, %v3395
    %v3397 = vand.u32 %v3396, 4294901760
    %3398 = vmatpush.msra.mxu0 %v3397
    %v3399 = vand.u32 %v2756, 4294901760
    %3400 = vmatmul.f32.gmra.mxu0 %v3399
    %v3401 = vpop.f32.mrf.mxu0
    %v3402 = vadd.f32 %v3333, %v3401
    %3403 = vdwg.mxu0
    %v3404 = vand.u32 %v1335, 4294901760
    %3405 = vmatpush.msra.mxu0 %v3404
    %v3406 = vand.u32 %v1334, 4294901760
    %3407 = vmatpush.msra.mxu0 %v3406
    %v3408 = vand.u32 %v1333, 4294901760
    %3409 = vmatpush.msra.mxu0 %v3408
    %v3410 = vand.u32 %v1332, 4294901760
    %3411 = vmatpush.msra.mxu0 %v3410
    %v3412 = vand.u32 %v1331, 4294901760
    %3413 = vmatpush.msra.mxu0 %v3412
    %v3414 = vand.u32 %v1330, 4294901760
    %3415 = vmatpush.msra.mxu0 %v3414
    %v3416 = vand.u32 %v1329, 4294901760
    %3417 = vmatpush.msra.mxu0 %v3416
    %v3418 = vand.u32 %v1328, 4294901760
    %3419 = vmatpush.msra.mxu0 %v3418
    %v3420 = vand.u32 %v1327, 4294901760
    %3421 = vmatpush.msra.mxu0 %v3420
    %v3422 = vand.u32 %v1326, 4294901760
    %3423 = vmatpush.msra.mxu0 %v3422
    %v3424 = vand.u32 %v1325, 4294901760
    %3425 = vmatpush.msra.mxu0 %v3424
    %v3426 = vand.u32 %v1324, 4294901760
    %3427 = vmatpush.msra.mxu0 %v3426
    %v3428 = vand.u32 %v1323, 4294901760
    %3429 = vmatpush.msra.mxu0 %v3428
    %v3430 = vand.u32 %v1322, 4294901760
    %3431 = vmatpush.msra.mxu0 %v3430
    %v3432 = vand.u32 %v1321, 4294901760
    %3433 = vmatpush.msra.mxu0 %v3432
    %v3434 = vand.u32 %v1320, 4294901760
    %3435 = vmatpush.msra.mxu0 %v3434
    %v3436 = vand.u32 %v2756, 4294901760
    %3437 = vmatmul.f32.gmra.mxu0 %v3436
    %v3438 = vpop.f32.mrf.mxu0
    %v3439 = vadd.f32 %v3402, %v3438
    %3440 = vdwg.mxu0
    %v3441 = vperm.slane %v1382, 0
    %v3442 = vperm.slane %v1382, 1
    %v3445 = vand.u32 %v1351, 4294901760
    %3446 = vmatpush.msra.mxu0 %v3445
    %v3447 = vand.u32 %v1350, 4294901760
    %3448 = vmatpush.msra.mxu0 %v3447
    %v3449 = vand.u32 %v1349, 4294901760
    %3450 = vmatpush.msra.mxu0 %v3449
    %v3451 = vand.u32 %v1348, 4294901760
    %3452 = vmatpush.msra.mxu0 %v3451
    %v3453 = vand.u32 %v1347, 4294901760
    %3454 = vmatpush.msra.mxu0 %v3453
    %v3455 = vand.u32 %v1346, 4294901760
    %3456 = vmatpush.msra.mxu0 %v3455
    %v3457 = vand.u32 %v1345, 4294901760
    %3458 = vmatpush.msra.mxu0 %v3457
    %v3459 = vand.u32 %v1344, 4294901760
    %3460 = vmatpush.msra.mxu0 %v3459
    %v3461 = vand.u32 %v1343, 4294901760
    %3462 = vmatpush.msra.mxu0 %v3461
    %v3463 = vand.u32 %v1342, 4294901760
    %3464 = vmatpush.msra.mxu0 %v3463
    %v3465 = vand.u32 %v1341, 4294901760
    %3466 = vmatpush.msra.mxu0 %v3465
    %v3467 = vand.u32 %v1340, 4294901760
    %3468 = vmatpush.msra.mxu0 %v3467
    %v3469 = vand.u32 %v1339, 4294901760
    %3470 = vmatpush.msra.mxu0 %v3469
    %v3471 = vand.u32 %v1338, 4294901760
    %3472 = vmatpush.msra.mxu0 %v3471
    %v3473 = vand.u32 %v1337, 4294901760
    %3474 = vmatpush.msra.mxu0 %v3473
    %v3475 = vand.u32 %v1336, 4294901760
    %3476 = vmatpush.msra.mxu0 %v3475
    %v3477 = vand.u32 %v3441, 4294901760
    %v3478 = vsub.f32 %v3441, %v3477
    %v3479 = vand.u32 %v3478, 4294901760
    %v3480 = vsub.f32 %v3478, %v3479
    %v3481 = vand.u32 %v3480, 4294901760
    %3482 = vmatmul.f32.gmra.mxu0 %v3481
    %v3483 = vpop.f32.mrf.mxu0
    %v3484 = vadd.f32 0.0, %v3483
    %3485 = vdwg.mxu0
    %v3486 = vand.u32 %v1351, 4294901760
    %v3487 = vsub.f32 %v1351, %v3486
    %v3488 = vand.u32 %v3487, 4294901760
    %v3489 = vsub.f32 %v3487, %v3488
    %v3490 = vand.u32 %v3489, 4294901760
    %3491 = vmatpush.msra.mxu0 %v3490
    %v3492 = vand.u32 %v1350, 4294901760
    %v3493 = vsub.f32 %v1350, %v3492
    %v3494 = vand.u32 %v3493, 4294901760
    %v3495 = vsub.f32 %v3493, %v3494
    %v3496 = vand.u32 %v3495, 4294901760
    %3497 = vmatpush.msra.mxu0 %v3496
    %v3498 = vand.u32 %v1349, 4294901760
    %v3499 = vsub.f32 %v1349, %v3498
    %v3500 = vand.u32 %v3499, 4294901760
    %v3501 = vsub.f32 %v3499, %v3500
    %v3502 = vand.u32 %v3501, 4294901760
    %3503 = vmatpush.msra.mxu0 %v3502
    %v3504 = vand.u32 %v1348, 4294901760
    %v3505 = vsub.f32 %v1348, %v3504
    %v3506 = vand.u32 %v3505, 4294901760
    %v3507 = vsub.f32 %v3505, %v3506
    %v3508 = vand.u32 %v3507, 4294901760
    %3509 = vmatpush.msra.mxu0 %v3508
    %v3510 = vand.u32 %v1347, 4294901760
    %v3511 = vsub.f32 %v1347, %v3510
    %v3512 = vand.u32 %v3511, 4294901760
    %v3513 = vsub.f32 %v3511, %v3512
    %v3514 = vand.u32 %v3513, 4294901760
    %3515 = vmatpush.msra.mxu0 %v3514
    %v3516 = vand.u32 %v1346, 4294901760
    %v3517 = vsub.f32 %v1346, %v3516
    %v3518 = vand.u32 %v3517, 4294901760
    %v3519 = vsub.f32 %v3517, %v3518
    %v3520 = vand.u32 %v3519, 4294901760
    %3521 = vmatpush.msra.mxu0 %v3520
    %v3522 = vand.u32 %v1345, 4294901760
    %v3523 = vsub.f32 %v1345, %v3522
    %v3524 = vand.u32 %v3523, 4294901760
    %v3525 = vsub.f32 %v3523, %v3524
    %v3526 = vand.u32 %v3525, 4294901760
    %3527 = vmatpush.msra.mxu0 %v3526
    %v3528 = vand.u32 %v1344, 4294901760
    %v3529 = vsub.f32 %v1344, %v3528
    %v3530 = vand.u32 %v3529, 4294901760
    %v3531 = vsub.f32 %v3529, %v3530
    %v3532 = vand.u32 %v3531, 4294901760
    %3533 = vmatpush.msra.mxu0 %v3532
    %v3534 = vand.u32 %v1343, 4294901760
    %v3535 = vsub.f32 %v1343, %v3534
    %v3536 = vand.u32 %v3535, 4294901760
    %v3537 = vsub.f32 %v3535, %v3536
    %v3538 = vand.u32 %v3537, 4294901760
    %3539 = vmatpush.msra.mxu0 %v3538
    %v3540 = vand.u32 %v1342, 4294901760
    %v3541 = vsub.f32 %v1342, %v3540
    %v3542 = vand.u32 %v3541, 4294901760
    %v3543 = vsub.f32 %v3541, %v3542
    %v3544 = vand.u32 %v3543, 4294901760
    %3545 = vmatpush.msra.mxu0 %v3544
    %v3546 = vand.u32 %v1341, 4294901760
    %v3547 = vsub.f32 %v1341, %v3546
    %v3548 = vand.u32 %v3547, 4294901760
    %v3549 = vsub.f32 %v3547, %v3548
    %v3550 = vand.u32 %v3549, 4294901760
    %3551 = vmatpush.msra.mxu0 %v3550
    %v3552 = vand.u32 %v1340, 4294901760
    %v3553 = vsub.f32 %v1340, %v3552
    %v3554 = vand.u32 %v3553, 4294901760
    %v3555 = vsub.f32 %v3553, %v3554
    %v3556 = vand.u32 %v3555, 4294901760
    %3557 = vmatpush.msra.mxu0 %v3556
    %v3558 = vand.u32 %v1339, 4294901760
    %v3559 = vsub.f32 %v1339, %v3558
    %v3560 = vand.u32 %v3559, 4294901760
    %v3561 = vsub.f32 %v3559, %v3560
    %v3562 = vand.u32 %v3561, 4294901760
    %3563 = vmatpush.msra.mxu0 %v3562
    %v3564 = vand.u32 %v1338, 4294901760
    %v3565 = vsub.f32 %v1338, %v3564
    %v3566 = vand.u32 %v3565, 4294901760
    %v3567 = vsub.f32 %v3565, %v3566
    %v3568 = vand.u32 %v3567, 4294901760
    %3569 = vmatpush.msra.mxu0 %v3568
    %v3570 = vand.u32 %v1337, 4294901760
    %v3571 = vsub.f32 %v1337, %v3570
    %v3572 = vand.u32 %v3571, 4294901760
    %v3573 = vsub.f32 %v3571, %v3572
    %v3574 = vand.u32 %v3573, 4294901760
    %3575 = vmatpush.msra.mxu0 %v3574
    %v3576 = vand.u32 %v1336, 4294901760
    %v3577 = vsub.f32 %v1336, %v3576
    %v3578 = vand.u32 %v3577, 4294901760
    %v3579 = vsub.f32 %v3577, %v3578
    %v3580 = vand.u32 %v3579, 4294901760
    %3581 = vmatpush.msra.mxu0 %v3580
    %v3582 = vand.u32 %v3441, 4294901760
    %3583 = vmatmul.f32.gmra.mxu0 %v3582
    %v3584 = vpop.f32.mrf.mxu0
    %v3585 = vadd.f32 %v3484, %v3584
    %3586 = vdwg.mxu0
    %v3587 = vand.u32 %v1351, 4294901760
    %v3588 = vsub.f32 %v1351, %v3587
    %3589 = vmatpush.msra.mxu0 %v3588
    %v3590 = vand.u32 %v1350, 4294901760
    %v3591 = vsub.f32 %v1350, %v3590
    %3592 = vmatpush.msra.mxu0 %v3591
    %v3593 = vand.u32 %v1349, 4294901760
    %v3594 = vsub.f32 %v1349, %v3593
    %3595 = vmatpush.msra.mxu0 %v3594
    %v3596 = vand.u32 %v1348, 4294901760
    %v3597 = vsub.f32 %v1348, %v3596
    %3598 = vmatpush.msra.mxu0 %v3597
    %v3599 = vand.u32 %v1347, 4294901760
    %v3600 = vsub.f32 %v1347, %v3599
    %3601 = vmatpush.msra.mxu0 %v3600
    %v3602 = vand.u32 %v1346, 4294901760
    %v3603 = vsub.f32 %v1346, %v3602
    %3604 = vmatpush.msra.mxu0 %v3603
    %v3605 = vand.u32 %v1345, 4294901760
    %v3606 = vsub.f32 %v1345, %v3605
    %3607 = vmatpush.msra.mxu0 %v3606
    %v3608 = vand.u32 %v1344, 4294901760
    %v3609 = vsub.f32 %v1344, %v3608
    %3610 = vmatpush.msra.mxu0 %v3609
    %v3611 = vand.u32 %v1343, 4294901760
    %v3612 = vsub.f32 %v1343, %v3611
    %3613 = vmatpush.msra.mxu0 %v3612
    %v3614 = vand.u32 %v1342, 4294901760
    %v3615 = vsub.f32 %v1342, %v3614
    %3616 = vmatpush.msra.mxu0 %v3615
    %v3617 = vand.u32 %v1341, 4294901760
    %v3618 = vsub.f32 %v1341, %v3617
    %3619 = vmatpush.msra.mxu0 %v3618
    %v3620 = vand.u32 %v1340, 4294901760
    %v3621 = vsub.f32 %v1340, %v3620
    %3622 = vmatpush.msra.mxu0 %v3621
    %v3623 = vand.u32 %v1339, 4294901760
    %v3624 = vsub.f32 %v1339, %v3623
    %3625 = vmatpush.msra.mxu0 %v3624
    %v3626 = vand.u32 %v1338, 4294901760
    %v3627 = vsub.f32 %v1338, %v3626
    %3628 = vmatpush.msra.mxu0 %v3627
    %v3629 = vand.u32 %v1337, 4294901760
    %v3630 = vsub.f32 %v1337, %v3629
    %3631 = vmatpush.msra.mxu0 %v3630
    %v3632 = vand.u32 %v1336, 4294901760
    %v3633 = vsub.f32 %v1336, %v3632
    %3634 = vmatpush.msra.mxu0 %v3633
    %v3635 = vand.u32 %v3441, 4294901760
    %v3636 = vsub.f32 %v3441, %v3635
    %3637 = vmatmul.f32.gmra.mxu0 %v3636
    %v3638 = vpop.f32.mrf.mxu0
    %v3639 = vadd.f32 %v3585, %v3638
    %3640 = vdwg.mxu0
    %v3641 = vand.u32 %v1351, 4294901760
    %3642 = vmatpush.msra.mxu0 %v3641
    %v3643 = vand.u32 %v1350, 4294901760
    %3644 = vmatpush.msra.mxu0 %v3643
    %v3645 = vand.u32 %v1349, 4294901760
    %3646 = vmatpush.msra.mxu0 %v3645
    %v3647 = vand.u32 %v1348, 4294901760
    %3648 = vmatpush.msra.mxu0 %v3647
    %v3649 = vand.u32 %v1347, 4294901760
    %3650 = vmatpush.msra.mxu0 %v3649
    %v3651 = vand.u32 %v1346, 4294901760
    %3652 = vmatpush.msra.mxu0 %v3651
    %v3653 = vand.u32 %v1345, 4294901760
    %3654 = vmatpush.msra.mxu0 %v3653
    %v3655 = vand.u32 %v1344, 4294901760
    %3656 = vmatpush.msra.mxu0 %v3655
    %v3657 = vand.u32 %v1343, 4294901760
    %3658 = vmatpush.msra.mxu0 %v3657
    %v3659 = vand.u32 %v1342, 4294901760
    %3660 = vmatpush.msra.mxu0 %v3659
    %v3661 = vand.u32 %v1341, 4294901760
    %3662 = vmatpush.msra.mxu0 %v3661
    %v3663 = vand.u32 %v1340, 4294901760
    %3664 = vmatpush.msra.mxu0 %v3663
    %v3665 = vand.u32 %v1339, 4294901760
    %3666 = vmatpush.msra.mxu0 %v3665
    %v3667 = vand.u32 %v1338, 4294901760
    %3668 = vmatpush.msra.mxu0 %v3667
    %v3669 = vand.u32 %v1337, 4294901760
    %3670 = vmatpush.msra.mxu0 %v3669
    %v3671 = vand.u32 %v1336, 4294901760
    %3672 = vmatpush.msra.mxu0 %v3671
    %v3673 = vand.u32 %v3441, 4294901760
    %v3674 = vsub.f32 %v3441, %v3673
    %v3675 = vand.u32 %v3674, 4294901760
    %3676 = vmatmul.f32.gmra.mxu0 %v3675
    %v3677 = vpop.f32.mrf.mxu0
    %v3678 = vadd.f32 %v3639, %v3677
    %3679 = vdwg.mxu0
    %v3680 = vand.u32 %v1351, 4294901760
    %v3681 = vsub.f32 %v1351, %v3680
    %v3682 = vand.u32 %v3681, 4294901760
    %3683 = vmatpush.msra.mxu0 %v3682
    %v3684 = vand.u32 %v1350, 4294901760
    %v3685 = vsub.f32 %v1350, %v3684
    %v3686 = vand.u32 %v3685, 4294901760
    %3687 = vmatpush.msra.mxu0 %v3686
    %v3688 = vand.u32 %v1349, 4294901760
    %v3689 = vsub.f32 %v1349, %v3688
    %v3690 = vand.u32 %v3689, 4294901760
    %3691 = vmatpush.msra.mxu0 %v3690
    %v3692 = vand.u32 %v1348, 4294901760
    %v3693 = vsub.f32 %v1348, %v3692
    %v3694 = vand.u32 %v3693, 4294901760
    %3695 = vmatpush.msra.mxu0 %v3694
    %v3696 = vand.u32 %v1347, 4294901760
    %v3697 = vsub.f32 %v1347, %v3696
    %v3698 = vand.u32 %v3697, 4294901760
    %3699 = vmatpush.msra.mxu0 %v3698
    %v3700 = vand.u32 %v1346, 4294901760
    %v3701 = vsub.f32 %v1346, %v3700
    %v3702 = vand.u32 %v3701, 4294901760
    %3703 = vmatpush.msra.mxu0 %v3702
    %v3704 = vand.u32 %v1345, 4294901760
    %v3705 = vsub.f32 %v1345, %v3704
    %v3706 = vand.u32 %v3705, 4294901760
    %3707 = vmatpush.msra.mxu0 %v3706
    %v3708 = vand.u32 %v1344, 4294901760
    %v3709 = vsub.f32 %v1344, %v3708
    %v3710 = vand.u32 %v3709, 4294901760
    %3711 = vmatpush.msra.mxu0 %v3710
    %v3712 = vand.u32 %v1343, 4294901760
    %v3713 = vsub.f32 %v1343, %v3712
    %v3714 = vand.u32 %v3713, 4294901760
    %3715 = vmatpush.msra.mxu0 %v3714
    %v3716 = vand.u32 %v1342, 4294901760
    %v3717 = vsub.f32 %v1342, %v3716
    %v3718 = vand.u32 %v3717, 4294901760
    %3719 = vmatpush.msra.mxu0 %v3718
    %v3720 = vand.u32 %v1341, 4294901760
    %v3721 = vsub.f32 %v1341, %v3720
    %v3722 = vand.u32 %v3721, 4294901760
    %3723 = vmatpush.msra.mxu0 %v3722
    %v3724 = vand.u32 %v1340, 4294901760
    %v3725 = vsub.f32 %v1340, %v3724
    %v3726 = vand.u32 %v3725, 4294901760
    %3727 = vmatpush.msra.mxu0 %v3726
    %v3728 = vand.u32 %v1339, 4294901760
    %v3729 = vsub.f32 %v1339, %v3728
    %v3730 = vand.u32 %v3729, 4294901760
    %3731 = vmatpush.msra.mxu0 %v3730
    %v3732 = vand.u32 %v1338, 4294901760
    %v3733 = vsub.f32 %v1338, %v3732
    %v3734 = vand.u32 %v3733, 4294901760
    %3735 = vmatpush.msra.mxu0 %v3734
    %v3736 = vand.u32 %v1337, 4294901760
    %v3737 = vsub.f32 %v1337, %v3736
    %v3738 = vand.u32 %v3737, 4294901760
    %3739 = vmatpush.msra.mxu0 %v3738
    %v3740 = vand.u32 %v1336, 4294901760
    %v3741 = vsub.f32 %v1336, %v3740
    %v3742 = vand.u32 %v3741, 4294901760
    %3743 = vmatpush.msra.mxu0 %v3742
    %v3744 = vand.u32 %v3441, 4294901760
    %3745 = vmatmul.f32.gmra.mxu0 %v3744
    %v3746 = vpop.f32.mrf.mxu0
    %v3747 = vadd.f32 %v3678, %v3746
    %3748 = vdwg.mxu0
    %v3749 = vand.u32 %v1351, 4294901760
    %3750 = vmatpush.msra.mxu0 %v3749
    %v3751 = vand.u32 %v1350, 4294901760
    %3752 = vmatpush.msra.mxu0 %v3751
    %v3753 = vand.u32 %v1349, 4294901760
    %3754 = vmatpush.msra.mxu0 %v3753
    %v3755 = vand.u32 %v1348, 4294901760
    %3756 = vmatpush.msra.mxu0 %v3755
    %v3757 = vand.u32 %v1347, 4294901760
    %3758 = vmatpush.msra.mxu0 %v3757
    %v3759 = vand.u32 %v1346, 4294901760
    %3760 = vmatpush.msra.mxu0 %v3759
    %v3761 = vand.u32 %v1345, 4294901760
    %3762 = vmatpush.msra.mxu0 %v3761
    %v3763 = vand.u32 %v1344, 4294901760
    %3764 = vmatpush.msra.mxu0 %v3763
    %v3765 = vand.u32 %v1343, 4294901760
    %3766 = vmatpush.msra.mxu0 %v3765
    %v3767 = vand.u32 %v1342, 4294901760
    %3768 = vmatpush.msra.mxu0 %v3767
    %v3769 = vand.u32 %v1341, 4294901760
    %3770 = vmatpush.msra.mxu0 %v3769
    %v3771 = vand.u32 %v1340, 4294901760
    %3772 = vmatpush.msra.mxu0 %v3771
    %v3773 = vand.u32 %v1339, 4294901760
    %3774 = vmatpush.msra.mxu0 %v3773
    %v3775 = vand.u32 %v1338, 4294901760
    %3776 = vmatpush.msra.mxu0 %v3775
    %v3777 = vand.u32 %v1337, 4294901760
    %3778 = vmatpush.msra.mxu0 %v3777
    %v3779 = vand.u32 %v1336, 4294901760
    %3780 = vmatpush.msra.mxu0 %v3779
    %v3781 = vand.u32 %v3441, 4294901760
    %3782 = vmatmul.f32.gmra.mxu0 %v3781
    %v3783 = vpop.f32.mrf.mxu0
    %v3784 = vadd.f32 %v3747, %v3783
    %3785 = vdwg.mxu0
    %v3786 = vand.u32 %v1367, 4294901760
    %3787 = vmatpush.msra.mxu0 %v3786
    %v3788 = vand.u32 %v1366, 4294901760
    %3789 = vmatpush.msra.mxu0 %v3788
    %v3790 = vand.u32 %v1365, 4294901760
    %3791 = vmatpush.msra.mxu0 %v3790
    %v3792 = vand.u32 %v1364, 4294901760
    %3793 = vmatpush.msra.mxu0 %v3792
    %v3794 = vand.u32 %v1363, 4294901760
    %3795 = vmatpush.msra.mxu0 %v3794
    %v3796 = vand.u32 %v1362, 4294901760
    %3797 = vmatpush.msra.mxu0 %v3796
    %v3798 = vand.u32 %v1361, 4294901760
    %3799 = vmatpush.msra.mxu0 %v3798
    %v3800 = vand.u32 %v1360, 4294901760
    %3801 = vmatpush.msra.mxu0 %v3800
    %v3802 = vand.u32 %v1359, 4294901760
    %3803 = vmatpush.msra.mxu0 %v3802
    %v3804 = vand.u32 %v1358, 4294901760
    %3805 = vmatpush.msra.mxu0 %v3804
    %v3806 = vand.u32 %v1357, 4294901760
    %3807 = vmatpush.msra.mxu0 %v3806
    %v3808 = vand.u32 %v1356, 4294901760
    %3809 = vmatpush.msra.mxu0 %v3808
    %v3810 = vand.u32 %v1355, 4294901760
    %3811 = vmatpush.msra.mxu0 %v3810
    %v3812 = vand.u32 %v1354, 4294901760
    %3813 = vmatpush.msra.mxu0 %v3812
    %v3814 = vand.u32 %v1353, 4294901760
    %3815 = vmatpush.msra.mxu0 %v3814
    %v3816 = vand.u32 %v1352, 4294901760
    %3817 = vmatpush.msra.mxu0 %v3816
    %v3818 = vand.u32 %v3442, 4294901760
    %v3819 = vsub.f32 %v3442, %v3818
    %v3820 = vand.u32 %v3819, 4294901760
    %v3821 = vsub.f32 %v3819, %v3820
    %v3822 = vand.u32 %v3821, 4294901760
    %3823 = vmatmul.f32.gmra.mxu0 %v3822
    %v3824 = vpop.f32.mrf.mxu0
    %v3825 = vadd.f32 %v3784, %v3824
    %3826 = vdwg.mxu0
    %v3827 = vand.u32 %v1367, 4294901760
    %v3828 = vsub.f32 %v1367, %v3827
    %v3829 = vand.u32 %v3828, 4294901760
    %v3830 = vsub.f32 %v3828, %v3829
    %v3831 = vand.u32 %v3830, 4294901760
    %3832 = vmatpush.msra.mxu0 %v3831
    %v3833 = vand.u32 %v1366, 4294901760
    %v3834 = vsub.f32 %v1366, %v3833
    %v3835 = vand.u32 %v3834, 4294901760
    %v3836 = vsub.f32 %v3834, %v3835
    %v3837 = vand.u32 %v3836, 4294901760
    %3838 = vmatpush.msra.mxu0 %v3837
    %v3839 = vand.u32 %v1365, 4294901760
    %v3840 = vsub.f32 %v1365, %v3839
    %v3841 = vand.u32 %v3840, 4294901760
    %v3842 = vsub.f32 %v3840, %v3841
    %v3843 = vand.u32 %v3842, 4294901760
    %3844 = vmatpush.msra.mxu0 %v3843
    %v3845 = vand.u32 %v1364, 4294901760
    %v3846 = vsub.f32 %v1364, %v3845
    %v3847 = vand.u32 %v3846, 4294901760
    %v3848 = vsub.f32 %v3846, %v3847
    %v3849 = vand.u32 %v3848, 4294901760
    %3850 = vmatpush.msra.mxu0 %v3849
    %v3851 = vand.u32 %v1363, 4294901760
    %v3852 = vsub.f32 %v1363, %v3851
    %v3853 = vand.u32 %v3852, 4294901760
    %v3854 = vsub.f32 %v3852, %v3853
    %v3855 = vand.u32 %v3854, 4294901760
    %3856 = vmatpush.msra.mxu0 %v3855
    %v3857 = vand.u32 %v1362, 4294901760
    %v3858 = vsub.f32 %v1362, %v3857
    %v3859 = vand.u32 %v3858, 4294901760
    %v3860 = vsub.f32 %v3858, %v3859
    %v3861 = vand.u32 %v3860, 4294901760
    %3862 = vmatpush.msra.mxu0 %v3861
    %v3863 = vand.u32 %v1361, 4294901760
    %v3864 = vsub.f32 %v1361, %v3863
    %v3865 = vand.u32 %v3864, 4294901760
    %v3866 = vsub.f32 %v3864, %v3865
    %v3867 = vand.u32 %v3866, 4294901760
    %3868 = vmatpush.msra.mxu0 %v3867
    %v3869 = vand.u32 %v1360, 4294901760
    %v3870 = vsub.f32 %v1360, %v3869
    %v3871 = vand.u32 %v3870, 4294901760
    %v3872 = vsub.f32 %v3870, %v3871
    %v3873 = vand.u32 %v3872, 4294901760
    %3874 = vmatpush.msra.mxu0 %v3873
    %v3875 = vand.u32 %v1359, 4294901760
    %v3876 = vsub.f32 %v1359, %v3875
    %v3877 = vand.u32 %v3876, 4294901760
    %v3878 = vsub.f32 %v3876, %v3877
    %v3879 = vand.u32 %v3878, 4294901760
    %3880 = vmatpush.msra.mxu0 %v3879
    %v3881 = vand.u32 %v1358, 4294901760
    %v3882 = vsub.f32 %v1358, %v3881
    %v3883 = vand.u32 %v3882, 4294901760
    %v3884 = vsub.f32 %v3882, %v3883
    %v3885 = vand.u32 %v3884, 4294901760
    %3886 = vmatpush.msra.mxu0 %v3885
    %v3887 = vand.u32 %v1357, 4294901760
    %v3888 = vsub.f32 %v1357, %v3887
    %v3889 = vand.u32 %v3888, 4294901760
    %v3890 = vsub.f32 %v3888, %v3889
    %v3891 = vand.u32 %v3890, 4294901760
    %3892 = vmatpush.msra.mxu0 %v3891
    %v3893 = vand.u32 %v1356, 4294901760
    %v3894 = vsub.f32 %v1356, %v3893
    %v3895 = vand.u32 %v3894, 4294901760
    %v3896 = vsub.f32 %v3894, %v3895
    %v3897 = vand.u32 %v3896, 4294901760
    %3898 = vmatpush.msra.mxu0 %v3897
    %v3899 = vand.u32 %v1355, 4294901760
    %v3900 = vsub.f32 %v1355, %v3899
    %v3901 = vand.u32 %v3900, 4294901760
    %v3902 = vsub.f32 %v3900, %v3901
    %v3903 = vand.u32 %v3902, 4294901760
    %3904 = vmatpush.msra.mxu0 %v3903
    %v3905 = vand.u32 %v1354, 4294901760
    %v3906 = vsub.f32 %v1354, %v3905
    %v3907 = vand.u32 %v3906, 4294901760
    %v3908 = vsub.f32 %v3906, %v3907
    %v3909 = vand.u32 %v3908, 4294901760
    %3910 = vmatpush.msra.mxu0 %v3909
    %v3911 = vand.u32 %v1353, 4294901760
    %v3912 = vsub.f32 %v1353, %v3911
    %v3913 = vand.u32 %v3912, 4294901760
    %v3914 = vsub.f32 %v3912, %v3913
    %v3915 = vand.u32 %v3914, 4294901760
    %3916 = vmatpush.msra.mxu0 %v3915
    %v3917 = vand.u32 %v1352, 4294901760
    %v3918 = vsub.f32 %v1352, %v3917
    %v3919 = vand.u32 %v3918, 4294901760
    %v3920 = vsub.f32 %v3918, %v3919
    %v3921 = vand.u32 %v3920, 4294901760
    %3922 = vmatpush.msra.mxu0 %v3921
    %v3923 = vand.u32 %v3442, 4294901760
    %3924 = vmatmul.f32.gmra.mxu0 %v3923
    %v3925 = vpop.f32.mrf.mxu0
    %v3926 = vadd.f32 %v3825, %v3925
    %3927 = vdwg.mxu0
    %v3928 = vand.u32 %v1367, 4294901760
    %v3929 = vsub.f32 %v1367, %v3928
    %3930 = vmatpush.msra.mxu0 %v3929
    %v3931 = vand.u32 %v1366, 4294901760
    %v3932 = vsub.f32 %v1366, %v3931
    %3933 = vmatpush.msra.mxu0 %v3932
    %v3934 = vand.u32 %v1365, 4294901760
    %v3935 = vsub.f32 %v1365, %v3934
    %3936 = vmatpush.msra.mxu0 %v3935
    %v3937 = vand.u32 %v1364, 4294901760
    %v3938 = vsub.f32 %v1364, %v3937
    %3939 = vmatpush.msra.mxu0 %v3938
    %v3940 = vand.u32 %v1363, 4294901760
    %v3941 = vsub.f32 %v1363, %v3940
    %3942 = vmatpush.msra.mxu0 %v3941
    %v3943 = vand.u32 %v1362, 4294901760
    %v3944 = vsub.f32 %v1362, %v3943
    %3945 = vmatpush.msra.mxu0 %v3944
    %v3946 = vand.u32 %v1361, 4294901760
    %v3947 = vsub.f32 %v1361, %v3946
    %3948 = vmatpush.msra.mxu0 %v3947
    %v3949 = vand.u32 %v1360, 4294901760
    %v3950 = vsub.f32 %v1360, %v3949
    %3951 = vmatpush.msra.mxu0 %v3950
    %v3952 = vand.u32 %v1359, 4294901760
    %v3953 = vsub.f32 %v1359, %v3952
    %3954 = vmatpush.msra.mxu0 %v3953
    %v3955 = vand.u32 %v1358, 4294901760
    %v3956 = vsub.f32 %v1358, %v3955
    %3957 = vmatpush.msra.mxu0 %v3956
    %v3958 = vand.u32 %v1357, 4294901760
    %v3959 = vsub.f32 %v1357, %v3958
    %3960 = vmatpush.msra.mxu0 %v3959
    %v3961 = vand.u32 %v1356, 4294901760
    %v3962 = vsub.f32 %v1356, %v3961
    %3963 = vmatpush.msra.mxu0 %v3962
    %v3964 = vand.u32 %v1355, 4294901760
    %v3965 = vsub.f32 %v1355, %v3964
    %3966 = vmatpush.msra.mxu0 %v3965
    %v3967 = vand.u32 %v1354, 4294901760
    %v3968 = vsub.f32 %v1354, %v3967
    %3969 = vmatpush.msra.mxu0 %v3968
    %v3970 = vand.u32 %v1353, 4294901760
    %v3971 = vsub.f32 %v1353, %v3970
    %3972 = vmatpush.msra.mxu0 %v3971
    %v3973 = vand.u32 %v1352, 4294901760
    %v3974 = vsub.f32 %v1352, %v3973
    %3975 = vmatpush.msra.mxu0 %v3974
    %v3976 = vand.u32 %v3442, 4294901760
    %v3977 = vsub.f32 %v3442, %v3976
    %3978 = vmatmul.f32.gmra.mxu0 %v3977
    %v3979 = vpop.f32.mrf.mxu0
    %v3980 = vadd.f32 %v3926, %v3979
    %3981 = vdwg.mxu0
    %v3982 = vand.u32 %v1367, 4294901760
    %3983 = vmatpush.msra.mxu0 %v3982
    %v3984 = vand.u32 %v1366, 4294901760
    %3985 = vmatpush.msra.mxu0 %v3984
    %v3986 = vand.u32 %v1365, 4294901760
    %3987 = vmatpush.msra.mxu0 %v3986
    %v3988 = vand.u32 %v1364, 4294901760
    %3989 = vmatpush.msra.mxu0 %v3988
    %v3990 = vand.u32 %v1363, 4294901760
    %3991 = vmatpush.msra.mxu0 %v3990
    %v3992 = vand.u32 %v1362, 4294901760
    %3993 = vmatpush.msra.mxu0 %v3992
    %v3994 = vand.u32 %v1361, 4294901760
    %3995 = vmatpush.msra.mxu0 %v3994
    %v3996 = vand.u32 %v1360, 4294901760
    %3997 = vmatpush.msra.mxu0 %v3996
    %v3998 = vand.u32 %v1359, 4294901760
    %3999 = vmatpush.msra.mxu0 %v3998
    %v4000 = vand.u32 %v1358, 4294901760
    %4001 = vmatpush.msra.mxu0 %v4000
    %v4002 = vand.u32 %v1357, 4294901760
    %4003 = vmatpush.msra.mxu0 %v4002
    %v4004 = vand.u32 %v1356, 4294901760
    %4005 = vmatpush.msra.mxu0 %v4004
    %v4006 = vand.u32 %v1355, 4294901760
    %4007 = vmatpush.msra.mxu0 %v4006
    %v4008 = vand.u32 %v1354, 4294901760
    %4009 = vmatpush.msra.mxu0 %v4008
    %v4010 = vand.u32 %v1353, 4294901760
    %4011 = vmatpush.msra.mxu0 %v4010
    %v4012 = vand.u32 %v1352, 4294901760
    %4013 = vmatpush.msra.mxu0 %v4012
    %v4014 = vand.u32 %v3442, 4294901760
    %v4015 = vsub.f32 %v3442, %v4014
    %v4016 = vand.u32 %v4015, 4294901760
    %4017 = vmatmul.f32.gmra.mxu0 %v4016
    %v4018 = vpop.f32.mrf.mxu0
    %v4019 = vadd.f32 %v3980, %v4018
    %4020 = vdwg.mxu0
    %v4021 = vand.u32 %v1367, 4294901760
    %v4022 = vsub.f32 %v1367, %v4021
    %v4023 = vand.u32 %v4022, 4294901760
    %4024 = vmatpush.msra.mxu0 %v4023
    %v4025 = vand.u32 %v1366, 4294901760
    %v4026 = vsub.f32 %v1366, %v4025
    %v4027 = vand.u32 %v4026, 4294901760
    %4028 = vmatpush.msra.mxu0 %v4027
    %v4029 = vand.u32 %v1365, 4294901760
    %v4030 = vsub.f32 %v1365, %v4029
    %v4031 = vand.u32 %v4030, 4294901760
    %4032 = vmatpush.msra.mxu0 %v4031
    %v4033 = vand.u32 %v1364, 4294901760
    %v4034 = vsub.f32 %v1364, %v4033
    %v4035 = vand.u32 %v4034, 4294901760
    %4036 = vmatpush.msra.mxu0 %v4035
    %v4037 = vand.u32 %v1363, 4294901760
    %v4038 = vsub.f32 %v1363, %v4037
    %v4039 = vand.u32 %v4038, 4294901760
    %4040 = vmatpush.msra.mxu0 %v4039
    %v4041 = vand.u32 %v1362, 4294901760
    %v4042 = vsub.f32 %v1362, %v4041
    %v4043 = vand.u32 %v4042, 4294901760
    %4044 = vmatpush.msra.mxu0 %v4043
    %v4045 = vand.u32 %v1361, 4294901760
    %v4046 = vsub.f32 %v1361, %v4045
    %v4047 = vand.u32 %v4046, 4294901760
    %4048 = vmatpush.msra.mxu0 %v4047
    %v4049 = vand.u32 %v1360, 4294901760
    %v4050 = vsub.f32 %v1360, %v4049
    %v4051 = vand.u32 %v4050, 4294901760
    %4052 = vmatpush.msra.mxu0 %v4051
    %v4053 = vand.u32 %v1359, 4294901760
    %v4054 = vsub.f32 %v1359, %v4053
    %v4055 = vand.u32 %v4054, 4294901760
    %4056 = vmatpush.msra.mxu0 %v4055
    %v4057 = vand.u32 %v1358, 4294901760
    %v4058 = vsub.f32 %v1358, %v4057
    %v4059 = vand.u32 %v4058, 4294901760
    %4060 = vmatpush.msra.mxu0 %v4059
    %v4061 = vand.u32 %v1357, 4294901760
    %v4062 = vsub.f32 %v1357, %v4061
    %v4063 = vand.u32 %v4062, 4294901760
    %4064 = vmatpush.msra.mxu0 %v4063
    %v4065 = vand.u32 %v1356, 4294901760
    %v4066 = vsub.f32 %v1356, %v4065
    %v4067 = vand.u32 %v4066, 4294901760
    %4068 = vmatpush.msra.mxu0 %v4067
    %v4069 = vand.u32 %v1355, 4294901760
    %v4070 = vsub.f32 %v1355, %v4069
    %v4071 = vand.u32 %v4070, 4294901760
    %4072 = vmatpush.msra.mxu0 %v4071
    %v4073 = vand.u32 %v1354, 4294901760
    %v4074 = vsub.f32 %v1354, %v4073
    %v4075 = vand.u32 %v4074, 4294901760
    %4076 = vmatpush.msra.mxu0 %v4075
    %v4077 = vand.u32 %v1353, 4294901760
    %v4078 = vsub.f32 %v1353, %v4077
    %v4079 = vand.u32 %v4078, 4294901760
    %4080 = vmatpush.msra.mxu0 %v4079
    %v4081 = vand.u32 %v1352, 4294901760
    %v4082 = vsub.f32 %v1352, %v4081
    %v4083 = vand.u32 %v4082, 4294901760
    %4084 = vmatpush.msra.mxu0 %v4083
    %v4085 = vand.u32 %v3442, 4294901760
    %4086 = vmatmul.f32.gmra.mxu0 %v4085
    %v4087 = vpop.f32.mrf.mxu0
    %v4088 = vadd.f32 %v4019, %v4087
    %4089 = vdwg.mxu0
    %v4090 = vand.u32 %v1367, 4294901760
    %4091 = vmatpush.msra.mxu0 %v4090
    %v4092 = vand.u32 %v1366, 4294901760
    %4093 = vmatpush.msra.mxu0 %v4092
    %v4094 = vand.u32 %v1365, 4294901760
    %4095 = vmatpush.msra.mxu0 %v4094
    %v4096 = vand.u32 %v1364, 4294901760
    %4097 = vmatpush.msra.mxu0 %v4096
    %v4098 = vand.u32 %v1363, 4294901760
    %4099 = vmatpush.msra.mxu0 %v4098
    %v4100 = vand.u32 %v1362, 4294901760
    %4101 = vmatpush.msra.mxu0 %v4100
    %v4102 = vand.u32 %v1361, 4294901760
    %4103 = vmatpush.msra.mxu0 %v4102
    %v4104 = vand.u32 %v1360, 4294901760
    %4105 = vmatpush.msra.mxu0 %v4104
    %v4106 = vand.u32 %v1359, 4294901760
    %4107 = vmatpush.msra.mxu0 %v4106
    %v4108 = vand.u32 %v1358, 4294901760
    %4109 = vmatpush.msra.mxu0 %v4108
    %v4110 = vand.u32 %v1357, 4294901760
    %4111 = vmatpush.msra.mxu0 %v4110
    %v4112 = vand.u32 %v1356, 4294901760
    %4113 = vmatpush.msra.mxu0 %v4112
    %v4114 = vand.u32 %v1355, 4294901760
    %4115 = vmatpush.msra.mxu0 %v4114
    %v4116 = vand.u32 %v1354, 4294901760
    %4117 = vmatpush.msra.mxu0 %v4116
    %v4118 = vand.u32 %v1353, 4294901760
    %4119 = vmatpush.msra.mxu0 %v4118
    %v4120 = vand.u32 %v1352, 4294901760
    %4121 = vmatpush.msra.mxu0 %v4120
    %v4122 = vand.u32 %v3442, 4294901760
    %4123 = vmatmul.f32.gmra.mxu0 %v4122
    %v4124 = vpop.f32.mrf.mxu0
    %v4125 = vadd.f32 %v4088, %v4124
    %4126 = vdwg.mxu0
    %vm4127 = vcmask 32768
    %v4128 = vsel %vm4127, %v2067, 0.0
    %v4129 = vsel %vm4127, %v2753, 0.0
    %v4130 = vadd.f32 %v4128, %v4129
    %v4131 = vsel %vm4127, %v3439, 0.0
    %v4132 = vadd.f32 %v4130, %v4131
    %v4133 = vsel %vm4127, %v4125, 0.0
    %v4134 = vadd.f32 %v4132, %v4133
    %v4135 = vadd.f32 %v4134, %v1368
    %v4138 = vrot.slane %v1239, 7
    %v4139 = vsel %vm1372, %v1238, %v4138
    %v4140 = vsel %vm1374, %v1238, %v4138
    %v4141 = vrot.slane %v4140, 1
    %v4142 = vsel %vm1377, %v1238, %v4138
    %v4143 = vrot.slane %v4142, 2
    %v4144 = vsel %vm1380, %v1238, %v4138
    %v4145 = vrot.slane %v4144, 3
    %v4146 = vperm.slane %v4139, 0
    %v4147 = vperm.slane %v4139, 1
    %v4150 = vand.u32 %v1255, 4294901760
    %4151 = vmatpush.msra.mxu0 %v4150
    %v4152 = vand.u32 %v1254, 4294901760
    %4153 = vmatpush.msra.mxu0 %v4152
    %v4154 = vand.u32 %v1253, 4294901760
    %4155 = vmatpush.msra.mxu0 %v4154
    %v4156 = vand.u32 %v1252, 4294901760
    %4157 = vmatpush.msra.mxu0 %v4156
    %v4158 = vand.u32 %v1251, 4294901760
    %4159 = vmatpush.msra.mxu0 %v4158
    %v4160 = vand.u32 %v1250, 4294901760
    %4161 = vmatpush.msra.mxu0 %v4160
    %v4162 = vand.u32 %v1249, 4294901760
    %4163 = vmatpush.msra.mxu0 %v4162
    %v4164 = vand.u32 %v1248, 4294901760
    %4165 = vmatpush.msra.mxu0 %v4164
    %v4166 = vand.u32 %v1247, 4294901760
    %4167 = vmatpush.msra.mxu0 %v4166
    %v4168 = vand.u32 %v1246, 4294901760
    %4169 = vmatpush.msra.mxu0 %v4168
    %v4170 = vand.u32 %v1245, 4294901760
    %4171 = vmatpush.msra.mxu0 %v4170
    %v4172 = vand.u32 %v1244, 4294901760
    %4173 = vmatpush.msra.mxu0 %v4172
    %v4174 = vand.u32 %v1243, 4294901760
    %4175 = vmatpush.msra.mxu0 %v4174
    %v4176 = vand.u32 %v1242, 4294901760
    %4177 = vmatpush.msra.mxu0 %v4176
    %v4178 = vand.u32 %v1241, 4294901760
    %4179 = vmatpush.msra.mxu0 %v4178
    %v4180 = vand.u32 %v1240, 4294901760
    %4181 = vmatpush.msra.mxu0 %v4180
    %v4182 = vand.u32 %v4146, 4294901760
    %v4183 = vsub.f32 %v4146, %v4182
    %v4184 = vand.u32 %v4183, 4294901760
    %v4185 = vsub.f32 %v4183, %v4184
    %v4186 = vand.u32 %v4185, 4294901760
    %4187 = vmatmul.f32.gmra.mxu0 %v4186
    %v4188 = vpop.f32.mrf.mxu0
    %v4189 = vadd.f32 0.0, %v4188
    %4190 = vdwg.mxu0
    %v4191 = vand.u32 %v1255, 4294901760
    %v4192 = vsub.f32 %v1255, %v4191
    %v4193 = vand.u32 %v4192, 4294901760
    %v4194 = vsub.f32 %v4192, %v4193
    %v4195 = vand.u32 %v4194, 4294901760
    %4196 = vmatpush.msra.mxu0 %v4195
    %v4197 = vand.u32 %v1254, 4294901760
    %v4198 = vsub.f32 %v1254, %v4197
    %v4199 = vand.u32 %v4198, 4294901760
    %v4200 = vsub.f32 %v4198, %v4199
    %v4201 = vand.u32 %v4200, 4294901760
    %4202 = vmatpush.msra.mxu0 %v4201
    %v4203 = vand.u32 %v1253, 4294901760
    %v4204 = vsub.f32 %v1253, %v4203
    %v4205 = vand.u32 %v4204, 4294901760
    %v4206 = vsub.f32 %v4204, %v4205
    %v4207 = vand.u32 %v4206, 4294901760
    %4208 = vmatpush.msra.mxu0 %v4207
    %v4209 = vand.u32 %v1252, 4294901760
    %v4210 = vsub.f32 %v1252, %v4209
    %v4211 = vand.u32 %v4210, 4294901760
    %v4212 = vsub.f32 %v4210, %v4211
    %v4213 = vand.u32 %v4212, 4294901760
    %4214 = vmatpush.msra.mxu0 %v4213
    %v4215 = vand.u32 %v1251, 4294901760
    %v4216 = vsub.f32 %v1251, %v4215
    %v4217 = vand.u32 %v4216, 4294901760
    %v4218 = vsub.f32 %v4216, %v4217
    %v4219 = vand.u32 %v4218, 4294901760
    %4220 = vmatpush.msra.mxu0 %v4219
    %v4221 = vand.u32 %v1250, 4294901760
    %v4222 = vsub.f32 %v1250, %v4221
    %v4223 = vand.u32 %v4222, 4294901760
    %v4224 = vsub.f32 %v4222, %v4223
    %v4225 = vand.u32 %v4224, 4294901760
    %4226 = vmatpush.msra.mxu0 %v4225
    %v4227 = vand.u32 %v1249, 4294901760
    %v4228 = vsub.f32 %v1249, %v4227
    %v4229 = vand.u32 %v4228, 4294901760
    %v4230 = vsub.f32 %v4228, %v4229
    %v4231 = vand.u32 %v4230, 4294901760
    %4232 = vmatpush.msra.mxu0 %v4231
    %v4233 = vand.u32 %v1248, 4294901760
    %v4234 = vsub.f32 %v1248, %v4233
    %v4235 = vand.u32 %v4234, 4294901760
    %v4236 = vsub.f32 %v4234, %v4235
    %v4237 = vand.u32 %v4236, 4294901760
    %4238 = vmatpush.msra.mxu0 %v4237
    %v4239 = vand.u32 %v1247, 4294901760
    %v4240 = vsub.f32 %v1247, %v4239
    %v4241 = vand.u32 %v4240, 4294901760
    %v4242 = vsub.f32 %v4240, %v4241
    %v4243 = vand.u32 %v4242, 4294901760
    %4244 = vmatpush.msra.mxu0 %v4243
    %v4245 = vand.u32 %v1246, 4294901760
    %v4246 = vsub.f32 %v1246, %v4245
    %v4247 = vand.u32 %v4246, 4294901760
    %v4248 = vsub.f32 %v4246, %v4247
    %v4249 = vand.u32 %v4248, 4294901760
    %4250 = vmatpush.msra.mxu0 %v4249
    %v4251 = vand.u32 %v1245, 4294901760
    %v4252 = vsub.f32 %v1245, %v4251
    %v4253 = vand.u32 %v4252, 4294901760
    %v4254 = vsub.f32 %v4252, %v4253
    %v4255 = vand.u32 %v4254, 4294901760
    %4256 = vmatpush.msra.mxu0 %v4255
    %v4257 = vand.u32 %v1244, 4294901760
    %v4258 = vsub.f32 %v1244, %v4257
    %v4259 = vand.u32 %v4258, 4294901760
    %v4260 = vsub.f32 %v4258, %v4259
    %v4261 = vand.u32 %v4260, 4294901760
    %4262 = vmatpush.msra.mxu0 %v4261
    %v4263 = vand.u32 %v1243, 4294901760
    %v4264 = vsub.f32 %v1243, %v4263
    %v4265 = vand.u32 %v4264, 4294901760
    %v4266 = vsub.f32 %v4264, %v4265
    %v4267 = vand.u32 %v4266, 4294901760
    %4268 = vmatpush.msra.mxu0 %v4267
    %v4269 = vand.u32 %v1242, 4294901760
    %v4270 = vsub.f32 %v1242, %v4269
    %v4271 = vand.u32 %v4270, 4294901760
    %v4272 = vsub.f32 %v4270, %v4271
    %v4273 = vand.u32 %v4272, 4294901760
    %4274 = vmatpush.msra.mxu0 %v4273
    %v4275 = vand.u32 %v1241, 4294901760
    %v4276 = vsub.f32 %v1241, %v4275
    %v4277 = vand.u32 %v4276, 4294901760
    %v4278 = vsub.f32 %v4276, %v4277
    %v4279 = vand.u32 %v4278, 4294901760
    %4280 = vmatpush.msra.mxu0 %v4279
    %v4281 = vand.u32 %v1240, 4294901760
    %v4282 = vsub.f32 %v1240, %v4281
    %v4283 = vand.u32 %v4282, 4294901760
    %v4284 = vsub.f32 %v4282, %v4283
    %v4285 = vand.u32 %v4284, 4294901760
    %4286 = vmatpush.msra.mxu0 %v4285
    %v4287 = vand.u32 %v4146, 4294901760
    %4288 = vmatmul.f32.gmra.mxu0 %v4287
    %v4289 = vpop.f32.mrf.mxu0
    %v4290 = vadd.f32 %v4189, %v4289
    %4291 = vdwg.mxu0
    %v4292 = vand.u32 %v1255, 4294901760
    %v4293 = vsub.f32 %v1255, %v4292
    %4294 = vmatpush.msra.mxu0 %v4293
    %v4295 = vand.u32 %v1254, 4294901760
    %v4296 = vsub.f32 %v1254, %v4295
    %4297 = vmatpush.msra.mxu0 %v4296
    %v4298 = vand.u32 %v1253, 4294901760
    %v4299 = vsub.f32 %v1253, %v4298
    %4300 = vmatpush.msra.mxu0 %v4299
    %v4301 = vand.u32 %v1252, 4294901760
    %v4302 = vsub.f32 %v1252, %v4301
    %4303 = vmatpush.msra.mxu0 %v4302
    %v4304 = vand.u32 %v1251, 4294901760
    %v4305 = vsub.f32 %v1251, %v4304
    %4306 = vmatpush.msra.mxu0 %v4305
    %v4307 = vand.u32 %v1250, 4294901760
    %v4308 = vsub.f32 %v1250, %v4307
    %4309 = vmatpush.msra.mxu0 %v4308
    %v4310 = vand.u32 %v1249, 4294901760
    %v4311 = vsub.f32 %v1249, %v4310
    %4312 = vmatpush.msra.mxu0 %v4311
    %v4313 = vand.u32 %v1248, 4294901760
    %v4314 = vsub.f32 %v1248, %v4313
    %4315 = vmatpush.msra.mxu0 %v4314
    %v4316 = vand.u32 %v1247, 4294901760
    %v4317 = vsub.f32 %v1247, %v4316
    %4318 = vmatpush.msra.mxu0 %v4317
    %v4319 = vand.u32 %v1246, 4294901760
    %v4320 = vsub.f32 %v1246, %v4319
    %4321 = vmatpush.msra.mxu0 %v4320
    %v4322 = vand.u32 %v1245, 4294901760
    %v4323 = vsub.f32 %v1245, %v4322
    %4324 = vmatpush.msra.mxu0 %v4323
    %v4325 = vand.u32 %v1244, 4294901760
    %v4326 = vsub.f32 %v1244, %v4325
    %4327 = vmatpush.msra.mxu0 %v4326
    %v4328 = vand.u32 %v1243, 4294901760
    %v4329 = vsub.f32 %v1243, %v4328
    %4330 = vmatpush.msra.mxu0 %v4329
    %v4331 = vand.u32 %v1242, 4294901760
    %v4332 = vsub.f32 %v1242, %v4331
    %4333 = vmatpush.msra.mxu0 %v4332
    %v4334 = vand.u32 %v1241, 4294901760
    %v4335 = vsub.f32 %v1241, %v4334
    %4336 = vmatpush.msra.mxu0 %v4335
    %v4337 = vand.u32 %v1240, 4294901760
    %v4338 = vsub.f32 %v1240, %v4337
    %4339 = vmatpush.msra.mxu0 %v4338
    %v4340 = vand.u32 %v4146, 4294901760
    %v4341 = vsub.f32 %v4146, %v4340
    %4342 = vmatmul.f32.gmra.mxu0 %v4341
    %v4343 = vpop.f32.mrf.mxu0
    %v4344 = vadd.f32 %v4290, %v4343
    %4345 = vdwg.mxu0
    %v4346 = vand.u32 %v1255, 4294901760
    %4347 = vmatpush.msra.mxu0 %v4346
    %v4348 = vand.u32 %v1254, 4294901760
    %4349 = vmatpush.msra.mxu0 %v4348
    %v4350 = vand.u32 %v1253, 4294901760
    %4351 = vmatpush.msra.mxu0 %v4350
    %v4352 = vand.u32 %v1252, 4294901760
    %4353 = vmatpush.msra.mxu0 %v4352
    %v4354 = vand.u32 %v1251, 4294901760
    %4355 = vmatpush.msra.mxu0 %v4354
    %v4356 = vand.u32 %v1250, 4294901760
    %4357 = vmatpush.msra.mxu0 %v4356
    %v4358 = vand.u32 %v1249, 4294901760
    %4359 = vmatpush.msra.mxu0 %v4358
    %v4360 = vand.u32 %v1248, 4294901760
    %4361 = vmatpush.msra.mxu0 %v4360
    %v4362 = vand.u32 %v1247, 4294901760
    %4363 = vmatpush.msra.mxu0 %v4362
    %v4364 = vand.u32 %v1246, 4294901760
    %4365 = vmatpush.msra.mxu0 %v4364
    %v4366 = vand.u32 %v1245, 4294901760
    %4367 = vmatpush.msra.mxu0 %v4366
    %v4368 = vand.u32 %v1244, 4294901760
    %4369 = vmatpush.msra.mxu0 %v4368
    %v4370 = vand.u32 %v1243, 4294901760
    %4371 = vmatpush.msra.mxu0 %v4370
    %v4372 = vand.u32 %v1242, 4294901760
    %4373 = vmatpush.msra.mxu0 %v4372
    %v4374 = vand.u32 %v1241, 4294901760
    %4375 = vmatpush.msra.mxu0 %v4374
    %v4376 = vand.u32 %v1240, 4294901760
    %4377 = vmatpush.msra.mxu0 %v4376
    %v4378 = vand.u32 %v4146, 4294901760
    %v4379 = vsub.f32 %v4146, %v4378
    %v4380 = vand.u32 %v4379, 4294901760
    %4381 = vmatmul.f32.gmra.mxu0 %v4380
    %v4382 = vpop.f32.mrf.mxu0
    %v4383 = vadd.f32 %v4344, %v4382
    %4384 = vdwg.mxu0
    %v4385 = vand.u32 %v1255, 4294901760
    %v4386 = vsub.f32 %v1255, %v4385
    %v4387 = vand.u32 %v4386, 4294901760
    %4388 = vmatpush.msra.mxu0 %v4387
    %v4389 = vand.u32 %v1254, 4294901760
    %v4390 = vsub.f32 %v1254, %v4389
    %v4391 = vand.u32 %v4390, 4294901760
    %4392 = vmatpush.msra.mxu0 %v4391
    %v4393 = vand.u32 %v1253, 4294901760
    %v4394 = vsub.f32 %v1253, %v4393
    %v4395 = vand.u32 %v4394, 4294901760
    %4396 = vmatpush.msra.mxu0 %v4395
    %v4397 = vand.u32 %v1252, 4294901760
    %v4398 = vsub.f32 %v1252, %v4397
    %v4399 = vand.u32 %v4398, 4294901760
    %4400 = vmatpush.msra.mxu0 %v4399
    %v4401 = vand.u32 %v1251, 4294901760
    %v4402 = vsub.f32 %v1251, %v4401
    %v4403 = vand.u32 %v4402, 4294901760
    %4404 = vmatpush.msra.mxu0 %v4403
    %v4405 = vand.u32 %v1250, 4294901760
    %v4406 = vsub.f32 %v1250, %v4405
    %v4407 = vand.u32 %v4406, 4294901760
    %4408 = vmatpush.msra.mxu0 %v4407
    %v4409 = vand.u32 %v1249, 4294901760
    %v4410 = vsub.f32 %v1249, %v4409
    %v4411 = vand.u32 %v4410, 4294901760
    %4412 = vmatpush.msra.mxu0 %v4411
    %v4413 = vand.u32 %v1248, 4294901760
    %v4414 = vsub.f32 %v1248, %v4413
    %v4415 = vand.u32 %v4414, 4294901760
    %4416 = vmatpush.msra.mxu0 %v4415
    %v4417 = vand.u32 %v1247, 4294901760
    %v4418 = vsub.f32 %v1247, %v4417
    %v4419 = vand.u32 %v4418, 4294901760
    %4420 = vmatpush.msra.mxu0 %v4419
    %v4421 = vand.u32 %v1246, 4294901760
    %v4422 = vsub.f32 %v1246, %v4421
    %v4423 = vand.u32 %v4422, 4294901760
    %4424 = vmatpush.msra.mxu0 %v4423
    %v4425 = vand.u32 %v1245, 4294901760
    %v4426 = vsub.f32 %v1245, %v4425
    %v4427 = vand.u32 %v4426, 4294901760
    %4428 = vmatpush.msra.mxu0 %v4427
    %v4429 = vand.u32 %v1244, 4294901760
    %v4430 = vsub.f32 %v1244, %v4429
    %v4431 = vand.u32 %v4430, 4294901760
    %4432 = vmatpush.msra.mxu0 %v4431
    %v4433 = vand.u32 %v1243, 4294901760
    %v4434 = vsub.f32 %v1243, %v4433
    %v4435 = vand.u32 %v4434, 4294901760
    %4436 = vmatpush.msra.mxu0 %v4435
    %v4437 = vand.u32 %v1242, 4294901760
    %v4438 = vsub.f32 %v1242, %v4437
    %v4439 = vand.u32 %v4438, 4294901760
    %4440 = vmatpush.msra.mxu0 %v4439
    %v4441 = vand.u32 %v1241, 4294901760
    %v4442 = vsub.f32 %v1241, %v4441
    %v4443 = vand.u32 %v4442, 4294901760
    %4444 = vmatpush.msra.mxu0 %v4443
    %v4445 = vand.u32 %v1240, 4294901760
    %v4446 = vsub.f32 %v1240, %v4445
    %v4447 = vand.u32 %v4446, 4294901760
    %4448 = vmatpush.msra.mxu0 %v4447
    %v4449 = vand.u32 %v4146, 4294901760
    %4450 = vmatmul.f32.gmra.mxu0 %v4449
    %v4451 = vpop.f32.mrf.mxu0
    %v4452 = vadd.f32 %v4383, %v4451
    %4453 = vdwg.mxu0
    %v4454 = vand.u32 %v1255, 4294901760
    %4455 = vmatpush.msra.mxu0 %v4454
    %v4456 = vand.u32 %v1254, 4294901760
    %4457 = vmatpush.msra.mxu0 %v4456
    %v4458 = vand.u32 %v1253, 4294901760
    %4459 = vmatpush.msra.mxu0 %v4458
    %v4460 = vand.u32 %v1252, 4294901760
    %4461 = vmatpush.msra.mxu0 %v4460
    %v4462 = vand.u32 %v1251, 4294901760
    %4463 = vmatpush.msra.mxu0 %v4462
    %v4464 = vand.u32 %v1250, 4294901760
    %4465 = vmatpush.msra.mxu0 %v4464
    %v4466 = vand.u32 %v1249, 4294901760
    %4467 = vmatpush.msra.mxu0 %v4466
    %v4468 = vand.u32 %v1248, 4294901760
    %4469 = vmatpush.msra.mxu0 %v4468
    %v4470 = vand.u32 %v1247, 4294901760
    %4471 = vmatpush.msra.mxu0 %v4470
    %v4472 = vand.u32 %v1246, 4294901760
    %4473 = vmatpush.msra.mxu0 %v4472
    %v4474 = vand.u32 %v1245, 4294901760
    %4475 = vmatpush.msra.mxu0 %v4474
    %v4476 = vand.u32 %v1244, 4294901760
    %4477 = vmatpush.msra.mxu0 %v4476
    %v4478 = vand.u32 %v1243, 4294901760
    %4479 = vmatpush.msra.mxu0 %v4478
    %v4480 = vand.u32 %v1242, 4294901760
    %4481 = vmatpush.msra.mxu0 %v4480
    %v4482 = vand.u32 %v1241, 4294901760
    %4483 = vmatpush.msra.mxu0 %v4482
    %v4484 = vand.u32 %v1240, 4294901760
    %4485 = vmatpush.msra.mxu0 %v4484
    %v4486 = vand.u32 %v4146, 4294901760
    %4487 = vmatmul.f32.gmra.mxu0 %v4486
    %v4488 = vpop.f32.mrf.mxu0
    %v4489 = vadd.f32 %v4452, %v4488
    %4490 = vdwg.mxu0
    %v4491 = vand.u32 %v1271, 4294901760
    %4492 = vmatpush.msra.mxu0 %v4491
    %v4493 = vand.u32 %v1270, 4294901760
    %4494 = vmatpush.msra.mxu0 %v4493
    %v4495 = vand.u32 %v1269, 4294901760
    %4496 = vmatpush.msra.mxu0 %v4495
    %v4497 = vand.u32 %v1268, 4294901760
    %4498 = vmatpush.msra.mxu0 %v4497
    %v4499 = vand.u32 %v1267, 4294901760
    %4500 = vmatpush.msra.mxu0 %v4499
    %v4501 = vand.u32 %v1266, 4294901760
    %4502 = vmatpush.msra.mxu0 %v4501
    %v4503 = vand.u32 %v1265, 4294901760
    %4504 = vmatpush.msra.mxu0 %v4503
    %v4505 = vand.u32 %v1264, 4294901760
    %4506 = vmatpush.msra.mxu0 %v4505
    %v4507 = vand.u32 %v1263, 4294901760
    %4508 = vmatpush.msra.mxu0 %v4507
    %v4509 = vand.u32 %v1262, 4294901760
    %4510 = vmatpush.msra.mxu0 %v4509
    %v4511 = vand.u32 %v1261, 4294901760
    %4512 = vmatpush.msra.mxu0 %v4511
    %v4513 = vand.u32 %v1260, 4294901760
    %4514 = vmatpush.msra.mxu0 %v4513
    %v4515 = vand.u32 %v1259, 4294901760
    %4516 = vmatpush.msra.mxu0 %v4515
    %v4517 = vand.u32 %v1258, 4294901760
    %4518 = vmatpush.msra.mxu0 %v4517
    %v4519 = vand.u32 %v1257, 4294901760
    %4520 = vmatpush.msra.mxu0 %v4519
    %v4521 = vand.u32 %v1256, 4294901760
    %4522 = vmatpush.msra.mxu0 %v4521
    %v4523 = vand.u32 %v4147, 4294901760
    %v4524 = vsub.f32 %v4147, %v4523
    %v4525 = vand.u32 %v4524, 4294901760
    %v4526 = vsub.f32 %v4524, %v4525
    %v4527 = vand.u32 %v4526, 4294901760
    %4528 = vmatmul.f32.gmra.mxu0 %v4527
    %v4529 = vpop.f32.mrf.mxu0
    %v4530 = vadd.f32 %v4489, %v4529
    %4531 = vdwg.mxu0
    %v4532 = vand.u32 %v1271, 4294901760
    %v4533 = vsub.f32 %v1271, %v4532
    %v4534 = vand.u32 %v4533, 4294901760
    %v4535 = vsub.f32 %v4533, %v4534
    %v4536 = vand.u32 %v4535, 4294901760
    %4537 = vmatpush.msra.mxu0 %v4536
    %v4538 = vand.u32 %v1270, 4294901760
    %v4539 = vsub.f32 %v1270, %v4538
    %v4540 = vand.u32 %v4539, 4294901760
    %v4541 = vsub.f32 %v4539, %v4540
    %v4542 = vand.u32 %v4541, 4294901760
    %4543 = vmatpush.msra.mxu0 %v4542
    %v4544 = vand.u32 %v1269, 4294901760
    %v4545 = vsub.f32 %v1269, %v4544
    %v4546 = vand.u32 %v4545, 4294901760
    %v4547 = vsub.f32 %v4545, %v4546
    %v4548 = vand.u32 %v4547, 4294901760
    %4549 = vmatpush.msra.mxu0 %v4548
    %v4550 = vand.u32 %v1268, 4294901760
    %v4551 = vsub.f32 %v1268, %v4550
    %v4552 = vand.u32 %v4551, 4294901760
    %v4553 = vsub.f32 %v4551, %v4552
    %v4554 = vand.u32 %v4553, 4294901760
    %4555 = vmatpush.msra.mxu0 %v4554
    %v4556 = vand.u32 %v1267, 4294901760
    %v4557 = vsub.f32 %v1267, %v4556
    %v4558 = vand.u32 %v4557, 4294901760
    %v4559 = vsub.f32 %v4557, %v4558
    %v4560 = vand.u32 %v4559, 4294901760
    %4561 = vmatpush.msra.mxu0 %v4560
    %v4562 = vand.u32 %v1266, 4294901760
    %v4563 = vsub.f32 %v1266, %v4562
    %v4564 = vand.u32 %v4563, 4294901760
    %v4565 = vsub.f32 %v4563, %v4564
    %v4566 = vand.u32 %v4565, 4294901760
    %4567 = vmatpush.msra.mxu0 %v4566
    %v4568 = vand.u32 %v1265, 4294901760
    %v4569 = vsub.f32 %v1265, %v4568
    %v4570 = vand.u32 %v4569, 4294901760
    %v4571 = vsub.f32 %v4569, %v4570
    %v4572 = vand.u32 %v4571, 4294901760
    %4573 = vmatpush.msra.mxu0 %v4572
    %v4574 = vand.u32 %v1264, 4294901760
    %v4575 = vsub.f32 %v1264, %v4574
    %v4576 = vand.u32 %v4575, 4294901760
    %v4577 = vsub.f32 %v4575, %v4576
    %v4578 = vand.u32 %v4577, 4294901760
    %4579 = vmatpush.msra.mxu0 %v4578
    %v4580 = vand.u32 %v1263, 4294901760
    %v4581 = vsub.f32 %v1263, %v4580
    %v4582 = vand.u32 %v4581, 4294901760
    %v4583 = vsub.f32 %v4581, %v4582
    %v4584 = vand.u32 %v4583, 4294901760
    %4585 = vmatpush.msra.mxu0 %v4584
    %v4586 = vand.u32 %v1262, 4294901760
    %v4587 = vsub.f32 %v1262, %v4586
    %v4588 = vand.u32 %v4587, 4294901760
    %v4589 = vsub.f32 %v4587, %v4588
    %v4590 = vand.u32 %v4589, 4294901760
    %4591 = vmatpush.msra.mxu0 %v4590
    %v4592 = vand.u32 %v1261, 4294901760
    %v4593 = vsub.f32 %v1261, %v4592
    %v4594 = vand.u32 %v4593, 4294901760
    %v4595 = vsub.f32 %v4593, %v4594
    %v4596 = vand.u32 %v4595, 4294901760
    %4597 = vmatpush.msra.mxu0 %v4596
    %v4598 = vand.u32 %v1260, 4294901760
    %v4599 = vsub.f32 %v1260, %v4598
    %v4600 = vand.u32 %v4599, 4294901760
    %v4601 = vsub.f32 %v4599, %v4600
    %v4602 = vand.u32 %v4601, 4294901760
    %4603 = vmatpush.msra.mxu0 %v4602
    %v4604 = vand.u32 %v1259, 4294901760
    %v4605 = vsub.f32 %v1259, %v4604
    %v4606 = vand.u32 %v4605, 4294901760
    %v4607 = vsub.f32 %v4605, %v4606
    %v4608 = vand.u32 %v4607, 4294901760
    %4609 = vmatpush.msra.mxu0 %v4608
    %v4610 = vand.u32 %v1258, 4294901760
    %v4611 = vsub.f32 %v1258, %v4610
    %v4612 = vand.u32 %v4611, 4294901760
    %v4613 = vsub.f32 %v4611, %v4612
    %v4614 = vand.u32 %v4613, 4294901760
    %4615 = vmatpush.msra.mxu0 %v4614
    %v4616 = vand.u32 %v1257, 4294901760
    %v4617 = vsub.f32 %v1257, %v4616
    %v4618 = vand.u32 %v4617, 4294901760
    %v4619 = vsub.f32 %v4617, %v4618
    %v4620 = vand.u32 %v4619, 4294901760
    %4621 = vmatpush.msra.mxu0 %v4620
    %v4622 = vand.u32 %v1256, 4294901760
    %v4623 = vsub.f32 %v1256, %v4622
    %v4624 = vand.u32 %v4623, 4294901760
    %v4625 = vsub.f32 %v4623, %v4624
    %v4626 = vand.u32 %v4625, 4294901760
    %4627 = vmatpush.msra.mxu0 %v4626
    %v4628 = vand.u32 %v4147, 4294901760
    %4629 = vmatmul.f32.gmra.mxu0 %v4628
    %v4630 = vpop.f32.mrf.mxu0
    %v4631 = vadd.f32 %v4530, %v4630
    %4632 = vdwg.mxu0
    %v4633 = vand.u32 %v1271, 4294901760
    %v4634 = vsub.f32 %v1271, %v4633
    %4635 = vmatpush.msra.mxu0 %v4634
    %v4636 = vand.u32 %v1270, 4294901760
    %v4637 = vsub.f32 %v1270, %v4636
    %4638 = vmatpush.msra.mxu0 %v4637
    %v4639 = vand.u32 %v1269, 4294901760
    %v4640 = vsub.f32 %v1269, %v4639
    %4641 = vmatpush.msra.mxu0 %v4640
    %v4642 = vand.u32 %v1268, 4294901760
    %v4643 = vsub.f32 %v1268, %v4642
    %4644 = vmatpush.msra.mxu0 %v4643
    %v4645 = vand.u32 %v1267, 4294901760
    %v4646 = vsub.f32 %v1267, %v4645
    %4647 = vmatpush.msra.mxu0 %v4646
    %v4648 = vand.u32 %v1266, 4294901760
    %v4649 = vsub.f32 %v1266, %v4648
    %4650 = vmatpush.msra.mxu0 %v4649
    %v4651 = vand.u32 %v1265, 4294901760
    %v4652 = vsub.f32 %v1265, %v4651
    %4653 = vmatpush.msra.mxu0 %v4652
    %v4654 = vand.u32 %v1264, 4294901760
    %v4655 = vsub.f32 %v1264, %v4654
    %4656 = vmatpush.msra.mxu0 %v4655
    %v4657 = vand.u32 %v1263, 4294901760
    %v4658 = vsub.f32 %v1263, %v4657
    %4659 = vmatpush.msra.mxu0 %v4658
    %v4660 = vand.u32 %v1262, 4294901760
    %v4661 = vsub.f32 %v1262, %v4660
    %4662 = vmatpush.msra.mxu0 %v4661
    %v4663 = vand.u32 %v1261, 4294901760
    %v4664 = vsub.f32 %v1261, %v4663
    %4665 = vmatpush.msra.mxu0 %v4664
    %v4666 = vand.u32 %v1260, 4294901760
    %v4667 = vsub.f32 %v1260, %v4666
    %4668 = vmatpush.msra.mxu0 %v4667
    %v4669 = vand.u32 %v1259, 4294901760
    %v4670 = vsub.f32 %v1259, %v4669
    %4671 = vmatpush.msra.mxu0 %v4670
    %v4672 = vand.u32 %v1258, 4294901760
    %v4673 = vsub.f32 %v1258, %v4672
    %4674 = vmatpush.msra.mxu0 %v4673
    %v4675 = vand.u32 %v1257, 4294901760
    %v4676 = vsub.f32 %v1257, %v4675
    %4677 = vmatpush.msra.mxu0 %v4676
    %v4678 = vand.u32 %v1256, 4294901760
    %v4679 = vsub.f32 %v1256, %v4678
    %4680 = vmatpush.msra.mxu0 %v4679
    %v4681 = vand.u32 %v4147, 4294901760
    %v4682 = vsub.f32 %v4147, %v4681
    %4683 = vmatmul.f32.gmra.mxu0 %v4682
    %v4684 = vpop.f32.mrf.mxu0
    %v4685 = vadd.f32 %v4631, %v4684
    %4686 = vdwg.mxu0
    %v4687 = vand.u32 %v1271, 4294901760
    %4688 = vmatpush.msra.mxu0 %v4687
    %v4689 = vand.u32 %v1270, 4294901760
    %4690 = vmatpush.msra.mxu0 %v4689
    %v4691 = vand.u32 %v1269, 4294901760
    %4692 = vmatpush.msra.mxu0 %v4691
    %v4693 = vand.u32 %v1268, 4294901760
    %4694 = vmatpush.msra.mxu0 %v4693
    %v4695 = vand.u32 %v1267, 4294901760
    %4696 = vmatpush.msra.mxu0 %v4695
    %v4697 = vand.u32 %v1266, 4294901760
    %4698 = vmatpush.msra.mxu0 %v4697
    %v4699 = vand.u32 %v1265, 4294901760
    %4700 = vmatpush.msra.mxu0 %v4699
    %v4701 = vand.u32 %v1264, 4294901760
    %4702 = vmatpush.msra.mxu0 %v4701
    %v4703 = vand.u32 %v1263, 4294901760
    %4704 = vmatpush.msra.mxu0 %v4703
    %v4705 = vand.u32 %v1262, 4294901760
    %4706 = vmatpush.msra.mxu0 %v4705
    %v4707 = vand.u32 %v1261, 4294901760
    %4708 = vmatpush.msra.mxu0 %v4707
    %v4709 = vand.u32 %v1260, 4294901760
    %4710 = vmatpush.msra.mxu0 %v4709
    %v4711 = vand.u32 %v1259, 4294901760
    %4712 = vmatpush.msra.mxu0 %v4711
    %v4713 = vand.u32 %v1258, 4294901760
    %4714 = vmatpush.msra.mxu0 %v4713
    %v4715 = vand.u32 %v1257, 4294901760
    %4716 = vmatpush.msra.mxu0 %v4715
    %v4717 = vand.u32 %v1256, 4294901760
    %4718 = vmatpush.msra.mxu0 %v4717
    %v4719 = vand.u32 %v4147, 4294901760
    %v4720 = vsub.f32 %v4147, %v4719
    %v4721 = vand.u32 %v4720, 4294901760
    %4722 = vmatmul.f32.gmra.mxu0 %v4721
    %v4723 = vpop.f32.mrf.mxu0
    %v4724 = vadd.f32 %v4685, %v4723
    %4725 = vdwg.mxu0
    %v4726 = vand.u32 %v1271, 4294901760
    %v4727 = vsub.f32 %v1271, %v4726
    %v4728 = vand.u32 %v4727, 4294901760
    %4729 = vmatpush.msra.mxu0 %v4728
    %v4730 = vand.u32 %v1270, 4294901760
    %v4731 = vsub.f32 %v1270, %v4730
    %v4732 = vand.u32 %v4731, 4294901760
    %4733 = vmatpush.msra.mxu0 %v4732
    %v4734 = vand.u32 %v1269, 4294901760
    %v4735 = vsub.f32 %v1269, %v4734
    %v4736 = vand.u32 %v4735, 4294901760
    %4737 = vmatpush.msra.mxu0 %v4736
    %v4738 = vand.u32 %v1268, 4294901760
    %v4739 = vsub.f32 %v1268, %v4738
    %v4740 = vand.u32 %v4739, 4294901760
    %4741 = vmatpush.msra.mxu0 %v4740
    %v4742 = vand.u32 %v1267, 4294901760
    %v4743 = vsub.f32 %v1267, %v4742
    %v4744 = vand.u32 %v4743, 4294901760
    %4745 = vmatpush.msra.mxu0 %v4744
    %v4746 = vand.u32 %v1266, 4294901760
    %v4747 = vsub.f32 %v1266, %v4746
    %v4748 = vand.u32 %v4747, 4294901760
    %4749 = vmatpush.msra.mxu0 %v4748
    %v4750 = vand.u32 %v1265, 4294901760
    %v4751 = vsub.f32 %v1265, %v4750
    %v4752 = vand.u32 %v4751, 4294901760
    %4753 = vmatpush.msra.mxu0 %v4752
    %v4754 = vand.u32 %v1264, 4294901760
    %v4755 = vsub.f32 %v1264, %v4754
    %v4756 = vand.u32 %v4755, 4294901760
    %4757 = vmatpush.msra.mxu0 %v4756
    %v4758 = vand.u32 %v1263, 4294901760
    %v4759 = vsub.f32 %v1263, %v4758
    %v4760 = vand.u32 %v4759, 4294901760
    %4761 = vmatpush.msra.mxu0 %v4760
    %v4762 = vand.u32 %v1262, 4294901760
    %v4763 = vsub.f32 %v1262, %v4762
    %v4764 = vand.u32 %v4763, 4294901760
    %4765 = vmatpush.msra.mxu0 %v4764
    %v4766 = vand.u32 %v1261, 4294901760
    %v4767 = vsub.f32 %v1261, %v4766
    %v4768 = vand.u32 %v4767, 4294901760
    %4769 = vmatpush.msra.mxu0 %v4768
    %v4770 = vand.u32 %v1260, 4294901760
    %v4771 = vsub.f32 %v1260, %v4770
    %v4772 = vand.u32 %v4771, 4294901760
    %4773 = vmatpush.msra.mxu0 %v4772
    %v4774 = vand.u32 %v1259, 4294901760
    %v4775 = vsub.f32 %v1259, %v4774
    %v4776 = vand.u32 %v4775, 4294901760
    %4777 = vmatpush.msra.mxu0 %v4776
    %v4778 = vand.u32 %v1258, 4294901760
    %v4779 = vsub.f32 %v1258, %v4778
    %v4780 = vand.u32 %v4779, 4294901760
    %4781 = vmatpush.msra.mxu0 %v4780
    %v4782 = vand.u32 %v1257, 4294901760
    %v4783 = vsub.f32 %v1257, %v4782
    %v4784 = vand.u32 %v4783, 4294901760
    %4785 = vmatpush.msra.mxu0 %v4784
    %v4786 = vand.u32 %v1256, 4294901760
    %v4787 = vsub.f32 %v1256, %v4786
    %v4788 = vand.u32 %v4787, 4294901760
    %4789 = vmatpush.msra.mxu0 %v4788
    %v4790 = vand.u32 %v4147, 4294901760
    %4791 = vmatmul.f32.gmra.mxu0 %v4790
    %v4792 = vpop.f32.mrf.mxu0
    %v4793 = vadd.f32 %v4724, %v4792
    %4794 = vdwg.mxu0
    %v4795 = vand.u32 %v1271, 4294901760
    %4796 = vmatpush.msra.mxu0 %v4795
    %v4797 = vand.u32 %v1270, 4294901760
    %4798 = vmatpush.msra.mxu0 %v4797
    %v4799 = vand.u32 %v1269, 4294901760
    %4800 = vmatpush.msra.mxu0 %v4799
    %v4801 = vand.u32 %v1268, 4294901760
    %4802 = vmatpush.msra.mxu0 %v4801
    %v4803 = vand.u32 %v1267, 4294901760
    %4804 = vmatpush.msra.mxu0 %v4803
    %v4805 = vand.u32 %v1266, 4294901760
    %4806 = vmatpush.msra.mxu0 %v4805
    %v4807 = vand.u32 %v1265, 4294901760
    %4808 = vmatpush.msra.mxu0 %v4807
    %v4809 = vand.u32 %v1264, 4294901760
    %4810 = vmatpush.msra.mxu0 %v4809
    %v4811 = vand.u32 %v1263, 4294901760
    %4812 = vmatpush.msra.mxu0 %v4811
    %v4813 = vand.u32 %v1262, 4294901760
    %4814 = vmatpush.msra.mxu0 %v4813
    %v4815 = vand.u32 %v1261, 4294901760
    %4816 = vmatpush.msra.mxu0 %v4815
    %v4817 = vand.u32 %v1260, 4294901760
    %4818 = vmatpush.msra.mxu0 %v4817
    %v4819 = vand.u32 %v1259, 4294901760
    %4820 = vmatpush.msra.mxu0 %v4819
    %v4821 = vand.u32 %v1258, 4294901760
    %4822 = vmatpush.msra.mxu0 %v4821
    %v4823 = vand.u32 %v1257, 4294901760
    %4824 = vmatpush.msra.mxu0 %v4823
    %v4825 = vand.u32 %v1256, 4294901760
    %4826 = vmatpush.msra.mxu0 %v4825
    %v4827 = vand.u32 %v4147, 4294901760
    %4828 = vmatmul.f32.gmra.mxu0 %v4827
    %v4829 = vpop.f32.mrf.mxu0
    %v4830 = vadd.f32 %v4793, %v4829
    %4831 = vdwg.mxu0
    %v4832 = vperm.slane %v4141, 0
    %v4833 = vperm.slane %v4141, 1
    %v4836 = vand.u32 %v1287, 4294901760
    %4837 = vmatpush.msra.mxu0 %v4836
    %v4838 = vand.u32 %v1286, 4294901760
    %4839 = vmatpush.msra.mxu0 %v4838
    %v4840 = vand.u32 %v1285, 4294901760
    %4841 = vmatpush.msra.mxu0 %v4840
    %v4842 = vand.u32 %v1284, 4294901760
    %4843 = vmatpush.msra.mxu0 %v4842
    %v4844 = vand.u32 %v1283, 4294901760
    %4845 = vmatpush.msra.mxu0 %v4844
    %v4846 = vand.u32 %v1282, 4294901760
    %4847 = vmatpush.msra.mxu0 %v4846
    %v4848 = vand.u32 %v1281, 4294901760
    %4849 = vmatpush.msra.mxu0 %v4848
    %v4850 = vand.u32 %v1280, 4294901760
    %4851 = vmatpush.msra.mxu0 %v4850
    %v4852 = vand.u32 %v1279, 4294901760
    %4853 = vmatpush.msra.mxu0 %v4852
    %v4854 = vand.u32 %v1278, 4294901760
    %4855 = vmatpush.msra.mxu0 %v4854
    %v4856 = vand.u32 %v1277, 4294901760
    %4857 = vmatpush.msra.mxu0 %v4856
    %v4858 = vand.u32 %v1276, 4294901760
    %4859 = vmatpush.msra.mxu0 %v4858
    %v4860 = vand.u32 %v1275, 4294901760
    %4861 = vmatpush.msra.mxu0 %v4860
    %v4862 = vand.u32 %v1274, 4294901760
    %4863 = vmatpush.msra.mxu0 %v4862
    %v4864 = vand.u32 %v1273, 4294901760
    %4865 = vmatpush.msra.mxu0 %v4864
    %v4866 = vand.u32 %v1272, 4294901760
    %4867 = vmatpush.msra.mxu0 %v4866
    %v4868 = vand.u32 %v4832, 4294901760
    %v4869 = vsub.f32 %v4832, %v4868
    %v4870 = vand.u32 %v4869, 4294901760
    %v4871 = vsub.f32 %v4869, %v4870
    %v4872 = vand.u32 %v4871, 4294901760
    %4873 = vmatmul.f32.gmra.mxu0 %v4872
    %v4874 = vpop.f32.mrf.mxu0
    %v4875 = vadd.f32 0.0, %v4874
    %4876 = vdwg.mxu0
    %v4877 = vand.u32 %v1287, 4294901760
    %v4878 = vsub.f32 %v1287, %v4877
    %v4879 = vand.u32 %v4878, 4294901760
    %v4880 = vsub.f32 %v4878, %v4879
    %v4881 = vand.u32 %v4880, 4294901760
    %4882 = vmatpush.msra.mxu0 %v4881
    %v4883 = vand.u32 %v1286, 4294901760
    %v4884 = vsub.f32 %v1286, %v4883
    %v4885 = vand.u32 %v4884, 4294901760
    %v4886 = vsub.f32 %v4884, %v4885
    %v4887 = vand.u32 %v4886, 4294901760
    %4888 = vmatpush.msra.mxu0 %v4887
    %v4889 = vand.u32 %v1285, 4294901760
    %v4890 = vsub.f32 %v1285, %v4889
    %v4891 = vand.u32 %v4890, 4294901760
    %v4892 = vsub.f32 %v4890, %v4891
    %v4893 = vand.u32 %v4892, 4294901760
    %4894 = vmatpush.msra.mxu0 %v4893
    %v4895 = vand.u32 %v1284, 4294901760
    %v4896 = vsub.f32 %v1284, %v4895
    %v4897 = vand.u32 %v4896, 4294901760
    %v4898 = vsub.f32 %v4896, %v4897
    %v4899 = vand.u32 %v4898, 4294901760
    %4900 = vmatpush.msra.mxu0 %v4899
    %v4901 = vand.u32 %v1283, 4294901760
    %v4902 = vsub.f32 %v1283, %v4901
    %v4903 = vand.u32 %v4902, 4294901760
    %v4904 = vsub.f32 %v4902, %v4903
    %v4905 = vand.u32 %v4904, 4294901760
    %4906 = vmatpush.msra.mxu0 %v4905
    %v4907 = vand.u32 %v1282, 4294901760
    %v4908 = vsub.f32 %v1282, %v4907
    %v4909 = vand.u32 %v4908, 4294901760
    %v4910 = vsub.f32 %v4908, %v4909
    %v4911 = vand.u32 %v4910, 4294901760
    %4912 = vmatpush.msra.mxu0 %v4911
    %v4913 = vand.u32 %v1281, 4294901760
    %v4914 = vsub.f32 %v1281, %v4913
    %v4915 = vand.u32 %v4914, 4294901760
    %v4916 = vsub.f32 %v4914, %v4915
    %v4917 = vand.u32 %v4916, 4294901760
    %4918 = vmatpush.msra.mxu0 %v4917
    %v4919 = vand.u32 %v1280, 4294901760
    %v4920 = vsub.f32 %v1280, %v4919
    %v4921 = vand.u32 %v4920, 4294901760
    %v4922 = vsub.f32 %v4920, %v4921
    %v4923 = vand.u32 %v4922, 4294901760
    %4924 = vmatpush.msra.mxu0 %v4923
    %v4925 = vand.u32 %v1279, 4294901760
    %v4926 = vsub.f32 %v1279, %v4925
    %v4927 = vand.u32 %v4926, 4294901760
    %v4928 = vsub.f32 %v4926, %v4927
    %v4929 = vand.u32 %v4928, 4294901760
    %4930 = vmatpush.msra.mxu0 %v4929
    %v4931 = vand.u32 %v1278, 4294901760
    %v4932 = vsub.f32 %v1278, %v4931
    %v4933 = vand.u32 %v4932, 4294901760
    %v4934 = vsub.f32 %v4932, %v4933
    %v4935 = vand.u32 %v4934, 4294901760
    %4936 = vmatpush.msra.mxu0 %v4935
    %v4937 = vand.u32 %v1277, 4294901760
    %v4938 = vsub.f32 %v1277, %v4937
    %v4939 = vand.u32 %v4938, 4294901760
    %v4940 = vsub.f32 %v4938, %v4939
    %v4941 = vand.u32 %v4940, 4294901760
    %4942 = vmatpush.msra.mxu0 %v4941
    %v4943 = vand.u32 %v1276, 4294901760
    %v4944 = vsub.f32 %v1276, %v4943
    %v4945 = vand.u32 %v4944, 4294901760
    %v4946 = vsub.f32 %v4944, %v4945
    %v4947 = vand.u32 %v4946, 4294901760
    %4948 = vmatpush.msra.mxu0 %v4947
    %v4949 = vand.u32 %v1275, 4294901760
    %v4950 = vsub.f32 %v1275, %v4949
    %v4951 = vand.u32 %v4950, 4294901760
    %v4952 = vsub.f32 %v4950, %v4951
    %v4953 = vand.u32 %v4952, 4294901760
    %4954 = vmatpush.msra.mxu0 %v4953
    %v4955 = vand.u32 %v1274, 4294901760
    %v4956 = vsub.f32 %v1274, %v4955
    %v4957 = vand.u32 %v4956, 4294901760
    %v4958 = vsub.f32 %v4956, %v4957
    %v4959 = vand.u32 %v4958, 4294901760
    %4960 = vmatpush.msra.mxu0 %v4959
    %v4961 = vand.u32 %v1273, 4294901760
    %v4962 = vsub.f32 %v1273, %v4961
    %v4963 = vand.u32 %v4962, 4294901760
    %v4964 = vsub.f32 %v4962, %v4963
    %v4965 = vand.u32 %v4964, 4294901760
    %4966 = vmatpush.msra.mxu0 %v4965
    %v4967 = vand.u32 %v1272, 4294901760
    %v4968 = vsub.f32 %v1272, %v4967
    %v4969 = vand.u32 %v4968, 4294901760
    %v4970 = vsub.f32 %v4968, %v4969
    %v4971 = vand.u32 %v4970, 4294901760
    %4972 = vmatpush.msra.mxu0 %v4971
    %v4973 = vand.u32 %v4832, 4294901760
    %4974 = vmatmul.f32.gmra.mxu0 %v4973
    %v4975 = vpop.f32.mrf.mxu0
    %v4976 = vadd.f32 %v4875, %v4975
    %4977 = vdwg.mxu0
    %v4978 = vand.u32 %v1287, 4294901760
    %v4979 = vsub.f32 %v1287, %v4978
    %4980 = vmatpush.msra.mxu0 %v4979
    %v4981 = vand.u32 %v1286, 4294901760
    %v4982 = vsub.f32 %v1286, %v4981
    %4983 = vmatpush.msra.mxu0 %v4982
    %v4984 = vand.u32 %v1285, 4294901760
    %v4985 = vsub.f32 %v1285, %v4984
    %4986 = vmatpush.msra.mxu0 %v4985
    %v4987 = vand.u32 %v1284, 4294901760
    %v4988 = vsub.f32 %v1284, %v4987
    %4989 = vmatpush.msra.mxu0 %v4988
    %v4990 = vand.u32 %v1283, 4294901760
    %v4991 = vsub.f32 %v1283, %v4990
    %4992 = vmatpush.msra.mxu0 %v4991
    %v4993 = vand.u32 %v1282, 4294901760
    %v4994 = vsub.f32 %v1282, %v4993
    %4995 = vmatpush.msra.mxu0 %v4994
    %v4996 = vand.u32 %v1281, 4294901760
    %v4997 = vsub.f32 %v1281, %v4996
    %4998 = vmatpush.msra.mxu0 %v4997
    %v4999 = vand.u32 %v1280, 4294901760
    %v5000 = vsub.f32 %v1280, %v4999
    %5001 = vmatpush.msra.mxu0 %v5000
    %v5002 = vand.u32 %v1279, 4294901760
    %v5003 = vsub.f32 %v1279, %v5002
    %5004 = vmatpush.msra.mxu0 %v5003
    %v5005 = vand.u32 %v1278, 4294901760
    %v5006 = vsub.f32 %v1278, %v5005
    %5007 = vmatpush.msra.mxu0 %v5006
    %v5008 = vand.u32 %v1277, 4294901760
    %v5009 = vsub.f32 %v1277, %v5008
    %5010 = vmatpush.msra.mxu0 %v5009
    %v5011 = vand.u32 %v1276, 4294901760
    %v5012 = vsub.f32 %v1276, %v5011
    %5013 = vmatpush.msra.mxu0 %v5012
    %v5014 = vand.u32 %v1275, 4294901760
    %v5015 = vsub.f32 %v1275, %v5014
    %5016 = vmatpush.msra.mxu0 %v5015
    %v5017 = vand.u32 %v1274, 4294901760
    %v5018 = vsub.f32 %v1274, %v5017
    %5019 = vmatpush.msra.mxu0 %v5018
    %v5020 = vand.u32 %v1273, 4294901760
    %v5021 = vsub.f32 %v1273, %v5020
    %5022 = vmatpush.msra.mxu0 %v5021
    %v5023 = vand.u32 %v1272, 4294901760
    %v5024 = vsub.f32 %v1272, %v5023
    %5025 = vmatpush.msra.mxu0 %v5024
    %v5026 = vand.u32 %v4832, 4294901760
    %v5027 = vsub.f32 %v4832, %v5026
    %5028 = vmatmul.f32.gmra.mxu0 %v5027
    %v5029 = vpop.f32.mrf.mxu0
    %v5030 = vadd.f32 %v4976, %v5029
    %5031 = vdwg.mxu0
    %v5032 = vand.u32 %v1287, 4294901760
    %5033 = vmatpush.msra.mxu0 %v5032
    %v5034 = vand.u32 %v1286, 4294901760
    %5035 = vmatpush.msra.mxu0 %v5034
    %v5036 = vand.u32 %v1285, 4294901760
    %5037 = vmatpush.msra.mxu0 %v5036
    %v5038 = vand.u32 %v1284, 4294901760
    %5039 = vmatpush.msra.mxu0 %v5038
    %v5040 = vand.u32 %v1283, 4294901760
    %5041 = vmatpush.msra.mxu0 %v5040
    %v5042 = vand.u32 %v1282, 4294901760
    %5043 = vmatpush.msra.mxu0 %v5042
    %v5044 = vand.u32 %v1281, 4294901760
    %5045 = vmatpush.msra.mxu0 %v5044
    %v5046 = vand.u32 %v1280, 4294901760
    %5047 = vmatpush.msra.mxu0 %v5046
    %v5048 = vand.u32 %v1279, 4294901760
    %5049 = vmatpush.msra.mxu0 %v5048
    %v5050 = vand.u32 %v1278, 4294901760
    %5051 = vmatpush.msra.mxu0 %v5050
    %v5052 = vand.u32 %v1277, 4294901760
    %5053 = vmatpush.msra.mxu0 %v5052
    %v5054 = vand.u32 %v1276, 4294901760
    %5055 = vmatpush.msra.mxu0 %v5054
    %v5056 = vand.u32 %v1275, 4294901760
    %5057 = vmatpush.msra.mxu0 %v5056
    %v5058 = vand.u32 %v1274, 4294901760
    %5059 = vmatpush.msra.mxu0 %v5058
    %v5060 = vand.u32 %v1273, 4294901760
    %5061 = vmatpush.msra.mxu0 %v5060
    %v5062 = vand.u32 %v1272, 4294901760
    %5063 = vmatpush.msra.mxu0 %v5062
    %v5064 = vand.u32 %v4832, 4294901760
    %v5065 = vsub.f32 %v4832, %v5064
    %v5066 = vand.u32 %v5065, 4294901760
    %5067 = vmatmul.f32.gmra.mxu0 %v5066
    %v5068 = vpop.f32.mrf.mxu0
    %v5069 = vadd.f32 %v5030, %v5068
    %5070 = vdwg.mxu0
    %v5071 = vand.u32 %v1287, 4294901760
    %v5072 = vsub.f32 %v1287, %v5071
    %v5073 = vand.u32 %v5072, 4294901760
    %5074 = vmatpush.msra.mxu0 %v5073
    %v5075 = vand.u32 %v1286, 4294901760
    %v5076 = vsub.f32 %v1286, %v5075
    %v5077 = vand.u32 %v5076, 4294901760
    %5078 = vmatpush.msra.mxu0 %v5077
    %v5079 = vand.u32 %v1285, 4294901760
    %v5080 = vsub.f32 %v1285, %v5079
    %v5081 = vand.u32 %v5080, 4294901760
    %5082 = vmatpush.msra.mxu0 %v5081
    %v5083 = vand.u32 %v1284, 4294901760
    %v5084 = vsub.f32 %v1284, %v5083
    %v5085 = vand.u32 %v5084, 4294901760
    %5086 = vmatpush.msra.mxu0 %v5085
    %v5087 = vand.u32 %v1283, 4294901760
    %v5088 = vsub.f32 %v1283, %v5087
    %v5089 = vand.u32 %v5088, 4294901760
    %5090 = vmatpush.msra.mxu0 %v5089
    %v5091 = vand.u32 %v1282, 4294901760
    %v5092 = vsub.f32 %v1282, %v5091
    %v5093 = vand.u32 %v5092, 4294901760
    %5094 = vmatpush.msra.mxu0 %v5093
    %v5095 = vand.u32 %v1281, 4294901760
    %v5096 = vsub.f32 %v1281, %v5095
    %v5097 = vand.u32 %v5096, 4294901760
    %5098 = vmatpush.msra.mxu0 %v5097
    %v5099 = vand.u32 %v1280, 4294901760
    %v5100 = vsub.f32 %v1280, %v5099
    %v5101 = vand.u32 %v5100, 4294901760
    %5102 = vmatpush.msra.mxu0 %v5101
    %v5103 = vand.u32 %v1279, 4294901760
    %v5104 = vsub.f32 %v1279, %v5103
    %v5105 = vand.u32 %v5104, 4294901760
    %5106 = vmatpush.msra.mxu0 %v5105
    %v5107 = vand.u32 %v1278, 4294901760
    %v5108 = vsub.f32 %v1278, %v5107
    %v5109 = vand.u32 %v5108, 4294901760
    %5110 = vmatpush.msra.mxu0 %v5109
    %v5111 = vand.u32 %v1277, 4294901760
    %v5112 = vsub.f32 %v1277, %v5111
    %v5113 = vand.u32 %v5112, 4294901760
    %5114 = vmatpush.msra.mxu0 %v5113
    %v5115 = vand.u32 %v1276, 4294901760
    %v5116 = vsub.f32 %v1276, %v5115
    %v5117 = vand.u32 %v5116, 4294901760
    %5118 = vmatpush.msra.mxu0 %v5117
    %v5119 = vand.u32 %v1275, 4294901760
    %v5120 = vsub.f32 %v1275, %v5119
    %v5121 = vand.u32 %v5120, 4294901760
    %5122 = vmatpush.msra.mxu0 %v5121
    %v5123 = vand.u32 %v1274, 4294901760
    %v5124 = vsub.f32 %v1274, %v5123
    %v5125 = vand.u32 %v5124, 4294901760
    %5126 = vmatpush.msra.mxu0 %v5125
    %v5127 = vand.u32 %v1273, 4294901760
    %v5128 = vsub.f32 %v1273, %v5127
    %v5129 = vand.u32 %v5128, 4294901760
    %5130 = vmatpush.msra.mxu0 %v5129
    %v5131 = vand.u32 %v1272, 4294901760
    %v5132 = vsub.f32 %v1272, %v5131
    %v5133 = vand.u32 %v5132, 4294901760
    %5134 = vmatpush.msra.mxu0 %v5133
    %v5135 = vand.u32 %v4832, 4294901760
    %5136 = vmatmul.f32.gmra.mxu0 %v5135
    %v5137 = vpop.f32.mrf.mxu0
    %v5138 = vadd.f32 %v5069, %v5137
    %5139 = vdwg.mxu0
    %v5140 = vand.u32 %v1287, 4294901760
    %5141 = vmatpush.msra.mxu0 %v5140
    %v5142 = vand.u32 %v1286, 4294901760
    %5143 = vmatpush.msra.mxu0 %v5142
    %v5144 = vand.u32 %v1285, 4294901760
    %5145 = vmatpush.msra.mxu0 %v5144
    %v5146 = vand.u32 %v1284, 4294901760
    %5147 = vmatpush.msra.mxu0 %v5146
    %v5148 = vand.u32 %v1283, 4294901760
    %5149 = vmatpush.msra.mxu0 %v5148
    %v5150 = vand.u32 %v1282, 4294901760
    %5151 = vmatpush.msra.mxu0 %v5150
    %v5152 = vand.u32 %v1281, 4294901760
    %5153 = vmatpush.msra.mxu0 %v5152
    %v5154 = vand.u32 %v1280, 4294901760
    %5155 = vmatpush.msra.mxu0 %v5154
    %v5156 = vand.u32 %v1279, 4294901760
    %5157 = vmatpush.msra.mxu0 %v5156
    %v5158 = vand.u32 %v1278, 4294901760
    %5159 = vmatpush.msra.mxu0 %v5158
    %v5160 = vand.u32 %v1277, 4294901760
    %5161 = vmatpush.msra.mxu0 %v5160
    %v5162 = vand.u32 %v1276, 4294901760
    %5163 = vmatpush.msra.mxu0 %v5162
    %v5164 = vand.u32 %v1275, 4294901760
    %5165 = vmatpush.msra.mxu0 %v5164
    %v5166 = vand.u32 %v1274, 4294901760
    %5167 = vmatpush.msra.mxu0 %v5166
    %v5168 = vand.u32 %v1273, 4294901760
    %5169 = vmatpush.msra.mxu0 %v5168
    %v5170 = vand.u32 %v1272, 4294901760
    %5171 = vmatpush.msra.mxu0 %v5170
    %v5172 = vand.u32 %v4832, 4294901760
    %5173 = vmatmul.f32.gmra.mxu0 %v5172
    %v5174 = vpop.f32.mrf.mxu0
    %v5175 = vadd.f32 %v5138, %v5174
    %5176 = vdwg.mxu0
    %v5177 = vand.u32 %v1303, 4294901760
    %5178 = vmatpush.msra.mxu0 %v5177
    %v5179 = vand.u32 %v1302, 4294901760
    %5180 = vmatpush.msra.mxu0 %v5179
    %v5181 = vand.u32 %v1301, 4294901760
    %5182 = vmatpush.msra.mxu0 %v5181
    %v5183 = vand.u32 %v1300, 4294901760
    %5184 = vmatpush.msra.mxu0 %v5183
    %v5185 = vand.u32 %v1299, 4294901760
    %5186 = vmatpush.msra.mxu0 %v5185
    %v5187 = vand.u32 %v1298, 4294901760
    %5188 = vmatpush.msra.mxu0 %v5187
    %v5189 = vand.u32 %v1297, 4294901760
    %5190 = vmatpush.msra.mxu0 %v5189
    %v5191 = vand.u32 %v1296, 4294901760
    %5192 = vmatpush.msra.mxu0 %v5191
    %v5193 = vand.u32 %v1295, 4294901760
    %5194 = vmatpush.msra.mxu0 %v5193
    %v5195 = vand.u32 %v1294, 4294901760
    %5196 = vmatpush.msra.mxu0 %v5195
    %v5197 = vand.u32 %v1293, 4294901760
    %5198 = vmatpush.msra.mxu0 %v5197
    %v5199 = vand.u32 %v1292, 4294901760
    %5200 = vmatpush.msra.mxu0 %v5199
    %v5201 = vand.u32 %v1291, 4294901760
    %5202 = vmatpush.msra.mxu0 %v5201
    %v5203 = vand.u32 %v1290, 4294901760
    %5204 = vmatpush.msra.mxu0 %v5203
    %v5205 = vand.u32 %v1289, 4294901760
    %5206 = vmatpush.msra.mxu0 %v5205
    %v5207 = vand.u32 %v1288, 4294901760
    %5208 = vmatpush.msra.mxu0 %v5207
    %v5209 = vand.u32 %v4833, 4294901760
    %v5210 = vsub.f32 %v4833, %v5209
    %v5211 = vand.u32 %v5210, 4294901760
    %v5212 = vsub.f32 %v5210, %v5211
    %v5213 = vand.u32 %v5212, 4294901760
    %5214 = vmatmul.f32.gmra.mxu0 %v5213
    %v5215 = vpop.f32.mrf.mxu0
    %v5216 = vadd.f32 %v5175, %v5215
    %5217 = vdwg.mxu0
    %v5218 = vand.u32 %v1303, 4294901760
    %v5219 = vsub.f32 %v1303, %v5218
    %v5220 = vand.u32 %v5219, 4294901760
    %v5221 = vsub.f32 %v5219, %v5220
    %v5222 = vand.u32 %v5221, 4294901760
    %5223 = vmatpush.msra.mxu0 %v5222
    %v5224 = vand.u32 %v1302, 4294901760
    %v5225 = vsub.f32 %v1302, %v5224
    %v5226 = vand.u32 %v5225, 4294901760
    %v5227 = vsub.f32 %v5225, %v5226
    %v5228 = vand.u32 %v5227, 4294901760
    %5229 = vmatpush.msra.mxu0 %v5228
    %v5230 = vand.u32 %v1301, 4294901760
    %v5231 = vsub.f32 %v1301, %v5230
    %v5232 = vand.u32 %v5231, 4294901760
    %v5233 = vsub.f32 %v5231, %v5232
    %v5234 = vand.u32 %v5233, 4294901760
    %5235 = vmatpush.msra.mxu0 %v5234
    %v5236 = vand.u32 %v1300, 4294901760
    %v5237 = vsub.f32 %v1300, %v5236
    %v5238 = vand.u32 %v5237, 4294901760
    %v5239 = vsub.f32 %v5237, %v5238
    %v5240 = vand.u32 %v5239, 4294901760
    %5241 = vmatpush.msra.mxu0 %v5240
    %v5242 = vand.u32 %v1299, 4294901760
    %v5243 = vsub.f32 %v1299, %v5242
    %v5244 = vand.u32 %v5243, 4294901760
    %v5245 = vsub.f32 %v5243, %v5244
    %v5246 = vand.u32 %v5245, 4294901760
    %5247 = vmatpush.msra.mxu0 %v5246
    %v5248 = vand.u32 %v1298, 4294901760
    %v5249 = vsub.f32 %v1298, %v5248
    %v5250 = vand.u32 %v5249, 4294901760
    %v5251 = vsub.f32 %v5249, %v5250
    %v5252 = vand.u32 %v5251, 4294901760
    %5253 = vmatpush.msra.mxu0 %v5252
    %v5254 = vand.u32 %v1297, 4294901760
    %v5255 = vsub.f32 %v1297, %v5254
    %v5256 = vand.u32 %v5255, 4294901760
    %v5257 = vsub.f32 %v5255, %v5256
    %v5258 = vand.u32 %v5257, 4294901760
    %5259 = vmatpush.msra.mxu0 %v5258
    %v5260 = vand.u32 %v1296, 4294901760
    %v5261 = vsub.f32 %v1296, %v5260
    %v5262 = vand.u32 %v5261, 4294901760
    %v5263 = vsub.f32 %v5261, %v5262
    %v5264 = vand.u32 %v5263, 4294901760
    %5265 = vmatpush.msra.mxu0 %v5264
    %v5266 = vand.u32 %v1295, 4294901760
    %v5267 = vsub.f32 %v1295, %v5266
    %v5268 = vand.u32 %v5267, 4294901760
    %v5269 = vsub.f32 %v5267, %v5268
    %v5270 = vand.u32 %v5269, 4294901760
    %5271 = vmatpush.msra.mxu0 %v5270
    %v5272 = vand.u32 %v1294, 4294901760
    %v5273 = vsub.f32 %v1294, %v5272
    %v5274 = vand.u32 %v5273, 4294901760
    %v5275 = vsub.f32 %v5273, %v5274
    %v5276 = vand.u32 %v5275, 4294901760
    %5277 = vmatpush.msra.mxu0 %v5276
    %v5278 = vand.u32 %v1293, 4294901760
    %v5279 = vsub.f32 %v1293, %v5278
    %v5280 = vand.u32 %v5279, 4294901760
    %v5281 = vsub.f32 %v5279, %v5280
    %v5282 = vand.u32 %v5281, 4294901760
    %5283 = vmatpush.msra.mxu0 %v5282
    %v5284 = vand.u32 %v1292, 4294901760
    %v5285 = vsub.f32 %v1292, %v5284
    %v5286 = vand.u32 %v5285, 4294901760
    %v5287 = vsub.f32 %v5285, %v5286
    %v5288 = vand.u32 %v5287, 4294901760
    %5289 = vmatpush.msra.mxu0 %v5288
    %v5290 = vand.u32 %v1291, 4294901760
    %v5291 = vsub.f32 %v1291, %v5290
    %v5292 = vand.u32 %v5291, 4294901760
    %v5293 = vsub.f32 %v5291, %v5292
    %v5294 = vand.u32 %v5293, 4294901760
    %5295 = vmatpush.msra.mxu0 %v5294
    %v5296 = vand.u32 %v1290, 4294901760
    %v5297 = vsub.f32 %v1290, %v5296
    %v5298 = vand.u32 %v5297, 4294901760
    %v5299 = vsub.f32 %v5297, %v5298
    %v5300 = vand.u32 %v5299, 4294901760
    %5301 = vmatpush.msra.mxu0 %v5300
    %v5302 = vand.u32 %v1289, 4294901760
    %v5303 = vsub.f32 %v1289, %v5302
    %v5304 = vand.u32 %v5303, 4294901760
    %v5305 = vsub.f32 %v5303, %v5304
    %v5306 = vand.u32 %v5305, 4294901760
    %5307 = vmatpush.msra.mxu0 %v5306
    %v5308 = vand.u32 %v1288, 4294901760
    %v5309 = vsub.f32 %v1288, %v5308
    %v5310 = vand.u32 %v5309, 4294901760
    %v5311 = vsub.f32 %v5309, %v5310
    %v5312 = vand.u32 %v5311, 4294901760
    %5313 = vmatpush.msra.mxu0 %v5312
    %v5314 = vand.u32 %v4833, 4294901760
    %5315 = vmatmul.f32.gmra.mxu0 %v5314
    %v5316 = vpop.f32.mrf.mxu0
    %v5317 = vadd.f32 %v5216, %v5316
    %5318 = vdwg.mxu0
    %v5319 = vand.u32 %v1303, 4294901760
    %v5320 = vsub.f32 %v1303, %v5319
    %5321 = vmatpush.msra.mxu0 %v5320
    %v5322 = vand.u32 %v1302, 4294901760
    %v5323 = vsub.f32 %v1302, %v5322
    %5324 = vmatpush.msra.mxu0 %v5323
    %v5325 = vand.u32 %v1301, 4294901760
    %v5326 = vsub.f32 %v1301, %v5325
    %5327 = vmatpush.msra.mxu0 %v5326
    %v5328 = vand.u32 %v1300, 4294901760
    %v5329 = vsub.f32 %v1300, %v5328
    %5330 = vmatpush.msra.mxu0 %v5329
    %v5331 = vand.u32 %v1299, 4294901760
    %v5332 = vsub.f32 %v1299, %v5331
    %5333 = vmatpush.msra.mxu0 %v5332
    %v5334 = vand.u32 %v1298, 4294901760
    %v5335 = vsub.f32 %v1298, %v5334
    %5336 = vmatpush.msra.mxu0 %v5335
    %v5337 = vand.u32 %v1297, 4294901760
    %v5338 = vsub.f32 %v1297, %v5337
    %5339 = vmatpush.msra.mxu0 %v5338
    %v5340 = vand.u32 %v1296, 4294901760
    %v5341 = vsub.f32 %v1296, %v5340
    %5342 = vmatpush.msra.mxu0 %v5341
    %v5343 = vand.u32 %v1295, 4294901760
    %v5344 = vsub.f32 %v1295, %v5343
    %5345 = vmatpush.msra.mxu0 %v5344
    %v5346 = vand.u32 %v1294, 4294901760
    %v5347 = vsub.f32 %v1294, %v5346
    %5348 = vmatpush.msra.mxu0 %v5347
    %v5349 = vand.u32 %v1293, 4294901760
    %v5350 = vsub.f32 %v1293, %v5349
    %5351 = vmatpush.msra.mxu0 %v5350
    %v5352 = vand.u32 %v1292, 4294901760
    %v5353 = vsub.f32 %v1292, %v5352
    %5354 = vmatpush.msra.mxu0 %v5353
    %v5355 = vand.u32 %v1291, 4294901760
    %v5356 = vsub.f32 %v1291, %v5355
    %5357 = vmatpush.msra.mxu0 %v5356
    %v5358 = vand.u32 %v1290, 4294901760
    %v5359 = vsub.f32 %v1290, %v5358
    %5360 = vmatpush.msra.mxu0 %v5359
    %v5361 = vand.u32 %v1289, 4294901760
    %v5362 = vsub.f32 %v1289, %v5361
    %5363 = vmatpush.msra.mxu0 %v5362
    %v5364 = vand.u32 %v1288, 4294901760
    %v5365 = vsub.f32 %v1288, %v5364
    %5366 = vmatpush.msra.mxu0 %v5365
    %v5367 = vand.u32 %v4833, 4294901760
    %v5368 = vsub.f32 %v4833, %v5367
    %5369 = vmatmul.f32.gmra.mxu0 %v5368
    %v5370 = vpop.f32.mrf.mxu0
    %v5371 = vadd.f32 %v5317, %v5370
    %5372 = vdwg.mxu0
    %v5373 = vand.u32 %v1303, 4294901760
    %5374 = vmatpush.msra.mxu0 %v5373
    %v5375 = vand.u32 %v1302, 4294901760
    %5376 = vmatpush.msra.mxu0 %v5375
    %v5377 = vand.u32 %v1301, 4294901760
    %5378 = vmatpush.msra.mxu0 %v5377
    %v5379 = vand.u32 %v1300, 4294901760
    %5380 = vmatpush.msra.mxu0 %v5379
    %v5381 = vand.u32 %v1299, 4294901760
    %5382 = vmatpush.msra.mxu0 %v5381
    %v5383 = vand.u32 %v1298, 4294901760
    %5384 = vmatpush.msra.mxu0 %v5383
    %v5385 = vand.u32 %v1297, 4294901760
    %5386 = vmatpush.msra.mxu0 %v5385
    %v5387 = vand.u32 %v1296, 4294901760
    %5388 = vmatpush.msra.mxu0 %v5387
    %v5389 = vand.u32 %v1295, 4294901760
    %5390 = vmatpush.msra.mxu0 %v5389
    %v5391 = vand.u32 %v1294, 4294901760
    %5392 = vmatpush.msra.mxu0 %v5391
    %v5393 = vand.u32 %v1293, 4294901760
    %5394 = vmatpush.msra.mxu0 %v5393
    %v5395 = vand.u32 %v1292, 4294901760
    %5396 = vmatpush.msra.mxu0 %v5395
    %v5397 = vand.u32 %v1291, 4294901760
    %5398 = vmatpush.msra.mxu0 %v5397
    %v5399 = vand.u32 %v1290, 4294901760
    %5400 = vmatpush.msra.mxu0 %v5399
    %v5401 = vand.u32 %v1289, 4294901760
    %5402 = vmatpush.msra.mxu0 %v5401
    %v5403 = vand.u32 %v1288, 4294901760
    %5404 = vmatpush.msra.mxu0 %v5403
    %v5405 = vand.u32 %v4833, 4294901760
    %v5406 = vsub.f32 %v4833, %v5405
    %v5407 = vand.u32 %v5406, 4294901760
    %5408 = vmatmul.f32.gmra.mxu0 %v5407
    %v5409 = vpop.f32.mrf.mxu0
    %v5410 = vadd.f32 %v5371, %v5409
    %5411 = vdwg.mxu0
    %v5412 = vand.u32 %v1303, 4294901760
    %v5413 = vsub.f32 %v1303, %v5412
    %v5414 = vand.u32 %v5413, 4294901760
    %5415 = vmatpush.msra.mxu0 %v5414
    %v5416 = vand.u32 %v1302, 4294901760
    %v5417 = vsub.f32 %v1302, %v5416
    %v5418 = vand.u32 %v5417, 4294901760
    %5419 = vmatpush.msra.mxu0 %v5418
    %v5420 = vand.u32 %v1301, 4294901760
    %v5421 = vsub.f32 %v1301, %v5420
    %v5422 = vand.u32 %v5421, 4294901760
    %5423 = vmatpush.msra.mxu0 %v5422
    %v5424 = vand.u32 %v1300, 4294901760
    %v5425 = vsub.f32 %v1300, %v5424
    %v5426 = vand.u32 %v5425, 4294901760
    %5427 = vmatpush.msra.mxu0 %v5426
    %v5428 = vand.u32 %v1299, 4294901760
    %v5429 = vsub.f32 %v1299, %v5428
    %v5430 = vand.u32 %v5429, 4294901760
    %5431 = vmatpush.msra.mxu0 %v5430
    %v5432 = vand.u32 %v1298, 4294901760
    %v5433 = vsub.f32 %v1298, %v5432
    %v5434 = vand.u32 %v5433, 4294901760
    %5435 = vmatpush.msra.mxu0 %v5434
    %v5436 = vand.u32 %v1297, 4294901760
    %v5437 = vsub.f32 %v1297, %v5436
    %v5438 = vand.u32 %v5437, 4294901760
    %5439 = vmatpush.msra.mxu0 %v5438
    %v5440 = vand.u32 %v1296, 4294901760
    %v5441 = vsub.f32 %v1296, %v5440
    %v5442 = vand.u32 %v5441, 4294901760
    %5443 = vmatpush.msra.mxu0 %v5442
    %v5444 = vand.u32 %v1295, 4294901760
    %v5445 = vsub.f32 %v1295, %v5444
    %v5446 = vand.u32 %v5445, 4294901760
    %5447 = vmatpush.msra.mxu0 %v5446
    %v5448 = vand.u32 %v1294, 4294901760
    %v5449 = vsub.f32 %v1294, %v5448
    %v5450 = vand.u32 %v5449, 4294901760
    %5451 = vmatpush.msra.mxu0 %v5450
    %v5452 = vand.u32 %v1293, 4294901760
    %v5453 = vsub.f32 %v1293, %v5452
    %v5454 = vand.u32 %v5453, 4294901760
    %5455 = vmatpush.msra.mxu0 %v5454
    %v5456 = vand.u32 %v1292, 4294901760
    %v5457 = vsub.f32 %v1292, %v5456
    %v5458 = vand.u32 %v5457, 4294901760
    %5459 = vmatpush.msra.mxu0 %v5458
    %v5460 = vand.u32 %v1291, 4294901760
    %v5461 = vsub.f32 %v1291, %v5460
    %v5462 = vand.u32 %v5461, 4294901760
    %5463 = vmatpush.msra.mxu0 %v5462
    %v5464 = vand.u32 %v1290, 4294901760
    %v5465 = vsub.f32 %v1290, %v5464
    %v5466 = vand.u32 %v5465, 4294901760
    %5467 = vmatpush.msra.mxu0 %v5466
    %v5468 = vand.u32 %v1289, 4294901760
    %v5469 = vsub.f32 %v1289, %v5468
    %v5470 = vand.u32 %v5469, 4294901760
    %5471 = vmatpush.msra.mxu0 %v5470
    %v5472 = vand.u32 %v1288, 4294901760
    %v5473 = vsub.f32 %v1288, %v5472
    %v5474 = vand.u32 %v5473, 4294901760
    %5475 = vmatpush.msra.mxu0 %v5474
    %v5476 = vand.u32 %v4833, 4294901760
    %5477 = vmatmul.f32.gmra.mxu0 %v5476
    %v5478 = vpop.f32.mrf.mxu0
    %v5479 = vadd.f32 %v5410, %v5478
    %5480 = vdwg.mxu0
    %v5481 = vand.u32 %v1303, 4294901760
    %5482 = vmatpush.msra.mxu0 %v5481
    %v5483 = vand.u32 %v1302, 4294901760
    %5484 = vmatpush.msra.mxu0 %v5483
    %v5485 = vand.u32 %v1301, 4294901760
    %5486 = vmatpush.msra.mxu0 %v5485
    %v5487 = vand.u32 %v1300, 4294901760
    %5488 = vmatpush.msra.mxu0 %v5487
    %v5489 = vand.u32 %v1299, 4294901760
    %5490 = vmatpush.msra.mxu0 %v5489
    %v5491 = vand.u32 %v1298, 4294901760
    %5492 = vmatpush.msra.mxu0 %v5491
    %v5493 = vand.u32 %v1297, 4294901760
    %5494 = vmatpush.msra.mxu0 %v5493
    %v5495 = vand.u32 %v1296, 4294901760
    %5496 = vmatpush.msra.mxu0 %v5495
    %v5497 = vand.u32 %v1295, 4294901760
    %5498 = vmatpush.msra.mxu0 %v5497
    %v5499 = vand.u32 %v1294, 4294901760
    %5500 = vmatpush.msra.mxu0 %v5499
    %v5501 = vand.u32 %v1293, 4294901760
    %5502 = vmatpush.msra.mxu0 %v5501
    %v5503 = vand.u32 %v1292, 4294901760
    %5504 = vmatpush.msra.mxu0 %v5503
    %v5505 = vand.u32 %v1291, 4294901760
    %5506 = vmatpush.msra.mxu0 %v5505
    %v5507 = vand.u32 %v1290, 4294901760
    %5508 = vmatpush.msra.mxu0 %v5507
    %v5509 = vand.u32 %v1289, 4294901760
    %5510 = vmatpush.msra.mxu0 %v5509
    %v5511 = vand.u32 %v1288, 4294901760
    %5512 = vmatpush.msra.mxu0 %v5511
    %v5513 = vand.u32 %v4833, 4294901760
    %5514 = vmatmul.f32.gmra.mxu0 %v5513
    %v5515 = vpop.f32.mrf.mxu0
    %v5516 = vadd.f32 %v5479, %v5515
    %5517 = vdwg.mxu0
    %v5518 = vperm.slane %v4143, 0
    %v5519 = vperm.slane %v4143, 1
    %v5522 = vand.u32 %v1319, 4294901760
    %5523 = vmatpush.msra.mxu0 %v5522
    %v5524 = vand.u32 %v1318, 4294901760
    %5525 = vmatpush.msra.mxu0 %v5524
    %v5526 = vand.u32 %v1317, 4294901760
    %5527 = vmatpush.msra.mxu0 %v5526
    %v5528 = vand.u32 %v1316, 4294901760
    %5529 = vmatpush.msra.mxu0 %v5528
    %v5530 = vand.u32 %v1315, 4294901760
    %5531 = vmatpush.msra.mxu0 %v5530
    %v5532 = vand.u32 %v1314, 4294901760
    %5533 = vmatpush.msra.mxu0 %v5532
    %v5534 = vand.u32 %v1313, 4294901760
    %5535 = vmatpush.msra.mxu0 %v5534
    %v5536 = vand.u32 %v1312, 4294901760
    %5537 = vmatpush.msra.mxu0 %v5536
    %v5538 = vand.u32 %v1311, 4294901760
    %5539 = vmatpush.msra.mxu0 %v5538
    %v5540 = vand.u32 %v1310, 4294901760
    %5541 = vmatpush.msra.mxu0 %v5540
    %v5542 = vand.u32 %v1309, 4294901760
    %5543 = vmatpush.msra.mxu0 %v5542
    %v5544 = vand.u32 %v1308, 4294901760
    %5545 = vmatpush.msra.mxu0 %v5544
    %v5546 = vand.u32 %v1307, 4294901760
    %5547 = vmatpush.msra.mxu0 %v5546
    %v5548 = vand.u32 %v1306, 4294901760
    %5549 = vmatpush.msra.mxu0 %v5548
    %v5550 = vand.u32 %v1305, 4294901760
    %5551 = vmatpush.msra.mxu0 %v5550
    %v5552 = vand.u32 %v1304, 4294901760
    %5553 = vmatpush.msra.mxu0 %v5552
    %v5554 = vand.u32 %v5518, 4294901760
    %v5555 = vsub.f32 %v5518, %v5554
    %v5556 = vand.u32 %v5555, 4294901760
    %v5557 = vsub.f32 %v5555, %v5556
    %v5558 = vand.u32 %v5557, 4294901760
    %5559 = vmatmul.f32.gmra.mxu0 %v5558
    %v5560 = vpop.f32.mrf.mxu0
    %v5561 = vadd.f32 0.0, %v5560
    %5562 = vdwg.mxu0
    %v5563 = vand.u32 %v1319, 4294901760
    %v5564 = vsub.f32 %v1319, %v5563
    %v5565 = vand.u32 %v5564, 4294901760
    %v5566 = vsub.f32 %v5564, %v5565
    %v5567 = vand.u32 %v5566, 4294901760
    %5568 = vmatpush.msra.mxu0 %v5567
    %v5569 = vand.u32 %v1318, 4294901760
    %v5570 = vsub.f32 %v1318, %v5569
    %v5571 = vand.u32 %v5570, 4294901760
    %v5572 = vsub.f32 %v5570, %v5571
    %v5573 = vand.u32 %v5572, 4294901760
    %5574 = vmatpush.msra.mxu0 %v5573
    %v5575 = vand.u32 %v1317, 4294901760
    %v5576 = vsub.f32 %v1317, %v5575
    %v5577 = vand.u32 %v5576, 4294901760
    %v5578 = vsub.f32 %v5576, %v5577
    %v5579 = vand.u32 %v5578, 4294901760
    %5580 = vmatpush.msra.mxu0 %v5579
    %v5581 = vand.u32 %v1316, 4294901760
    %v5582 = vsub.f32 %v1316, %v5581
    %v5583 = vand.u32 %v5582, 4294901760
    %v5584 = vsub.f32 %v5582, %v5583
    %v5585 = vand.u32 %v5584, 4294901760
    %5586 = vmatpush.msra.mxu0 %v5585
    %v5587 = vand.u32 %v1315, 4294901760
    %v5588 = vsub.f32 %v1315, %v5587
    %v5589 = vand.u32 %v5588, 4294901760
    %v5590 = vsub.f32 %v5588, %v5589
    %v5591 = vand.u32 %v5590, 4294901760
    %5592 = vmatpush.msra.mxu0 %v5591
    %v5593 = vand.u32 %v1314, 4294901760
    %v5594 = vsub.f32 %v1314, %v5593
    %v5595 = vand.u32 %v5594, 4294901760
    %v5596 = vsub.f32 %v5594, %v5595
    %v5597 = vand.u32 %v5596, 4294901760
    %5598 = vmatpush.msra.mxu0 %v5597
    %v5599 = vand.u32 %v1313, 4294901760
    %v5600 = vsub.f32 %v1313, %v5599
    %v5601 = vand.u32 %v5600, 4294901760
    %v5602 = vsub.f32 %v5600, %v5601
    %v5603 = vand.u32 %v5602, 4294901760
    %5604 = vmatpush.msra.mxu0 %v5603
    %v5605 = vand.u32 %v1312, 4294901760
    %v5606 = vsub.f32 %v1312, %v5605
    %v5607 = vand.u32 %v5606, 4294901760
    %v5608 = vsub.f32 %v5606, %v5607
    %v5609 = vand.u32 %v5608, 4294901760
    %5610 = vmatpush.msra.mxu0 %v5609
    %v5611 = vand.u32 %v1311, 4294901760
    %v5612 = vsub.f32 %v1311, %v5611
    %v5613 = vand.u32 %v5612, 4294901760
    %v5614 = vsub.f32 %v5612, %v5613
    %v5615 = vand.u32 %v5614, 4294901760
    %5616 = vmatpush.msra.mxu0 %v5615
    %v5617 = vand.u32 %v1310, 4294901760
    %v5618 = vsub.f32 %v1310, %v5617
    %v5619 = vand.u32 %v5618, 4294901760
    %v5620 = vsub.f32 %v5618, %v5619
    %v5621 = vand.u32 %v5620, 4294901760
    %5622 = vmatpush.msra.mxu0 %v5621
    %v5623 = vand.u32 %v1309, 4294901760
    %v5624 = vsub.f32 %v1309, %v5623
    %v5625 = vand.u32 %v5624, 4294901760
    %v5626 = vsub.f32 %v5624, %v5625
    %v5627 = vand.u32 %v5626, 4294901760
    %5628 = vmatpush.msra.mxu0 %v5627
    %v5629 = vand.u32 %v1308, 4294901760
    %v5630 = vsub.f32 %v1308, %v5629
    %v5631 = vand.u32 %v5630, 4294901760
    %v5632 = vsub.f32 %v5630, %v5631
    %v5633 = vand.u32 %v5632, 4294901760
    %5634 = vmatpush.msra.mxu0 %v5633
    %v5635 = vand.u32 %v1307, 4294901760
    %v5636 = vsub.f32 %v1307, %v5635
    %v5637 = vand.u32 %v5636, 4294901760
    %v5638 = vsub.f32 %v5636, %v5637
    %v5639 = vand.u32 %v5638, 4294901760
    %5640 = vmatpush.msra.mxu0 %v5639
    %v5641 = vand.u32 %v1306, 4294901760
    %v5642 = vsub.f32 %v1306, %v5641
    %v5643 = vand.u32 %v5642, 4294901760
    %v5644 = vsub.f32 %v5642, %v5643
    %v5645 = vand.u32 %v5644, 4294901760
    %5646 = vmatpush.msra.mxu0 %v5645
    %v5647 = vand.u32 %v1305, 4294901760
    %v5648 = vsub.f32 %v1305, %v5647
    %v5649 = vand.u32 %v5648, 4294901760
    %v5650 = vsub.f32 %v5648, %v5649
    %v5651 = vand.u32 %v5650, 4294901760
    %5652 = vmatpush.msra.mxu0 %v5651
    %v5653 = vand.u32 %v1304, 4294901760
    %v5654 = vsub.f32 %v1304, %v5653
    %v5655 = vand.u32 %v5654, 4294901760
    %v5656 = vsub.f32 %v5654, %v5655
    %v5657 = vand.u32 %v5656, 4294901760
    %5658 = vmatpush.msra.mxu0 %v5657
    %v5659 = vand.u32 %v5518, 4294901760
    %5660 = vmatmul.f32.gmra.mxu0 %v5659
    %v5661 = vpop.f32.mrf.mxu0
    %v5662 = vadd.f32 %v5561, %v5661
    %5663 = vdwg.mxu0
    %v5664 = vand.u32 %v1319, 4294901760
    %v5665 = vsub.f32 %v1319, %v5664
    %5666 = vmatpush.msra.mxu0 %v5665
    %v5667 = vand.u32 %v1318, 4294901760
    %v5668 = vsub.f32 %v1318, %v5667
    %5669 = vmatpush.msra.mxu0 %v5668
    %v5670 = vand.u32 %v1317, 4294901760
    %v5671 = vsub.f32 %v1317, %v5670
    %5672 = vmatpush.msra.mxu0 %v5671
    %v5673 = vand.u32 %v1316, 4294901760
    %v5674 = vsub.f32 %v1316, %v5673
    %5675 = vmatpush.msra.mxu0 %v5674
    %v5676 = vand.u32 %v1315, 4294901760
    %v5677 = vsub.f32 %v1315, %v5676
    %5678 = vmatpush.msra.mxu0 %v5677
    %v5679 = vand.u32 %v1314, 4294901760
    %v5680 = vsub.f32 %v1314, %v5679
    %5681 = vmatpush.msra.mxu0 %v5680
    %v5682 = vand.u32 %v1313, 4294901760
    %v5683 = vsub.f32 %v1313, %v5682
    %5684 = vmatpush.msra.mxu0 %v5683
    %v5685 = vand.u32 %v1312, 4294901760
    %v5686 = vsub.f32 %v1312, %v5685
    %5687 = vmatpush.msra.mxu0 %v5686
    %v5688 = vand.u32 %v1311, 4294901760
    %v5689 = vsub.f32 %v1311, %v5688
    %5690 = vmatpush.msra.mxu0 %v5689
    %v5691 = vand.u32 %v1310, 4294901760
    %v5692 = vsub.f32 %v1310, %v5691
    %5693 = vmatpush.msra.mxu0 %v5692
    %v5694 = vand.u32 %v1309, 4294901760
    %v5695 = vsub.f32 %v1309, %v5694
    %5696 = vmatpush.msra.mxu0 %v5695
    %v5697 = vand.u32 %v1308, 4294901760
    %v5698 = vsub.f32 %v1308, %v5697
    %5699 = vmatpush.msra.mxu0 %v5698
    %v5700 = vand.u32 %v1307, 4294901760
    %v5701 = vsub.f32 %v1307, %v5700
    %5702 = vmatpush.msra.mxu0 %v5701
    %v5703 = vand.u32 %v1306, 4294901760
    %v5704 = vsub.f32 %v1306, %v5703
    %5705 = vmatpush.msra.mxu0 %v5704
    %v5706 = vand.u32 %v1305, 4294901760
    %v5707 = vsub.f32 %v1305, %v5706
    %5708 = vmatpush.msra.mxu0 %v5707
    %v5709 = vand.u32 %v1304, 4294901760
    %v5710 = vsub.f32 %v1304, %v5709
    %5711 = vmatpush.msra.mxu0 %v5710
    %v5712 = vand.u32 %v5518, 4294901760
    %v5713 = vsub.f32 %v5518, %v5712
    %5714 = vmatmul.f32.gmra.mxu0 %v5713
    %v5715 = vpop.f32.mrf.mxu0
    %v5716 = vadd.f32 %v5662, %v5715
    %5717 = vdwg.mxu0
    %v5718 = vand.u32 %v1319, 4294901760
    %5719 = vmatpush.msra.mxu0 %v5718
    %v5720 = vand.u32 %v1318, 4294901760
    %5721 = vmatpush.msra.mxu0 %v5720
    %v5722 = vand.u32 %v1317, 4294901760
    %5723 = vmatpush.msra.mxu0 %v5722
    %v5724 = vand.u32 %v1316, 4294901760
    %5725 = vmatpush.msra.mxu0 %v5724
    %v5726 = vand.u32 %v1315, 4294901760
    %5727 = vmatpush.msra.mxu0 %v5726
    %v5728 = vand.u32 %v1314, 4294901760
    %5729 = vmatpush.msra.mxu0 %v5728
    %v5730 = vand.u32 %v1313, 4294901760
    %5731 = vmatpush.msra.mxu0 %v5730
    %v5732 = vand.u32 %v1312, 4294901760
    %5733 = vmatpush.msra.mxu0 %v5732
    %v5734 = vand.u32 %v1311, 4294901760
    %5735 = vmatpush.msra.mxu0 %v5734
    %v5736 = vand.u32 %v1310, 4294901760
    %5737 = vmatpush.msra.mxu0 %v5736
    %v5738 = vand.u32 %v1309, 4294901760
    %5739 = vmatpush.msra.mxu0 %v5738
    %v5740 = vand.u32 %v1308, 4294901760
    %5741 = vmatpush.msra.mxu0 %v5740
    %v5742 = vand.u32 %v1307, 4294901760
    %5743 = vmatpush.msra.mxu0 %v5742
    %v5744 = vand.u32 %v1306, 4294901760
    %5745 = vmatpush.msra.mxu0 %v5744
    %v5746 = vand.u32 %v1305, 4294901760
    %5747 = vmatpush.msra.mxu0 %v5746
    %v5748 = vand.u32 %v1304, 4294901760
    %5749 = vmatpush.msra.mxu0 %v5748
    %v5750 = vand.u32 %v5518, 4294901760
    %v5751 = vsub.f32 %v5518, %v5750
    %v5752 = vand.u32 %v5751, 4294901760
    %5753 = vmatmul.f32.gmra.mxu0 %v5752
    %v5754 = vpop.f32.mrf.mxu0
    %v5755 = vadd.f32 %v5716, %v5754
    %5756 = vdwg.mxu0
    %v5757 = vand.u32 %v1319, 4294901760
    %v5758 = vsub.f32 %v1319, %v5757
    %v5759 = vand.u32 %v5758, 4294901760
    %5760 = vmatpush.msra.mxu0 %v5759
    %v5761 = vand.u32 %v1318, 4294901760
    %v5762 = vsub.f32 %v1318, %v5761
    %v5763 = vand.u32 %v5762, 4294901760
    %5764 = vmatpush.msra.mxu0 %v5763
    %v5765 = vand.u32 %v1317, 4294901760
    %v5766 = vsub.f32 %v1317, %v5765
    %v5767 = vand.u32 %v5766, 4294901760
    %5768 = vmatpush.msra.mxu0 %v5767
    %v5769 = vand.u32 %v1316, 4294901760
    %v5770 = vsub.f32 %v1316, %v5769
    %v5771 = vand.u32 %v5770, 4294901760
    %5772 = vmatpush.msra.mxu0 %v5771
    %v5773 = vand.u32 %v1315, 4294901760
    %v5774 = vsub.f32 %v1315, %v5773
    %v5775 = vand.u32 %v5774, 4294901760
    %5776 = vmatpush.msra.mxu0 %v5775
    %v5777 = vand.u32 %v1314, 4294901760
    %v5778 = vsub.f32 %v1314, %v5777
    %v5779 = vand.u32 %v5778, 4294901760
    %5780 = vmatpush.msra.mxu0 %v5779
    %v5781 = vand.u32 %v1313, 4294901760
    %v5782 = vsub.f32 %v1313, %v5781
    %v5783 = vand.u32 %v5782, 4294901760
    %5784 = vmatpush.msra.mxu0 %v5783
    %v5785 = vand.u32 %v1312, 4294901760
    %v5786 = vsub.f32 %v1312, %v5785
    %v5787 = vand.u32 %v5786, 4294901760
    %5788 = vmatpush.msra.mxu0 %v5787
    %v5789 = vand.u32 %v1311, 4294901760
    %v5790 = vsub.f32 %v1311, %v5789
    %v5791 = vand.u32 %v5790, 4294901760
    %5792 = vmatpush.msra.mxu0 %v5791
    %v5793 = vand.u32 %v1310, 4294901760
    %v5794 = vsub.f32 %v1310, %v5793
    %v5795 = vand.u32 %v5794, 4294901760
    %5796 = vmatpush.msra.mxu0 %v5795
    %v5797 = vand.u32 %v1309, 4294901760
    %v5798 = vsub.f32 %v1309, %v5797
    %v5799 = vand.u32 %v5798, 4294901760
    %5800 = vmatpush.msra.mxu0 %v5799
    %v5801 = vand.u32 %v1308, 4294901760
    %v5802 = vsub.f32 %v1308, %v5801
    %v5803 = vand.u32 %v5802, 4294901760
    %5804 = vmatpush.msra.mxu0 %v5803
    %v5805 = vand.u32 %v1307, 4294901760
    %v5806 = vsub.f32 %v1307, %v5805
    %v5807 = vand.u32 %v5806, 4294901760
    %5808 = vmatpush.msra.mxu0 %v5807
    %v5809 = vand.u32 %v1306, 4294901760
    %v5810 = vsub.f32 %v1306, %v5809
    %v5811 = vand.u32 %v5810, 4294901760
    %5812 = vmatpush.msra.mxu0 %v5811
    %v5813 = vand.u32 %v1305, 4294901760
    %v5814 = vsub.f32 %v1305, %v5813
    %v5815 = vand.u32 %v5814, 4294901760
    %5816 = vmatpush.msra.mxu0 %v5815
    %v5817 = vand.u32 %v1304, 4294901760
    %v5818 = vsub.f32 %v1304, %v5817
    %v5819 = vand.u32 %v5818, 4294901760
    %5820 = vmatpush.msra.mxu0 %v5819
    %v5821 = vand.u32 %v5518, 4294901760
    %5822 = vmatmul.f32.gmra.mxu0 %v5821
    %v5823 = vpop.f32.mrf.mxu0
    %v5824 = vadd.f32 %v5755, %v5823
    %5825 = vdwg.mxu0
    %v5826 = vand.u32 %v1319, 4294901760
    %5827 = vmatpush.msra.mxu0 %v5826
    %v5828 = vand.u32 %v1318, 4294901760
    %5829 = vmatpush.msra.mxu0 %v5828
    %v5830 = vand.u32 %v1317, 4294901760
    %5831 = vmatpush.msra.mxu0 %v5830
    %v5832 = vand.u32 %v1316, 4294901760
    %5833 = vmatpush.msra.mxu0 %v5832
    %v5834 = vand.u32 %v1315, 4294901760
    %5835 = vmatpush.msra.mxu0 %v5834
    %v5836 = vand.u32 %v1314, 4294901760
    %5837 = vmatpush.msra.mxu0 %v5836
    %v5838 = vand.u32 %v1313, 4294901760
    %5839 = vmatpush.msra.mxu0 %v5838
    %v5840 = vand.u32 %v1312, 4294901760
    %5841 = vmatpush.msra.mxu0 %v5840
    %v5842 = vand.u32 %v1311, 4294901760
    %5843 = vmatpush.msra.mxu0 %v5842
    %v5844 = vand.u32 %v1310, 4294901760
    %5845 = vmatpush.msra.mxu0 %v5844
    %v5846 = vand.u32 %v1309, 4294901760
    %5847 = vmatpush.msra.mxu0 %v5846
    %v5848 = vand.u32 %v1308, 4294901760
    %5849 = vmatpush.msra.mxu0 %v5848
    %v5850 = vand.u32 %v1307, 4294901760
    %5851 = vmatpush.msra.mxu0 %v5850
    %v5852 = vand.u32 %v1306, 4294901760
    %5853 = vmatpush.msra.mxu0 %v5852
    %v5854 = vand.u32 %v1305, 4294901760
    %5855 = vmatpush.msra.mxu0 %v5854
    %v5856 = vand.u32 %v1304, 4294901760
    %5857 = vmatpush.msra.mxu0 %v5856
    %v5858 = vand.u32 %v5518, 4294901760
    %5859 = vmatmul.f32.gmra.mxu0 %v5858
    %v5860 = vpop.f32.mrf.mxu0
    %v5861 = vadd.f32 %v5824, %v5860
    %5862 = vdwg.mxu0
    %v5863 = vand.u32 %v1335, 4294901760
    %5864 = vmatpush.msra.mxu0 %v5863
    %v5865 = vand.u32 %v1334, 4294901760
    %5866 = vmatpush.msra.mxu0 %v5865
    %v5867 = vand.u32 %v1333, 4294901760
    %5868 = vmatpush.msra.mxu0 %v5867
    %v5869 = vand.u32 %v1332, 4294901760
    %5870 = vmatpush.msra.mxu0 %v5869
    %v5871 = vand.u32 %v1331, 4294901760
    %5872 = vmatpush.msra.mxu0 %v5871
    %v5873 = vand.u32 %v1330, 4294901760
    %5874 = vmatpush.msra.mxu0 %v5873
    %v5875 = vand.u32 %v1329, 4294901760
    %5876 = vmatpush.msra.mxu0 %v5875
    %v5877 = vand.u32 %v1328, 4294901760
    %5878 = vmatpush.msra.mxu0 %v5877
    %v5879 = vand.u32 %v1327, 4294901760
    %5880 = vmatpush.msra.mxu0 %v5879
    %v5881 = vand.u32 %v1326, 4294901760
    %5882 = vmatpush.msra.mxu0 %v5881
    %v5883 = vand.u32 %v1325, 4294901760
    %5884 = vmatpush.msra.mxu0 %v5883
    %v5885 = vand.u32 %v1324, 4294901760
    %5886 = vmatpush.msra.mxu0 %v5885
    %v5887 = vand.u32 %v1323, 4294901760
    %5888 = vmatpush.msra.mxu0 %v5887
    %v5889 = vand.u32 %v1322, 4294901760
    %5890 = vmatpush.msra.mxu0 %v5889
    %v5891 = vand.u32 %v1321, 4294901760
    %5892 = vmatpush.msra.mxu0 %v5891
    %v5893 = vand.u32 %v1320, 4294901760
    %5894 = vmatpush.msra.mxu0 %v5893
    %v5895 = vand.u32 %v5519, 4294901760
    %v5896 = vsub.f32 %v5519, %v5895
    %v5897 = vand.u32 %v5896, 4294901760
    %v5898 = vsub.f32 %v5896, %v5897
    %v5899 = vand.u32 %v5898, 4294901760
    %5900 = vmatmul.f32.gmra.mxu0 %v5899
    %v5901 = vpop.f32.mrf.mxu0
    %v5902 = vadd.f32 %v5861, %v5901
    %5903 = vdwg.mxu0
    %v5904 = vand.u32 %v1335, 4294901760
    %v5905 = vsub.f32 %v1335, %v5904
    %v5906 = vand.u32 %v5905, 4294901760
    %v5907 = vsub.f32 %v5905, %v5906
    %v5908 = vand.u32 %v5907, 4294901760
    %5909 = vmatpush.msra.mxu0 %v5908
    %v5910 = vand.u32 %v1334, 4294901760
    %v5911 = vsub.f32 %v1334, %v5910
    %v5912 = vand.u32 %v5911, 4294901760
    %v5913 = vsub.f32 %v5911, %v5912
    %v5914 = vand.u32 %v5913, 4294901760
    %5915 = vmatpush.msra.mxu0 %v5914
    %v5916 = vand.u32 %v1333, 4294901760
    %v5917 = vsub.f32 %v1333, %v5916
    %v5918 = vand.u32 %v5917, 4294901760
    %v5919 = vsub.f32 %v5917, %v5918
    %v5920 = vand.u32 %v5919, 4294901760
    %5921 = vmatpush.msra.mxu0 %v5920
    %v5922 = vand.u32 %v1332, 4294901760
    %v5923 = vsub.f32 %v1332, %v5922
    %v5924 = vand.u32 %v5923, 4294901760
    %v5925 = vsub.f32 %v5923, %v5924
    %v5926 = vand.u32 %v5925, 4294901760
    %5927 = vmatpush.msra.mxu0 %v5926
    %v5928 = vand.u32 %v1331, 4294901760
    %v5929 = vsub.f32 %v1331, %v5928
    %v5930 = vand.u32 %v5929, 4294901760
    %v5931 = vsub.f32 %v5929, %v5930
    %v5932 = vand.u32 %v5931, 4294901760
    %5933 = vmatpush.msra.mxu0 %v5932
    %v5934 = vand.u32 %v1330, 4294901760
    %v5935 = vsub.f32 %v1330, %v5934
    %v5936 = vand.u32 %v5935, 4294901760
    %v5937 = vsub.f32 %v5935, %v5936
    %v5938 = vand.u32 %v5937, 4294901760
    %5939 = vmatpush.msra.mxu0 %v5938
    %v5940 = vand.u32 %v1329, 4294901760
    %v5941 = vsub.f32 %v1329, %v5940
    %v5942 = vand.u32 %v5941, 4294901760
    %v5943 = vsub.f32 %v5941, %v5942
    %v5944 = vand.u32 %v5943, 4294901760
    %5945 = vmatpush.msra.mxu0 %v5944
    %v5946 = vand.u32 %v1328, 4294901760
    %v5947 = vsub.f32 %v1328, %v5946
    %v5948 = vand.u32 %v5947, 4294901760
    %v5949 = vsub.f32 %v5947, %v5948
    %v5950 = vand.u32 %v5949, 4294901760
    %5951 = vmatpush.msra.mxu0 %v5950
    %v5952 = vand.u32 %v1327, 4294901760
    %v5953 = vsub.f32 %v1327, %v5952
    %v5954 = vand.u32 %v5953, 4294901760
    %v5955 = vsub.f32 %v5953, %v5954
    %v5956 = vand.u32 %v5955, 4294901760
    %5957 = vmatpush.msra.mxu0 %v5956
    %v5958 = vand.u32 %v1326, 4294901760
    %v5959 = vsub.f32 %v1326, %v5958
    %v5960 = vand.u32 %v5959, 4294901760
    %v5961 = vsub.f32 %v5959, %v5960
    %v5962 = vand.u32 %v5961, 4294901760
    %5963 = vmatpush.msra.mxu0 %v5962
    %v5964 = vand.u32 %v1325, 4294901760
    %v5965 = vsub.f32 %v1325, %v5964
    %v5966 = vand.u32 %v5965, 4294901760
    %v5967 = vsub.f32 %v5965, %v5966
    %v5968 = vand.u32 %v5967, 4294901760
    %5969 = vmatpush.msra.mxu0 %v5968
    %v5970 = vand.u32 %v1324, 4294901760
    %v5971 = vsub.f32 %v1324, %v5970
    %v5972 = vand.u32 %v5971, 4294901760
    %v5973 = vsub.f32 %v5971, %v5972
    %v5974 = vand.u32 %v5973, 4294901760
    %5975 = vmatpush.msra.mxu0 %v5974
    %v5976 = vand.u32 %v1323, 4294901760
    %v5977 = vsub.f32 %v1323, %v5976
    %v5978 = vand.u32 %v5977, 4294901760
    %v5979 = vsub.f32 %v5977, %v5978
    %v5980 = vand.u32 %v5979, 4294901760
    %5981 = vmatpush.msra.mxu0 %v5980
    %v5982 = vand.u32 %v1322, 4294901760
    %v5983 = vsub.f32 %v1322, %v5982
    %v5984 = vand.u32 %v5983, 4294901760
    %v5985 = vsub.f32 %v5983, %v5984
    %v5986 = vand.u32 %v5985, 4294901760
    %5987 = vmatpush.msra.mxu0 %v5986
    %v5988 = vand.u32 %v1321, 4294901760
    %v5989 = vsub.f32 %v1321, %v5988
    %v5990 = vand.u32 %v5989, 4294901760
    %v5991 = vsub.f32 %v5989, %v5990
    %v5992 = vand.u32 %v5991, 4294901760
    %5993 = vmatpush.msra.mxu0 %v5992
    %v5994 = vand.u32 %v1320, 4294901760
    %v5995 = vsub.f32 %v1320, %v5994
    %v5996 = vand.u32 %v5995, 4294901760
    %v5997 = vsub.f32 %v5995, %v5996
    %v5998 = vand.u32 %v5997, 4294901760
    %5999 = vmatpush.msra.mxu0 %v5998
    %v6000 = vand.u32 %v5519, 4294901760
    %6001 = vmatmul.f32.gmra.mxu0 %v6000
    %v6002 = vpop.f32.mrf.mxu0
    %v6003 = vadd.f32 %v5902, %v6002
    %6004 = vdwg.mxu0
    %v6005 = vand.u32 %v1335, 4294901760
    %v6006 = vsub.f32 %v1335, %v6005
    %6007 = vmatpush.msra.mxu0 %v6006
    %v6008 = vand.u32 %v1334, 4294901760
    %v6009 = vsub.f32 %v1334, %v6008
    %6010 = vmatpush.msra.mxu0 %v6009
    %v6011 = vand.u32 %v1333, 4294901760
    %v6012 = vsub.f32 %v1333, %v6011
    %6013 = vmatpush.msra.mxu0 %v6012
    %v6014 = vand.u32 %v1332, 4294901760
    %v6015 = vsub.f32 %v1332, %v6014
    %6016 = vmatpush.msra.mxu0 %v6015
    %v6017 = vand.u32 %v1331, 4294901760
    %v6018 = vsub.f32 %v1331, %v6017
    %6019 = vmatpush.msra.mxu0 %v6018
    %v6020 = vand.u32 %v1330, 4294901760
    %v6021 = vsub.f32 %v1330, %v6020
    %6022 = vmatpush.msra.mxu0 %v6021
    %v6023 = vand.u32 %v1329, 4294901760
    %v6024 = vsub.f32 %v1329, %v6023
    %6025 = vmatpush.msra.mxu0 %v6024
    %v6026 = vand.u32 %v1328, 4294901760
    %v6027 = vsub.f32 %v1328, %v6026
    %6028 = vmatpush.msra.mxu0 %v6027
    %v6029 = vand.u32 %v1327, 4294901760
    %v6030 = vsub.f32 %v1327, %v6029
    %6031 = vmatpush.msra.mxu0 %v6030
    %v6032 = vand.u32 %v1326, 4294901760
    %v6033 = vsub.f32 %v1326, %v6032
    %6034 = vmatpush.msra.mxu0 %v6033
    %v6035 = vand.u32 %v1325, 4294901760
    %v6036 = vsub.f32 %v1325, %v6035
    %6037 = vmatpush.msra.mxu0 %v6036
    %v6038 = vand.u32 %v1324, 4294901760
    %v6039 = vsub.f32 %v1324, %v6038
    %6040 = vmatpush.msra.mxu0 %v6039
    %v6041 = vand.u32 %v1323, 4294901760
    %v6042 = vsub.f32 %v1323, %v6041
    %6043 = vmatpush.msra.mxu0 %v6042
    %v6044 = vand.u32 %v1322, 4294901760
    %v6045 = vsub.f32 %v1322, %v6044
    %6046 = vmatpush.msra.mxu0 %v6045
    %v6047 = vand.u32 %v1321, 4294901760
    %v6048 = vsub.f32 %v1321, %v6047
    %6049 = vmatpush.msra.mxu0 %v6048
    %v6050 = vand.u32 %v1320, 4294901760
    %v6051 = vsub.f32 %v1320, %v6050
    %6052 = vmatpush.msra.mxu0 %v6051
    %v6053 = vand.u32 %v5519, 4294901760
    %v6054 = vsub.f32 %v5519, %v6053
    %6055 = vmatmul.f32.gmra.mxu0 %v6054
    %v6056 = vpop.f32.mrf.mxu0
    %v6057 = vadd.f32 %v6003, %v6056
    %6058 = vdwg.mxu0
    %v6059 = vand.u32 %v1335, 4294901760
    %6060 = vmatpush.msra.mxu0 %v6059
    %v6061 = vand.u32 %v1334, 4294901760
    %6062 = vmatpush.msra.mxu0 %v6061
    %v6063 = vand.u32 %v1333, 4294901760
    %6064 = vmatpush.msra.mxu0 %v6063
    %v6065 = vand.u32 %v1332, 4294901760
    %6066 = vmatpush.msra.mxu0 %v6065
    %v6067 = vand.u32 %v1331, 4294901760
    %6068 = vmatpush.msra.mxu0 %v6067
    %v6069 = vand.u32 %v1330, 4294901760
    %6070 = vmatpush.msra.mxu0 %v6069
    %v6071 = vand.u32 %v1329, 4294901760
    %6072 = vmatpush.msra.mxu0 %v6071
    %v6073 = vand.u32 %v1328, 4294901760
    %6074 = vmatpush.msra.mxu0 %v6073
    %v6075 = vand.u32 %v1327, 4294901760
    %6076 = vmatpush.msra.mxu0 %v6075
    %v6077 = vand.u32 %v1326, 4294901760
    %6078 = vmatpush.msra.mxu0 %v6077
    %v6079 = vand.u32 %v1325, 4294901760
    %6080 = vmatpush.msra.mxu0 %v6079
    %v6081 = vand.u32 %v1324, 4294901760
    %6082 = vmatpush.msra.mxu0 %v6081
    %v6083 = vand.u32 %v1323, 4294901760
    %6084 = vmatpush.msra.mxu0 %v6083
    %v6085 = vand.u32 %v1322, 4294901760
    %6086 = vmatpush.msra.mxu0 %v6085
    %v6087 = vand.u32 %v1321, 4294901760
    %6088 = vmatpush.msra.mxu0 %v6087
    %v6089 = vand.u32 %v1320, 4294901760
    %6090 = vmatpush.msra.mxu0 %v6089
    %v6091 = vand.u32 %v5519, 4294901760
    %v6092 = vsub.f32 %v5519, %v6091
    %v6093 = vand.u32 %v6092, 4294901760
    %6094 = vmatmul.f32.gmra.mxu0 %v6093
    %v6095 = vpop.f32.mrf.mxu0
    %v6096 = vadd.f32 %v6057, %v6095
    %6097 = vdwg.mxu0
    %v6098 = vand.u32 %v1335, 4294901760
    %v6099 = vsub.f32 %v1335, %v6098
    %v6100 = vand.u32 %v6099, 4294901760
    %6101 = vmatpush.msra.mxu0 %v6100
    %v6102 = vand.u32 %v1334, 4294901760
    %v6103 = vsub.f32 %v1334, %v6102
    %v6104 = vand.u32 %v6103, 4294901760
    %6105 = vmatpush.msra.mxu0 %v6104
    %v6106 = vand.u32 %v1333, 4294901760
    %v6107 = vsub.f32 %v1333, %v6106
    %v6108 = vand.u32 %v6107, 4294901760
    %6109 = vmatpush.msra.mxu0 %v6108
    %v6110 = vand.u32 %v1332, 4294901760
    %v6111 = vsub.f32 %v1332, %v6110
    %v6112 = vand.u32 %v6111, 4294901760
    %6113 = vmatpush.msra.mxu0 %v6112
    %v6114 = vand.u32 %v1331, 4294901760
    %v6115 = vsub.f32 %v1331, %v6114
    %v6116 = vand.u32 %v6115, 4294901760
    %6117 = vmatpush.msra.mxu0 %v6116
    %v6118 = vand.u32 %v1330, 4294901760
    %v6119 = vsub.f32 %v1330, %v6118
    %v6120 = vand.u32 %v6119, 4294901760
    %6121 = vmatpush.msra.mxu0 %v6120
    %v6122 = vand.u32 %v1329, 4294901760
    %v6123 = vsub.f32 %v1329, %v6122
    %v6124 = vand.u32 %v6123, 4294901760
    %6125 = vmatpush.msra.mxu0 %v6124
    %v6126 = vand.u32 %v1328, 4294901760
    %v6127 = vsub.f32 %v1328, %v6126
    %v6128 = vand.u32 %v6127, 4294901760
    %6129 = vmatpush.msra.mxu0 %v6128
    %v6130 = vand.u32 %v1327, 4294901760
    %v6131 = vsub.f32 %v1327, %v6130
    %v6132 = vand.u32 %v6131, 4294901760
    %6133 = vmatpush.msra.mxu0 %v6132
    %v6134 = vand.u32 %v1326, 4294901760
    %v6135 = vsub.f32 %v1326, %v6134
    %v6136 = vand.u32 %v6135, 4294901760
    %6137 = vmatpush.msra.mxu0 %v6136
    %v6138 = vand.u32 %v1325, 4294901760
    %v6139 = vsub.f32 %v1325, %v6138
    %v6140 = vand.u32 %v6139, 4294901760
    %6141 = vmatpush.msra.mxu0 %v6140
    %v6142 = vand.u32 %v1324, 4294901760
    %v6143 = vsub.f32 %v1324, %v6142
    %v6144 = vand.u32 %v6143, 4294901760
    %6145 = vmatpush.msra.mxu0 %v6144
    %v6146 = vand.u32 %v1323, 4294901760
    %v6147 = vsub.f32 %v1323, %v6146
    %v6148 = vand.u32 %v6147, 4294901760
    %6149 = vmatpush.msra.mxu0 %v6148
    %v6150 = vand.u32 %v1322, 4294901760
    %v6151 = vsub.f32 %v1322, %v6150
    %v6152 = vand.u32 %v6151, 4294901760
    %6153 = vmatpush.msra.mxu0 %v6152
    %v6154 = vand.u32 %v1321, 4294901760
    %v6155 = vsub.f32 %v1321, %v6154
    %v6156 = vand.u32 %v6155, 4294901760
    %6157 = vmatpush.msra.mxu0 %v6156
    %v6158 = vand.u32 %v1320, 4294901760
    %v6159 = vsub.f32 %v1320, %v6158
    %v6160 = vand.u32 %v6159, 4294901760
    %6161 = vmatpush.msra.mxu0 %v6160
    %v6162 = vand.u32 %v5519, 4294901760
    %6163 = vmatmul.f32.gmra.mxu0 %v6162
    %v6164 = vpop.f32.mrf.mxu0
    %v6165 = vadd.f32 %v6096, %v6164
    %6166 = vdwg.mxu0
    %v6167 = vand.u32 %v1335, 4294901760
    %6168 = vmatpush.msra.mxu0 %v6167
    %v6169 = vand.u32 %v1334, 4294901760
    %6170 = vmatpush.msra.mxu0 %v6169
    %v6171 = vand.u32 %v1333, 4294901760
    %6172 = vmatpush.msra.mxu0 %v6171
    %v6173 = vand.u32 %v1332, 4294901760
    %6174 = vmatpush.msra.mxu0 %v6173
    %v6175 = vand.u32 %v1331, 4294901760
    %6176 = vmatpush.msra.mxu0 %v6175
    %v6177 = vand.u32 %v1330, 4294901760
    %6178 = vmatpush.msra.mxu0 %v6177
    %v6179 = vand.u32 %v1329, 4294901760
    %6180 = vmatpush.msra.mxu0 %v6179
    %v6181 = vand.u32 %v1328, 4294901760
    %6182 = vmatpush.msra.mxu0 %v6181
    %v6183 = vand.u32 %v1327, 4294901760
    %6184 = vmatpush.msra.mxu0 %v6183
    %v6185 = vand.u32 %v1326, 4294901760
    %6186 = vmatpush.msra.mxu0 %v6185
    %v6187 = vand.u32 %v1325, 4294901760
    %6188 = vmatpush.msra.mxu0 %v6187
    %v6189 = vand.u32 %v1324, 4294901760
    %6190 = vmatpush.msra.mxu0 %v6189
    %v6191 = vand.u32 %v1323, 4294901760
    %6192 = vmatpush.msra.mxu0 %v6191
    %v6193 = vand.u32 %v1322, 4294901760
    %6194 = vmatpush.msra.mxu0 %v6193
    %v6195 = vand.u32 %v1321, 4294901760
    %6196 = vmatpush.msra.mxu0 %v6195
    %v6197 = vand.u32 %v1320, 4294901760
    %6198 = vmatpush.msra.mxu0 %v6197
    %v6199 = vand.u32 %v5519, 4294901760
    %6200 = vmatmul.f32.gmra.mxu0 %v6199
    %v6201 = vpop.f32.mrf.mxu0
    %v6202 = vadd.f32 %v6165, %v6201
    %6203 = vdwg.mxu0
    %v6204 = vperm.slane %v4145, 0
    %v6205 = vperm.slane %v4145, 1
    %v6208 = vand.u32 %v1351, 4294901760
    %6209 = vmatpush.msra.mxu0 %v6208
    %v6210 = vand.u32 %v1350, 4294901760
    %6211 = vmatpush.msra.mxu0 %v6210
    %v6212 = vand.u32 %v1349, 4294901760
    %6213 = vmatpush.msra.mxu0 %v6212
    %v6214 = vand.u32 %v1348, 4294901760
    %6215 = vmatpush.msra.mxu0 %v6214
    %v6216 = vand.u32 %v1347, 4294901760
    %6217 = vmatpush.msra.mxu0 %v6216
    %v6218 = vand.u32 %v1346, 4294901760
    %6219 = vmatpush.msra.mxu0 %v6218
    %v6220 = vand.u32 %v1345, 4294901760
    %6221 = vmatpush.msra.mxu0 %v6220
    %v6222 = vand.u32 %v1344, 4294901760
    %6223 = vmatpush.msra.mxu0 %v6222
    %v6224 = vand.u32 %v1343, 4294901760
    %6225 = vmatpush.msra.mxu0 %v6224
    %v6226 = vand.u32 %v1342, 4294901760
    %6227 = vmatpush.msra.mxu0 %v6226
    %v6228 = vand.u32 %v1341, 4294901760
    %6229 = vmatpush.msra.mxu0 %v6228
    %v6230 = vand.u32 %v1340, 4294901760
    %6231 = vmatpush.msra.mxu0 %v6230
    %v6232 = vand.u32 %v1339, 4294901760
    %6233 = vmatpush.msra.mxu0 %v6232
    %v6234 = vand.u32 %v1338, 4294901760
    %6235 = vmatpush.msra.mxu0 %v6234
    %v6236 = vand.u32 %v1337, 4294901760
    %6237 = vmatpush.msra.mxu0 %v6236
    %v6238 = vand.u32 %v1336, 4294901760
    %6239 = vmatpush.msra.mxu0 %v6238
    %v6240 = vand.u32 %v6204, 4294901760
    %v6241 = vsub.f32 %v6204, %v6240
    %v6242 = vand.u32 %v6241, 4294901760
    %v6243 = vsub.f32 %v6241, %v6242
    %v6244 = vand.u32 %v6243, 4294901760
    %6245 = vmatmul.f32.gmra.mxu0 %v6244
    %v6246 = vpop.f32.mrf.mxu0
    %v6247 = vadd.f32 0.0, %v6246
    %6248 = vdwg.mxu0
    %v6249 = vand.u32 %v1351, 4294901760
    %v6250 = vsub.f32 %v1351, %v6249
    %v6251 = vand.u32 %v6250, 4294901760
    %v6252 = vsub.f32 %v6250, %v6251
    %v6253 = vand.u32 %v6252, 4294901760
    %6254 = vmatpush.msra.mxu0 %v6253
    %v6255 = vand.u32 %v1350, 4294901760
    %v6256 = vsub.f32 %v1350, %v6255
    %v6257 = vand.u32 %v6256, 4294901760
    %v6258 = vsub.f32 %v6256, %v6257
    %v6259 = vand.u32 %v6258, 4294901760
    %6260 = vmatpush.msra.mxu0 %v6259
    %v6261 = vand.u32 %v1349, 4294901760
    %v6262 = vsub.f32 %v1349, %v6261
    %v6263 = vand.u32 %v6262, 4294901760
    %v6264 = vsub.f32 %v6262, %v6263
    %v6265 = vand.u32 %v6264, 4294901760
    %6266 = vmatpush.msra.mxu0 %v6265
    %v6267 = vand.u32 %v1348, 4294901760
    %v6268 = vsub.f32 %v1348, %v6267
    %v6269 = vand.u32 %v6268, 4294901760
    %v6270 = vsub.f32 %v6268, %v6269
    %v6271 = vand.u32 %v6270, 4294901760
    %6272 = vmatpush.msra.mxu0 %v6271
    %v6273 = vand.u32 %v1347, 4294901760
    %v6274 = vsub.f32 %v1347, %v6273
    %v6275 = vand.u32 %v6274, 4294901760
    %v6276 = vsub.f32 %v6274, %v6275
    %v6277 = vand.u32 %v6276, 4294901760
    %6278 = vmatpush.msra.mxu0 %v6277
    %v6279 = vand.u32 %v1346, 4294901760
    %v6280 = vsub.f32 %v1346, %v6279
    %v6281 = vand.u32 %v6280, 4294901760
    %v6282 = vsub.f32 %v6280, %v6281
    %v6283 = vand.u32 %v6282, 4294901760
    %6284 = vmatpush.msra.mxu0 %v6283
    %v6285 = vand.u32 %v1345, 4294901760
    %v6286 = vsub.f32 %v1345, %v6285
    %v6287 = vand.u32 %v6286, 4294901760
    %v6288 = vsub.f32 %v6286, %v6287
    %v6289 = vand.u32 %v6288, 4294901760
    %6290 = vmatpush.msra.mxu0 %v6289
    %v6291 = vand.u32 %v1344, 4294901760
    %v6292 = vsub.f32 %v1344, %v6291
    %v6293 = vand.u32 %v6292, 4294901760
    %v6294 = vsub.f32 %v6292, %v6293
    %v6295 = vand.u32 %v6294, 4294901760
    %6296 = vmatpush.msra.mxu0 %v6295
    %v6297 = vand.u32 %v1343, 4294901760
    %v6298 = vsub.f32 %v1343, %v6297
    %v6299 = vand.u32 %v6298, 4294901760
    %v6300 = vsub.f32 %v6298, %v6299
    %v6301 = vand.u32 %v6300, 4294901760
    %6302 = vmatpush.msra.mxu0 %v6301
    %v6303 = vand.u32 %v1342, 4294901760
    %v6304 = vsub.f32 %v1342, %v6303
    %v6305 = vand.u32 %v6304, 4294901760
    %v6306 = vsub.f32 %v6304, %v6305
    %v6307 = vand.u32 %v6306, 4294901760
    %6308 = vmatpush.msra.mxu0 %v6307
    %v6309 = vand.u32 %v1341, 4294901760
    %v6310 = vsub.f32 %v1341, %v6309
    %v6311 = vand.u32 %v6310, 4294901760
    %v6312 = vsub.f32 %v6310, %v6311
    %v6313 = vand.u32 %v6312, 4294901760
    %6314 = vmatpush.msra.mxu0 %v6313
    %v6315 = vand.u32 %v1340, 4294901760
    %v6316 = vsub.f32 %v1340, %v6315
    %v6317 = vand.u32 %v6316, 4294901760
    %v6318 = vsub.f32 %v6316, %v6317
    %v6319 = vand.u32 %v6318, 4294901760
    %6320 = vmatpush.msra.mxu0 %v6319
    %v6321 = vand.u32 %v1339, 4294901760
    %v6322 = vsub.f32 %v1339, %v6321
    %v6323 = vand.u32 %v6322, 4294901760
    %v6324 = vsub.f32 %v6322, %v6323
    %v6325 = vand.u32 %v6324, 4294901760
    %6326 = vmatpush.msra.mxu0 %v6325
    %v6327 = vand.u32 %v1338, 4294901760
    %v6328 = vsub.f32 %v1338, %v6327
    %v6329 = vand.u32 %v6328, 4294901760
    %v6330 = vsub.f32 %v6328, %v6329
    %v6331 = vand.u32 %v6330, 4294901760
    %6332 = vmatpush.msra.mxu0 %v6331
    %v6333 = vand.u32 %v1337, 4294901760
    %v6334 = vsub.f32 %v1337, %v6333
    %v6335 = vand.u32 %v6334, 4294901760
    %v6336 = vsub.f32 %v6334, %v6335
    %v6337 = vand.u32 %v6336, 4294901760
    %6338 = vmatpush.msra.mxu0 %v6337
    %v6339 = vand.u32 %v1336, 4294901760
    %v6340 = vsub.f32 %v1336, %v6339
    %v6341 = vand.u32 %v6340, 4294901760
    %v6342 = vsub.f32 %v6340, %v6341
    %v6343 = vand.u32 %v6342, 4294901760
    %6344 = vmatpush.msra.mxu0 %v6343
    %v6345 = vand.u32 %v6204, 4294901760
    %6346 = vmatmul.f32.gmra.mxu0 %v6345
    %v6347 = vpop.f32.mrf.mxu0
    %v6348 = vadd.f32 %v6247, %v6347
    %6349 = vdwg.mxu0
    %v6350 = vand.u32 %v1351, 4294901760
    %v6351 = vsub.f32 %v1351, %v6350
    %6352 = vmatpush.msra.mxu0 %v6351
    %v6353 = vand.u32 %v1350, 4294901760
    %v6354 = vsub.f32 %v1350, %v6353
    %6355 = vmatpush.msra.mxu0 %v6354
    %v6356 = vand.u32 %v1349, 4294901760
    %v6357 = vsub.f32 %v1349, %v6356
    %6358 = vmatpush.msra.mxu0 %v6357
    %v6359 = vand.u32 %v1348, 4294901760
    %v6360 = vsub.f32 %v1348, %v6359
    %6361 = vmatpush.msra.mxu0 %v6360
    %v6362 = vand.u32 %v1347, 4294901760
    %v6363 = vsub.f32 %v1347, %v6362
    %6364 = vmatpush.msra.mxu0 %v6363
    %v6365 = vand.u32 %v1346, 4294901760
    %v6366 = vsub.f32 %v1346, %v6365
    %6367 = vmatpush.msra.mxu0 %v6366
    %v6368 = vand.u32 %v1345, 4294901760
    %v6369 = vsub.f32 %v1345, %v6368
    %6370 = vmatpush.msra.mxu0 %v6369
    %v6371 = vand.u32 %v1344, 4294901760
    %v6372 = vsub.f32 %v1344, %v6371
    %6373 = vmatpush.msra.mxu0 %v6372
    %v6374 = vand.u32 %v1343, 4294901760
    %v6375 = vsub.f32 %v1343, %v6374
    %6376 = vmatpush.msra.mxu0 %v6375
    %v6377 = vand.u32 %v1342, 4294901760
    %v6378 = vsub.f32 %v1342, %v6377
    %6379 = vmatpush.msra.mxu0 %v6378
    %v6380 = vand.u32 %v1341, 4294901760
    %v6381 = vsub.f32 %v1341, %v6380
    %6382 = vmatpush.msra.mxu0 %v6381
    %v6383 = vand.u32 %v1340, 4294901760
    %v6384 = vsub.f32 %v1340, %v6383
    %6385 = vmatpush.msra.mxu0 %v6384
    %v6386 = vand.u32 %v1339, 4294901760
    %v6387 = vsub.f32 %v1339, %v6386
    %6388 = vmatpush.msra.mxu0 %v6387
    %v6389 = vand.u32 %v1338, 4294901760
    %v6390 = vsub.f32 %v1338, %v6389
    %6391 = vmatpush.msra.mxu0 %v6390
    %v6392 = vand.u32 %v1337, 4294901760
    %v6393 = vsub.f32 %v1337, %v6392
    %6394 = vmatpush.msra.mxu0 %v6393
    %v6395 = vand.u32 %v1336, 4294901760
    %v6396 = vsub.f32 %v1336, %v6395
    %6397 = vmatpush.msra.mxu0 %v6396
    %v6398 = vand.u32 %v6204, 4294901760
    %v6399 = vsub.f32 %v6204, %v6398
    %6400 = vmatmul.f32.gmra.mxu0 %v6399
    %v6401 = vpop.f32.mrf.mxu0
    %v6402 = vadd.f32 %v6348, %v6401
    %6403 = vdwg.mxu0
    %v6404 = vand.u32 %v1351, 4294901760
    %6405 = vmatpush.msra.mxu0 %v6404
    %v6406 = vand.u32 %v1350, 4294901760
    %6407 = vmatpush.msra.mxu0 %v6406
    %v6408 = vand.u32 %v1349, 4294901760
    %6409 = vmatpush.msra.mxu0 %v6408
    %v6410 = vand.u32 %v1348, 4294901760
    %6411 = vmatpush.msra.mxu0 %v6410
    %v6412 = vand.u32 %v1347, 4294901760
    %6413 = vmatpush.msra.mxu0 %v6412
    %v6414 = vand.u32 %v1346, 4294901760
    %6415 = vmatpush.msra.mxu0 %v6414
    %v6416 = vand.u32 %v1345, 4294901760
    %6417 = vmatpush.msra.mxu0 %v6416
    %v6418 = vand.u32 %v1344, 4294901760
    %6419 = vmatpush.msra.mxu0 %v6418
    %v6420 = vand.u32 %v1343, 4294901760
    %6421 = vmatpush.msra.mxu0 %v6420
    %v6422 = vand.u32 %v1342, 4294901760
    %6423 = vmatpush.msra.mxu0 %v6422
    %v6424 = vand.u32 %v1341, 4294901760
    %6425 = vmatpush.msra.mxu0 %v6424
    %v6426 = vand.u32 %v1340, 4294901760
    %6427 = vmatpush.msra.mxu0 %v6426
    %v6428 = vand.u32 %v1339, 4294901760
    %6429 = vmatpush.msra.mxu0 %v6428
    %v6430 = vand.u32 %v1338, 4294901760
    %6431 = vmatpush.msra.mxu0 %v6430
    %v6432 = vand.u32 %v1337, 4294901760
    %6433 = vmatpush.msra.mxu0 %v6432
    %v6434 = vand.u32 %v1336, 4294901760
    %6435 = vmatpush.msra.mxu0 %v6434
    %v6436 = vand.u32 %v6204, 4294901760
    %v6437 = vsub.f32 %v6204, %v6436
    %v6438 = vand.u32 %v6437, 4294901760
    %6439 = vmatmul.f32.gmra.mxu0 %v6438
    %v6440 = vpop.f32.mrf.mxu0
    %v6441 = vadd.f32 %v6402, %v6440
    %6442 = vdwg.mxu0
    %v6443 = vand.u32 %v1351, 4294901760
    %v6444 = vsub.f32 %v1351, %v6443
    %v6445 = vand.u32 %v6444, 4294901760
    %6446 = vmatpush.msra.mxu0 %v6445
    %v6447 = vand.u32 %v1350, 4294901760
    %v6448 = vsub.f32 %v1350, %v6447
    %v6449 = vand.u32 %v6448, 4294901760
    %6450 = vmatpush.msra.mxu0 %v6449
    %v6451 = vand.u32 %v1349, 4294901760
    %v6452 = vsub.f32 %v1349, %v6451
    %v6453 = vand.u32 %v6452, 4294901760
    %6454 = vmatpush.msra.mxu0 %v6453
    %v6455 = vand.u32 %v1348, 4294901760
    %v6456 = vsub.f32 %v1348, %v6455
    %v6457 = vand.u32 %v6456, 4294901760
    %6458 = vmatpush.msra.mxu0 %v6457
    %v6459 = vand.u32 %v1347, 4294901760
    %v6460 = vsub.f32 %v1347, %v6459
    %v6461 = vand.u32 %v6460, 4294901760
    %6462 = vmatpush.msra.mxu0 %v6461
    %v6463 = vand.u32 %v1346, 4294901760
    %v6464 = vsub.f32 %v1346, %v6463
    %v6465 = vand.u32 %v6464, 4294901760
    %6466 = vmatpush.msra.mxu0 %v6465
    %v6467 = vand.u32 %v1345, 4294901760
    %v6468 = vsub.f32 %v1345, %v6467
    %v6469 = vand.u32 %v6468, 4294901760
    %6470 = vmatpush.msra.mxu0 %v6469
    %v6471 = vand.u32 %v1344, 4294901760
    %v6472 = vsub.f32 %v1344, %v6471
    %v6473 = vand.u32 %v6472, 4294901760
    %6474 = vmatpush.msra.mxu0 %v6473
    %v6475 = vand.u32 %v1343, 4294901760
    %v6476 = vsub.f32 %v1343, %v6475
    %v6477 = vand.u32 %v6476, 4294901760
    %6478 = vmatpush.msra.mxu0 %v6477
    %v6479 = vand.u32 %v1342, 4294901760
    %v6480 = vsub.f32 %v1342, %v6479
    %v6481 = vand.u32 %v6480, 4294901760
    %6482 = vmatpush.msra.mxu0 %v6481
    %v6483 = vand.u32 %v1341, 4294901760
    %v6484 = vsub.f32 %v1341, %v6483
    %v6485 = vand.u32 %v6484, 4294901760
    %6486 = vmatpush.msra.mxu0 %v6485
    %v6487 = vand.u32 %v1340, 4294901760
    %v6488 = vsub.f32 %v1340, %v6487
    %v6489 = vand.u32 %v6488, 4294901760
    %6490 = vmatpush.msra.mxu0 %v6489
    %v6491 = vand.u32 %v1339, 4294901760
    %v6492 = vsub.f32 %v1339, %v6491
    %v6493 = vand.u32 %v6492, 4294901760
    %6494 = vmatpush.msra.mxu0 %v6493
    %v6495 = vand.u32 %v1338, 4294901760
    %v6496 = vsub.f32 %v1338, %v6495
    %v6497 = vand.u32 %v6496, 4294901760
    %6498 = vmatpush.msra.mxu0 %v6497
    %v6499 = vand.u32 %v1337, 4294901760
    %v6500 = vsub.f32 %v1337, %v6499
    %v6501 = vand.u32 %v6500, 4294901760
    %6502 = vmatpush.msra.mxu0 %v6501
    %v6503 = vand.u32 %v1336, 4294901760
    %v6504 = vsub.f32 %v1336, %v6503
    %v6505 = vand.u32 %v6504, 4294901760
    %6506 = vmatpush.msra.mxu0 %v6505
    %v6507 = vand.u32 %v6204, 4294901760
    %6508 = vmatmul.f32.gmra.mxu0 %v6507
    %v6509 = vpop.f32.mrf.mxu0
    %v6510 = vadd.f32 %v6441, %v6509
    %6511 = vdwg.mxu0
    %v6512 = vand.u32 %v1351, 4294901760
    %6513 = vmatpush.msra.mxu0 %v6512
    %v6514 = vand.u32 %v1350, 4294901760
    %6515 = vmatpush.msra.mxu0 %v6514
    %v6516 = vand.u32 %v1349, 4294901760
    %6517 = vmatpush.msra.mxu0 %v6516
    %v6518 = vand.u32 %v1348, 4294901760
    %6519 = vmatpush.msra.mxu0 %v6518
    %v6520 = vand.u32 %v1347, 4294901760
    %6521 = vmatpush.msra.mxu0 %v6520
    %v6522 = vand.u32 %v1346, 4294901760
    %6523 = vmatpush.msra.mxu0 %v6522
    %v6524 = vand.u32 %v1345, 4294901760
    %6525 = vmatpush.msra.mxu0 %v6524
    %v6526 = vand.u32 %v1344, 4294901760
    %6527 = vmatpush.msra.mxu0 %v6526
    %v6528 = vand.u32 %v1343, 4294901760
    %6529 = vmatpush.msra.mxu0 %v6528
    %v6530 = vand.u32 %v1342, 4294901760
    %6531 = vmatpush.msra.mxu0 %v6530
    %v6532 = vand.u32 %v1341, 4294901760
    %6533 = vmatpush.msra.mxu0 %v6532
    %v6534 = vand.u32 %v1340, 4294901760
    %6535 = vmatpush.msra.mxu0 %v6534
    %v6536 = vand.u32 %v1339, 4294901760
    %6537 = vmatpush.msra.mxu0 %v6536
    %v6538 = vand.u32 %v1338, 4294901760
    %6539 = vmatpush.msra.mxu0 %v6538
    %v6540 = vand.u32 %v1337, 4294901760
    %6541 = vmatpush.msra.mxu0 %v6540
    %v6542 = vand.u32 %v1336, 4294901760
    %6543 = vmatpush.msra.mxu0 %v6542
    %v6544 = vand.u32 %v6204, 4294901760
    %6545 = vmatmul.f32.gmra.mxu0 %v6544
    %v6546 = vpop.f32.mrf.mxu0
    %v6547 = vadd.f32 %v6510, %v6546
    %6548 = vdwg.mxu0
    %v6549 = vand.u32 %v1367, 4294901760
    %6550 = vmatpush.msra.mxu0 %v6549
    %v6551 = vand.u32 %v1366, 4294901760
    %6552 = vmatpush.msra.mxu0 %v6551
    %v6553 = vand.u32 %v1365, 4294901760
    %6554 = vmatpush.msra.mxu0 %v6553
    %v6555 = vand.u32 %v1364, 4294901760
    %6556 = vmatpush.msra.mxu0 %v6555
    %v6557 = vand.u32 %v1363, 4294901760
    %6558 = vmatpush.msra.mxu0 %v6557
    %v6559 = vand.u32 %v1362, 4294901760
    %6560 = vmatpush.msra.mxu0 %v6559
    %v6561 = vand.u32 %v1361, 4294901760
    %6562 = vmatpush.msra.mxu0 %v6561
    %v6563 = vand.u32 %v1360, 4294901760
    %6564 = vmatpush.msra.mxu0 %v6563
    %v6565 = vand.u32 %v1359, 4294901760
    %6566 = vmatpush.msra.mxu0 %v6565
    %v6567 = vand.u32 %v1358, 4294901760
    %6568 = vmatpush.msra.mxu0 %v6567
    %v6569 = vand.u32 %v1357, 4294901760
    %6570 = vmatpush.msra.mxu0 %v6569
    %v6571 = vand.u32 %v1356, 4294901760
    %6572 = vmatpush.msra.mxu0 %v6571
    %v6573 = vand.u32 %v1355, 4294901760
    %6574 = vmatpush.msra.mxu0 %v6573
    %v6575 = vand.u32 %v1354, 4294901760
    %6576 = vmatpush.msra.mxu0 %v6575
    %v6577 = vand.u32 %v1353, 4294901760
    %6578 = vmatpush.msra.mxu0 %v6577
    %v6579 = vand.u32 %v1352, 4294901760
    %6580 = vmatpush.msra.mxu0 %v6579
    %v6581 = vand.u32 %v6205, 4294901760
    %v6582 = vsub.f32 %v6205, %v6581
    %v6583 = vand.u32 %v6582, 4294901760
    %v6584 = vsub.f32 %v6582, %v6583
    %v6585 = vand.u32 %v6584, 4294901760
    %6586 = vmatmul.f32.gmra.mxu0 %v6585
    %v6587 = vpop.f32.mrf.mxu0
    %v6588 = vadd.f32 %v6547, %v6587
    %6589 = vdwg.mxu0
    %v6590 = vand.u32 %v1367, 4294901760
    %v6591 = vsub.f32 %v1367, %v6590
    %v6592 = vand.u32 %v6591, 4294901760
    %v6593 = vsub.f32 %v6591, %v6592
    %v6594 = vand.u32 %v6593, 4294901760
    %6595 = vmatpush.msra.mxu0 %v6594
    %v6596 = vand.u32 %v1366, 4294901760
    %v6597 = vsub.f32 %v1366, %v6596
    %v6598 = vand.u32 %v6597, 4294901760
    %v6599 = vsub.f32 %v6597, %v6598
    %v6600 = vand.u32 %v6599, 4294901760
    %6601 = vmatpush.msra.mxu0 %v6600
    %v6602 = vand.u32 %v1365, 4294901760
    %v6603 = vsub.f32 %v1365, %v6602
    %v6604 = vand.u32 %v6603, 4294901760
    %v6605 = vsub.f32 %v6603, %v6604
    %v6606 = vand.u32 %v6605, 4294901760
    %6607 = vmatpush.msra.mxu0 %v6606
    %v6608 = vand.u32 %v1364, 4294901760
    %v6609 = vsub.f32 %v1364, %v6608
    %v6610 = vand.u32 %v6609, 4294901760
    %v6611 = vsub.f32 %v6609, %v6610
    %v6612 = vand.u32 %v6611, 4294901760
    %6613 = vmatpush.msra.mxu0 %v6612
    %v6614 = vand.u32 %v1363, 4294901760
    %v6615 = vsub.f32 %v1363, %v6614
    %v6616 = vand.u32 %v6615, 4294901760
    %v6617 = vsub.f32 %v6615, %v6616
    %v6618 = vand.u32 %v6617, 4294901760
    %6619 = vmatpush.msra.mxu0 %v6618
    %v6620 = vand.u32 %v1362, 4294901760
    %v6621 = vsub.f32 %v1362, %v6620
    %v6622 = vand.u32 %v6621, 4294901760
    %v6623 = vsub.f32 %v6621, %v6622
    %v6624 = vand.u32 %v6623, 4294901760
    %6625 = vmatpush.msra.mxu0 %v6624
    %v6626 = vand.u32 %v1361, 4294901760
    %v6627 = vsub.f32 %v1361, %v6626
    %v6628 = vand.u32 %v6627, 4294901760
    %v6629 = vsub.f32 %v6627, %v6628
    %v6630 = vand.u32 %v6629, 4294901760
    %6631 = vmatpush.msra.mxu0 %v6630
    %v6632 = vand.u32 %v1360, 4294901760
    %v6633 = vsub.f32 %v1360, %v6632
    %v6634 = vand.u32 %v6633, 4294901760
    %v6635 = vsub.f32 %v6633, %v6634
    %v6636 = vand.u32 %v6635, 4294901760
    %6637 = vmatpush.msra.mxu0 %v6636
    %v6638 = vand.u32 %v1359, 4294901760
    %v6639 = vsub.f32 %v1359, %v6638
    %v6640 = vand.u32 %v6639, 4294901760
    %v6641 = vsub.f32 %v6639, %v6640
    %v6642 = vand.u32 %v6641, 4294901760
    %6643 = vmatpush.msra.mxu0 %v6642
    %v6644 = vand.u32 %v1358, 4294901760
    %v6645 = vsub.f32 %v1358, %v6644
    %v6646 = vand.u32 %v6645, 4294901760
    %v6647 = vsub.f32 %v6645, %v6646
    %v6648 = vand.u32 %v6647, 4294901760
    %6649 = vmatpush.msra.mxu0 %v6648
    %v6650 = vand.u32 %v1357, 4294901760
    %v6651 = vsub.f32 %v1357, %v6650
    %v6652 = vand.u32 %v6651, 4294901760
    %v6653 = vsub.f32 %v6651, %v6652
    %v6654 = vand.u32 %v6653, 4294901760
    %6655 = vmatpush.msra.mxu0 %v6654
    %v6656 = vand.u32 %v1356, 4294901760
    %v6657 = vsub.f32 %v1356, %v6656
    %v6658 = vand.u32 %v6657, 4294901760
    %v6659 = vsub.f32 %v6657, %v6658
    %v6660 = vand.u32 %v6659, 4294901760
    %6661 = vmatpush.msra.mxu0 %v6660
    %v6662 = vand.u32 %v1355, 4294901760
    %v6663 = vsub.f32 %v1355, %v6662
    %v6664 = vand.u32 %v6663, 4294901760
    %v6665 = vsub.f32 %v6663, %v6664
    %v6666 = vand.u32 %v6665, 4294901760
    %6667 = vmatpush.msra.mxu0 %v6666
    %v6668 = vand.u32 %v1354, 4294901760
    %v6669 = vsub.f32 %v1354, %v6668
    %v6670 = vand.u32 %v6669, 4294901760
    %v6671 = vsub.f32 %v6669, %v6670
    %v6672 = vand.u32 %v6671, 4294901760
    %6673 = vmatpush.msra.mxu0 %v6672
    %v6674 = vand.u32 %v1353, 4294901760
    %v6675 = vsub.f32 %v1353, %v6674
    %v6676 = vand.u32 %v6675, 4294901760
    %v6677 = vsub.f32 %v6675, %v6676
    %v6678 = vand.u32 %v6677, 4294901760
    %6679 = vmatpush.msra.mxu0 %v6678
    %v6680 = vand.u32 %v1352, 4294901760
    %v6681 = vsub.f32 %v1352, %v6680
    %v6682 = vand.u32 %v6681, 4294901760
    %v6683 = vsub.f32 %v6681, %v6682
    %v6684 = vand.u32 %v6683, 4294901760
    %6685 = vmatpush.msra.mxu0 %v6684
    %v6686 = vand.u32 %v6205, 4294901760
    %6687 = vmatmul.f32.gmra.mxu0 %v6686
    %v6688 = vpop.f32.mrf.mxu0
    %v6689 = vadd.f32 %v6588, %v6688
    %6690 = vdwg.mxu0
    %v6691 = vand.u32 %v1367, 4294901760
    %v6692 = vsub.f32 %v1367, %v6691
    %6693 = vmatpush.msra.mxu0 %v6692
    %v6694 = vand.u32 %v1366, 4294901760
    %v6695 = vsub.f32 %v1366, %v6694
    %6696 = vmatpush.msra.mxu0 %v6695
    %v6697 = vand.u32 %v1365, 4294901760
    %v6698 = vsub.f32 %v1365, %v6697
    %6699 = vmatpush.msra.mxu0 %v6698
    %v6700 = vand.u32 %v1364, 4294901760
    %v6701 = vsub.f32 %v1364, %v6700
    %6702 = vmatpush.msra.mxu0 %v6701
    %v6703 = vand.u32 %v1363, 4294901760
    %v6704 = vsub.f32 %v1363, %v6703
    %6705 = vmatpush.msra.mxu0 %v6704
    %v6706 = vand.u32 %v1362, 4294901760
    %v6707 = vsub.f32 %v1362, %v6706
    %6708 = vmatpush.msra.mxu0 %v6707
    %v6709 = vand.u32 %v1361, 4294901760
    %v6710 = vsub.f32 %v1361, %v6709
    %6711 = vmatpush.msra.mxu0 %v6710
    %v6712 = vand.u32 %v1360, 4294901760
    %v6713 = vsub.f32 %v1360, %v6712
    %6714 = vmatpush.msra.mxu0 %v6713
    %v6715 = vand.u32 %v1359, 4294901760
    %v6716 = vsub.f32 %v1359, %v6715
    %6717 = vmatpush.msra.mxu0 %v6716
    %v6718 = vand.u32 %v1358, 4294901760
    %v6719 = vsub.f32 %v1358, %v6718
    %6720 = vmatpush.msra.mxu0 %v6719
    %v6721 = vand.u32 %v1357, 4294901760
    %v6722 = vsub.f32 %v1357, %v6721
    %6723 = vmatpush.msra.mxu0 %v6722
    %v6724 = vand.u32 %v1356, 4294901760
    %v6725 = vsub.f32 %v1356, %v6724
    %6726 = vmatpush.msra.mxu0 %v6725
    %v6727 = vand.u32 %v1355, 4294901760
    %v6728 = vsub.f32 %v1355, %v6727
    %6729 = vmatpush.msra.mxu0 %v6728
    %v6730 = vand.u32 %v1354, 4294901760
    %v6731 = vsub.f32 %v1354, %v6730
    %6732 = vmatpush.msra.mxu0 %v6731
    %v6733 = vand.u32 %v1353, 4294901760
    %v6734 = vsub.f32 %v1353, %v6733
    %6735 = vmatpush.msra.mxu0 %v6734
    %v6736 = vand.u32 %v1352, 4294901760
    %v6737 = vsub.f32 %v1352, %v6736
    %6738 = vmatpush.msra.mxu0 %v6737
    %v6739 = vand.u32 %v6205, 4294901760
    %v6740 = vsub.f32 %v6205, %v6739
    %6741 = vmatmul.f32.gmra.mxu0 %v6740
    %v6742 = vpop.f32.mrf.mxu0
    %v6743 = vadd.f32 %v6689, %v6742
    %6744 = vdwg.mxu0
    %v6745 = vand.u32 %v1367, 4294901760
    %6746 = vmatpush.msra.mxu0 %v6745
    %v6747 = vand.u32 %v1366, 4294901760
    %6748 = vmatpush.msra.mxu0 %v6747
    %v6749 = vand.u32 %v1365, 4294901760
    %6750 = vmatpush.msra.mxu0 %v6749
    %v6751 = vand.u32 %v1364, 4294901760
    %6752 = vmatpush.msra.mxu0 %v6751
    %v6753 = vand.u32 %v1363, 4294901760
    %6754 = vmatpush.msra.mxu0 %v6753
    %v6755 = vand.u32 %v1362, 4294901760
    %6756 = vmatpush.msra.mxu0 %v6755
    %v6757 = vand.u32 %v1361, 4294901760
    %6758 = vmatpush.msra.mxu0 %v6757
    %v6759 = vand.u32 %v1360, 4294901760
    %6760 = vmatpush.msra.mxu0 %v6759
    %v6761 = vand.u32 %v1359, 4294901760
    %6762 = vmatpush.msra.mxu0 %v6761
    %v6763 = vand.u32 %v1358, 4294901760
    %6764 = vmatpush.msra.mxu0 %v6763
    %v6765 = vand.u32 %v1357, 4294901760
    %6766 = vmatpush.msra.mxu0 %v6765
    %v6767 = vand.u32 %v1356, 4294901760
    %6768 = vmatpush.msra.mxu0 %v6767
    %v6769 = vand.u32 %v1355, 4294901760
    %6770 = vmatpush.msra.mxu0 %v6769
    %v6771 = vand.u32 %v1354, 4294901760
    %6772 = vmatpush.msra.mxu0 %v6771
    %v6773 = vand.u32 %v1353, 4294901760
    %6774 = vmatpush.msra.mxu0 %v6773
    %v6775 = vand.u32 %v1352, 4294901760
    %6776 = vmatpush.msra.mxu0 %v6775
    %v6777 = vand.u32 %v6205, 4294901760
    %v6778 = vsub.f32 %v6205, %v6777
    %v6779 = vand.u32 %v6778, 4294901760
    %6780 = vmatmul.f32.gmra.mxu0 %v6779
    %v6781 = vpop.f32.mrf.mxu0
    %v6782 = vadd.f32 %v6743, %v6781
    %6783 = vdwg.mxu0
    %v6784 = vand.u32 %v1367, 4294901760
    %v6785 = vsub.f32 %v1367, %v6784
    %v6786 = vand.u32 %v6785, 4294901760
    %6787 = vmatpush.msra.mxu0 %v6786
    %v6788 = vand.u32 %v1366, 4294901760
    %v6789 = vsub.f32 %v1366, %v6788
    %v6790 = vand.u32 %v6789, 4294901760
    %6791 = vmatpush.msra.mxu0 %v6790
    %v6792 = vand.u32 %v1365, 4294901760
    %v6793 = vsub.f32 %v1365, %v6792
    %v6794 = vand.u32 %v6793, 4294901760
    %6795 = vmatpush.msra.mxu0 %v6794
    %v6796 = vand.u32 %v1364, 4294901760
    %v6797 = vsub.f32 %v1364, %v6796
    %v6798 = vand.u32 %v6797, 4294901760
    %6799 = vmatpush.msra.mxu0 %v6798
    %v6800 = vand.u32 %v1363, 4294901760
    %v6801 = vsub.f32 %v1363, %v6800
    %v6802 = vand.u32 %v6801, 4294901760
    %6803 = vmatpush.msra.mxu0 %v6802
    %v6804 = vand.u32 %v1362, 4294901760
    %v6805 = vsub.f32 %v1362, %v6804
    %v6806 = vand.u32 %v6805, 4294901760
    %6807 = vmatpush.msra.mxu0 %v6806
    %v6808 = vand.u32 %v1361, 4294901760
    %v6809 = vsub.f32 %v1361, %v6808
    %v6810 = vand.u32 %v6809, 4294901760
    %6811 = vmatpush.msra.mxu0 %v6810
    %v6812 = vand.u32 %v1360, 4294901760
    %v6813 = vsub.f32 %v1360, %v6812
    %v6814 = vand.u32 %v6813, 4294901760
    %6815 = vmatpush.msra.mxu0 %v6814
    %v6816 = vand.u32 %v1359, 4294901760
    %v6817 = vsub.f32 %v1359, %v6816
    %v6818 = vand.u32 %v6817, 4294901760
    %6819 = vmatpush.msra.mxu0 %v6818
    %v6820 = vand.u32 %v1358, 4294901760
    %v6821 = vsub.f32 %v1358, %v6820
    %v6822 = vand.u32 %v6821, 4294901760
    %6823 = vmatpush.msra.mxu0 %v6822
    %v6824 = vand.u32 %v1357, 4294901760
    %v6825 = vsub.f32 %v1357, %v6824
    %v6826 = vand.u32 %v6825, 4294901760
    %6827 = vmatpush.msra.mxu0 %v6826
    %v6828 = vand.u32 %v1356, 4294901760
    %v6829 = vsub.f32 %v1356, %v6828
    %v6830 = vand.u32 %v6829, 4294901760
    %6831 = vmatpush.msra.mxu0 %v6830
    %v6832 = vand.u32 %v1355, 4294901760
    %v6833 = vsub.f32 %v1355, %v6832
    %v6834 = vand.u32 %v6833, 4294901760
    %6835 = vmatpush.msra.mxu0 %v6834
    %v6836 = vand.u32 %v1354, 4294901760
    %v6837 = vsub.f32 %v1354, %v6836
    %v6838 = vand.u32 %v6837, 4294901760
    %6839 = vmatpush.msra.mxu0 %v6838
    %v6840 = vand.u32 %v1353, 4294901760
    %v6841 = vsub.f32 %v1353, %v6840
    %v6842 = vand.u32 %v6841, 4294901760
    %6843 = vmatpush.msra.mxu0 %v6842
    %v6844 = vand.u32 %v1352, 4294901760
    %v6845 = vsub.f32 %v1352, %v6844
    %v6846 = vand.u32 %v6845, 4294901760
    %6847 = vmatpush.msra.mxu0 %v6846
    %v6848 = vand.u32 %v6205, 4294901760
    %6849 = vmatmul.f32.gmra.mxu0 %v6848
    %v6850 = vpop.f32.mrf.mxu0
    %v6851 = vadd.f32 %v6782, %v6850
    %6852 = vdwg.mxu0
    %v6853 = vand.u32 %v1367, 4294901760
    %6854 = vmatpush.msra.mxu0 %v6853
    %v6855 = vand.u32 %v1366, 4294901760
    %6856 = vmatpush.msra.mxu0 %v6855
    %v6857 = vand.u32 %v1365, 4294901760
    %6858 = vmatpush.msra.mxu0 %v6857
    %v6859 = vand.u32 %v1364, 4294901760
    %6860 = vmatpush.msra.mxu0 %v6859
    %v6861 = vand.u32 %v1363, 4294901760
    %6862 = vmatpush.msra.mxu0 %v6861
    %v6863 = vand.u32 %v1362, 4294901760
    %6864 = vmatpush.msra.mxu0 %v6863
    %v6865 = vand.u32 %v1361, 4294901760
    %6866 = vmatpush.msra.mxu0 %v6865
    %v6867 = vand.u32 %v1360, 4294901760
    %6868 = vmatpush.msra.mxu0 %v6867
    %v6869 = vand.u32 %v1359, 4294901760
    %6870 = vmatpush.msra.mxu0 %v6869
    %v6871 = vand.u32 %v1358, 4294901760
    %6872 = vmatpush.msra.mxu0 %v6871
    %v6873 = vand.u32 %v1357, 4294901760
    %6874 = vmatpush.msra.mxu0 %v6873
    %v6875 = vand.u32 %v1356, 4294901760
    %6876 = vmatpush.msra.mxu0 %v6875
    %v6877 = vand.u32 %v1355, 4294901760
    %6878 = vmatpush.msra.mxu0 %v6877
    %v6879 = vand.u32 %v1354, 4294901760
    %6880 = vmatpush.msra.mxu0 %v6879
    %v6881 = vand.u32 %v1353, 4294901760
    %6882 = vmatpush.msra.mxu0 %v6881
    %v6883 = vand.u32 %v1352, 4294901760
    %6884 = vmatpush.msra.mxu0 %v6883
    %v6885 = vand.u32 %v6205, 4294901760
    %6886 = vmatmul.f32.gmra.mxu0 %v6885
    %v6887 = vpop.f32.mrf.mxu0
    %v6888 = vadd.f32 %v6851, %v6887
    %6889 = vdwg.mxu0
    %v6890 = vsel %vm4127, %v4830, 0.0
    %v6891 = vsel %vm4127, %v5516, 0.0
    %v6892 = vadd.f32 %v6890, %v6891
    %v6893 = vsel %vm4127, %v6202, 0.0
    %v6894 = vadd.f32 %v6892, %v6893
    %v6895 = vsel %vm4127, %v6888, 0.0
    %v6896 = vadd.f32 %v6894, %v6895
    %v6897 = vadd.f32 %v6896, %v1368
    %v6899 = vrot.slane %v6897, 7
    %v6901 = vsel %vm1372, %v4135, %v6899
    %vm6902 = vcmask 33792
    %6903 = vst.msk [vmem:[#allocation2] sm:$0x3] %vm6902, %v6901
    // Predicated region
    $region18: #{net_forward.1} parent=1 // pred_check
      _
    $region19: #{net_forward.1} parent=1 // pred_check_branch
      %6905 = sbr.rel (0) target = $region21
    $region20: #{net_forward.1} parent=1 // pred_region
      %6907 = vsyncadd [#allocation3], 0
      %s6909 = sshll.u32 [#allocation2], 4
      %s6910 = int_to_ptr.vmem [resolvable:$true] %s6909
      %s6911 = sshll.u32 %s4, 4
      %s6912 = int_to_ptr.hbm [resolvable:$true] %s6911
      %6914 = dma.vmem_to_hbm [thread:$0]  %s6910, 32, %s6912, [#allocation3]
    $region21: #{net_forward.1} parent=1 // pred_fallthru
      _
    // Predicated region
    $region22: #{net_forward.1} parent=1 // pred_check
      _
    $region23: #{net_forward.1} parent=1 // pred_check_branch
      %6916 = sbr.rel (0) target = $region25
    $region24: #{net_forward.1} parent=1 // pred_region
      %6918 = dma.done [#allocation3], 32
    $region25: #{net_forward.1} parent=1 // pred_fallthru
      _
    %6919 = vsyncpa [#allocation3], 1

</llo_original>
